<compile_context>
chip_gen: v6e
topology: v6e:2x2x1
jax: 0.10.0
libtpu: 0.0.40
codegen_flags: <defaults>
</compile_context>

<pallas_src>
import jax
import jax.numpy as jnp
from jax.experimental import pallas as pl
from jax.experimental.pallas import tpu as pltpu

EPS = 1e-5  # PyTorch BatchNorm3d default eps


# --------------------------------------------------------------------------- #
# Kernel: 3x3x3 conv for one (n, depth-block) as ONE im2col matmul + BN stats  #
# --------------------------------------------------------------------------- #
def _conv_stats_kernel(xa_ref, xb_ref, xc_ref, w_ref, conv_ref, stats_ref):
    # xa_ref : (Td, H+2, W+2, Cin)  padded-input depths [d*Td, d*Td+Td)
    # xb_ref : (1,  H+2, W+2, Cin)  padded-input depth   d*Td+Td      (halo)
    # xc_ref : (1,  H+2, W+2, Cin)  padded-input depth   d*Td+Td+1    (halo)
    # w_ref  : (27*Cin, Cp)         im2col weight, rows ordered (kd, kh, kw, cin)
    # conv_ref : (Td, H*W, Cp)      conv output block (lane-dense)
    # stats_ref: (8, Cp)            rows 0/1 = partial [sum, sum_sq] of this block
    Td, Hp, Wp, Cin = xa_ref.shape
    H, W = Hp - 2, Wp - 2
    HW = H * W
    Cp = w_ref.shape[-1]

    # (Td+2)-deep contiguous input window for this output-depth block.
    x_win = jnp.concatenate([xa_ref[...], xb_ref[...], xc_ref[...]], axis=0)

    # 9 spatial-tap slabs per input plane (each plane feeds up to 3 output
    # depths, so build its slabs once and reuse).
    slabs = []
    for dz in range(Td + 2):
        plane = x_win[dz]                                     # (H+2, W+2, Cin)
        per_plane = []
        for kh in range(3):
            for kw in range(3):
                per_plane.append(
                    plane[kh:kh + H, kw:kw + W, :].reshape(HW, Cin))
        slabs.append(per_plane)

    # im2col LHS: rows = (td, h, w), cols = (kd, kh, kw, cin).
    rows = []
    for td in range(Td):
        cols = []
        for kd in range(3):
            cols.extend(slabs[td + kd])
        rows.append(jnp.concatenate(cols, axis=-1))           # (HW, 27*Cin)
    lhs = jnp.concatenate(rows, axis=0)                        # (Td*HW, 27*Cin)

    # Single large-K MXU matmul; accumulator stays a live value (no scratch RMW),
    # conv block is stored exactly once, lane-dense.
    acc = jnp.dot(lhs, w_ref[...], preferred_element_type=jnp.float32)
    conv_ref[...] = acc.reshape(Td, HW, Cp)

    # Per-step partial BatchNorm statistics: one full-block lane-dense store
    # (no masked sub-tile RMW, no cross-step accumulation).
    s = jnp.sum(acc, axis=0, keepdims=True)
    ss = jnp.sum(acc * acc, axis=0, keepdims=True)
    stats_ref[...] = jnp.concatenate(
        [s, ss, jnp.zeros((6, Cp), jnp.float32)], axis=0)


# --------------------------------------------------------------------------- #
# Wrapper                                                                      #
# --------------------------------------------------------------------------- #
def conv_bn_relu_3d(x_ncdhw, weight_oidhw, gamma, beta, *,
                    block_d=None, compute_dtype=jnp.float32):
    """PyTorch-equivalent forward. x: (N, Cin, D, H, W); weight: (Cout, Cin, 3, 3, 3)."""
    N, Cin, D, H, W = x_ncdhw.shape
    Cout = weight_oidhw.shape[0]
    Cp = ((Cout + 127) // 128) * 128            # lane-dense padded channel count
    HW = H * W
    Hp, Wp = H + 2, W + 2

    # Largest depth block that divides D and keeps the double-buffered conv
    # output block comfortably inside VMEM (budget chosen with v7x's 64 MiB in
    # mind; at the demo shapes this picks Td = 8).
    if block_d is None:
        block_d = 1
        for t in (8, 4, 2):
            if D % t == 0 and 2 * t * HW * Cp * 4 <= 16 * 1024 * 1024:
                block_d = t
                break
    Td = block_d
    assert D % Td == 0, "block_d must divide D"
    G = D // Td

    # ---- layout plumbing (single XLA fusion): NCDHW -> NDHWC + zero halo ------
    x = jnp.transpose(x_ncdhw, (0, 2, 3, 4, 1)).astype(compute_dtype)
    xp = jnp.pad(x, ((0, 0), (1, 1), (1, 1), (1, 1), (0, 0)))  # (N, D+2, Hp, Wp, Cin)
    # TODO(synk): fold the H/W halo into the kernel with boundary masking (and
    # merge W/Cin into the lane dim for tiny Cin) to drop this padded HBM copy.

    # ---- weight: OIDHW -> im2col RHS (27*Cin, Cp), exact MXU layout -----------
    w = jnp.transpose(weight_oidhw.astype(compute_dtype), (2, 3, 4, 1, 0))
    w = jnp.pad(w, ((0, 0), (0, 0), (0, 0), (0, 0), (0, Cp - Cout)))
    w = w.reshape(27 * Cin, Cp)

    in_bytes = xp.size * xp.dtype.itemsize * (Td + 2) // Td + w.size * w.dtype.itemsize
    out_bytes = 4 * (N * D * HW * Cp + N * G * 8 * Cp)
    cost = pl.CostEstimate(flops=2 * N * D * HW * 27 * Cin * Cp,
                           transcendentals=0,
                           bytes_accessed=in_bytes + out_bytes)

    conv_out, stats = pl.pallas_call(
        _conv_stats_kernel,
        grid_spec=pltpu.PrefetchScalarGridSpec(
            num_scalar_prefetch=0,
            grid=(N, G),
            in_specs=[
                # Td-deep main block of the padded input.
                pl.BlockSpec((None, Td, Hp, Wp, Cin),
                             lambda n, d: (n, d, 0, 0, 0)),
                # Two single-depth halo taps (block size 1 => block index is the
                # element offset, so arbitrary Td stays pure-BlockSpec).
                pl.BlockSpec((None, 1, Hp, Wp, Cin),
                             lambda n, d: (n, (d + 1) * Td, 0, 0, 0)),
                pl.BlockSpec((None, 1, Hp, Wp, Cin),
                             lambda n, d: (n, (d + 1) * Td + 1, 0, 0, 0)),
                # Grid-invariant weight (single-buffering it is a further VMEM
                # saving at production channel counts).
                pl.BlockSpec((27 * Cin, Cp), lambda n, d: (0, 0)),
            ],
            out_specs=[
                pl.BlockSpec((None, Td, HW, Cp), lambda n, d: (n, d, 0, 0)),
                pl.BlockSpec((None, None, 8, Cp), lambda n, d: (n, d, 0, 0)),
            ],
        ),
        out_shape=[
            jax.ShapeDtypeStruct((N, D, HW, Cp), jnp.float32),
            jax.ShapeDtypeStruct((N, G, 8, Cp), jnp.float32),
        ],
        compiler_params=pltpu.CompilerParams(
            dimension_semantics=("parallel", "parallel"),
            vmem_limit_bytes=48 * 1024 * 1024),
        cost_estimate=cost,
    )(xp, xp, xp, w)

    # ---- global batch statistics -> per-channel affine (O(Cout) work) ---------
    tot = jnp.sum(stats, axis=(0, 1))                         # (8, Cp)
    m = float(N * D * H * W)
    mean = tot[0, :Cout] / m
    # E[x^2] - E[x]^2 in f32; clamp guards cancellation.
    # TODO(synk): mean-shifted / compensated accumulation for very large N*D*H*W.
    var = jnp.maximum(tot[1, :Cout] / m - mean * mean, 0.0)
    scale = gamma.astype(jnp.float32) * jax.lax.rsqrt(var + EPS)
    shift = beta.astype(jnp.float32) - mean * scale
    # TODO(synk): BatchNorm3d running_mean/running_var buffer updates (training
    # side effect) are not modeled; the forward output is unaffected.

    # ---- BN + ReLU epilogue in plain jnp: XLA fuses it with the :Cout slice
    # and the NDHWC -> NCDHW transpose (no second kernel, no Cp-padded write).
    y = jnp.maximum(conv_out[..., :Cout] * scale + shift, 0.0)  # (N, D, HW, Cout)
    y = y.reshape(N, D, H, W, Cout)
    return jnp.transpose(y, (0, 4, 1, 2, 3))


# --------------------------------------------------------------------------- #
# Pure-JAX reference (matches the PyTorch module forward)                      #
# --------------------------------------------------------------------------- #
def reference(x_ncdhw, weight_oidhw, gamma, beta):
    conv = jax.lax.conv_general_dilated(
        x_ncdhw, weight_oidhw, window_strides=(1, 1, 1),
        padding=((1, 1), (1, 1), (1, 1)),
        dimension_numbers=("NCDHW", "OIDHW", "NCDHW"))
    mean = conv.mean(axis=(0, 2, 3, 4), keepdims=True)
    var = ((conv - mean) ** 2).mean(axis=(0, 2, 3, 4), keepdims=True)
    y = (conv - mean) / jnp.sqrt(var + EPS) * gamma.reshape(1, -1, 1, 1, 1) \
        + beta.reshape(1, -1, 1, 1, 1)
    return jnp.maximum(y, 0.0)


if __name__ == "__main__":
    key = jax.random.PRNGKey(0)
    k_x, k_w = jax.random.split(key)

    # Small shapes consistent with the module: N=2, Cin=4, Cout=8, D=H=W=8
    N, Cin, Cout, D, H, W = 2, 4, 8, 8, 8, 8

    x = jax.random.normal(k_x, (N, Cin, D, H, W), dtype=jnp.float32)
    weight = 0.1 * jax.random.normal(k_w, (Cout, Cin, 3, 3, 3), dtype=jnp.float32)
    gamma = 1.0 + 0.05 * jnp.arange(Cout, dtype=jnp.float32)
    beta = 0.01 * jnp.arange(Cout, dtype=jnp.float32)

    fwd = jax.jit(conv_bn_relu_3d)
    out = jax.block_until_ready(fwd(x, weight, gamma, beta))

    ref = reference(x, weight, gamma, beta)
    assert out.shape == (N, Cout, D, H, W)
    err = float(jnp.max(jnp.abs(out - ref)))
    assert jnp.allclose(out, ref, atol=2e-4, rtol=2e-4), f"max abs err = {err}"

    print("KERNEL_OK")
</pallas_src>

<mosaic_0001>
module attributes {stable_mosaic.version = 11 : i64} {
  func.func @_conv_stats_kernel(%arg0: i32, %arg1: i32, %arg2: memref<1x8x10x10x4xf32, #tpu.memory_space<vmem>>, %arg3: memref<1x1x10x10x4xf32, #tpu.memory_space<vmem>>, %arg4: memref<1x1x10x10x4xf32, #tpu.memory_space<vmem>>, %arg5: memref<108x128xf32, #tpu.memory_space<vmem>>, %arg6: memref<1x8x64x128xf32, #tpu.memory_space<vmem>>, %arg7: memref<1x1x8x128xf32, #tpu.memory_space<vmem>>) attributes {dimension_semantics = [#tpu.dimension_semantics<parallel>, #tpu.dimension_semantics<parallel>], iteration_bounds = array<i64: 2, 1>, scalar_prefetch = 0 : i64, scratch_operands = 0 : i64, tpu.core_type = #tpu.core_type<tc>, window_params = [{transform_indices = @transform_0, window_bounds = array<i64: 1, 8, 10, 10, 4>}, {transform_indices = @transform_1, window_bounds = array<i64: 1, 1, 10, 10, 4>}, {transform_indices = @transform_2, window_bounds = array<i64: 1, 1, 10, 10, 4>}, {pipeline_mode = #tpu.pipeline_mode<synchronous>, transform_indices = @transform_3, window_bounds = array<i64: 108, 128>}, {transform_indices = @transform_4, window_bounds = array<i64: 1, 8, 64, 128>}, {transform_indices = @transform_5, window_bounds = array<i64: 1, 1, 8, 128>}]} {
    %c0 = arith.constant 0 : index
    %c0_0 = arith.constant 0 : index
    %c0_1 = arith.constant 0 : index
    %c0_2 = arith.constant 0 : index
    %c0_3 = arith.constant 0 : index
    %0 = vector.load %arg2[%c0, %c0_0, %c0_1, %c0_2, %c0_3] : memref<1x8x10x10x4xf32, #tpu.memory_space<vmem>>, vector<1x8x10x10x4xf32>
    %1 = vector.shape_cast %0 : vector<1x8x10x10x4xf32> to vector<8x10x10x4xf32>
    %c0_4 = arith.constant 0 : index
    %c0_5 = arith.constant 0 : index
    %c0_6 = arith.constant 0 : index
    %c0_7 = arith.constant 0 : index
    %c0_8 = arith.constant 0 : index
    %2 = vector.load %arg3[%c0_4, %c0_5, %c0_6, %c0_7, %c0_8] : memref<1x1x10x10x4xf32, #tpu.memory_space<vmem>>, vector<1x1x10x10x4xf32>
    %3 = vector.shape_cast %2 : vector<1x1x10x10x4xf32> to vector<1x10x10x4xf32>
    %c0_9 = arith.constant 0 : index
    %c0_10 = arith.constant 0 : index
    %c0_11 = arith.constant 0 : index
    %c0_12 = arith.constant 0 : index
    %c0_13 = arith.constant 0 : index
    %4 = vector.load %arg4[%c0_9, %c0_10, %c0_11, %c0_12, %c0_13] : memref<1x1x10x10x4xf32, #tpu.memory_space<vmem>>, vector<1x1x10x10x4xf32>
    %5 = vector.shape_cast %4 : vector<1x1x10x10x4xf32> to vector<1x10x10x4xf32>
    %6 = tpu.concatenate %1, %3, %5 in 0 : vector<8x10x10x4xf32>, vector<1x10x10x4xf32>, vector<1x10x10x4xf32> -> vector<10x10x10x4xf32>
    %7 = vector.extract_strided_slice %6 {offsets = [0, 0, 0, 0], sizes = [1, 10, 10, 4], strides = [1, 1, 1, 1]} : vector<10x10x10x4xf32> to vector<1x10x10x4xf32>
    %8 = vector.shape_cast %7 : vector<1x10x10x4xf32> to vector<10x10x4xf32>
    %9 = vector.extract_strided_slice %8 {offsets = [0, 0, 0], sizes = [8, 8, 4], strides = [1, 1, 1]} : vector<10x10x4xf32> to vector<8x8x4xf32>
    %10 = vector.shape_cast %9 : vector<8x8x4xf32> to vector<64x4xf32>
    %11 = vector.extract_strided_slice %8 {offsets = [0, 1, 0], sizes = [8, 8, 4], strides = [1, 1, 1]} : vector<10x10x4xf32> to vector<8x8x4xf32>
    %12 = vector.shape_cast %11 : vector<8x8x4xf32> to vector<64x4xf32>
    %13 = vector.extract_strided_slice %8 {offsets = [0, 2, 0], sizes = [8, 8, 4], strides = [1, 1, 1]} : vector<10x10x4xf32> to vector<8x8x4xf32>
    %14 = vector.shape_cast %13 : vector<8x8x4xf32> to vector<64x4xf32>
    %15 = vector.extract_strided_slice %8 {offsets = [1, 0, 0], sizes = [8, 8, 4], strides = [1, 1, 1]} : vector<10x10x4xf32> to vector<8x8x4xf32>
    %16 = vector.shape_cast %15 : vector<8x8x4xf32> to vector<64x4xf32>
    %17 = vector.extract_strided_slice %8 {offsets = [1, 1, 0], sizes = [8, 8, 4], strides = [1, 1, 1]} : vector<10x10x4xf32> to vector<8x8x4xf32>
    %18 = vector.shape_cast %17 : vector<8x8x4xf32> to vector<64x4xf32>
    %19 = vector.extract_strided_slice %8 {offsets = [1, 2, 0], sizes = [8, 8, 4], strides = [1, 1, 1]} : vector<10x10x4xf32> to vector<8x8x4xf32>
    %20 = vector.shape_cast %19 : vector<8x8x4xf32> to vector<64x4xf32>
    %21 = vector.extract_strided_slice %8 {offsets = [2, 0, 0], sizes = [8, 8, 4], strides = [1, 1, 1]} : vector<10x10x4xf32> to vector<8x8x4xf32>
    %22 = vector.shape_cast %21 : vector<8x8x4xf32> to vector<64x4xf32>
    %23 = vector.extract_strided_slice %8 {offsets = [2, 1, 0], sizes = [8, 8, 4], strides = [1, 1, 1]} : vector<10x10x4xf32> to vector<8x8x4xf32>
    %24 = vector.shape_cast %23 : vector<8x8x4xf32> to vector<64x4xf32>
    %25 = vector.extract_strided_slice %8 {offsets = [2, 2, 0], sizes = [8, 8, 4], strides = [1, 1, 1]} : vector<10x10x4xf32> to vector<8x8x4xf32>
    %26 = vector.shape_cast %25 : vector<8x8x4xf32> to vector<64x4xf32>
    %27 = vector.extract_strided_slice %6 {offsets = [1, 0, 0, 0], sizes = [1, 10, 10, 4], strides = [1, 1, 1, 1]} : vector<10x10x10x4xf32> to vector<1x10x10x4xf32>
    %28 = vector.shape_cast %27 : vector<1x10x10x4xf32> to vector<10x10x4xf32>
    %29 = vector.extract_strided_slice %28 {offsets = [0, 0, 0], sizes = [8, 8, 4], strides = [1, 1, 1]} : vector<10x10x4xf32> to vector<8x8x4xf32>
    %30 = vector.shape_cast %29 : vector<8x8x4xf32> to vector<64x4xf32>
    %31 = vector.extract_strided_slice %28 {offsets = [0, 1, 0], sizes = [8, 8, 4], strides = [1, 1, 1]} : vector<10x10x4xf32> to vector<8x8x4xf32>
    %32 = vector.shape_cast %31 : vector<8x8x4xf32> to vector<64x4xf32>
    %33 = vector.extract_strided_slice %28 {offsets = [0, 2, 0], sizes = [8, 8, 4], strides = [1, 1, 1]} : vector<10x10x4xf32> to vector<8x8x4xf32>
    %34 = vector.shape_cast %33 : vector<8x8x4xf32> to vector<64x4xf32>
    %35 = vector.extract_strided_slice %28 {offsets = [1, 0, 0], sizes = [8, 8, 4], strides = [1, 1, 1]} : vector<10x10x4xf32> to vector<8x8x4xf32>
    %36 = vector.shape_cast %35 : vector<8x8x4xf32> to vector<64x4xf32>
    %37 = vector.extract_strided_slice %28 {offsets = [1, 1, 0], sizes = [8, 8, 4], strides = [1, 1, 1]} : vector<10x10x4xf32> to vector<8x8x4xf32>
    %38 = vector.shape_cast %37 : vector<8x8x4xf32> to vector<64x4xf32>
    %39 = vector.extract_strided_slice %28 {offsets = [1, 2, 0], sizes = [8, 8, 4], strides = [1, 1, 1]} : vector<10x10x4xf32> to vector<8x8x4xf32>
    %40 = vector.shape_cast %39 : vector<8x8x4xf32> to vector<64x4xf32>
    %41 = vector.extract_strided_slice %28 {offsets = [2, 0, 0], sizes = [8, 8, 4], strides = [1, 1, 1]} : vector<10x10x4xf32> to vector<8x8x4xf32>
    %42 = vector.shape_cast %41 : vector<8x8x4xf32> to vector<64x4xf32>
    %43 = vector.extract_strided_slice %28 {offsets = [2, 1, 0], sizes = [8, 8, 4], strides = [1, 1, 1]} : vector<10x10x4xf32> to vector<8x8x4xf32>
    %44 = vector.shape_cast %43 : vector<8x8x4xf32> to vector<64x4xf32>
    %45 = vector.extract_strided_slice %28 {offsets = [2, 2, 0], sizes = [8, 8, 4], strides = [1, 1, 1]} : vector<10x10x4xf32> to vector<8x8x4xf32>
    %46 = vector.shape_cast %45 : vector<8x8x4xf32> to vector<64x4xf32>
    %47 = vector.extract_strided_slice %6 {offsets = [2, 0, 0, 0], sizes = [1, 10, 10, 4], strides = [1, 1, 1, 1]} : vector<10x10x10x4xf32> to vector<1x10x10x4xf32>
    %48 = vector.shape_cast %47 : vector<1x10x10x4xf32> to vector<10x10x4xf32>
    %49 = vector.extract_strided_slice %48 {offsets = [0, 0, 0], sizes = [8, 8, 4], strides = [1, 1, 1]} : vector<10x10x4xf32> to vector<8x8x4xf32>
    %50 = vector.shape_cast %49 : vector<8x8x4xf32> to vector<64x4xf32>
    %51 = vector.extract_strided_slice %48 {offsets = [0, 1, 0], sizes = [8, 8, 4], strides = [1, 1, 1]} : vector<10x10x4xf32> to vector<8x8x4xf32>
    %52 = vector.shape_cast %51 : vector<8x8x4xf32> to vector<64x4xf32>
    %53 = vector.extract_strided_slice %48 {offsets = [0, 2, 0], sizes = [8, 8, 4], strides = [1, 1, 1]} : vector<10x10x4xf32> to vector<8x8x4xf32>
    %54 = vector.shape_cast %53 : vector<8x8x4xf32> to vector<64x4xf32>
    %55 = vector.extract_strided_slice %48 {offsets = [1, 0, 0], sizes = [8, 8, 4], strides = [1, 1, 1]} : vector<10x10x4xf32> to vector<8x8x4xf32>
    %56 = vector.shape_cast %55 : vector<8x8x4xf32> to vector<64x4xf32>
    %57 = vector.extract_strided_slice %48 {offsets = [1, 1, 0], sizes = [8, 8, 4], strides = [1, 1, 1]} : vector<10x10x4xf32> to vector<8x8x4xf32>
    %58 = vector.shape_cast %57 : vector<8x8x4xf32> to vector<64x4xf32>
    %59 = vector.extract_strided_slice %48 {offsets = [1, 2, 0], sizes = [8, 8, 4], strides = [1, 1, 1]} : vector<10x10x4xf32> to vector<8x8x4xf32>
    %60 = vector.shape_cast %59 : vector<8x8x4xf32> to vector<64x4xf32>
    %61 = vector.extract_strided_slice %48 {offsets = [2, 0, 0], sizes = [8, 8, 4], strides = [1, 1, 1]} : vector<10x10x4xf32> to vector<8x8x4xf32>
    %62 = vector.shape_cast %61 : vector<8x8x4xf32> to vector<64x4xf32>
    %63 = vector.extract_strided_slice %48 {offsets = [2, 1, 0], sizes = [8, 8, 4], strides = [1, 1, 1]} : vector<10x10x4xf32> to vector<8x8x4xf32>
    %64 = vector.shape_cast %63 : vector<8x8x4xf32> to vector<64x4xf32>
    %65 = vector.extract_strided_slice %48 {offsets = [2, 2, 0], sizes = [8, 8, 4], strides = [1, 1, 1]} : vector<10x10x4xf32> to vector<8x8x4xf32>
    %66 = vector.shape_cast %65 : vector<8x8x4xf32> to vector<64x4xf32>
    %67 = vector.extract_strided_slice %6 {offsets = [3, 0, 0, 0], sizes = [1, 10, 10, 4], strides = [1, 1, 1, 1]} : vector<10x10x10x4xf32> to vector<1x10x10x4xf32>
    %68 = vector.shape_cast %67 : vector<1x10x10x4xf32> to vector<10x10x4xf32>
    %69 = vector.extract_strided_slice %68 {offsets = [0, 0, 0], sizes = [8, 8, 4], strides = [1, 1, 1]} : vector<10x10x4xf32> to vector<8x8x4xf32>
    %70 = vector.shape_cast %69 : vector<8x8x4xf32> to vector<64x4xf32>
    %71 = vector.extract_strided_slice %68 {offsets = [0, 1, 0], sizes = [8, 8, 4], strides = [1, 1, 1]} : vector<10x10x4xf32> to vector<8x8x4xf32>
    %72 = vector.shape_cast %71 : vector<8x8x4xf32> to vector<64x4xf32>
    %73 = vector.extract_strided_slice %68 {offsets = [0, 2, 0], sizes = [8, 8, 4], strides = [1, 1, 1]} : vector<10x10x4xf32> to vector<8x8x4xf32>
    %74 = vector.shape_cast %73 : vector<8x8x4xf32> to vector<64x4xf32>
    %75 = vector.extract_strided_slice %68 {offsets = [1, 0, 0], sizes = [8, 8, 4], strides = [1, 1, 1]} : vector<10x10x4xf32> to vector<8x8x4xf32>
    %76 = vector.shape_cast %75 : vector<8x8x4xf32> to vector<64x4xf32>
    %77 = vector.extract_strided_slice %68 {offsets = [1, 1, 0], sizes = [8, 8, 4], strides = [1, 1, 1]} : vector<10x10x4xf32> to vector<8x8x4xf32>
    %78 = vector.shape_cast %77 : vector<8x8x4xf32> to vector<64x4xf32>
    %79 = vector.extract_strided_slice %68 {offsets = [1, 2, 0], sizes = [8, 8, 4], strides = [1, 1, 1]} : vector<10x10x4xf32> to vector<8x8x4xf32>
    %80 = vector.shape_cast %79 : vector<8x8x4xf32> to vector<64x4xf32>
    %81 = vector.extract_strided_slice %68 {offsets = [2, 0, 0], sizes = [8, 8, 4], strides = [1, 1, 1]} : vector<10x10x4xf32> to vector<8x8x4xf32>
    %82 = vector.shape_cast %81 : vector<8x8x4xf32> to vector<64x4xf32>
    %83 = vector.extract_strided_slice %68 {offsets = [2, 1, 0], sizes = [8, 8, 4], strides = [1, 1, 1]} : vector<10x10x4xf32> to vector<8x8x4xf32>
    %84 = vector.shape_cast %83 : vector<8x8x4xf32> to vector<64x4xf32>
    %85 = vector.extract_strided_slice %68 {offsets = [2, 2, 0], sizes = [8, 8, 4], strides = [1, 1, 1]} : vector<10x10x4xf32> to vector<8x8x4xf32>
    %86 = vector.shape_cast %85 : vector<8x8x4xf32> to vector<64x4xf32>
    %87 = vector.extract_strided_slice %6 {offsets = [4, 0, 0, 0], sizes = [1, 10, 10, 4], strides = [1, 1, 1, 1]} : vector<10x10x10x4xf32> to vector<1x10x10x4xf32>
    %88 = vector.shape_cast %87 : vector<1x10x10x4xf32> to vector<10x10x4xf32>
    %89 = vector.extract_strided_slice %88 {offsets = [0, 0, 0], sizes = [8, 8, 4], strides = [1, 1, 1]} : vector<10x10x4xf32> to vector<8x8x4xf32>
    %90 = vector.shape_cast %89 : vector<8x8x4xf32> to vector<64x4xf32>
    %91 = vector.extract_strided_slice %88 {offsets = [0, 1, 0], sizes = [8, 8, 4], strides = [1, 1, 1]} : vector<10x10x4xf32> to vector<8x8x4xf32>
    %92 = vector.shape_cast %91 : vector<8x8x4xf32> to vector<64x4xf32>
    %93 = vector.extract_strided_slice %88 {offsets = [0, 2, 0], sizes = [8, 8, 4], strides = [1, 1, 1]} : vector<10x10x4xf32> to vector<8x8x4xf32>
    %94 = vector.shape_cast %93 : vector<8x8x4xf32> to vector<64x4xf32>
    %95 = vector.extract_strided_slice %88 {offsets = [1, 0, 0], sizes = [8, 8, 4], strides = [1, 1, 1]} : vector<10x10x4xf32> to vector<8x8x4xf32>
    %96 = vector.shape_cast %95 : vector<8x8x4xf32> to vector<64x4xf32>
    %97 = vector.extract_strided_slice %88 {offsets = [1, 1, 0], sizes = [8, 8, 4], strides = [1, 1, 1]} : vector<10x10x4xf32> to vector<8x8x4xf32>
    %98 = vector.shape_cast %97 : vector<8x8x4xf32> to vector<64x4xf32>
    %99 = vector.extract_strided_slice %88 {offsets = [1, 2, 0], sizes = [8, 8, 4], strides = [1, 1, 1]} : vector<10x10x4xf32> to vector<8x8x4xf32>
    %100 = vector.shape_cast %99 : vector<8x8x4xf32> to vector<64x4xf32>
    %101 = vector.extract_strided_slice %88 {offsets = [2, 0, 0], sizes = [8, 8, 4], strides = [1, 1, 1]} : vector<10x10x4xf32> to vector<8x8x4xf32>
    %102 = vector.shape_cast %101 : vector<8x8x4xf32> to vector<64x4xf32>
    %103 = vector.extract_strided_slice %88 {offsets = [2, 1, 0], sizes = [8, 8, 4], strides = [1, 1, 1]} : vector<10x10x4xf32> to vector<8x8x4xf32>
    %104 = vector.shape_cast %103 : vector<8x8x4xf32> to vector<64x4xf32>
    %105 = vector.extract_strided_slice %88 {offsets = [2, 2, 0], sizes = [8, 8, 4], strides = [1, 1, 1]} : vector<10x10x4xf32> to vector<8x8x4xf32>
    %106 = vector.shape_cast %105 : vector<8x8x4xf32> to vector<64x4xf32>
    %107 = vector.extract_strided_slice %6 {offsets = [5, 0, 0, 0], sizes = [1, 10, 10, 4], strides = [1, 1, 1, 1]} : vector<10x10x10x4xf32> to vector<1x10x10x4xf32>
    %108 = vector.shape_cast %107 : vector<1x10x10x4xf32> to vector<10x10x4xf32>
    %109 = vector.extract_strided_slice %108 {offsets = [0, 0, 0], sizes = [8, 8, 4], strides = [1, 1, 1]} : vector<10x10x4xf32> to vector<8x8x4xf32>
    %110 = vector.shape_cast %109 : vector<8x8x4xf32> to vector<64x4xf32>
    %111 = vector.extract_strided_slice %108 {offsets = [0, 1, 0], sizes = [8, 8, 4], strides = [1, 1, 1]} : vector<10x10x4xf32> to vector<8x8x4xf32>
    %112 = vector.shape_cast %111 : vector<8x8x4xf32> to vector<64x4xf32>
    %113 = vector.extract_strided_slice %108 {offsets = [0, 2, 0], sizes = [8, 8, 4], strides = [1, 1, 1]} : vector<10x10x4xf32> to vector<8x8x4xf32>
    %114 = vector.shape_cast %113 : vector<8x8x4xf32> to vector<64x4xf32>
    %115 = vector.extract_strided_slice %108 {offsets = [1, 0, 0], sizes = [8, 8, 4], strides = [1, 1, 1]} : vector<10x10x4xf32> to vector<8x8x4xf32>
    %116 = vector.shape_cast %115 : vector<8x8x4xf32> to vector<64x4xf32>
    %117 = vector.extract_strided_slice %108 {offsets = [1, 1, 0], sizes = [8, 8, 4], strides = [1, 1, 1]} : vector<10x10x4xf32> to vector<8x8x4xf32>
    %118 = vector.shape_cast %117 : vector<8x8x4xf32> to vector<64x4xf32>
    %119 = vector.extract_strided_slice %108 {offsets = [1, 2, 0], sizes = [8, 8, 4], strides = [1, 1, 1]} : vector<10x10x4xf32> to vector<8x8x4xf32>
    %120 = vector.shape_cast %119 : vector<8x8x4xf32> to vector<64x4xf32>
    %121 = vector.extract_strided_slice %108 {offsets = [2, 0, 0], sizes = [8, 8, 4], strides = [1, 1, 1]} : vector<10x10x4xf32> to vector<8x8x4xf32>
    %122 = vector.shape_cast %121 : vector<8x8x4xf32> to vector<64x4xf32>
    %123 = vector.extract_strided_slice %108 {offsets = [2, 1, 0], sizes = [8, 8, 4], strides = [1, 1, 1]} : vector<10x10x4xf32> to vector<8x8x4xf32>
    %124 = vector.shape_cast %123 : vector<8x8x4xf32> to vector<64x4xf32>
    %125 = vector.extract_strided_slice %108 {offsets = [2, 2, 0], sizes = [8, 8, 4], strides = [1, 1, 1]} : vector<10x10x4xf32> to vector<8x8x4xf32>
    %126 = vector.shape_cast %125 : vector<8x8x4xf32> to vector<64x4xf32>
    %127 = vector.extract_strided_slice %6 {offsets = [6, 0, 0, 0], sizes = [1, 10, 10, 4], strides = [1, 1, 1, 1]} : vector<10x10x10x4xf32> to vector<1x10x10x4xf32>
    %128 = vector.shape_cast %127 : vector<1x10x10x4xf32> to vector<10x10x4xf32>
    %129 = vector.extract_strided_slice %128 {offsets = [0, 0, 0], sizes = [8, 8, 4], strides = [1, 1, 1]} : vector<10x10x4xf32> to vector<8x8x4xf32>
    %130 = vector.shape_cast %129 : vector<8x8x4xf32> to vector<64x4xf32>
    %131 = vector.extract_strided_slice %128 {offsets = [0, 1, 0], sizes = [8, 8, 4], strides = [1, 1, 1]} : vector<10x10x4xf32> to vector<8x8x4xf32>
    %132 = vector.shape_cast %131 : vector<8x8x4xf32> to vector<64x4xf32>
    %133 = vector.extract_strided_slice %128 {offsets = [0, 2, 0], sizes = [8, 8, 4], strides = [1, 1, 1]} : vector<10x10x4xf32> to vector<8x8x4xf32>
    %134 = vector.shape_cast %133 : vector<8x8x4xf32> to vector<64x4xf32>
    %135 = vector.extract_strided_slice %128 {offsets = [1, 0, 0], sizes = [8, 8, 4], strides = [1, 1, 1]} : vector<10x10x4xf32> to vector<8x8x4xf32>
    %136 = vector.shape_cast %135 : vector<8x8x4xf32> to vector<64x4xf32>
    %137 = vector.extract_strided_slice %128 {offsets = [1, 1, 0], sizes = [8, 8, 4], strides = [1, 1, 1]} : vector<10x10x4xf32> to vector<8x8x4xf32>
    %138 = vector.shape_cast %137 : vector<8x8x4xf32> to vector<64x4xf32>
    %139 = vector.extract_strided_slice %128 {offsets = [1, 2, 0], sizes = [8, 8, 4], strides = [1, 1, 1]} : vector<10x10x4xf32> to vector<8x8x4xf32>
    %140 = vector.shape_cast %139 : vector<8x8x4xf32> to vector<64x4xf32>
    %141 = vector.extract_strided_slice %128 {offsets = [2, 0, 0], sizes = [8, 8, 4], strides = [1, 1, 1]} : vector<10x10x4xf32> to vector<8x8x4xf32>
    %142 = vector.shape_cast %141 : vector<8x8x4xf32> to vector<64x4xf32>
    %143 = vector.extract_strided_slice %128 {offsets = [2, 1, 0], sizes = [8, 8, 4], strides = [1, 1, 1]} : vector<10x10x4xf32> to vector<8x8x4xf32>
    %144 = vector.shape_cast %143 : vector<8x8x4xf32> to vector<64x4xf32>
    %145 = vector.extract_strided_slice %128 {offsets = [2, 2, 0], sizes = [8, 8, 4], strides = [1, 1, 1]} : vector<10x10x4xf32> to vector<8x8x4xf32>
    %146 = vector.shape_cast %145 : vector<8x8x4xf32> to vector<64x4xf32>
    %147 = vector.extract_strided_slice %6 {offsets = [7, 0, 0, 0], sizes = [1, 10, 10, 4], strides = [1, 1, 1, 1]} : vector<10x10x10x4xf32> to vector<1x10x10x4xf32>
    %148 = vector.shape_cast %147 : vector<1x10x10x4xf32> to vector<10x10x4xf32>
    %149 = vector.extract_strided_slice %148 {offsets = [0, 0, 0], sizes = [8, 8, 4], strides = [1, 1, 1]} : vector<10x10x4xf32> to vector<8x8x4xf32>
    %150 = vector.shape_cast %149 : vector<8x8x4xf32> to vector<64x4xf32>
    %151 = vector.extract_strided_slice %148 {offsets = [0, 1, 0], sizes = [8, 8, 4], strides = [1, 1, 1]} : vector<10x10x4xf32> to vector<8x8x4xf32>
    %152 = vector.shape_cast %151 : vector<8x8x4xf32> to vector<64x4xf32>
    %153 = vector.extract_strided_slice %148 {offsets = [0, 2, 0], sizes = [8, 8, 4], strides = [1, 1, 1]} : vector<10x10x4xf32> to vector<8x8x4xf32>
    %154 = vector.shape_cast %153 : vector<8x8x4xf32> to vector<64x4xf32>
    %155 = vector.extract_strided_slice %148 {offsets = [1, 0, 0], sizes = [8, 8, 4], strides = [1, 1, 1]} : vector<10x10x4xf32> to vector<8x8x4xf32>
    %156 = vector.shape_cast %155 : vector<8x8x4xf32> to vector<64x4xf32>
    %157 = vector.extract_strided_slice %148 {offsets = [1, 1, 0], sizes = [8, 8, 4], strides = [1, 1, 1]} : vector<10x10x4xf32> to vector<8x8x4xf32>
    %158 = vector.shape_cast %157 : vector<8x8x4xf32> to vector<64x4xf32>
    %159 = vector.extract_strided_slice %148 {offsets = [1, 2, 0], sizes = [8, 8, 4], strides = [1, 1, 1]} : vector<10x10x4xf32> to vector<8x8x4xf32>
    %160 = vector.shape_cast %159 : vector<8x8x4xf32> to vector<64x4xf32>
    %161 = vector.extract_strided_slice %148 {offsets = [2, 0, 0], sizes = [8, 8, 4], strides = [1, 1, 1]} : vector<10x10x4xf32> to vector<8x8x4xf32>
    %162 = vector.shape_cast %161 : vector<8x8x4xf32> to vector<64x4xf32>
    %163 = vector.extract_strided_slice %148 {offsets = [2, 1, 0], sizes = [8, 8, 4], strides = [1, 1, 1]} : vector<10x10x4xf32> to vector<8x8x4xf32>
    %164 = vector.shape_cast %163 : vector<8x8x4xf32> to vector<64x4xf32>
    %165 = vector.extract_strided_slice %148 {offsets = [2, 2, 0], sizes = [8, 8, 4], strides = [1, 1, 1]} : vector<10x10x4xf32> to vector<8x8x4xf32>
    %166 = vector.shape_cast %165 : vector<8x8x4xf32> to vector<64x4xf32>
    %167 = vector.extract_strided_slice %6 {offsets = [8, 0, 0, 0], sizes = [1, 10, 10, 4], strides = [1, 1, 1, 1]} : vector<10x10x10x4xf32> to vector<1x10x10x4xf32>
    %168 = vector.shape_cast %167 : vector<1x10x10x4xf32> to vector<10x10x4xf32>
    %169 = vector.extract_strided_slice %168 {offsets = [0, 0, 0], sizes = [8, 8, 4], strides = [1, 1, 1]} : vector<10x10x4xf32> to vector<8x8x4xf32>
    %170 = vector.shape_cast %169 : vector<8x8x4xf32> to vector<64x4xf32>
    %171 = vector.extract_strided_slice %168 {offsets = [0, 1, 0], sizes = [8, 8, 4], strides = [1, 1, 1]} : vector<10x10x4xf32> to vector<8x8x4xf32>
    %172 = vector.shape_cast %171 : vector<8x8x4xf32> to vector<64x4xf32>
    %173 = vector.extract_strided_slice %168 {offsets = [0, 2, 0], sizes = [8, 8, 4], strides = [1, 1, 1]} : vector<10x10x4xf32> to vector<8x8x4xf32>
    %174 = vector.shape_cast %173 : vector<8x8x4xf32> to vector<64x4xf32>
    %175 = vector.extract_strided_slice %168 {offsets = [1, 0, 0], sizes = [8, 8, 4], strides = [1, 1, 1]} : vector<10x10x4xf32> to vector<8x8x4xf32>
    %176 = vector.shape_cast %175 : vector<8x8x4xf32> to vector<64x4xf32>
    %177 = vector.extract_strided_slice %168 {offsets = [1, 1, 0], sizes = [8, 8, 4], strides = [1, 1, 1]} : vector<10x10x4xf32> to vector<8x8x4xf32>
    %178 = vector.shape_cast %177 : vector<8x8x4xf32> to vector<64x4xf32>
    %179 = vector.extract_strided_slice %168 {offsets = [1, 2, 0], sizes = [8, 8, 4], strides = [1, 1, 1]} : vector<10x10x4xf32> to vector<8x8x4xf32>
    %180 = vector.shape_cast %179 : vector<8x8x4xf32> to vector<64x4xf32>
    %181 = vector.extract_strided_slice %168 {offsets = [2, 0, 0], sizes = [8, 8, 4], strides = [1, 1, 1]} : vector<10x10x4xf32> to vector<8x8x4xf32>
    %182 = vector.shape_cast %181 : vector<8x8x4xf32> to vector<64x4xf32>
    %183 = vector.extract_strided_slice %168 {offsets = [2, 1, 0], sizes = [8, 8, 4], strides = [1, 1, 1]} : vector<10x10x4xf32> to vector<8x8x4xf32>
    %184 = vector.shape_cast %183 : vector<8x8x4xf32> to vector<64x4xf32>
    %185 = vector.extract_strided_slice %168 {offsets = [2, 2, 0], sizes = [8, 8, 4], strides = [1, 1, 1]} : vector<10x10x4xf32> to vector<8x8x4xf32>
    %186 = vector.shape_cast %185 : vector<8x8x4xf32> to vector<64x4xf32>
    %187 = vector.extract_strided_slice %6 {offsets = [9, 0, 0, 0], sizes = [1, 10, 10, 4], strides = [1, 1, 1, 1]} : vector<10x10x10x4xf32> to vector<1x10x10x4xf32>
    %188 = vector.shape_cast %187 : vector<1x10x10x4xf32> to vector<10x10x4xf32>
    %189 = vector.extract_strided_slice %188 {offsets = [0, 0, 0], sizes = [8, 8, 4], strides = [1, 1, 1]} : vector<10x10x4xf32> to vector<8x8x4xf32>
    %190 = vector.shape_cast %189 : vector<8x8x4xf32> to vector<64x4xf32>
    %191 = vector.extract_strided_slice %188 {offsets = [0, 1, 0], sizes = [8, 8, 4], strides = [1, 1, 1]} : vector<10x10x4xf32> to vector<8x8x4xf32>
    %192 = vector.shape_cast %191 : vector<8x8x4xf32> to vector<64x4xf32>
    %193 = vector.extract_strided_slice %188 {offsets = [0, 2, 0], sizes = [8, 8, 4], strides = [1, 1, 1]} : vector<10x10x4xf32> to vector<8x8x4xf32>
    %194 = vector.shape_cast %193 : vector<8x8x4xf32> to vector<64x4xf32>
    %195 = vector.extract_strided_slice %188 {offsets = [1, 0, 0], sizes = [8, 8, 4], strides = [1, 1, 1]} : vector<10x10x4xf32> to vector<8x8x4xf32>
    %196 = vector.shape_cast %195 : vector<8x8x4xf32> to vector<64x4xf32>
    %197 = vector.extract_strided_slice %188 {offsets = [1, 1, 0], sizes = [8, 8, 4], strides = [1, 1, 1]} : vector<10x10x4xf32> to vector<8x8x4xf32>
    %198 = vector.shape_cast %197 : vector<8x8x4xf32> to vector<64x4xf32>
    %199 = vector.extract_strided_slice %188 {offsets = [1, 2, 0], sizes = [8, 8, 4], strides = [1, 1, 1]} : vector<10x10x4xf32> to vector<8x8x4xf32>
    %200 = vector.shape_cast %199 : vector<8x8x4xf32> to vector<64x4xf32>
    %201 = vector.extract_strided_slice %188 {offsets = [2, 0, 0], sizes = [8, 8, 4], strides = [1, 1, 1]} : vector<10x10x4xf32> to vector<8x8x4xf32>
    %202 = vector.shape_cast %201 : vector<8x8x4xf32> to vector<64x4xf32>
    %203 = vector.extract_strided_slice %188 {offsets = [2, 1, 0], sizes = [8, 8, 4], strides = [1, 1, 1]} : vector<10x10x4xf32> to vector<8x8x4xf32>
    %204 = vector.shape_cast %203 : vector<8x8x4xf32> to vector<64x4xf32>
    %205 = vector.extract_strided_slice %188 {offsets = [2, 2, 0], sizes = [8, 8, 4], strides = [1, 1, 1]} : vector<10x10x4xf32> to vector<8x8x4xf32>
    %206 = vector.shape_cast %205 : vector<8x8x4xf32> to vector<64x4xf32>
    %207 = tpu.concatenate %10, %12, %14, %16, %18, %20, %22, %24, %26, %30, %32, %34, %36, %38, %40, %42 in 1 : vector<64x4xf32>, vector<64x4xf32>, vector<64x4xf32>, vector<64x4xf32>, vector<64x4xf32>, vector<64x4xf32>, vector<64x4xf32>, vector<64x4xf32>, vector<64x4xf32>, vector<64x4xf32>, vector<64x4xf32>, vector<64x4xf32>, vector<64x4xf32>, vector<64x4xf32>, vector<64x4xf32>, vector<64x4xf32> -> vector<64x64xf32>
    %208 = tpu.concatenate %44, %46, %50, %52, %54, %56, %58, %60, %62, %64, %66 in 1 : vector<64x4xf32>, vector<64x4xf32>, vector<64x4xf32>, vector<64x4xf32>, vector<64x4xf32>, vector<64x4xf32>, vector<64x4xf32>, vector<64x4xf32>, vector<64x4xf32>, vector<64x4xf32>, vector<64x4xf32> -> vector<64x44xf32>
    %209 = tpu.concatenate %207, %208 in 1 : vector<64x64xf32>, vector<64x44xf32> -> vector<64x108xf32>
    %210 = tpu.concatenate %30, %32, %34, %36, %38, %40, %42, %44, %46, %50, %52, %54, %56, %58, %60, %62 in 1 : vector<64x4xf32>, vector<64x4xf32>, vector<64x4xf32>, vector<64x4xf32>, vector<64x4xf32>, vector<64x4xf32>, vector<64x4xf32>, vector<64x4xf32>, vector<64x4xf32>, vector<64x4xf32>, vector<64x4xf32>, vector<64x4xf32>, vector<64x4xf32>, vector<64x4xf32>, vector<64x4xf32>, vector<64x4xf32> -> vector<64x64xf32>
    %211 = tpu.concatenate %64, %66, %70, %72, %74, %76, %78, %80, %82, %84, %86 in 1 : vector<64x4xf32>, vector<64x4xf32>, vector<64x4xf32>, vector<64x4xf32>, vector<64x4xf32>, vector<64x4xf32>, vector<64x4xf32>, vector<64x4xf32>, vector<64x4xf32>, vector<64x4xf32>, vector<64x4xf32> -> vector<64x44xf32>
    %212 = tpu.concatenate %210, %211 in 1 : vector<64x64xf32>, vector<64x44xf32> -> vector<64x108xf32>
    %213 = tpu.concatenate %50, %52, %54, %56, %58, %60, %62, %64, %66, %70, %72, %74, %76, %78, %80, %82 in 1 : vector<64x4xf32>, vector<64x4xf32>, vector<64x4xf32>, vector<64x4xf32>, vector<64x4xf32>, vector<64x4xf32>, vector<64x4xf32>, vector<64x4xf32>, vector<64x4xf32>, vector<64x4xf32>, vector<64x4xf32>, vector<64x4xf32>, vector<64x4xf32>, vector<64x4xf32>, vector<64x4xf32>, vector<64x4xf32> -> vector<64x64xf32>
    %214 = tpu.concatenate %84, %86, %90, %92, %94, %96, %98, %100, %102, %104, %106 in 1 : vector<64x4xf32>, vector<64x4xf32>, vector<64x4xf32>, vector<64x4xf32>, vector<64x4xf32>, vector<64x4xf32>, vector<64x4xf32>, vector<64x4xf32>, vector<64x4xf32>, vector<64x4xf32>, vector<64x4xf32> -> vector<64x44xf32>
    %215 = tpu.concatenate %213, %214 in 1 : vector<64x64xf32>, vector<64x44xf32> -> vector<64x108xf32>
    %216 = tpu.concatenate %70, %72, %74, %76, %78, %80, %82, %84, %86, %90, %92, %94, %96, %98, %100, %102 in 1 : vector<64x4xf32>, vector<64x4xf32>, vector<64x4xf32>, vector<64x4xf32>, vector<64x4xf32>, vector<64x4xf32>, vector<64x4xf32>, vector<64x4xf32>, vector<64x4xf32>, vector<64x4xf32>, vector<64x4xf32>, vector<64x4xf32>, vector<64x4xf32>, vector<64x4xf32>, vector<64x4xf32>, vector<64x4xf32> -> vector<64x64xf32>
    %217 = tpu.concatenate %104, %106, %110, %112, %114, %116, %118, %120, %122, %124, %126 in 1 : vector<64x4xf32>, vector<64x4xf32>, vector<64x4xf32>, vector<64x4xf32>, vector<64x4xf32>, vector<64x4xf32>, vector<64x4xf32>, vector<64x4xf32>, vector<64x4xf32>, vector<64x4xf32>, vector<64x4xf32> -> vector<64x44xf32>
    %218 = tpu.concatenate %216, %217 in 1 : vector<64x64xf32>, vector<64x44xf32> -> vector<64x108xf32>
    %219 = tpu.concatenate %90, %92, %94, %96, %98, %100, %102, %104, %106, %110, %112, %114, %116, %118, %120, %122 in 1 : vector<64x4xf32>, vector<64x4xf32>, vector<64x4xf32>, vector<64x4xf32>, vector<64x4xf32>, vector<64x4xf32>, vector<64x4xf32>, vector<64x4xf32>, vector<64x4xf32>, vector<64x4xf32>, vector<64x4xf32>, vector<64x4xf32>, vector<64x4xf32>, vector<64x4xf32>, vector<64x4xf32>, vector<64x4xf32> -> vector<64x64xf32>
    %220 = tpu.concatenate %124, %126, %130, %132, %134, %136, %138, %140, %142, %144, %146 in 1 : vector<64x4xf32>, vector<64x4xf32>, vector<64x4xf32>, vector<64x4xf32>, vector<64x4xf32>, vector<64x4xf32>, vector<64x4xf32>, vector<64x4xf32>, vector<64x4xf32>, vector<64x4xf32>, vector<64x4xf32> -> vector<64x44xf32>
    %221 = tpu.concatenate %219, %220 in 1 : vector<64x64xf32>, vector<64x44xf32> -> vector<64x108xf32>
    %222 = tpu.concatenate %110, %112, %114, %116, %118, %120, %122, %124, %126, %130, %132, %134, %136, %138, %140, %142 in 1 : vector<64x4xf32>, vector<64x4xf32>, vector<64x4xf32>, vector<64x4xf32>, vector<64x4xf32>, vector<64x4xf32>, vector<64x4xf32>, vector<64x4xf32>, vector<64x4xf32>, vector<64x4xf32>, vector<64x4xf32>, vector<64x4xf32>, vector<64x4xf32>, vector<64x4xf32>, vector<64x4xf32>, vector<64x4xf32> -> vector<64x64xf32>
    %223 = tpu.concatenate %144, %146, %150, %152, %154, %156, %158, %160, %162, %164, %166 in 1 : vector<64x4xf32>, vector<64x4xf32>, vector<64x4xf32>, vector<64x4xf32>, vector<64x4xf32>, vector<64x4xf32>, vector<64x4xf32>, vector<64x4xf32>, vector<64x4xf32>, vector<64x4xf32>, vector<64x4xf32> -> vector<64x44xf32>
    %224 = tpu.concatenate %222, %223 in 1 : vector<64x64xf32>, vector<64x44xf32> -> vector<64x108xf32>
    %225 = tpu.concatenate %130, %132, %134, %136, %138, %140, %142, %144, %146, %150, %152, %154, %156, %158, %160, %162 in 1 : vector<64x4xf32>, vector<64x4xf32>, vector<64x4xf32>, vector<64x4xf32>, vector<64x4xf32>, vector<64x4xf32>, vector<64x4xf32>, vector<64x4xf32>, vector<64x4xf32>, vector<64x4xf32>, vector<64x4xf32>, vector<64x4xf32>, vector<64x4xf32>, vector<64x4xf32>, vector<64x4xf32>, vector<64x4xf32> -> vector<64x64xf32>
    %226 = tpu.concatenate %164, %166, %170, %172, %174, %176, %178, %180, %182, %184, %186 in 1 : vector<64x4xf32>, vector<64x4xf32>, vector<64x4xf32>, vector<64x4xf32>, vector<64x4xf32>, vector<64x4xf32>, vector<64x4xf32>, vector<64x4xf32>, vector<64x4xf32>, vector<64x4xf32>, vector<64x4xf32> -> vector<64x44xf32>
    %227 = tpu.concatenate %225, %226 in 1 : vector<64x64xf32>, vector<64x44xf32> -> vector<64x108xf32>
    %228 = tpu.concatenate %150, %152, %154, %156, %158, %160, %162, %164, %166, %170, %172, %174, %176, %178, %180, %182 in 1 : vector<64x4xf32>, vector<64x4xf32>, vector<64x4xf32>, vector<64x4xf32>, vector<64x4xf32>, vector<64x4xf32>, vector<64x4xf32>, vector<64x4xf32>, vector<64x4xf32>, vector<64x4xf32>, vector<64x4xf32>, vector<64x4xf32>, vector<64x4xf32>, vector<64x4xf32>, vector<64x4xf32>, vector<64x4xf32> -> vector<64x64xf32>
    %229 = tpu.concatenate %184, %186, %190, %192, %194, %196, %198, %200, %202, %204, %206 in 1 : vector<64x4xf32>, vector<64x4xf32>, vector<64x4xf32>, vector<64x4xf32>, vector<64x4xf32>, vector<64x4xf32>, vector<64x4xf32>, vector<64x4xf32>, vector<64x4xf32>, vector<64x4xf32>, vector<64x4xf32> -> vector<64x44xf32>
    %230 = tpu.concatenate %228, %229 in 1 : vector<64x64xf32>, vector<64x44xf32> -> vector<64x108xf32>
    %231 = tpu.concatenate %209, %212, %215, %218, %221, %224, %227, %230 in 0 : vector<64x108xf32>, vector<64x108xf32>, vector<64x108xf32>, vector<64x108xf32>, vector<64x108xf32>, vector<64x108xf32>, vector<64x108xf32>, vector<64x108xf32> -> vector<512x108xf32>
    %c0_14 = arith.constant 0 : index
    %c0_15 = arith.constant 0 : index
    %232 = vector.load %arg5[%c0_14, %c0_15] : memref<108x128xf32, #tpu.memory_space<vmem>>, vector<108x128xf32>
    %cst = arith.constant dense<0.000000e+00> : vector<512x128xf32>
    %233 = tpu.matmul %231, %232, %cst {dimension_numbers = #tpu.dot_dimension_numbers<[1], [0], [0], [1], [0, 0, 1, 1], [], []>} : vector<512x108xf32>, vector<108x128xf32>, vector<512x128xf32> -> vector<512x128xf32>
    %234 = vector.shape_cast %233 : vector<512x128xf32> to vector<8x64x128xf32>
    %c0_16 = arith.constant 0 : index
    %c0_17 = arith.constant 0 : index
    %c0_18 = arith.constant 0 : index
    %c0_19 = arith.constant 0 : index
    %235 = vector.load %arg6[%c0_16, %c0_17, %c0_18, %c0_19] : memref<1x8x64x128xf32, #tpu.memory_space<vmem>>, vector<1x8x64x128xf32>
    %236 = vector.shape_cast %235 : vector<1x8x64x128xf32> to vector<8x64x128xf32>
    %237 = vector.shape_cast %234 : vector<8x64x128xf32> to vector<1x8x64x128xf32>
    tpu.vector_store %arg6[%c0_16, %c0_17, %c0_18, %c0_19], %237 {strides = array<i32>} : memref<1x8x64x128xf32, #tpu.memory_space<vmem>>, vector<1x8x64x128xf32>,
    %cst_20 = arith.constant dense<0.000000e+00> : vector<128xf32>
    %238 = vector.multi_reduction <add>, %233, %cst_20 [0] : vector<512x128xf32> to vector<128xf32>
    %239 = vector.shape_cast %238 : vector<128xf32> to vector<1x128xf32>
    %240 = arith.mulf %233, %233 : vector<512x128xf32>
    %cst_21 = arith.constant dense<0.000000e+00> : vector<128xf32>
    %241 = vector.multi_reduction <add>, %240, %cst_21 [0] : vector<512x128xf32> to vector<128xf32>
    %242 = vector.shape_cast %241 : vector<128xf32> to vector<1x128xf32>
    %cst_22 = arith.constant 0.000000e+00 : f32
    %243 = vector.broadcast %cst_22 : f32 to vector<6x128xf32>
    %244 = tpu.concatenate %239, %242, %243 in 0 : vector<1x128xf32>, vector<1x128xf32>, vector<6x128xf32> -> vector<8x128xf32>
    %c0_23 = arith.constant 0 : index
    %c0_24 = arith.constant 0 : index
    %c0_25 = arith.constant 0 : index
    %c0_26 = arith.constant 0 : index
    %245 = vector.load %arg7[%c0_23, %c0_24, %c0_25, %c0_26] : memref<1x1x8x128xf32, #tpu.memory_space<vmem>>, vector<1x1x8x128xf32>
    %246 = vector.shape_cast %245 : vector<1x1x8x128xf32> to vector<8x128xf32>
    %247 = vector.shape_cast %244 : vector<8x128xf32> to vector<1x1x8x128xf32>
    tpu.vector_store %arg7[%c0_23, %c0_24, %c0_25, %c0_26], %247 {strides = array<i32>} : memref<1x1x8x128xf32, #tpu.memory_space<vmem>>, vector<1x1x8x128xf32>,
    return
  }
  func.func @transform_0(%arg0: i32, %arg1: i32) -> (i32, i32, i32, i32, i32) {
    %c0_i32 = arith.constant 0 : i32
    %c0_i32_0 = arith.constant 0 : i32
    %c0_i32_1 = arith.constant 0 : i32
    %c0_i32_2 = arith.constant 0 : i32
    return %arg0, %arg1, %c0_i32, %c0_i32_0, %c0_i32_1 : i32, i32, i32, i32, i32
  }
  func.func @transform_1(%arg0: i32, %arg1: i32) -> (i32, i32, i32, i32, i32) {
    %c1_i32 = arith.constant 1 : i32
    %0 = arith.addi %arg1, %c1_i32 : i32
    %c8_i32 = arith.constant 8 : i32
    %1 = arith.muli %0, %c8_i32 : i32
    %c0_i32 = arith.constant 0 : i32
    %c0_i32_0 = arith.constant 0 : i32
    %c0_i32_1 = arith.constant 0 : i32
    %c0_i32_2 = arith.constant 0 : i32
    return %arg0, %1, %c0_i32, %c0_i32_0, %c0_i32_1 : i32, i32, i32, i32, i32
  }
  func.func @transform_2(%arg0: i32, %arg1: i32) -> (i32, i32, i32, i32, i32) {
    %c1_i32 = arith.constant 1 : i32
    %0 = arith.addi %arg1, %c1_i32 : i32
    %c8_i32 = arith.constant 8 : i32
    %1 = arith.muli %0, %c8_i32 : i32
    %c1_i32_0 = arith.constant 1 : i32
    %2 = arith.addi %1, %c1_i32_0 : i32
    %c0_i32 = arith.constant 0 : i32
    %c0_i32_1 = arith.constant 0 : i32
    %c0_i32_2 = arith.constant 0 : i32
    %c0_i32_3 = arith.constant 0 : i32
    return %arg0, %2, %c0_i32, %c0_i32_1, %c0_i32_2 : i32, i32, i32, i32, i32
  }
  func.func @transform_3(%arg0: i32, %arg1: i32) -> (i32, i32) {
    %c0_i32 = arith.constant 0 : i32
    %c0_i32_0 = arith.constant 0 : i32
    %c0_i32_1 = arith.constant 0 : i32
    return %c0_i32, %c0_i32_0 : i32, i32
  }
  func.func @transform_4(%arg0: i32, %arg1: i32) -> (i32, i32, i32, i32) {
    %c0_i32 = arith.constant 0 : i32
    %c0_i32_0 = arith.constant 0 : i32
    %c0_i32_1 = arith.constant 0 : i32
    return %arg0, %arg1, %c0_i32, %c0_i32_0 : i32, i32, i32, i32
  }
  func.func @transform_5(%arg0: i32, %arg1: i32) -> (i32, i32, i32, i32) {
    %c0_i32 = arith.constant 0 : i32
    %c0_i32_0 = arith.constant 0 : i32
    %c0_i32_1 = arith.constant 0 : i32
    return %arg0, %arg1, %c0_i32, %c0_i32_0 : i32, i32, i32, i32
  }
}

</mosaic_0001>

<llo_original>
// kernel: conv_bn_relu_3d.1
$region0: #{conv_bn_relu_3d.1}
  #allocation0 [shape = 'u32[]', space=smem, size = 0x4, offset = 0x4, fixed_abs, tag = 'smem constant byte address 0x4 - core index']
  #allocation1 [shape = 'u32[144,128]{1,0:T(1,128)}', space=vmem, size = 0x12000, scoped, tag = 'internal scratch']
  %s0 = inlined_call_operand.vmem [shape: f32[2,10,10,10,4], index: 0, kind: input, shape index: {}, may-alias: {0,1,2}]
  %s1 = inlined_call_operand.vmem [shape: f32[2,10,10,10,4], index: 1, kind: input, shape index: {}, may-alias: {0,1,2}]
  %s2 = inlined_call_operand.vmem [shape: f32[2,10,10,10,4], index: 2, kind: input, shape index: {}, may-alias: {0,1,2}]
  %s3 = inlined_call_operand.vmem [shape: f32[108,128], index: 3, kind: input, shape index: {}]
  %s4 = inlined_call_operand.vmem [shape: f32[2,8,64,128], index: 4, kind: output, shape index: {0}]
  %s5 = inlined_call_operand.vmem [shape: f32[2,1,8,128], index: 5, kind: output, shape index: {1}]
  %6 = xla_tuple %s4, %s5
  %s7 = sld [smem:[#allocation0]]
  $region57: #{conv_bn_relu_3d.1} parent=0
    _
  %s9 = ssub.s32 1, %s7
  %s10 = scalar_select 0, %s9, %s7
  loop: start=0, step=1, limit=4
  $region2: #{conv_bn_relu_3d.1} parent=0 // loop_pre_header
    _
  $region3: #{conv_bn_relu_3d.1} parent=0 // loop_header
    %s12 = sphi 0, %s16
    %p13 = scmp.ge.s32.totalorder %s12, 4
    %s19 = sphi 0, %s31
    %s20 = sphi 0, %s27
    %s21 = sphi 0, %s19
    %s22 = sphi 0, %s20
    %s23 = sphi 0, %s21
    %s24 = sphi 0, %s22
    %s36 = sphi 0, %s38
    %s39 = sphi 0, %s36
    %s40 = sphi 0, %s39
    %s56 = sphi 0, %s40
    %s68 = sphi 0, %s70
    %s71 = sphi 0, %s68
    %s72 = sphi 0, %s71
    %s88 = sphi 0, %s72
    %s102 = sphi 0, %s104
    %s105 = sphi 0, %s102
    %s106 = sphi 0, %s105
    %s122 = sphi 0, %s106
    %s126 = sphi 0, %s126
    %s128 = sphi 0, %s126
    %s129 = sphi 0, %s128
    %s143 = sphi 0, %s129
    %s151 = sphi 0, %s153
    %s154 = sphi 0, %s151
    %s155 = sphi 0, %s154
    %s171 = sphi 0, %s155
    %s179 = sphi 0, %s181
    %s182 = sphi 0, %s179
    %s183 = sphi 0, %s182
    %s199 = sphi 0, %s183
  $region4: #{conv_bn_relu_3d.1} parent=0 // loop_header_branch
    %15 = sbr.rel (%p13) target = $region8
  $region5: #{conv_bn_relu_3d.1} parent=0 // loop_body
    %s17 = ssub.s32 %s12, 1
    %s18 = ssub.s32 %s12, 2
    %s25 = sadd.s32 1, %s20
    %p26 = scmp.ge.s32.totalorder %s25, 1
    %s27 = scalar_select %p26, 0, %s25
    %s28 = sadd.s32 1, %s19
    %s29 = scalar_select %p26, %s28, %s19
    %p30 = scmp.ge.s32.totalorder %s29, 2
    %s31 = scalar_select %p30, 0, %s29
    %s32 = ssub.s32 %s19, %s31
    %s33 = ssub.s32 %s20, %s27
    %s34 = sor.u32 %s32, %s33
    %p35 = scmp.eq.s32.totalorder %s34, 0
    %s37 = sadd.s32 %s36, 1
    %s38 = scalar_select %p35, %s36, %s37
    %p41 = pneg %p35
    %p42 = scmp.eq.s32.totalorder %s12, 1
    %p43 = por %p41, %p42
    %p44 = scmp.ne.s32.totalorder %s36, %s39
    %p45 = scmp.eq.s32.totalorder %s12, 0
    %p46 = por %p44, %p45
    %p47 = scmp.ne.s32.totalorder %s36, %s39
    %p48 = scmp.eq.s32.totalorder %s17, 1
    %p49 = por %p47, %p48
    %p50 = scmp.ne.s32.totalorder %s39, %s40
    %p51 = scmp.eq.s32.totalorder %s17, 0
    %p52 = por %p50, %p51
    %p53 = scmp.ne.s32.totalorder %s39, %s40
    %p54 = scmp.eq.s32.totalorder %s18, 1
    %p55 = por %p53, %p54
    %p57 = scmp.ne.s32.totalorder %s40, %s56
    %p58 = scmp.eq.s32.totalorder %s18, 0
    %p59 = por %p57, %p58
    %s60 = sadd.s32 %s20, 1
    %s61 = smul.u32 %s60, 8
    %s62 = sadd.s32 %s27, 1
    %s63 = smul.u32 %s62, 8
    %s64 = ssub.s32 %s19, %s31
    %s65 = ssub.s32 %s61, %s63
    %s66 = sor.u32 %s64, %s65
    %p67 = scmp.eq.s32.totalorder %s66, 0
    %s69 = sadd.s32 %s68, 1
    %s70 = scalar_select %p67, %s68, %s69
    %p73 = pneg %p67
    %p74 = scmp.eq.s32.totalorder %s12, 1
    %p75 = por %p73, %p74
    %p76 = scmp.ne.s32.totalorder %s68, %s71
    %p77 = scmp.eq.s32.totalorder %s12, 0
    %p78 = por %p76, %p77
    %p79 = scmp.ne.s32.totalorder %s68, %s71
    %p80 = scmp.eq.s32.totalorder %s17, 1
    %p81 = por %p79, %p80
    %p82 = scmp.ne.s32.totalorder %s71, %s72
    %p83 = scmp.eq.s32.totalorder %s17, 0
    %p84 = por %p82, %p83
    %p85 = scmp.ne.s32.totalorder %s71, %s72
    %p86 = scmp.eq.s32.totalorder %s18, 1
    %p87 = por %p85, %p86
    %p89 = scmp.ne.s32.totalorder %s72, %s88
    %p90 = scmp.eq.s32.totalorder %s18, 0
    %p91 = por %p89, %p90
    %s92 = sadd.s32 %s20, 1
    %s93 = smul.u32 %s92, 8
    %s94 = sadd.s32 %s93, 1
    %s95 = sadd.s32 %s27, 1
    %s96 = smul.u32 %s95, 8
    %s97 = sadd.s32 %s96, 1
    %s98 = ssub.s32 %s19, %s31
    %s99 = ssub.s32 %s94, %s97
    %s100 = sor.u32 %s98, %s99
    %p101 = scmp.eq.s32.totalorder %s100, 0
    %s103 = sadd.s32 %s102, 1
    %s104 = scalar_select %p101, %s102, %s103
    %p107 = pneg %p101
    %p108 = scmp.eq.s32.totalorder %s12, 1
    %p109 = por %p107, %p108
    %p110 = scmp.ne.s32.totalorder %s102, %s105
    %p111 = scmp.eq.s32.totalorder %s12, 0
    %p112 = por %p110, %p111
    %p113 = scmp.ne.s32.totalorder %s102, %s105
    %p114 = scmp.eq.s32.totalorder %s17, 1
    %p115 = por %p113, %p114
    %p116 = scmp.ne.s32.totalorder %s105, %s106
    %p117 = scmp.eq.s32.totalorder %s17, 0
    %p118 = por %p116, %p117
    %p119 = scmp.ne.s32.totalorder %s105, %s106
    %p120 = scmp.eq.s32.totalorder %s18, 1
    %p121 = por %p119, %p120
    %p123 = scmp.ne.s32.totalorder %s106, %s122
    %p124 = scmp.eq.s32.totalorder %s18, 0
    %p125 = por %p123, %p124
    %s127 = sadd.s32 %s126, 1
    %p130 = scmp.eq.s32.totalorder %s12, 1
    %p131 = scmp.ne.s32.totalorder %s126, %s128
    %p132 = scmp.eq.s32.totalorder %s12, 0
    %p133 = por %p131, %p132
    %p134 = scmp.ne.s32.totalorder %s126, %s128
    %p135 = scmp.eq.s32.totalorder %s17, 1
    %p136 = por %p134, %p135
    %p137 = scmp.ne.s32.totalorder %s128, %s129
    %p138 = scmp.eq.s32.totalorder %s17, 0
    %p139 = por %p137, %p138
    %p140 = scmp.ne.s32.totalorder %s128, %s129
    %p141 = scmp.eq.s32.totalorder %s18, 1
    %p142 = por %p140, %p141
    %p144 = scmp.ne.s32.totalorder %s129, %s143
    %p145 = scmp.eq.s32.totalorder %s18, 0
    %p146 = por %p144, %p145
    %s147 = ssub.s32 %s19, %s31
    %s148 = ssub.s32 %s20, %s27
    %s149 = sor.u32 %s147, %s148
    %p150 = scmp.eq.s32.totalorder %s149, 0
    %s152 = sadd.s32 %s151, 1
    %s153 = scalar_select %p150, %s151, %s152
    %p156 = pneg %p150
    %p157 = scmp.eq.s32.totalorder %s12, 1
    %p158 = por %p156, %p157
    %p159 = scmp.ne.s32.totalorder %s151, %s154
    %p160 = scmp.eq.s32.totalorder %s12, 0
    %p161 = por %p159, %p160
    %p162 = scmp.ne.s32.totalorder %s151, %s154
    %p163 = scmp.eq.s32.totalorder %s17, 1
    %p164 = por %p162, %p163
    %p165 = scmp.ne.s32.totalorder %s154, %s155
    %p166 = scmp.eq.s32.totalorder %s17, 0
    %p167 = por %p165, %p166
    %p168 = scmp.ne.s32.totalorder %s154, %s155
    %p169 = scmp.eq.s32.totalorder %s18, 1
    %p170 = por %p168, %p169
    %p172 = scmp.ne.s32.totalorder %s155, %s171
    %p173 = scmp.eq.s32.totalorder %s18, 0
    %p174 = por %p172, %p173
    %s175 = ssub.s32 %s19, %s31
    %s176 = ssub.s32 %s20, %s27
    %s177 = sor.u32 %s175, %s176
    %p178 = scmp.eq.s32.totalorder %s177, 0
    %s180 = sadd.s32 %s179, 1
    %s181 = scalar_select %p178, %s179, %s180
    %p184 = pneg %p178
    %p185 = scmp.eq.s32.totalorder %s12, 1
    %p186 = por %p184, %p185
    %p187 = scmp.ne.s32.totalorder %s179, %s182
    %p188 = scmp.eq.s32.totalorder %s12, 0
    %p189 = por %p187, %p188
    %p190 = scmp.ne.s32.totalorder %s179, %s182
    %p191 = scmp.eq.s32.totalorder %s17, 1
    %p192 = por %p190, %p191
    %p193 = scmp.ne.s32.totalorder %s182, %s183
    %p194 = scmp.eq.s32.totalorder %s17, 0
    %p195 = por %p193, %p194
    %p196 = scmp.ne.s32.totalorder %s182, %s183
    %p197 = scmp.eq.s32.totalorder %s18, 1
    %p198 = por %p196, %p197
    %p200 = scmp.ne.s32.totalorder %s183, %s199
    %p201 = scmp.eq.s32.totalorder %s18, 0
    %p202 = por %p200, %p201
    %p203 = scmp.le.s32.totalorder 1, %s12
    %p204 = scmp.lt.s32.totalorder %s12, 3
    %p205 = pnand %p203, %p204
    %p206 = pneg %p205
    // Predicated region
    $region9: #{conv_bn_relu_3d.1} parent=5 // pred_check
      _
    $region10: #{conv_bn_relu_3d.1} parent=5 // pred_check_branch
      %208 = sbr.rel (%p205) target = $region12
    $region11: #{conv_bn_relu_3d.1} parent=5 // pred_region
      %s209 = ssub.s32 %s12, 1
      // Predicated region
      $region13: #{conv_bn_relu_3d.1} parent=11 // pred_check
        %p210 = pneg %p139
      $region14: #{conv_bn_relu_3d.1} parent=11 // pred_check_branch
        %212 = sbr.rel (%p210) target = $region16
      $region15: #{conv_bn_relu_3d.1} parent=11 // pred_region
        _
      $region16: #{conv_bn_relu_3d.1} parent=11 // pred_fallthru
        _
    $region12: #{conv_bn_relu_3d.1} parent=5 // pred_fallthru
      _
    %p213 = scmp.lt.s32.totalorder %s12, 2
    // Predicated region
    $region17: #{conv_bn_relu_3d.1} parent=5 // pred_check
      %p214 = pneg %p213
    $region18: #{conv_bn_relu_3d.1} parent=5 // pred_check_branch
      %216 = sbr.rel (%p214) target = $region20
    $region19: #{conv_bn_relu_3d.1} parent=5 // pred_region
      // Predicated region
      $region21: #{conv_bn_relu_3d.1} parent=19 // pred_check
        %p217 = pneg %p46
      $region22: #{conv_bn_relu_3d.1} parent=19 // pred_check_branch
        %219 = sbr.rel (%p217) target = $region24
      $region23: #{conv_bn_relu_3d.1} parent=19 // pred_region
        %s220 = smul.u32 8, %s20
        %s221 = ssub.s32 10, %s220
        %p222 = scmp.lt.s32.totalorder %s221, 8
        %s223 = scalar_select %p222, %s221, 8
        %s224 = smul.u32 128, %s223
        %s225 = smul.u32 %s224, 10
        %s226 = smul.u32 %s225, 2
        %p227 = scmp.lt.s32.totalorder %s19, 1
        %s228 = scalar_select %p227, %s19, 1
        %p229 = scmp.lt.s32.totalorder %s220, 9
        %s230 = scalar_select %p229, %s220, 9
        %s231 = smul.addr %s230, 20
        %s232 = smul.addr %s228, 200
        %s233 = sadd.s32 %s231, %s232
        %s234 = smul.addr %s233, 8
        %s235 = scalar_lea.vmem %s0, %s234
        %s236 = smul.u32 8, %s20
        %s237 = ssub.s32 10, %s236
        %p238 = scmp.lt.s32.totalorder %s237, 8
        %s239 = scalar_select %p238, %s237, 8
        %s240 = smul.u32 128, %s239
        %s241 = smul.u32 %s240, 10
        %s242 = smul.u32 %s241, 2
      $region24: #{conv_bn_relu_3d.1} parent=19 // pred_fallthru
        _
      // Predicated region
      $region25: #{conv_bn_relu_3d.1} parent=19 // pred_check
        %p243 = pneg %p78
      $region26: #{conv_bn_relu_3d.1} parent=19 // pred_check_branch
        %245 = sbr.rel (%p243) target = $region28
      $region27: #{conv_bn_relu_3d.1} parent=19 // pred_region
        %s246 = sadd.s32 %s20, 1
        %s247 = smul.u32 %s246, 8
        %p248 = scmp.lt.s32.totalorder %s19, 1
        %s249 = scalar_select %p248, %s19, 1
        %p250 = scmp.lt.s32.totalorder %s247, 9
        %s251 = scalar_select %p250, %s247, 9
        %s252 = smul.addr %s251, 20
        %s253 = smul.addr %s249, 200
        %s254 = sadd.s32 %s252, %s253
        %s255 = smul.addr %s254, 8
        %s256 = scalar_lea.vmem %s1, %s255
        %s257 = sadd.s32 %s20, 1
        %s258 = smul.u32 %s257, 8
      $region28: #{conv_bn_relu_3d.1} parent=19 // pred_fallthru
        _
      // Predicated region
      $region29: #{conv_bn_relu_3d.1} parent=19 // pred_check
        %p259 = pneg %p112
      $region30: #{conv_bn_relu_3d.1} parent=19 // pred_check_branch
        %261 = sbr.rel (%p259) target = $region32
      $region31: #{conv_bn_relu_3d.1} parent=19 // pred_region
        %s262 = sadd.s32 %s20, 1
        %s263 = smul.u32 %s262, 8
        %s264 = sadd.s32 %s263, 1
        %p265 = scmp.lt.s32.totalorder %s19, 1
        %s266 = scalar_select %p265, %s19, 1
        %p267 = scmp.lt.s32.totalorder %s264, 9
        %s268 = scalar_select %p267, %s264, 9
        %s269 = smul.addr %s268, 20
        %s270 = smul.addr %s266, 200
        %s271 = sadd.s32 %s269, %s270
        %s272 = smul.addr %s271, 8
        %s273 = scalar_lea.vmem %s2, %s272
        %s274 = sadd.s32 %s20, 1
        %s275 = smul.u32 %s274, 8
        %s276 = sadd.s32 %s275, 1
      $region32: #{conv_bn_relu_3d.1} parent=19 // pred_fallthru
        _
    $region20: #{conv_bn_relu_3d.1} parent=5 // pred_fallthru
      _
    %p277 = scmp.le.s32.totalorder 1, %s12
    %p278 = scmp.lt.s32.totalorder %s12, 3
    %p279 = pnand %p277, %p278
    %p280 = pneg %p279
    // Predicated region
    $region33: #{conv_bn_relu_3d.1} parent=5 // pred_check
      _
    $region34: #{conv_bn_relu_3d.1} parent=5 // pred_check_branch
      %282 = sbr.rel (%p279) target = $region36
    $region35: #{conv_bn_relu_3d.1} parent=5 // pred_region
      %s283 = ssub.s32 %s12, 1
      %s284 = smul.u32 8, %s22
      %s285 = ssub.s32 10, %s284
      %p286 = scmp.lt.s32.totalorder %s285, 8
      %s287 = scalar_select %p286, %s285, 8
      %s288 = smul.u32 128, %s287
      %s289 = smul.u32 %s288, 10
      %s290 = smul.u32 %s289, 2
      %p291 = scmp.lt.s32.totalorder %s21, 1
      %s292 = scalar_select %p291, %s21, 1
      %p293 = scmp.lt.s32.totalorder %s284, 9
      %s294 = scalar_select %p293, %s284, 9
      %s295 = smul.addr %s294, 20
      %s296 = smul.addr %s292, 200
      %s297 = sadd.s32 %s295, %s296
      %s298 = smul.addr %s297, 8
      %s299 = scalar_lea.vmem %s0, %s298
      %p300 = pneg %p52
      %p301 = pneg %p49
      %s302 = sadd.s32 %s22, 1
      %s303 = smul.u32 %s302, 8
      %p304 = scmp.lt.s32.totalorder %s21, 1
      %s305 = scalar_select %p304, %s21, 1
      %p306 = scmp.lt.s32.totalorder %s303, 9
      %s307 = scalar_select %p306, %s303, 9
      %s308 = smul.addr %s307, 20
      %s309 = smul.addr %s305, 200
      %s310 = sadd.s32 %s308, %s309
      %s311 = smul.addr %s310, 8
      %s312 = scalar_lea.vmem %s1, %s311
      %p313 = pneg %p84
      %p314 = pneg %p81
      %s315 = sadd.s32 %s22, 1
      %s316 = smul.u32 %s315, 8
      %s317 = sadd.s32 %s316, 1
      %p318 = scmp.lt.s32.totalorder %s21, 1
      %s319 = scalar_select %p318, %s21, 1
      %p320 = scmp.lt.s32.totalorder %s317, 9
      %s321 = scalar_select %p320, %s317, 9
      %s322 = smul.addr %s321, 20
      %s323 = smul.addr %s319, 200
      %s324 = sadd.s32 %s322, %s323
      %s325 = smul.addr %s324, 8
      %s326 = scalar_lea.vmem %s2, %s325
      %p327 = pneg %p118
      %p328 = pneg %p115
      %p329 = pneg %p139
      %p330 = pneg %p136
      %p331 = pneg %p167
      %p332 = pneg %p164
      %s333 = smul.u32 8, %s22
      %p334 = scmp.lt.s32.totalorder %s21, 1
      %s335 = scalar_select %p334, %s21, 1
      %p336 = scmp.lt.s32.totalorder %s333, 7
      %s337 = scalar_select %p336, %s333, 7
      %s338 = smul.addr %s337, 8
      %s339 = smul.addr %s335, 64
      %s340 = sadd.s32 %s338, %s339
      %s341 = smul.addr %s340, 8
      %s342 = scalar_lea.vmem %s4, %s341
      %p343 = pneg %p195
      %p344 = pneg %p192
      %p345 = scmp.lt.s32.totalorder %s21, 1
      %s346 = scalar_select %p345, %s21, 1
      %p347 = scmp.lt.s32.totalorder %s22, 0
      %s348 = scalar_select %p347, %s22, 0
      %s349 = sadd.s32 %s348, %s346
      %s350 = smul.addr %s349, 8
      %s351 = scalar_lea.vmem %s5, %s350
      %s352 = smul.u32 8, %s22
      %s353 = ssub.s32 10, %s352
      %p354 = scmp.lt.s32.totalorder %s353, 8
      %s355 = scalar_select %p354, %s353, 8
      %s356 = smul.u32 128, %s355
      %s357 = smul.u32 %s356, 10
      %s358 = smul.u32 %s357, 2
      %p359 = scmp.lt.s32.totalorder %s21, 1
      %s360 = scalar_select %p359, %s21, 1
      %p361 = scmp.lt.s32.totalorder %s352, 9
      %s362 = scalar_select %p361, %s352, 9
      %s363 = smul.addr %s362, 20
      %s364 = smul.addr %s360, 200
      %s365 = sadd.s32 %s363, %s364
      %s366 = smul.addr %s365, 8
      %s367 = scalar_lea.vmem %s0, %s366
      %s368 = smul.u32 8, %s22
      %s369 = ssub.s32 10, %s368
      %p370 = scmp.lt.s32.totalorder %s369, 8
      %s371 = scalar_select %p370, %s369, 8
      %s372 = smul.u32 128, %s371
      %s373 = smul.u32 %s372, 10
      %s374 = smul.u32 %s373, 2
      %s375 = sadd.s32 %s22, 1
      %s376 = smul.u32 %s375, 8
      %p377 = scmp.lt.s32.totalorder %s21, 1
      %s378 = scalar_select %p377, %s21, 1
      %p379 = scmp.lt.s32.totalorder %s376, 9
      %s380 = scalar_select %p379, %s376, 9
      %s381 = smul.addr %s380, 20
      %s382 = smul.addr %s378, 200
      %s383 = sadd.s32 %s381, %s382
      %s384 = smul.addr %s383, 8
      %s385 = scalar_lea.vmem %s1, %s384
      %s386 = sadd.s32 %s22, 1
      %s387 = smul.u32 %s386, 8
      %s388 = sadd.s32 %s22, 1
      %s389 = smul.u32 %s388, 8
      %s390 = sadd.s32 %s389, 1
      %p391 = scmp.lt.s32.totalorder %s21, 1
      %s392 = scalar_select %p391, %s21, 1
      %p393 = scmp.lt.s32.totalorder %s390, 9
      %s394 = scalar_select %p393, %s390, 9
      %s395 = smul.addr %s394, 20
      %s396 = smul.addr %s392, 200
      %s397 = sadd.s32 %s395, %s396
      %s398 = smul.addr %s397, 8
      %s399 = scalar_lea.vmem %s2, %s398
      %s400 = sadd.s32 %s22, 1
      %s401 = smul.u32 %s400, 8
      %s402 = sadd.s32 %s401, 1
      %s403 = smul.u32 8, %s22
      %p404 = scmp.lt.s32.totalorder %s21, 1
      %s405 = scalar_select %p404, %s21, 1
      %p406 = scmp.lt.s32.totalorder %s403, 7
      %s407 = scalar_select %p406, %s403, 7
      %s408 = smul.addr %s407, 8
      %s409 = smul.addr %s405, 64
      %s410 = sadd.s32 %s408, %s409
      %s411 = smul.addr %s410, 8
      %s412 = scalar_lea.vmem %s4, %s411
      %s413 = smul.u32 8, %s22
      %p414 = scmp.lt.s32.totalorder %s21, 1
      %s415 = scalar_select %p414, %s21, 1
      %p416 = scmp.lt.s32.totalorder %s22, 0
      %s417 = scalar_select %p416, %s22, 0
      %s418 = sadd.s32 %s417, %s415
      %s419 = smul.addr %s418, 8
      %s420 = scalar_lea.vmem %s5, %s419
      %v421 = vld [vmem:[%s367] sm:$0xff]
      %v422 = vld [vmem:[%s367 + $0x8] sm:$0x3]
      %v423 = vld [vmem:[%s367 + $0x10] sm:$0xff]
      %v424 = vld [vmem:[%s367 + $0x18] sm:$0x3]
      %v425 = vld [vmem:[%s367 + $0x20] sm:$0xff]
      %v426 = vld [vmem:[%s367 + $0x28] sm:$0x3]
      %v427 = vld [vmem:[%s367 + $0x30] sm:$0xff]
      %v428 = vld [vmem:[%s367 + $0x38] sm:$0x3]
      %v429 = vld [vmem:[%s367 + $0x40] sm:$0xff]
      %v430 = vld [vmem:[%s367 + $0x48] sm:$0x3]
      %v431 = vld [vmem:[%s367 + $0x50] sm:$0xff]
      %v432 = vld [vmem:[%s367 + $0x58] sm:$0x3]
      %v433 = vld [vmem:[%s367 + $0x60] sm:$0xff]
      %v434 = vld [vmem:[%s367 + $0x68] sm:$0x3]
      %v435 = vld [vmem:[%s367 + $0x70] sm:$0xff]
      %v436 = vld [vmem:[%s367 + $0x78] sm:$0x3]
      %v437 = vld [vmem:[%s367 + $0x80] sm:$0xff]
      %v438 = vld [vmem:[%s367 + $0x88] sm:$0x3]
      %v439 = vld [vmem:[%s367 + $0x90] sm:$0xff]
      %v440 = vld [vmem:[%s367 + $0x98] sm:$0x3]
      %v441 = vld [vmem:[%s367 + $0xa0] sm:$0xff]
      %v442 = vld [vmem:[%s367 + $0xa8] sm:$0x3]
      %v443 = vld [vmem:[%s367 + $0xb0] sm:$0xff]
      %v444 = vld [vmem:[%s367 + $0xb8] sm:$0x3]
      %v445 = vld [vmem:[%s367 + $0xc0] sm:$0xff]
      %v446 = vld [vmem:[%s367 + $0xc8] sm:$0x3]
      %v447 = vld [vmem:[%s367 + $0xd0] sm:$0xff]
      %v448 = vld [vmem:[%s367 + $0xd8] sm:$0x3]
      %v449 = vld [vmem:[%s367 + $0xe0] sm:$0xff]
      %v450 = vld [vmem:[%s367 + $0xe8] sm:$0x3]
      %v451 = vld [vmem:[%s367 + $0xf0] sm:$0xff]
      %v452 = vld [vmem:[%s367 + $0xf8] sm:$0x3]
      %v453 = vld [vmem:[%s367 + $0x100] sm:$0xff]
      %v454 = vld [vmem:[%s367 + $0x108] sm:$0x3]
      %v455 = vld [vmem:[%s367 + $0x110] sm:$0xff]
      %v456 = vld [vmem:[%s367 + $0x118] sm:$0x3]
      %v457 = vld [vmem:[%s367 + $0x120] sm:$0xff]
      %v458 = vld [vmem:[%s367 + $0x128] sm:$0x3]
      %v459 = vld [vmem:[%s367 + $0x130] sm:$0xff]
      %v460 = vld [vmem:[%s367 + $0x138] sm:$0x3]
      %v461 = vld [vmem:[%s367 + $0x140] sm:$0xff]
      %v462 = vld [vmem:[%s367 + $0x148] sm:$0x3]
      %v463 = vld [vmem:[%s367 + $0x150] sm:$0xff]
      %v464 = vld [vmem:[%s367 + $0x158] sm:$0x3]
      %v465 = vld [vmem:[%s367 + $0x160] sm:$0xff]
      %v466 = vld [vmem:[%s367 + $0x168] sm:$0x3]
      %v467 = vld [vmem:[%s367 + $0x170] sm:$0xff]
      %v468 = vld [vmem:[%s367 + $0x178] sm:$0x3]
      %v469 = vld [vmem:[%s367 + $0x180] sm:$0xff]
      %v470 = vld [vmem:[%s367 + $0x188] sm:$0x3]
      %v471 = vld [vmem:[%s367 + $0x190] sm:$0xff]
      %v472 = vld [vmem:[%s367 + $0x198] sm:$0x3]
      %v473 = vld [vmem:[%s367 + $0x1a0] sm:$0xff]
      %v474 = vld [vmem:[%s367 + $0x1a8] sm:$0x3]
      %v475 = vld [vmem:[%s367 + $0x1b0] sm:$0xff]
      %v476 = vld [vmem:[%s367 + $0x1b8] sm:$0x3]
      %v477 = vld [vmem:[%s367 + $0x1c0] sm:$0xff]
      %v478 = vld [vmem:[%s367 + $0x1c8] sm:$0x3]
      %v479 = vld [vmem:[%s367 + $0x1d0] sm:$0xff]
      %v480 = vld [vmem:[%s367 + $0x1d8] sm:$0x3]
      %v481 = vld [vmem:[%s367 + $0x1e0] sm:$0xff]
      %v482 = vld [vmem:[%s367 + $0x1e8] sm:$0x3]
      %v483 = vld [vmem:[%s367 + $0x1f0] sm:$0xff]
      %v484 = vld [vmem:[%s367 + $0x1f8] sm:$0x3]
      %v485 = vld [vmem:[%s367 + $0x200] sm:$0xff]
      %v486 = vld [vmem:[%s367 + $0x208] sm:$0x3]
      %v487 = vld [vmem:[%s367 + $0x210] sm:$0xff]
      %v488 = vld [vmem:[%s367 + $0x218] sm:$0x3]
      %v489 = vld [vmem:[%s367 + $0x220] sm:$0xff]
      %v490 = vld [vmem:[%s367 + $0x228] sm:$0x3]
      %v491 = vld [vmem:[%s367 + $0x230] sm:$0xff]
      %v492 = vld [vmem:[%s367 + $0x238] sm:$0x3]
      %v493 = vld [vmem:[%s367 + $0x240] sm:$0xff]
      %v494 = vld [vmem:[%s367 + $0x248] sm:$0x3]
      %v495 = vld [vmem:[%s367 + $0x250] sm:$0xff]
      %v496 = vld [vmem:[%s367 + $0x258] sm:$0x3]
      %v497 = vld [vmem:[%s367 + $0x260] sm:$0xff]
      %v498 = vld [vmem:[%s367 + $0x268] sm:$0x3]
      %v499 = vld [vmem:[%s367 + $0x270] sm:$0xff]
      %v500 = vld [vmem:[%s367 + $0x278] sm:$0x3]
      %v501 = vld [vmem:[%s367 + $0x280] sm:$0xff]
      %v502 = vld [vmem:[%s367 + $0x288] sm:$0x3]
      %v503 = vld [vmem:[%s367 + $0x290] sm:$0xff]
      %v504 = vld [vmem:[%s367 + $0x298] sm:$0x3]
      %v505 = vld [vmem:[%s367 + $0x2a0] sm:$0xff]
      %v506 = vld [vmem:[%s367 + $0x2a8] sm:$0x3]
      %v507 = vld [vmem:[%s367 + $0x2b0] sm:$0xff]
      %v508 = vld [vmem:[%s367 + $0x2b8] sm:$0x3]
      %v509 = vld [vmem:[%s367 + $0x2c0] sm:$0xff]
      %v510 = vld [vmem:[%s367 + $0x2c8] sm:$0x3]
      %v511 = vld [vmem:[%s367 + $0x2d0] sm:$0xff]
      %v512 = vld [vmem:[%s367 + $0x2d8] sm:$0x3]
      %v513 = vld [vmem:[%s367 + $0x2e0] sm:$0xff]
      %v514 = vld [vmem:[%s367 + $0x2e8] sm:$0x3]
      %v515 = vld [vmem:[%s367 + $0x2f0] sm:$0xff]
      %v516 = vld [vmem:[%s367 + $0x2f8] sm:$0x3]
      %v517 = vld [vmem:[%s367 + $0x300] sm:$0xff]
      %v518 = vld [vmem:[%s367 + $0x308] sm:$0x3]
      %v519 = vld [vmem:[%s367 + $0x310] sm:$0xff]
      %v520 = vld [vmem:[%s367 + $0x318] sm:$0x3]
      %v521 = vld [vmem:[%s367 + $0x320] sm:$0xff]
      %v522 = vld [vmem:[%s367 + $0x328] sm:$0x3]
      %v523 = vld [vmem:[%s367 + $0x330] sm:$0xff]
      %v524 = vld [vmem:[%s367 + $0x338] sm:$0x3]
      %v525 = vld [vmem:[%s367 + $0x340] sm:$0xff]
      %v526 = vld [vmem:[%s367 + $0x348] sm:$0x3]
      %v527 = vld [vmem:[%s367 + $0x350] sm:$0xff]
      %v528 = vld [vmem:[%s367 + $0x358] sm:$0x3]
      %v529 = vld [vmem:[%s367 + $0x360] sm:$0xff]
      %v530 = vld [vmem:[%s367 + $0x368] sm:$0x3]
      %v531 = vld [vmem:[%s367 + $0x370] sm:$0xff]
      %v532 = vld [vmem:[%s367 + $0x378] sm:$0x3]
      %v533 = vld [vmem:[%s367 + $0x380] sm:$0xff]
      %v534 = vld [vmem:[%s367 + $0x388] sm:$0x3]
      %v535 = vld [vmem:[%s367 + $0x390] sm:$0xff]
      %v536 = vld [vmem:[%s367 + $0x398] sm:$0x3]
      %v537 = vld [vmem:[%s367 + $0x3a0] sm:$0xff]
      %v538 = vld [vmem:[%s367 + $0x3a8] sm:$0x3]
      %v539 = vld [vmem:[%s367 + $0x3b0] sm:$0xff]
      %v540 = vld [vmem:[%s367 + $0x3b8] sm:$0x3]
      %v541 = vld [vmem:[%s367 + $0x3c0] sm:$0xff]
      %v542 = vld [vmem:[%s367 + $0x3c8] sm:$0x3]
      %v543 = vld [vmem:[%s367 + $0x3d0] sm:$0xff]
      %v544 = vld [vmem:[%s367 + $0x3d8] sm:$0x3]
      %v545 = vld [vmem:[%s367 + $0x3e0] sm:$0xff]
      %v546 = vld [vmem:[%s367 + $0x3e8] sm:$0x3]
      %v547 = vld [vmem:[%s367 + $0x3f0] sm:$0xff]
      %v548 = vld [vmem:[%s367 + $0x3f8] sm:$0x3]
      %v549 = vld [vmem:[%s367 + $0x400] sm:$0xff]
      %v550 = vld [vmem:[%s367 + $0x408] sm:$0x3]
      %v551 = vld [vmem:[%s367 + $0x410] sm:$0xff]
      %v552 = vld [vmem:[%s367 + $0x418] sm:$0x3]
      %v553 = vld [vmem:[%s367 + $0x420] sm:$0xff]
      %v554 = vld [vmem:[%s367 + $0x428] sm:$0x3]
      %v555 = vld [vmem:[%s367 + $0x430] sm:$0xff]
      %v556 = vld [vmem:[%s367 + $0x438] sm:$0x3]
      %v557 = vld [vmem:[%s367 + $0x440] sm:$0xff]
      %v558 = vld [vmem:[%s367 + $0x448] sm:$0x3]
      %v559 = vld [vmem:[%s367 + $0x450] sm:$0xff]
      %v560 = vld [vmem:[%s367 + $0x458] sm:$0x3]
      %v561 = vld [vmem:[%s367 + $0x460] sm:$0xff]
      %v562 = vld [vmem:[%s367 + $0x468] sm:$0x3]
      %v563 = vld [vmem:[%s367 + $0x470] sm:$0xff]
      %v564 = vld [vmem:[%s367 + $0x478] sm:$0x3]
      %v565 = vld [vmem:[%s367 + $0x480] sm:$0xff]
      %v566 = vld [vmem:[%s367 + $0x488] sm:$0x3]
      %v567 = vld [vmem:[%s367 + $0x490] sm:$0xff]
      %v568 = vld [vmem:[%s367 + $0x498] sm:$0x3]
      %v569 = vld [vmem:[%s367 + $0x4a0] sm:$0xff]
      %v570 = vld [vmem:[%s367 + $0x4a8] sm:$0x3]
      %v571 = vld [vmem:[%s367 + $0x4b0] sm:$0xff]
      %v572 = vld [vmem:[%s367 + $0x4b8] sm:$0x3]
      %v573 = vld [vmem:[%s367 + $0x4c0] sm:$0xff]
      %v574 = vld [vmem:[%s367 + $0x4c8] sm:$0x3]
      %v575 = vld [vmem:[%s367 + $0x4d0] sm:$0xff]
      %v576 = vld [vmem:[%s367 + $0x4d8] sm:$0x3]
      %v577 = vld [vmem:[%s367 + $0x4e0] sm:$0xff]
      %v578 = vld [vmem:[%s367 + $0x4e8] sm:$0x3]
      %v579 = vld [vmem:[%s367 + $0x4f0] sm:$0xff]
      %v580 = vld [vmem:[%s367 + $0x4f8] sm:$0x3]
      %v581 = vld [vmem:[%s385] sm:$0xff]
      %v582 = vld [vmem:[%s385 + $0x8] sm:$0x3]
      %v583 = vld [vmem:[%s385 + $0x10] sm:$0xff]
      %v584 = vld [vmem:[%s385 + $0x18] sm:$0x3]
      %v585 = vld [vmem:[%s385 + $0x20] sm:$0xff]
      %v586 = vld [vmem:[%s385 + $0x28] sm:$0x3]
      %v587 = vld [vmem:[%s385 + $0x30] sm:$0xff]
      %v588 = vld [vmem:[%s385 + $0x38] sm:$0x3]
      %v589 = vld [vmem:[%s385 + $0x40] sm:$0xff]
      %v590 = vld [vmem:[%s385 + $0x48] sm:$0x3]
      %v591 = vld [vmem:[%s385 + $0x50] sm:$0xff]
      %v592 = vld [vmem:[%s385 + $0x58] sm:$0x3]
      %v593 = vld [vmem:[%s385 + $0x60] sm:$0xff]
      %v594 = vld [vmem:[%s385 + $0x68] sm:$0x3]
      %v595 = vld [vmem:[%s385 + $0x70] sm:$0xff]
      %v596 = vld [vmem:[%s385 + $0x78] sm:$0x3]
      %v597 = vld [vmem:[%s385 + $0x80] sm:$0xff]
      %v598 = vld [vmem:[%s385 + $0x88] sm:$0x3]
      %v599 = vld [vmem:[%s385 + $0x90] sm:$0xff]
      %v600 = vld [vmem:[%s385 + $0x98] sm:$0x3]
      %v601 = vld [vmem:[%s399] sm:$0xff]
      %v602 = vld [vmem:[%s399 + $0x8] sm:$0x3]
      %v603 = vld [vmem:[%s399 + $0x10] sm:$0xff]
      %v604 = vld [vmem:[%s399 + $0x18] sm:$0x3]
      %v605 = vld [vmem:[%s399 + $0x20] sm:$0xff]
      %v606 = vld [vmem:[%s399 + $0x28] sm:$0x3]
      %v607 = vld [vmem:[%s399 + $0x30] sm:$0xff]
      %v608 = vld [vmem:[%s399 + $0x38] sm:$0x3]
      %v609 = vld [vmem:[%s399 + $0x40] sm:$0xff]
      %v610 = vld [vmem:[%s399 + $0x48] sm:$0x3]
      %v611 = vld [vmem:[%s399 + $0x50] sm:$0xff]
      %v612 = vld [vmem:[%s399 + $0x58] sm:$0x3]
      %v613 = vld [vmem:[%s399 + $0x60] sm:$0xff]
      %v614 = vld [vmem:[%s399 + $0x68] sm:$0x3]
      %v615 = vld [vmem:[%s399 + $0x70] sm:$0xff]
      %v616 = vld [vmem:[%s399 + $0x78] sm:$0x3]
      %v617 = vld [vmem:[%s399 + $0x80] sm:$0xff]
      %v618 = vld [vmem:[%s399 + $0x88] sm:$0x3]
      %v619 = vld [vmem:[%s399 + $0x90] sm:$0xff]
      %v620 = vld [vmem:[%s399 + $0x98] sm:$0x3]
      %vm637 = vcmask 1046528
      %v638 = vrot.slane %v421, 1
      %v639 = vrot.slane %v422, 1
      %v640 = vsel %vm637, %v638, %v639
      %v641 = vrot.slane %v423, 1
      %v642 = vrot.slane %v424, 1
      %v643 = vsel %vm637, %v641, %v642
      %v644 = vrot.slane %v425, 1
      %v645 = vrot.slane %v426, 1
      %v646 = vsel %vm637, %v644, %v645
      %v647 = vrot.slane %v427, 1
      %v648 = vrot.slane %v428, 1
      %v649 = vsel %vm637, %v647, %v648
      %v650 = vrot.slane %v429, 1
      %v651 = vrot.slane %v430, 1
      %v652 = vsel %vm637, %v650, %v651
      %v653 = vrot.slane %v431, 1
      %v654 = vrot.slane %v432, 1
      %v655 = vsel %vm637, %v653, %v654
      %v656 = vrot.slane %v433, 1
      %v657 = vrot.slane %v434, 1
      %v658 = vsel %vm637, %v656, %v657
      %v659 = vrot.slane %v435, 1
      %v660 = vrot.slane %v436, 1
      %v661 = vsel %vm637, %v659, %v660
      %vm662 = vcmask 1045504
      %v663 = vrot.slane %v421, 2
      %v664 = vrot.slane %v422, 2
      %v665 = vsel %vm662, %v663, %v664
      %v666 = vrot.slane %v423, 2
      %v667 = vrot.slane %v424, 2
      %v668 = vsel %vm662, %v666, %v667
      %v669 = vrot.slane %v425, 2
      %v670 = vrot.slane %v426, 2
      %v671 = vsel %vm662, %v669, %v670
      %v672 = vrot.slane %v427, 2
      %v673 = vrot.slane %v428, 2
      %v674 = vsel %vm662, %v672, %v673
      %v675 = vrot.slane %v429, 2
      %v676 = vrot.slane %v430, 2
      %v677 = vsel %vm662, %v675, %v676
      %v678 = vrot.slane %v431, 2
      %v679 = vrot.slane %v432, 2
      %v680 = vsel %vm662, %v678, %v679
      %v681 = vrot.slane %v433, 2
      %v682 = vrot.slane %v434, 2
      %v683 = vsel %vm662, %v681, %v682
      %v684 = vrot.slane %v435, 2
      %v685 = vrot.slane %v436, 2
      %v686 = vsel %vm662, %v684, %v685
      %v689 = vrot.slane %v437, 1
      %v690 = vrot.slane %v438, 1
      %v691 = vsel %vm637, %v689, %v690
      %v692 = vrot.slane %v437, 2
      %v693 = vrot.slane %v438, 2
      %v694 = vsel %vm662, %v692, %v693
      %v697 = vrot.slane %v439, 1
      %v698 = vrot.slane %v440, 1
      %v699 = vsel %vm637, %v697, %v698
      %v700 = vrot.slane %v439, 2
      %v701 = vrot.slane %v440, 2
      %v702 = vsel %vm662, %v700, %v701
      %v719 = vrot.slane %v441, 1
      %v720 = vrot.slane %v442, 1
      %v721 = vsel %vm637, %v719, %v720
      %v722 = vrot.slane %v443, 1
      %v723 = vrot.slane %v444, 1
      %v724 = vsel %vm637, %v722, %v723
      %v725 = vrot.slane %v445, 1
      %v726 = vrot.slane %v446, 1
      %v727 = vsel %vm637, %v725, %v726
      %v728 = vrot.slane %v447, 1
      %v729 = vrot.slane %v448, 1
      %v730 = vsel %vm637, %v728, %v729
      %v731 = vrot.slane %v449, 1
      %v732 = vrot.slane %v450, 1
      %v733 = vsel %vm637, %v731, %v732
      %v734 = vrot.slane %v451, 1
      %v735 = vrot.slane %v452, 1
      %v736 = vsel %vm637, %v734, %v735
      %v737 = vrot.slane %v453, 1
      %v738 = vrot.slane %v454, 1
      %v739 = vsel %vm637, %v737, %v738
      %v740 = vrot.slane %v455, 1
      %v741 = vrot.slane %v456, 1
      %v742 = vsel %vm637, %v740, %v741
      %v743 = vrot.slane %v441, 2
      %v744 = vrot.slane %v442, 2
      %v745 = vsel %vm662, %v743, %v744
      %v746 = vrot.slane %v443, 2
      %v747 = vrot.slane %v444, 2
      %v748 = vsel %vm662, %v746, %v747
      %v749 = vrot.slane %v445, 2
      %v750 = vrot.slane %v446, 2
      %v751 = vsel %vm662, %v749, %v750
      %v752 = vrot.slane %v447, 2
      %v753 = vrot.slane %v448, 2
      %v754 = vsel %vm662, %v752, %v753
      %v755 = vrot.slane %v449, 2
      %v756 = vrot.slane %v450, 2
      %v757 = vsel %vm662, %v755, %v756
      %v758 = vrot.slane %v451, 2
      %v759 = vrot.slane %v452, 2
      %v760 = vsel %vm662, %v758, %v759
      %v761 = vrot.slane %v453, 2
      %v762 = vrot.slane %v454, 2
      %v763 = vsel %vm662, %v761, %v762
      %v764 = vrot.slane %v455, 2
      %v765 = vrot.slane %v456, 2
      %v766 = vsel %vm662, %v764, %v765
      %v769 = vrot.slane %v457, 1
      %v770 = vrot.slane %v458, 1
      %v771 = vsel %vm637, %v769, %v770
      %v772 = vrot.slane %v457, 2
      %v773 = vrot.slane %v458, 2
      %v774 = vsel %vm662, %v772, %v773
      %v777 = vrot.slane %v459, 1
      %v778 = vrot.slane %v460, 1
      %v779 = vsel %vm637, %v777, %v778
      %v788 = vrot.slane %v459, 2
      %v789 = vrot.slane %v460, 2
      %v790 = vsel %vm662, %v788, %v789
      %v807 = vrot.slane %v461, 1
      %v808 = vrot.slane %v462, 1
      %v809 = vsel %vm637, %v807, %v808
      %v810 = vrot.slane %v463, 1
      %v811 = vrot.slane %v464, 1
      %v812 = vsel %vm637, %v810, %v811
      %v813 = vrot.slane %v465, 1
      %v814 = vrot.slane %v466, 1
      %v815 = vsel %vm637, %v813, %v814
      %v816 = vrot.slane %v467, 1
      %v817 = vrot.slane %v468, 1
      %v818 = vsel %vm637, %v816, %v817
      %v819 = vrot.slane %v469, 1
      %v820 = vrot.slane %v470, 1
      %v821 = vsel %vm637, %v819, %v820
      %v822 = vrot.slane %v471, 1
      %v823 = vrot.slane %v472, 1
      %v824 = vsel %vm637, %v822, %v823
      %v825 = vrot.slane %v473, 1
      %v826 = vrot.slane %v474, 1
      %v827 = vsel %vm637, %v825, %v826
      %v828 = vrot.slane %v475, 1
      %v829 = vrot.slane %v476, 1
      %v830 = vsel %vm637, %v828, %v829
      %v831 = vrot.slane %v461, 2
      %v832 = vrot.slane %v462, 2
      %v833 = vsel %vm662, %v831, %v832
      %v834 = vrot.slane %v463, 2
      %v835 = vrot.slane %v464, 2
      %v836 = vsel %vm662, %v834, %v835
      %v837 = vrot.slane %v465, 2
      %v838 = vrot.slane %v466, 2
      %v839 = vsel %vm662, %v837, %v838
      %v840 = vrot.slane %v467, 2
      %v841 = vrot.slane %v468, 2
      %v842 = vsel %vm662, %v840, %v841
      %v843 = vrot.slane %v469, 2
      %v844 = vrot.slane %v470, 2
      %v845 = vsel %vm662, %v843, %v844
      %v846 = vrot.slane %v471, 2
      %v847 = vrot.slane %v472, 2
      %v848 = vsel %vm662, %v846, %v847
      %v849 = vrot.slane %v473, 2
      %v850 = vrot.slane %v474, 2
      %v851 = vsel %vm662, %v849, %v850
      %v852 = vrot.slane %v475, 2
      %v853 = vrot.slane %v476, 2
      %v854 = vsel %vm662, %v852, %v853
      %v857 = vrot.slane %v477, 1
      %v858 = vrot.slane %v478, 1
      %v859 = vsel %vm637, %v857, %v858
      %v860 = vrot.slane %v477, 2
      %v861 = vrot.slane %v478, 2
      %v862 = vsel %vm662, %v860, %v861
      %v865 = vrot.slane %v479, 1
      %v866 = vrot.slane %v480, 1
      %v867 = vsel %vm637, %v865, %v866
      %v876 = vrot.slane %v479, 2
      %v877 = vrot.slane %v480, 2
      %v878 = vsel %vm662, %v876, %v877
      %v895 = vrot.slane %v481, 1
      %v896 = vrot.slane %v482, 1
      %v897 = vsel %vm637, %v895, %v896
      %v898 = vrot.slane %v483, 1
      %v899 = vrot.slane %v484, 1
      %v900 = vsel %vm637, %v898, %v899
      %v901 = vrot.slane %v485, 1
      %v902 = vrot.slane %v486, 1
      %v903 = vsel %vm637, %v901, %v902
      %v904 = vrot.slane %v487, 1
      %v905 = vrot.slane %v488, 1
      %v906 = vsel %vm637, %v904, %v905
      %v907 = vrot.slane %v489, 1
      %v908 = vrot.slane %v490, 1
      %v909 = vsel %vm637, %v907, %v908
      %v910 = vrot.slane %v491, 1
      %v911 = vrot.slane %v492, 1
      %v912 = vsel %vm637, %v910, %v911
      %v913 = vrot.slane %v493, 1
      %v914 = vrot.slane %v494, 1
      %v915 = vsel %vm637, %v913, %v914
      %v916 = vrot.slane %v495, 1
      %v917 = vrot.slane %v496, 1
      %v918 = vsel %vm637, %v916, %v917
      %v919 = vrot.slane %v481, 2
      %v920 = vrot.slane %v482, 2
      %v921 = vsel %vm662, %v919, %v920
      %v922 = vrot.slane %v483, 2
      %v923 = vrot.slane %v484, 2
      %v924 = vsel %vm662, %v922, %v923
      %v925 = vrot.slane %v485, 2
      %v926 = vrot.slane %v486, 2
      %v927 = vsel %vm662, %v925, %v926
      %v928 = vrot.slane %v487, 2
      %v929 = vrot.slane %v488, 2
      %v930 = vsel %vm662, %v928, %v929
      %v931 = vrot.slane %v489, 2
      %v932 = vrot.slane %v490, 2
      %v933 = vsel %vm662, %v931, %v932
      %v934 = vrot.slane %v491, 2
      %v935 = vrot.slane %v492, 2
      %v936 = vsel %vm662, %v934, %v935
      %v937 = vrot.slane %v493, 2
      %v938 = vrot.slane %v494, 2
      %v939 = vsel %vm662, %v937, %v938
      %v940 = vrot.slane %v495, 2
      %v941 = vrot.slane %v496, 2
      %v942 = vsel %vm662, %v940, %v941
      %v945 = vrot.slane %v497, 1
      %v946 = vrot.slane %v498, 1
      %v947 = vsel %vm637, %v945, %v946
      %v948 = vrot.slane %v497, 2
      %v949 = vrot.slane %v498, 2
      %v950 = vsel %vm662, %v948, %v949
      %v953 = vrot.slane %v499, 1
      %v954 = vrot.slane %v500, 1
      %v955 = vsel %vm637, %v953, %v954
      %v964 = vrot.slane %v499, 2
      %v965 = vrot.slane %v500, 2
      %v966 = vsel %vm662, %v964, %v965
      %v983 = vrot.slane %v501, 1
      %v984 = vrot.slane %v502, 1
      %v985 = vsel %vm637, %v983, %v984
      %v986 = vrot.slane %v503, 1
      %v987 = vrot.slane %v504, 1
      %v988 = vsel %vm637, %v986, %v987
      %v989 = vrot.slane %v505, 1
      %v990 = vrot.slane %v506, 1
      %v991 = vsel %vm637, %v989, %v990
      %v992 = vrot.slane %v507, 1
      %v993 = vrot.slane %v508, 1
      %v994 = vsel %vm637, %v992, %v993
      %v995 = vrot.slane %v509, 1
      %v996 = vrot.slane %v510, 1
      %v997 = vsel %vm637, %v995, %v996
      %v998 = vrot.slane %v511, 1
      %v999 = vrot.slane %v512, 1
      %v1000 = vsel %vm637, %v998, %v999
      %v1001 = vrot.slane %v513, 1
      %v1002 = vrot.slane %v514, 1
      %v1003 = vsel %vm637, %v1001, %v1002
      %v1004 = vrot.slane %v515, 1
      %v1005 = vrot.slane %v516, 1
      %v1006 = vsel %vm637, %v1004, %v1005
      %v1007 = vrot.slane %v501, 2
      %v1008 = vrot.slane %v502, 2
      %v1009 = vsel %vm662, %v1007, %v1008
      %v1010 = vrot.slane %v503, 2
      %v1011 = vrot.slane %v504, 2
      %v1012 = vsel %vm662, %v1010, %v1011
      %v1013 = vrot.slane %v505, 2
      %v1014 = vrot.slane %v506, 2
      %v1015 = vsel %vm662, %v1013, %v1014
      %v1016 = vrot.slane %v507, 2
      %v1017 = vrot.slane %v508, 2
      %v1018 = vsel %vm662, %v1016, %v1017
      %v1019 = vrot.slane %v509, 2
      %v1020 = vrot.slane %v510, 2
      %v1021 = vsel %vm662, %v1019, %v1020
      %v1022 = vrot.slane %v511, 2
      %v1023 = vrot.slane %v512, 2
      %v1024 = vsel %vm662, %v1022, %v1023
      %v1025 = vrot.slane %v513, 2
      %v1026 = vrot.slane %v514, 2
      %v1027 = vsel %vm662, %v1025, %v1026
      %v1028 = vrot.slane %v515, 2
      %v1029 = vrot.slane %v516, 2
      %v1030 = vsel %vm662, %v1028, %v1029
      %v1033 = vrot.slane %v517, 1
      %v1034 = vrot.slane %v518, 1
      %v1035 = vsel %vm637, %v1033, %v1034
      %v1036 = vrot.slane %v517, 2
      %v1037 = vrot.slane %v518, 2
      %v1038 = vsel %vm662, %v1036, %v1037
      %v1041 = vrot.slane %v519, 1
      %v1042 = vrot.slane %v520, 1
      %v1043 = vsel %vm637, %v1041, %v1042
      %v1052 = vrot.slane %v519, 2
      %v1053 = vrot.slane %v520, 2
      %v1054 = vsel %vm662, %v1052, %v1053
      %v1071 = vrot.slane %v521, 1
      %v1072 = vrot.slane %v522, 1
      %v1073 = vsel %vm637, %v1071, %v1072
      %v1074 = vrot.slane %v523, 1
      %v1075 = vrot.slane %v524, 1
      %v1076 = vsel %vm637, %v1074, %v1075
      %v1077 = vrot.slane %v525, 1
      %v1078 = vrot.slane %v526, 1
      %v1079 = vsel %vm637, %v1077, %v1078
      %v1080 = vrot.slane %v527, 1
      %v1081 = vrot.slane %v528, 1
      %v1082 = vsel %vm637, %v1080, %v1081
      %v1083 = vrot.slane %v529, 1
      %v1084 = vrot.slane %v530, 1
      %v1085 = vsel %vm637, %v1083, %v1084
      %v1086 = vrot.slane %v531, 1
      %v1087 = vrot.slane %v532, 1
      %v1088 = vsel %vm637, %v1086, %v1087
      %v1089 = vrot.slane %v533, 1
      %v1090 = vrot.slane %v534, 1
      %v1091 = vsel %vm637, %v1089, %v1090
      %v1092 = vrot.slane %v535, 1
      %v1093 = vrot.slane %v536, 1
      %v1094 = vsel %vm637, %v1092, %v1093
      %v1095 = vrot.slane %v521, 2
      %v1096 = vrot.slane %v522, 2
      %v1097 = vsel %vm662, %v1095, %v1096
      %v1098 = vrot.slane %v523, 2
      %v1099 = vrot.slane %v524, 2
      %v1100 = vsel %vm662, %v1098, %v1099
      %v1101 = vrot.slane %v525, 2
      %v1102 = vrot.slane %v526, 2
      %v1103 = vsel %vm662, %v1101, %v1102
      %v1104 = vrot.slane %v527, 2
      %v1105 = vrot.slane %v528, 2
      %v1106 = vsel %vm662, %v1104, %v1105
      %v1107 = vrot.slane %v529, 2
      %v1108 = vrot.slane %v530, 2
      %v1109 = vsel %vm662, %v1107, %v1108
      %v1110 = vrot.slane %v531, 2
      %v1111 = vrot.slane %v532, 2
      %v1112 = vsel %vm662, %v1110, %v1111
      %v1113 = vrot.slane %v533, 2
      %v1114 = vrot.slane %v534, 2
      %v1115 = vsel %vm662, %v1113, %v1114
      %v1116 = vrot.slane %v535, 2
      %v1117 = vrot.slane %v536, 2
      %v1118 = vsel %vm662, %v1116, %v1117
      %v1121 = vrot.slane %v537, 1
      %v1122 = vrot.slane %v538, 1
      %v1123 = vsel %vm637, %v1121, %v1122
      %v1124 = vrot.slane %v537, 2
      %v1125 = vrot.slane %v538, 2
      %v1126 = vsel %vm662, %v1124, %v1125
      %v1129 = vrot.slane %v539, 1
      %v1130 = vrot.slane %v540, 1
      %v1131 = vsel %vm637, %v1129, %v1130
      %v1140 = vrot.slane %v539, 2
      %v1141 = vrot.slane %v540, 2
      %v1142 = vsel %vm662, %v1140, %v1141
      %v1159 = vrot.slane %v541, 1
      %v1160 = vrot.slane %v542, 1
      %v1161 = vsel %vm637, %v1159, %v1160
      %v1162 = vrot.slane %v543, 1
      %v1163 = vrot.slane %v544, 1
      %v1164 = vsel %vm637, %v1162, %v1163
      %v1165 = vrot.slane %v545, 1
      %v1166 = vrot.slane %v546, 1
      %v1167 = vsel %vm637, %v1165, %v1166
      %v1168 = vrot.slane %v547, 1
      %v1169 = vrot.slane %v548, 1
      %v1170 = vsel %vm637, %v1168, %v1169
      %v1171 = vrot.slane %v549, 1
      %v1172 = vrot.slane %v550, 1
      %v1173 = vsel %vm637, %v1171, %v1172
      %v1174 = vrot.slane %v551, 1
      %v1175 = vrot.slane %v552, 1
      %v1176 = vsel %vm637, %v1174, %v1175
      %v1177 = vrot.slane %v553, 1
      %v1178 = vrot.slane %v554, 1
      %v1179 = vsel %vm637, %v1177, %v1178
      %v1180 = vrot.slane %v555, 1
      %v1181 = vrot.slane %v556, 1
      %v1182 = vsel %vm637, %v1180, %v1181
      %v1183 = vrot.slane %v541, 2
      %v1184 = vrot.slane %v542, 2
      %v1185 = vsel %vm662, %v1183, %v1184
      %v1186 = vrot.slane %v543, 2
      %v1187 = vrot.slane %v544, 2
      %v1188 = vsel %vm662, %v1186, %v1187
      %v1189 = vrot.slane %v545, 2
      %v1190 = vrot.slane %v546, 2
      %v1191 = vsel %vm662, %v1189, %v1190
      %v1192 = vrot.slane %v547, 2
      %v1193 = vrot.slane %v548, 2
      %v1194 = vsel %vm662, %v1192, %v1193
      %v1195 = vrot.slane %v549, 2
      %v1196 = vrot.slane %v550, 2
      %v1197 = vsel %vm662, %v1195, %v1196
      %v1198 = vrot.slane %v551, 2
      %v1199 = vrot.slane %v552, 2
      %v1200 = vsel %vm662, %v1198, %v1199
      %v1201 = vrot.slane %v553, 2
      %v1202 = vrot.slane %v554, 2
      %v1203 = vsel %vm662, %v1201, %v1202
      %v1204 = vrot.slane %v555, 2
      %v1205 = vrot.slane %v556, 2
      %v1206 = vsel %vm662, %v1204, %v1205
      %v1209 = vrot.slane %v557, 1
      %v1210 = vrot.slane %v558, 1
      %v1211 = vsel %vm637, %v1209, %v1210
      %v1212 = vrot.slane %v557, 2
      %v1213 = vrot.slane %v558, 2
      %v1214 = vsel %vm662, %v1212, %v1213
      %v1217 = vrot.slane %v559, 1
      %v1218 = vrot.slane %v560, 1
      %v1219 = vsel %vm637, %v1217, %v1218
      %v1228 = vrot.slane %v559, 2
      %v1229 = vrot.slane %v560, 2
      %v1230 = vsel %vm662, %v1228, %v1229
      %v1247 = vrot.slane %v561, 1
      %v1248 = vrot.slane %v562, 1
      %v1249 = vsel %vm637, %v1247, %v1248
      %v1250 = vrot.slane %v563, 1
      %v1251 = vrot.slane %v564, 1
      %v1252 = vsel %vm637, %v1250, %v1251
      %v1253 = vrot.slane %v565, 1
      %v1254 = vrot.slane %v566, 1
      %v1255 = vsel %vm637, %v1253, %v1254
      %v1256 = vrot.slane %v567, 1
      %v1257 = vrot.slane %v568, 1
      %v1258 = vsel %vm637, %v1256, %v1257
      %v1259 = vrot.slane %v569, 1
      %v1260 = vrot.slane %v570, 1
      %v1261 = vsel %vm637, %v1259, %v1260
      %v1262 = vrot.slane %v571, 1
      %v1263 = vrot.slane %v572, 1
      %v1264 = vsel %vm637, %v1262, %v1263
      %v1265 = vrot.slane %v573, 1
      %v1266 = vrot.slane %v574, 1
      %v1267 = vsel %vm637, %v1265, %v1266
      %v1268 = vrot.slane %v575, 1
      %v1269 = vrot.slane %v576, 1
      %v1270 = vsel %vm637, %v1268, %v1269
      %v1271 = vrot.slane %v561, 2
      %v1272 = vrot.slane %v562, 2
      %v1273 = vsel %vm662, %v1271, %v1272
      %v1274 = vrot.slane %v563, 2
      %v1275 = vrot.slane %v564, 2
      %v1276 = vsel %vm662, %v1274, %v1275
      %v1277 = vrot.slane %v565, 2
      %v1278 = vrot.slane %v566, 2
      %v1279 = vsel %vm662, %v1277, %v1278
      %v1280 = vrot.slane %v567, 2
      %v1281 = vrot.slane %v568, 2
      %v1282 = vsel %vm662, %v1280, %v1281
      %v1283 = vrot.slane %v569, 2
      %v1284 = vrot.slane %v570, 2
      %v1285 = vsel %vm662, %v1283, %v1284
      %v1286 = vrot.slane %v571, 2
      %v1287 = vrot.slane %v572, 2
      %v1288 = vsel %vm662, %v1286, %v1287
      %v1289 = vrot.slane %v573, 2
      %v1290 = vrot.slane %v574, 2
      %v1291 = vsel %vm662, %v1289, %v1290
      %v1292 = vrot.slane %v575, 2
      %v1293 = vrot.slane %v576, 2
      %v1294 = vsel %vm662, %v1292, %v1293
      %v1297 = vrot.slane %v577, 1
      %v1298 = vrot.slane %v578, 1
      %v1299 = vsel %vm637, %v1297, %v1298
      %v1300 = vrot.slane %v577, 2
      %v1301 = vrot.slane %v578, 2
      %v1302 = vsel %vm662, %v1300, %v1301
      %v1305 = vrot.slane %v579, 1
      %v1306 = vrot.slane %v580, 1
      %v1307 = vsel %vm637, %v1305, %v1306
      %v1316 = vrot.slane %v579, 2
      %v1317 = vrot.slane %v580, 2
      %v1318 = vsel %vm662, %v1316, %v1317
      %v1335 = vrot.slane %v581, 1
      %v1336 = vrot.slane %v582, 1
      %v1337 = vsel %vm637, %v1335, %v1336
      %v1338 = vrot.slane %v583, 1
      %v1339 = vrot.slane %v584, 1
      %v1340 = vsel %vm637, %v1338, %v1339
      %v1341 = vrot.slane %v585, 1
      %v1342 = vrot.slane %v586, 1
      %v1343 = vsel %vm637, %v1341, %v1342
      %v1344 = vrot.slane %v587, 1
      %v1345 = vrot.slane %v588, 1
      %v1346 = vsel %vm637, %v1344, %v1345
      %v1347 = vrot.slane %v589, 1
      %v1348 = vrot.slane %v590, 1
      %v1349 = vsel %vm637, %v1347, %v1348
      %v1350 = vrot.slane %v591, 1
      %v1351 = vrot.slane %v592, 1
      %v1352 = vsel %vm637, %v1350, %v1351
      %v1353 = vrot.slane %v593, 1
      %v1354 = vrot.slane %v594, 1
      %v1355 = vsel %vm637, %v1353, %v1354
      %v1356 = vrot.slane %v595, 1
      %v1357 = vrot.slane %v596, 1
      %v1358 = vsel %vm637, %v1356, %v1357
      %v1359 = vrot.slane %v581, 2
      %v1360 = vrot.slane %v582, 2
      %v1361 = vsel %vm662, %v1359, %v1360
      %v1362 = vrot.slane %v583, 2
      %v1363 = vrot.slane %v584, 2
      %v1364 = vsel %vm662, %v1362, %v1363
      %v1365 = vrot.slane %v585, 2
      %v1366 = vrot.slane %v586, 2
      %v1367 = vsel %vm662, %v1365, %v1366
      %v1368 = vrot.slane %v587, 2
      %v1369 = vrot.slane %v588, 2
      %v1370 = vsel %vm662, %v1368, %v1369
      %v1371 = vrot.slane %v589, 2
      %v1372 = vrot.slane %v590, 2
      %v1373 = vsel %vm662, %v1371, %v1372
      %v1374 = vrot.slane %v591, 2
      %v1375 = vrot.slane %v592, 2
      %v1376 = vsel %vm662, %v1374, %v1375
      %v1377 = vrot.slane %v593, 2
      %v1378 = vrot.slane %v594, 2
      %v1379 = vsel %vm662, %v1377, %v1378
      %v1380 = vrot.slane %v595, 2
      %v1381 = vrot.slane %v596, 2
      %v1382 = vsel %vm662, %v1380, %v1381
      %v1385 = vrot.slane %v597, 1
      %v1386 = vrot.slane %v598, 1
      %v1387 = vsel %vm637, %v1385, %v1386
      %v1388 = vrot.slane %v597, 2
      %v1389 = vrot.slane %v598, 2
      %v1390 = vsel %vm662, %v1388, %v1389
      %v1393 = vrot.slane %v599, 1
      %v1394 = vrot.slane %v600, 1
      %v1395 = vsel %vm637, %v1393, %v1394
      %v1404 = vrot.slane %v599, 2
      %v1405 = vrot.slane %v600, 2
      %v1406 = vsel %vm662, %v1404, %v1405
      %v1423 = vrot.slane %v601, 1
      %v1424 = vrot.slane %v602, 1
      %v1425 = vsel %vm637, %v1423, %v1424
      %v1426 = vrot.slane %v603, 1
      %v1427 = vrot.slane %v604, 1
      %v1428 = vsel %vm637, %v1426, %v1427
      %v1429 = vrot.slane %v605, 1
      %v1430 = vrot.slane %v606, 1
      %v1431 = vsel %vm637, %v1429, %v1430
      %v1432 = vrot.slane %v607, 1
      %v1433 = vrot.slane %v608, 1
      %v1434 = vsel %vm637, %v1432, %v1433
      %v1435 = vrot.slane %v609, 1
      %v1436 = vrot.slane %v610, 1
      %v1437 = vsel %vm637, %v1435, %v1436
      %v1438 = vrot.slane %v611, 1
      %v1439 = vrot.slane %v612, 1
      %v1440 = vsel %vm637, %v1438, %v1439
      %v1441 = vrot.slane %v613, 1
      %v1442 = vrot.slane %v614, 1
      %v1443 = vsel %vm637, %v1441, %v1442
      %v1444 = vrot.slane %v615, 1
      %v1445 = vrot.slane %v616, 1
      %v1446 = vsel %vm637, %v1444, %v1445
      %v1447 = vrot.slane %v601, 2
      %v1448 = vrot.slane %v602, 2
      %v1449 = vsel %vm662, %v1447, %v1448
      %v1450 = vrot.slane %v603, 2
      %v1451 = vrot.slane %v604, 2
      %v1452 = vsel %vm662, %v1450, %v1451
      %v1453 = vrot.slane %v605, 2
      %v1454 = vrot.slane %v606, 2
      %v1455 = vsel %vm662, %v1453, %v1454
      %v1456 = vrot.slane %v607, 2
      %v1457 = vrot.slane %v608, 2
      %v1458 = vsel %vm662, %v1456, %v1457
      %v1459 = vrot.slane %v609, 2
      %v1460 = vrot.slane %v610, 2
      %v1461 = vsel %vm662, %v1459, %v1460
      %v1462 = vrot.slane %v611, 2
      %v1463 = vrot.slane %v612, 2
      %v1464 = vsel %vm662, %v1462, %v1463
      %v1465 = vrot.slane %v613, 2
      %v1466 = vrot.slane %v614, 2
      %v1467 = vsel %vm662, %v1465, %v1466
      %v1468 = vrot.slane %v615, 2
      %v1469 = vrot.slane %v616, 2
      %v1470 = vsel %vm662, %v1468, %v1469
      %v1473 = vrot.slane %v617, 1
      %v1474 = vrot.slane %v618, 1
      %v1475 = vsel %vm637, %v1473, %v1474
      %v1476 = vrot.slane %v617, 2
      %v1477 = vrot.slane %v618, 2
      %v1478 = vsel %vm662, %v1476, %v1477
      %v1481 = vrot.slane %v619, 1
      %v1482 = vrot.slane %v620, 1
      %v1483 = vsel %vm637, %v1481, %v1482
      %v1484 = vrot.slane %v619, 2
      %v1485 = vrot.slane %v620, 2
      %v1486 = vsel %vm662, %v1484, %v1485
      %1487 = vrot.lane.b32.xlu0 %v640, 4
      %v1488 = vpop.permute.xlu0 %1487
      %1489 = vrot.lane.b32.xlu0 %v643, 4
      %v1490 = vpop.permute.xlu0 %1489
      %1491 = vrot.lane.b32.xlu0 %v646, 4
      %v1492 = vpop.permute.xlu0 %1491
      %1493 = vrot.lane.b32.xlu0 %v649, 4
      %v1494 = vpop.permute.xlu0 %1493
      %1495 = vrot.lane.b32.xlu0 %v652, 4
      %v1496 = vpop.permute.xlu0 %1495
      %1497 = vrot.lane.b32.xlu0 %v655, 4
      %v1498 = vpop.permute.xlu0 %1497
      %1499 = vrot.lane.b32.xlu0 %v658, 4
      %v1500 = vpop.permute.xlu0 %1499
      %1501 = vrot.lane.b32.xlu0 %v661, 4
      %v1502 = vpop.permute.xlu0 %1501
      %1511 = vrot.lane.b32.xlu0 %v665, 8
      %v1512 = vpop.permute.xlu0 %1511
      %1513 = vrot.lane.b32.xlu0 %v668, 8
      %v1514 = vpop.permute.xlu0 %1513
      %1515 = vrot.lane.b32.xlu0 %v671, 8
      %v1516 = vpop.permute.xlu0 %1515
      %1517 = vrot.lane.b32.xlu0 %v674, 8
      %v1518 = vpop.permute.xlu0 %1517
      %1519 = vrot.lane.b32.xlu0 %v677, 8
      %v1520 = vpop.permute.xlu0 %1519
      %1521 = vrot.lane.b32.xlu0 %v680, 8
      %v1522 = vpop.permute.xlu0 %1521
      %1523 = vrot.lane.b32.xlu0 %v683, 8
      %v1524 = vpop.permute.xlu0 %1523
      %1525 = vrot.lane.b32.xlu0 %v686, 8
      %v1526 = vpop.permute.xlu0 %1525
      %1535 = vrot.lane.b32.xlu0 %v423, 12
      %v1536 = vpop.permute.xlu0 %1535
      %1537 = vrot.lane.b32.xlu0 %v425, 12
      %v1538 = vpop.permute.xlu0 %1537
      %1539 = vrot.lane.b32.xlu0 %v427, 12
      %v1540 = vpop.permute.xlu0 %1539
      %1541 = vrot.lane.b32.xlu0 %v429, 12
      %v1542 = vpop.permute.xlu0 %1541
      %1543 = vrot.lane.b32.xlu0 %v431, 12
      %v1544 = vpop.permute.xlu0 %1543
      %1545 = vrot.lane.b32.xlu0 %v433, 12
      %v1546 = vpop.permute.xlu0 %1545
      %1547 = vrot.lane.b32.xlu0 %v435, 12
      %v1548 = vpop.permute.xlu0 %1547
      %1549 = vrot.lane.b32.xlu0 %v437, 12
      %v1550 = vpop.permute.xlu0 %1549
      %1559 = vrot.lane.b32.xlu0 %v643, 16
      %v1560 = vpop.permute.xlu0 %1559
      %1561 = vrot.lane.b32.xlu0 %v646, 16
      %v1562 = vpop.permute.xlu0 %1561
      %1563 = vrot.lane.b32.xlu0 %v649, 16
      %v1564 = vpop.permute.xlu0 %1563
      %1565 = vrot.lane.b32.xlu0 %v652, 16
      %v1566 = vpop.permute.xlu0 %1565
      %1567 = vrot.lane.b32.xlu0 %v655, 16
      %v1568 = vpop.permute.xlu0 %1567
      %1569 = vrot.lane.b32.xlu0 %v658, 16
      %v1570 = vpop.permute.xlu0 %1569
      %1571 = vrot.lane.b32.xlu0 %v661, 16
      %v1572 = vpop.permute.xlu0 %1571
      %1573 = vrot.lane.b32.xlu0 %v691, 16
      %v1574 = vpop.permute.xlu0 %1573
      %1583 = vrot.lane.b32.xlu0 %v668, 20
      %v1584 = vpop.permute.xlu0 %1583
      %1585 = vrot.lane.b32.xlu0 %v671, 20
      %v1586 = vpop.permute.xlu0 %1585
      %1587 = vrot.lane.b32.xlu0 %v674, 20
      %v1588 = vpop.permute.xlu0 %1587
      %1589 = vrot.lane.b32.xlu0 %v677, 20
      %v1590 = vpop.permute.xlu0 %1589
      %1591 = vrot.lane.b32.xlu0 %v680, 20
      %v1592 = vpop.permute.xlu0 %1591
      %1593 = vrot.lane.b32.xlu0 %v683, 20
      %v1594 = vpop.permute.xlu0 %1593
      %1595 = vrot.lane.b32.xlu0 %v686, 20
      %v1596 = vpop.permute.xlu0 %1595
      %1597 = vrot.lane.b32.xlu0 %v694, 20
      %v1598 = vpop.permute.xlu0 %1597
      %1607 = vrot.lane.b32.xlu0 %v425, 24
      %v1608 = vpop.permute.xlu0 %1607
      %1609 = vrot.lane.b32.xlu0 %v427, 24
      %v1610 = vpop.permute.xlu0 %1609
      %1611 = vrot.lane.b32.xlu0 %v429, 24
      %v1612 = vpop.permute.xlu0 %1611
      %1613 = vrot.lane.b32.xlu0 %v431, 24
      %v1614 = vpop.permute.xlu0 %1613
      %1615 = vrot.lane.b32.xlu0 %v433, 24
      %v1616 = vpop.permute.xlu0 %1615
      %1617 = vrot.lane.b32.xlu0 %v435, 24
      %v1618 = vpop.permute.xlu0 %1617
      %1619 = vrot.lane.b32.xlu0 %v437, 24
      %v1620 = vpop.permute.xlu0 %1619
      %1621 = vrot.lane.b32.xlu0 %v439, 24
      %v1622 = vpop.permute.xlu0 %1621
      %1631 = vrot.lane.b32.xlu0 %v646, 28
      %v1632 = vpop.permute.xlu0 %1631
      %1633 = vrot.lane.b32.xlu0 %v649, 28
      %v1634 = vpop.permute.xlu0 %1633
      %1635 = vrot.lane.b32.xlu0 %v652, 28
      %v1636 = vpop.permute.xlu0 %1635
      %1637 = vrot.lane.b32.xlu0 %v655, 28
      %v1638 = vpop.permute.xlu0 %1637
      %1639 = vrot.lane.b32.xlu0 %v658, 28
      %v1640 = vpop.permute.xlu0 %1639
      %1641 = vrot.lane.b32.xlu0 %v661, 28
      %v1642 = vpop.permute.xlu0 %1641
      %1643 = vrot.lane.b32.xlu0 %v691, 28
      %v1644 = vpop.permute.xlu0 %1643
      %1645 = vrot.lane.b32.xlu0 %v699, 28
      %v1646 = vpop.permute.xlu0 %1645
      %1655 = vrot.lane.b32.xlu0 %v671, 32
      %v1656 = vpop.permute.xlu0 %1655
      %1657 = vrot.lane.b32.xlu0 %v674, 32
      %v1658 = vpop.permute.xlu0 %1657
      %1659 = vrot.lane.b32.xlu0 %v677, 32
      %v1660 = vpop.permute.xlu0 %1659
      %1661 = vrot.lane.b32.xlu0 %v680, 32
      %v1662 = vpop.permute.xlu0 %1661
      %1663 = vrot.lane.b32.xlu0 %v683, 32
      %v1664 = vpop.permute.xlu0 %1663
      %1665 = vrot.lane.b32.xlu0 %v686, 32
      %v1666 = vpop.permute.xlu0 %1665
      %1667 = vrot.lane.b32.xlu0 %v694, 32
      %v1668 = vpop.permute.xlu0 %1667
      %1669 = vrot.lane.b32.xlu0 %v702, 32
      %v1670 = vpop.permute.xlu0 %1669
      %1679 = vrot.lane.b32.xlu0 %v441, 36
      %v1680 = vpop.permute.xlu0 %1679
      %1681 = vrot.lane.b32.xlu0 %v443, 36
      %v1682 = vpop.permute.xlu0 %1681
      %1683 = vrot.lane.b32.xlu0 %v445, 36
      %v1684 = vpop.permute.xlu0 %1683
      %1685 = vrot.lane.b32.xlu0 %v447, 36
      %v1686 = vpop.permute.xlu0 %1685
      %1687 = vrot.lane.b32.xlu0 %v449, 36
      %v1688 = vpop.permute.xlu0 %1687
      %1689 = vrot.lane.b32.xlu0 %v451, 36
      %v1690 = vpop.permute.xlu0 %1689
      %1691 = vrot.lane.b32.xlu0 %v453, 36
      %v1692 = vpop.permute.xlu0 %1691
      %1693 = vrot.lane.b32.xlu0 %v455, 36
      %v1694 = vpop.permute.xlu0 %1693
      %1703 = vrot.lane.b32.xlu0 %v721, 40
      %v1704 = vpop.permute.xlu0 %1703
      %1705 = vrot.lane.b32.xlu0 %v724, 40
      %v1706 = vpop.permute.xlu0 %1705
      %1707 = vrot.lane.b32.xlu0 %v727, 40
      %v1708 = vpop.permute.xlu0 %1707
      %1709 = vrot.lane.b32.xlu0 %v730, 40
      %v1710 = vpop.permute.xlu0 %1709
      %1711 = vrot.lane.b32.xlu0 %v733, 40
      %v1712 = vpop.permute.xlu0 %1711
      %1713 = vrot.lane.b32.xlu0 %v736, 40
      %v1714 = vpop.permute.xlu0 %1713
      %1715 = vrot.lane.b32.xlu0 %v739, 40
      %v1716 = vpop.permute.xlu0 %1715
      %1717 = vrot.lane.b32.xlu0 %v742, 40
      %v1718 = vpop.permute.xlu0 %1717
      %1727 = vrot.lane.b32.xlu0 %v745, 44
      %v1728 = vpop.permute.xlu0 %1727
      %1729 = vrot.lane.b32.xlu0 %v748, 44
      %v1730 = vpop.permute.xlu0 %1729
      %1731 = vrot.lane.b32.xlu0 %v751, 44
      %v1732 = vpop.permute.xlu0 %1731
      %1733 = vrot.lane.b32.xlu0 %v754, 44
      %v1734 = vpop.permute.xlu0 %1733
      %1735 = vrot.lane.b32.xlu0 %v757, 44
      %v1736 = vpop.permute.xlu0 %1735
      %1737 = vrot.lane.b32.xlu0 %v760, 44
      %v1738 = vpop.permute.xlu0 %1737
      %1739 = vrot.lane.b32.xlu0 %v763, 44
      %v1740 = vpop.permute.xlu0 %1739
      %1741 = vrot.lane.b32.xlu0 %v766, 44
      %v1742 = vpop.permute.xlu0 %1741
      %1751 = vrot.lane.b32.xlu0 %v443, 48
      %v1752 = vpop.permute.xlu0 %1751
      %1753 = vrot.lane.b32.xlu0 %v445, 48
      %v1754 = vpop.permute.xlu0 %1753
      %1755 = vrot.lane.b32.xlu0 %v447, 48
      %v1756 = vpop.permute.xlu0 %1755
      %1757 = vrot.lane.b32.xlu0 %v449, 48
      %v1758 = vpop.permute.xlu0 %1757
      %1759 = vrot.lane.b32.xlu0 %v451, 48
      %v1760 = vpop.permute.xlu0 %1759
      %1761 = vrot.lane.b32.xlu0 %v453, 48
      %v1762 = vpop.permute.xlu0 %1761
      %1763 = vrot.lane.b32.xlu0 %v455, 48
      %v1764 = vpop.permute.xlu0 %1763
      %1765 = vrot.lane.b32.xlu0 %v457, 48
      %v1766 = vpop.permute.xlu0 %1765
      %1775 = vrot.lane.b32.xlu0 %v724, 52
      %v1776 = vpop.permute.xlu0 %1775
      %1777 = vrot.lane.b32.xlu0 %v727, 52
      %v1778 = vpop.permute.xlu0 %1777
      %1779 = vrot.lane.b32.xlu0 %v730, 52
      %v1780 = vpop.permute.xlu0 %1779
      %1781 = vrot.lane.b32.xlu0 %v733, 52
      %v1782 = vpop.permute.xlu0 %1781
      %1783 = vrot.lane.b32.xlu0 %v736, 52
      %v1784 = vpop.permute.xlu0 %1783
      %1785 = vrot.lane.b32.xlu0 %v739, 52
      %v1786 = vpop.permute.xlu0 %1785
      %1787 = vrot.lane.b32.xlu0 %v742, 52
      %v1788 = vpop.permute.xlu0 %1787
      %1789 = vrot.lane.b32.xlu0 %v771, 52
      %v1790 = vpop.permute.xlu0 %1789
      %1799 = vrot.lane.b32.xlu0 %v748, 56
      %v1800 = vpop.permute.xlu0 %1799
      %1801 = vrot.lane.b32.xlu0 %v751, 56
      %v1802 = vpop.permute.xlu0 %1801
      %1803 = vrot.lane.b32.xlu0 %v754, 56
      %v1804 = vpop.permute.xlu0 %1803
      %1805 = vrot.lane.b32.xlu0 %v757, 56
      %v1806 = vpop.permute.xlu0 %1805
      %1807 = vrot.lane.b32.xlu0 %v760, 56
      %v1808 = vpop.permute.xlu0 %1807
      %1809 = vrot.lane.b32.xlu0 %v763, 56
      %v1810 = vpop.permute.xlu0 %1809
      %1811 = vrot.lane.b32.xlu0 %v766, 56
      %v1812 = vpop.permute.xlu0 %1811
      %1813 = vrot.lane.b32.xlu0 %v774, 56
      %v1814 = vpop.permute.xlu0 %1813
      %1823 = vrot.lane.b32.xlu0 %v445, 60
      %v1824 = vpop.permute.xlu0 %1823
      %1825 = vrot.lane.b32.xlu0 %v447, 60
      %v1826 = vpop.permute.xlu0 %1825
      %1827 = vrot.lane.b32.xlu0 %v449, 60
      %v1828 = vpop.permute.xlu0 %1827
      %1829 = vrot.lane.b32.xlu0 %v451, 60
      %v1830 = vpop.permute.xlu0 %1829
      %1831 = vrot.lane.b32.xlu0 %v453, 60
      %v1832 = vpop.permute.xlu0 %1831
      %1833 = vrot.lane.b32.xlu0 %v455, 60
      %v1834 = vpop.permute.xlu0 %1833
      %1835 = vrot.lane.b32.xlu0 %v457, 60
      %v1836 = vpop.permute.xlu0 %1835
      %1837 = vrot.lane.b32.xlu0 %v459, 60
      %v1838 = vpop.permute.xlu0 %1837
      %vm1847 = vcmask 31744
      %v1848 = vsel %vm1847, %v421, %v1488
      %v1849 = vsel %vm1847, %v423, %v1490
      %v1850 = vsel %vm1847, %v425, %v1492
      %v1851 = vsel %vm1847, %v427, %v1494
      %v1852 = vsel %vm1847, %v429, %v1496
      %v1853 = vsel %vm1847, %v431, %v1498
      %v1854 = vsel %vm1847, %v433, %v1500
      %v1855 = vsel %vm1847, %v435, %v1502
      %vm1856 = vcmask 64512
      %v1857 = vsel %vm1856, %v1848, %v1512
      %v1858 = vsel %vm1856, %v1849, %v1514
      %v1859 = vsel %vm1856, %v1850, %v1516
      %v1860 = vsel %vm1856, %v1851, %v1518
      %v1861 = vsel %vm1856, %v1852, %v1520
      %v1862 = vsel %vm1856, %v1853, %v1522
      %v1863 = vsel %vm1856, %v1854, %v1524
      %v1864 = vsel %vm1856, %v1855, %v1526
      %vm1865 = vcmask 97280
      %v1866 = vsel %vm1865, %v1857, %v1536
      %v1867 = vsel %vm1865, %v1858, %v1538
      %v1868 = vsel %vm1865, %v1859, %v1540
      %v1869 = vsel %vm1865, %v1860, %v1542
      %v1870 = vsel %vm1865, %v1861, %v1544
      %v1871 = vsel %vm1865, %v1862, %v1546
      %v1872 = vsel %vm1865, %v1863, %v1548
      %v1873 = vsel %vm1865, %v1864, %v1550
      %vm1874 = vcmask 130048
      %v1875 = vsel %vm1874, %v1866, %v1560
      %v1876 = vsel %vm1874, %v1867, %v1562
      %v1877 = vsel %vm1874, %v1868, %v1564
      %v1878 = vsel %vm1874, %v1869, %v1566
      %v1879 = vsel %vm1874, %v1870, %v1568
      %v1880 = vsel %vm1874, %v1871, %v1570
      %v1881 = vsel %vm1874, %v1872, %v1572
      %v1882 = vsel %vm1874, %v1873, %v1574
      %vm1883 = vcmask 162816
      %v1884 = vsel %vm1883, %v1875, %v1584
      %v1885 = vsel %vm1883, %v1876, %v1586
      %v1886 = vsel %vm1883, %v1877, %v1588
      %v1887 = vsel %vm1883, %v1878, %v1590
      %v1888 = vsel %vm1883, %v1879, %v1592
      %v1889 = vsel %vm1883, %v1880, %v1594
      %v1890 = vsel %vm1883, %v1881, %v1596
      %v1891 = vsel %vm1883, %v1882, %v1598
      %vm1892 = vcmask 195584
      %v1893 = vsel %vm1892, %v1884, %v1608
      %v1894 = vsel %vm1892, %v1885, %v1610
      %v1895 = vsel %vm1892, %v1886, %v1612
      %v1896 = vsel %vm1892, %v1887, %v1614
      %v1897 = vsel %vm1892, %v1888, %v1616
      %v1898 = vsel %vm1892, %v1889, %v1618
      %v1899 = vsel %vm1892, %v1890, %v1620
      %v1900 = vsel %vm1892, %v1891, %v1622
      %vm1901 = vcmask 228352
      %v1902 = vsel %vm1901, %v1893, %v1632
      %v1903 = vsel %vm1901, %v1894, %v1634
      %v1904 = vsel %vm1901, %v1895, %v1636
      %v1905 = vsel %vm1901, %v1896, %v1638
      %v1906 = vsel %vm1901, %v1897, %v1640
      %v1907 = vsel %vm1901, %v1898, %v1642
      %v1908 = vsel %vm1901, %v1899, %v1644
      %v1909 = vsel %vm1901, %v1900, %v1646
      %vm1910 = vcmask 261120
      %v1911 = vsel %vm1910, %v1902, %v1656
      %v1912 = vsel %vm1910, %v1903, %v1658
      %v1913 = vsel %vm1910, %v1904, %v1660
      %v1914 = vsel %vm1910, %v1905, %v1662
      %v1915 = vsel %vm1910, %v1906, %v1664
      %v1916 = vsel %vm1910, %v1907, %v1666
      %v1917 = vsel %vm1910, %v1908, %v1668
      %v1918 = vsel %vm1910, %v1909, %v1670
      %vm1919 = vcmask 293888
      %v1920 = vsel %vm1919, %v1911, %v1680
      %v1921 = vsel %vm1919, %v1912, %v1682
      %v1922 = vsel %vm1919, %v1913, %v1684
      %v1923 = vsel %vm1919, %v1914, %v1686
      %v1924 = vsel %vm1919, %v1915, %v1688
      %v1925 = vsel %vm1919, %v1916, %v1690
      %v1926 = vsel %vm1919, %v1917, %v1692
      %v1927 = vsel %vm1919, %v1918, %v1694
      %vm1928 = vcmask 326656
      %v1929 = vsel %vm1928, %v1920, %v1704
      %v1930 = vsel %vm1928, %v1921, %v1706
      %v1931 = vsel %vm1928, %v1922, %v1708
      %v1932 = vsel %vm1928, %v1923, %v1710
      %v1933 = vsel %vm1928, %v1924, %v1712
      %v1934 = vsel %vm1928, %v1925, %v1714
      %v1935 = vsel %vm1928, %v1926, %v1716
      %v1936 = vsel %vm1928, %v1927, %v1718
      %vm1937 = vcmask 359424
      %v1938 = vsel %vm1937, %v1929, %v1728
      %v1939 = vsel %vm1937, %v1930, %v1730
      %v1940 = vsel %vm1937, %v1931, %v1732
      %v1941 = vsel %vm1937, %v1932, %v1734
      %v1942 = vsel %vm1937, %v1933, %v1736
      %v1943 = vsel %vm1937, %v1934, %v1738
      %v1944 = vsel %vm1937, %v1935, %v1740
      %v1945 = vsel %vm1937, %v1936, %v1742
      %vm1946 = vcmask 392192
      %v1947 = vsel %vm1946, %v1938, %v1752
      %v1948 = vsel %vm1946, %v1939, %v1754
      %v1949 = vsel %vm1946, %v1940, %v1756
      %v1950 = vsel %vm1946, %v1941, %v1758
      %v1951 = vsel %vm1946, %v1942, %v1760
      %v1952 = vsel %vm1946, %v1943, %v1762
      %v1953 = vsel %vm1946, %v1944, %v1764
      %v1954 = vsel %vm1946, %v1945, %v1766
      %vm1955 = vcmask 424960
      %v1956 = vsel %vm1955, %v1947, %v1776
      %v1957 = vsel %vm1955, %v1948, %v1778
      %v1958 = vsel %vm1955, %v1949, %v1780
      %v1959 = vsel %vm1955, %v1950, %v1782
      %v1960 = vsel %vm1955, %v1951, %v1784
      %v1961 = vsel %vm1955, %v1952, %v1786
      %v1962 = vsel %vm1955, %v1953, %v1788
      %v1963 = vsel %vm1955, %v1954, %v1790
      %vm1964 = vcmask 457728
      %v1965 = vsel %vm1964, %v1956, %v1800
      %v1966 = vsel %vm1964, %v1957, %v1802
      %v1967 = vsel %vm1964, %v1958, %v1804
      %v1968 = vsel %vm1964, %v1959, %v1806
      %v1969 = vsel %vm1964, %v1960, %v1808
      %v1970 = vsel %vm1964, %v1961, %v1810
      %v1971 = vsel %vm1964, %v1962, %v1812
      %v1972 = vsel %vm1964, %v1963, %v1814
      %vm1973 = vcmask 490496
      %v1974 = vsel %vm1973, %v1965, %v1824
      %v1975 = vsel %vm1973, %v1966, %v1826
      %v1976 = vsel %vm1973, %v1967, %v1828
      %v1977 = vsel %vm1973, %v1968, %v1830
      %v1978 = vsel %vm1973, %v1969, %v1832
      %v1979 = vsel %vm1973, %v1970, %v1834
      %v1980 = vsel %vm1973, %v1971, %v1836
      %v1981 = vsel %vm1973, %v1972, %v1838
      %1982 = vrot.lane.b32.xlu0 %v751, 4
      %v1983 = vpop.permute.xlu0 %1982
      %1984 = vrot.lane.b32.xlu0 %v754, 4
      %v1985 = vpop.permute.xlu0 %1984
      %1986 = vrot.lane.b32.xlu0 %v757, 4
      %v1987 = vpop.permute.xlu0 %1986
      %1988 = vrot.lane.b32.xlu0 %v760, 4
      %v1989 = vpop.permute.xlu0 %1988
      %1990 = vrot.lane.b32.xlu0 %v763, 4
      %v1991 = vpop.permute.xlu0 %1990
      %1992 = vrot.lane.b32.xlu0 %v766, 4
      %v1993 = vpop.permute.xlu0 %1992
      %1994 = vrot.lane.b32.xlu0 %v774, 4
      %v1995 = vpop.permute.xlu0 %1994
      %1996 = vrot.lane.b32.xlu0 %v790, 4
      %v1997 = vpop.permute.xlu0 %1996
      %2006 = vrot.lane.b32.xlu0 %v461, 8
      %v2007 = vpop.permute.xlu0 %2006
      %2008 = vrot.lane.b32.xlu0 %v463, 8
      %v2009 = vpop.permute.xlu0 %2008
      %2010 = vrot.lane.b32.xlu0 %v465, 8
      %v2011 = vpop.permute.xlu0 %2010
      %2012 = vrot.lane.b32.xlu0 %v467, 8
      %v2013 = vpop.permute.xlu0 %2012
      %2014 = vrot.lane.b32.xlu0 %v469, 8
      %v2015 = vpop.permute.xlu0 %2014
      %2016 = vrot.lane.b32.xlu0 %v471, 8
      %v2017 = vpop.permute.xlu0 %2016
      %2018 = vrot.lane.b32.xlu0 %v473, 8
      %v2019 = vpop.permute.xlu0 %2018
      %2020 = vrot.lane.b32.xlu0 %v475, 8
      %v2021 = vpop.permute.xlu0 %2020
      %2030 = vrot.lane.b32.xlu0 %v809, 12
      %v2031 = vpop.permute.xlu0 %2030
      %2032 = vrot.lane.b32.xlu0 %v812, 12
      %v2033 = vpop.permute.xlu0 %2032
      %2034 = vrot.lane.b32.xlu0 %v815, 12
      %v2035 = vpop.permute.xlu0 %2034
      %2036 = vrot.lane.b32.xlu0 %v818, 12
      %v2037 = vpop.permute.xlu0 %2036
      %2038 = vrot.lane.b32.xlu0 %v821, 12
      %v2039 = vpop.permute.xlu0 %2038
      %2040 = vrot.lane.b32.xlu0 %v824, 12
      %v2041 = vpop.permute.xlu0 %2040
      %2042 = vrot.lane.b32.xlu0 %v827, 12
      %v2043 = vpop.permute.xlu0 %2042
      %2044 = vrot.lane.b32.xlu0 %v830, 12
      %v2045 = vpop.permute.xlu0 %2044
      %2054 = vrot.lane.b32.xlu0 %v833, 16
      %v2055 = vpop.permute.xlu0 %2054
      %2056 = vrot.lane.b32.xlu0 %v836, 16
      %v2057 = vpop.permute.xlu0 %2056
      %2058 = vrot.lane.b32.xlu0 %v839, 16
      %v2059 = vpop.permute.xlu0 %2058
      %2060 = vrot.lane.b32.xlu0 %v842, 16
      %v2061 = vpop.permute.xlu0 %2060
      %2062 = vrot.lane.b32.xlu0 %v845, 16
      %v2063 = vpop.permute.xlu0 %2062
      %2064 = vrot.lane.b32.xlu0 %v848, 16
      %v2065 = vpop.permute.xlu0 %2064
      %2066 = vrot.lane.b32.xlu0 %v851, 16
      %v2067 = vpop.permute.xlu0 %2066
      %2068 = vrot.lane.b32.xlu0 %v854, 16
      %v2069 = vpop.permute.xlu0 %2068
      %2078 = vrot.lane.b32.xlu0 %v463, 20
      %v2079 = vpop.permute.xlu0 %2078
      %2080 = vrot.lane.b32.xlu0 %v465, 20
      %v2081 = vpop.permute.xlu0 %2080
      %2082 = vrot.lane.b32.xlu0 %v467, 20
      %v2083 = vpop.permute.xlu0 %2082
      %2084 = vrot.lane.b32.xlu0 %v469, 20
      %v2085 = vpop.permute.xlu0 %2084
      %2086 = vrot.lane.b32.xlu0 %v471, 20
      %v2087 = vpop.permute.xlu0 %2086
      %2088 = vrot.lane.b32.xlu0 %v473, 20
      %v2089 = vpop.permute.xlu0 %2088
      %2090 = vrot.lane.b32.xlu0 %v475, 20
      %v2091 = vpop.permute.xlu0 %2090
      %2092 = vrot.lane.b32.xlu0 %v477, 20
      %v2093 = vpop.permute.xlu0 %2092
      %2102 = vrot.lane.b32.xlu0 %v812, 24
      %v2103 = vpop.permute.xlu0 %2102
      %2104 = vrot.lane.b32.xlu0 %v815, 24
      %v2105 = vpop.permute.xlu0 %2104
      %2106 = vrot.lane.b32.xlu0 %v818, 24
      %v2107 = vpop.permute.xlu0 %2106
      %2108 = vrot.lane.b32.xlu0 %v821, 24
      %v2109 = vpop.permute.xlu0 %2108
      %2110 = vrot.lane.b32.xlu0 %v824, 24
      %v2111 = vpop.permute.xlu0 %2110
      %2112 = vrot.lane.b32.xlu0 %v827, 24
      %v2113 = vpop.permute.xlu0 %2112
      %2114 = vrot.lane.b32.xlu0 %v830, 24
      %v2115 = vpop.permute.xlu0 %2114
      %2116 = vrot.lane.b32.xlu0 %v859, 24
      %v2117 = vpop.permute.xlu0 %2116
      %2126 = vrot.lane.b32.xlu0 %v836, 28
      %v2127 = vpop.permute.xlu0 %2126
      %2128 = vrot.lane.b32.xlu0 %v839, 28
      %v2129 = vpop.permute.xlu0 %2128
      %2130 = vrot.lane.b32.xlu0 %v842, 28
      %v2131 = vpop.permute.xlu0 %2130
      %2132 = vrot.lane.b32.xlu0 %v845, 28
      %v2133 = vpop.permute.xlu0 %2132
      %2134 = vrot.lane.b32.xlu0 %v848, 28
      %v2135 = vpop.permute.xlu0 %2134
      %2136 = vrot.lane.b32.xlu0 %v851, 28
      %v2137 = vpop.permute.xlu0 %2136
      %2138 = vrot.lane.b32.xlu0 %v854, 28
      %v2139 = vpop.permute.xlu0 %2138
      %2140 = vrot.lane.b32.xlu0 %v862, 28
      %v2141 = vpop.permute.xlu0 %2140
      %2150 = vrot.lane.b32.xlu0 %v465, 32
      %v2151 = vpop.permute.xlu0 %2150
      %2152 = vrot.lane.b32.xlu0 %v467, 32
      %v2153 = vpop.permute.xlu0 %2152
      %2154 = vrot.lane.b32.xlu0 %v469, 32
      %v2155 = vpop.permute.xlu0 %2154
      %2156 = vrot.lane.b32.xlu0 %v471, 32
      %v2157 = vpop.permute.xlu0 %2156
      %2158 = vrot.lane.b32.xlu0 %v473, 32
      %v2159 = vpop.permute.xlu0 %2158
      %2160 = vrot.lane.b32.xlu0 %v475, 32
      %v2161 = vpop.permute.xlu0 %2160
      %2162 = vrot.lane.b32.xlu0 %v477, 32
      %v2163 = vpop.permute.xlu0 %2162
      %2164 = vrot.lane.b32.xlu0 %v479, 32
      %v2165 = vpop.permute.xlu0 %2164
      %2174 = vrot.lane.b32.xlu0 %v815, 36
      %v2175 = vpop.permute.xlu0 %2174
      %2176 = vrot.lane.b32.xlu0 %v818, 36
      %v2177 = vpop.permute.xlu0 %2176
      %2178 = vrot.lane.b32.xlu0 %v821, 36
      %v2179 = vpop.permute.xlu0 %2178
      %2180 = vrot.lane.b32.xlu0 %v824, 36
      %v2181 = vpop.permute.xlu0 %2180
      %2182 = vrot.lane.b32.xlu0 %v827, 36
      %v2183 = vpop.permute.xlu0 %2182
      %2184 = vrot.lane.b32.xlu0 %v830, 36
      %v2185 = vpop.permute.xlu0 %2184
      %2186 = vrot.lane.b32.xlu0 %v859, 36
      %v2187 = vpop.permute.xlu0 %2186
      %2188 = vrot.lane.b32.xlu0 %v867, 36
      %v2189 = vpop.permute.xlu0 %2188
      %2198 = vrot.lane.b32.xlu0 %v839, 40
      %v2199 = vpop.permute.xlu0 %2198
      %2200 = vrot.lane.b32.xlu0 %v842, 40
      %v2201 = vpop.permute.xlu0 %2200
      %2202 = vrot.lane.b32.xlu0 %v845, 40
      %v2203 = vpop.permute.xlu0 %2202
      %2204 = vrot.lane.b32.xlu0 %v848, 40
      %v2205 = vpop.permute.xlu0 %2204
      %2206 = vrot.lane.b32.xlu0 %v851, 40
      %v2207 = vpop.permute.xlu0 %2206
      %2208 = vrot.lane.b32.xlu0 %v854, 40
      %v2209 = vpop.permute.xlu0 %2208
      %2210 = vrot.lane.b32.xlu0 %v862, 40
      %v2211 = vpop.permute.xlu0 %2210
      %2212 = vrot.lane.b32.xlu0 %v878, 40
      %v2213 = vpop.permute.xlu0 %2212
      %v2222 = vsel %vm1847, %v727, %v1983
      %v2223 = vsel %vm1847, %v730, %v1985
      %v2224 = vsel %vm1847, %v733, %v1987
      %v2225 = vsel %vm1847, %v736, %v1989
      %v2226 = vsel %vm1847, %v739, %v1991
      %v2227 = vsel %vm1847, %v742, %v1993
      %v2228 = vsel %vm1847, %v771, %v1995
      %v2229 = vsel %vm1847, %v779, %v1997
      %v2230 = vsel %vm1856, %v2222, %v2007
      %v2231 = vsel %vm1856, %v2223, %v2009
      %v2232 = vsel %vm1856, %v2224, %v2011
      %v2233 = vsel %vm1856, %v2225, %v2013
      %v2234 = vsel %vm1856, %v2226, %v2015
      %v2235 = vsel %vm1856, %v2227, %v2017
      %v2236 = vsel %vm1856, %v2228, %v2019
      %v2237 = vsel %vm1856, %v2229, %v2021
      %v2238 = vsel %vm1865, %v2230, %v2031
      %v2239 = vsel %vm1865, %v2231, %v2033
      %v2240 = vsel %vm1865, %v2232, %v2035
      %v2241 = vsel %vm1865, %v2233, %v2037
      %v2242 = vsel %vm1865, %v2234, %v2039
      %v2243 = vsel %vm1865, %v2235, %v2041
      %v2244 = vsel %vm1865, %v2236, %v2043
      %v2245 = vsel %vm1865, %v2237, %v2045
      %v2246 = vsel %vm1874, %v2238, %v2055
      %v2247 = vsel %vm1874, %v2239, %v2057
      %v2248 = vsel %vm1874, %v2240, %v2059
      %v2249 = vsel %vm1874, %v2241, %v2061
      %v2250 = vsel %vm1874, %v2242, %v2063
      %v2251 = vsel %vm1874, %v2243, %v2065
      %v2252 = vsel %vm1874, %v2244, %v2067
      %v2253 = vsel %vm1874, %v2245, %v2069
      %v2254 = vsel %vm1883, %v2246, %v2079
      %v2255 = vsel %vm1883, %v2247, %v2081
      %v2256 = vsel %vm1883, %v2248, %v2083
      %v2257 = vsel %vm1883, %v2249, %v2085
      %v2258 = vsel %vm1883, %v2250, %v2087
      %v2259 = vsel %vm1883, %v2251, %v2089
      %v2260 = vsel %vm1883, %v2252, %v2091
      %v2261 = vsel %vm1883, %v2253, %v2093
      %v2262 = vsel %vm1892, %v2254, %v2103
      %v2263 = vsel %vm1892, %v2255, %v2105
      %v2264 = vsel %vm1892, %v2256, %v2107
      %v2265 = vsel %vm1892, %v2257, %v2109
      %v2266 = vsel %vm1892, %v2258, %v2111
      %v2267 = vsel %vm1892, %v2259, %v2113
      %v2268 = vsel %vm1892, %v2260, %v2115
      %v2269 = vsel %vm1892, %v2261, %v2117
      %v2270 = vsel %vm1901, %v2262, %v2127
      %v2271 = vsel %vm1901, %v2263, %v2129
      %v2272 = vsel %vm1901, %v2264, %v2131
      %v2273 = vsel %vm1901, %v2265, %v2133
      %v2274 = vsel %vm1901, %v2266, %v2135
      %v2275 = vsel %vm1901, %v2267, %v2137
      %v2276 = vsel %vm1901, %v2268, %v2139
      %v2277 = vsel %vm1901, %v2269, %v2141
      %v2278 = vsel %vm1910, %v2270, %v2151
      %v2279 = vsel %vm1910, %v2271, %v2153
      %v2280 = vsel %vm1910, %v2272, %v2155
      %v2281 = vsel %vm1910, %v2273, %v2157
      %v2282 = vsel %vm1910, %v2274, %v2159
      %v2283 = vsel %vm1910, %v2275, %v2161
      %v2284 = vsel %vm1910, %v2276, %v2163
      %v2285 = vsel %vm1910, %v2277, %v2165
      %v2286 = vsel %vm1919, %v2278, %v2175
      %v2287 = vsel %vm1919, %v2279, %v2177
      %v2288 = vsel %vm1919, %v2280, %v2179
      %v2289 = vsel %vm1919, %v2281, %v2181
      %v2290 = vsel %vm1919, %v2282, %v2183
      %v2291 = vsel %vm1919, %v2283, %v2185
      %v2292 = vsel %vm1919, %v2284, %v2187
      %v2293 = vsel %vm1919, %v2285, %v2189
      %v2294 = vsel %vm1928, %v2286, %v2199
      %v2295 = vsel %vm1928, %v2287, %v2201
      %v2296 = vsel %vm1928, %v2288, %v2203
      %v2297 = vsel %vm1928, %v2289, %v2205
      %v2298 = vsel %vm1928, %v2290, %v2207
      %v2299 = vsel %vm1928, %v2291, %v2209
      %v2300 = vsel %vm1928, %v2292, %v2211
      %v2301 = vsel %vm1928, %v2293, %v2213
      %2310 = vrot.lane.b32.xlu0 %v2294, 64
      %v2311 = vpop.permute.xlu0 %2310
      %2312 = vrot.lane.b32.xlu0 %v2295, 64
      %v2313 = vpop.permute.xlu0 %2312
      %2314 = vrot.lane.b32.xlu0 %v2296, 64
      %v2315 = vpop.permute.xlu0 %2314
      %2316 = vrot.lane.b32.xlu0 %v2297, 64
      %v2317 = vpop.permute.xlu0 %2316
      %2318 = vrot.lane.b32.xlu0 %v2298, 64
      %v2319 = vpop.permute.xlu0 %2318
      %2320 = vrot.lane.b32.xlu0 %v2299, 64
      %v2321 = vpop.permute.xlu0 %2320
      %2322 = vrot.lane.b32.xlu0 %v2300, 64
      %v2323 = vpop.permute.xlu0 %2322
      %2324 = vrot.lane.b32.xlu0 %v2301, 64
      %v2325 = vpop.permute.xlu0 %2324
      %vm2334 = vcmask 523264
      %v2335 = vsel %vm2334, %v1974, %v2311
      %v2336 = vsel %vm2334, %v1975, %v2313
      %v2337 = vsel %vm2334, %v1976, %v2315
      %v2338 = vsel %vm2334, %v1977, %v2317
      %v2339 = vsel %vm2334, %v1978, %v2319
      %v2340 = vsel %vm2334, %v1979, %v2321
      %v2341 = vsel %vm2334, %v1980, %v2323
      %v2342 = vsel %vm2334, %v1981, %v2325
      %2343 = vrot.lane.b32.xlu0 %v721, 4
      %v2344 = vpop.permute.xlu0 %2343
      %2345 = vrot.lane.b32.xlu0 %v724, 4
      %v2346 = vpop.permute.xlu0 %2345
      %2347 = vrot.lane.b32.xlu0 %v727, 4
      %v2348 = vpop.permute.xlu0 %2347
      %2349 = vrot.lane.b32.xlu0 %v730, 4
      %v2350 = vpop.permute.xlu0 %2349
      %2351 = vrot.lane.b32.xlu0 %v733, 4
      %v2352 = vpop.permute.xlu0 %2351
      %2353 = vrot.lane.b32.xlu0 %v736, 4
      %v2354 = vpop.permute.xlu0 %2353
      %2355 = vrot.lane.b32.xlu0 %v739, 4
      %v2356 = vpop.permute.xlu0 %2355
      %2357 = vrot.lane.b32.xlu0 %v742, 4
      %v2358 = vpop.permute.xlu0 %2357
      %2367 = vrot.lane.b32.xlu0 %v745, 8
      %v2368 = vpop.permute.xlu0 %2367
      %2369 = vrot.lane.b32.xlu0 %v748, 8
      %v2370 = vpop.permute.xlu0 %2369
      %2371 = vrot.lane.b32.xlu0 %v751, 8
      %v2372 = vpop.permute.xlu0 %2371
      %2373 = vrot.lane.b32.xlu0 %v754, 8
      %v2374 = vpop.permute.xlu0 %2373
      %2375 = vrot.lane.b32.xlu0 %v757, 8
      %v2376 = vpop.permute.xlu0 %2375
      %2377 = vrot.lane.b32.xlu0 %v760, 8
      %v2378 = vpop.permute.xlu0 %2377
      %2379 = vrot.lane.b32.xlu0 %v763, 8
      %v2380 = vpop.permute.xlu0 %2379
      %2381 = vrot.lane.b32.xlu0 %v766, 8
      %v2382 = vpop.permute.xlu0 %2381
      %2391 = vrot.lane.b32.xlu0 %v443, 12
      %v2392 = vpop.permute.xlu0 %2391
      %2393 = vrot.lane.b32.xlu0 %v445, 12
      %v2394 = vpop.permute.xlu0 %2393
      %2395 = vrot.lane.b32.xlu0 %v447, 12
      %v2396 = vpop.permute.xlu0 %2395
      %2397 = vrot.lane.b32.xlu0 %v449, 12
      %v2398 = vpop.permute.xlu0 %2397
      %2399 = vrot.lane.b32.xlu0 %v451, 12
      %v2400 = vpop.permute.xlu0 %2399
      %2401 = vrot.lane.b32.xlu0 %v453, 12
      %v2402 = vpop.permute.xlu0 %2401
      %2403 = vrot.lane.b32.xlu0 %v455, 12
      %v2404 = vpop.permute.xlu0 %2403
      %2405 = vrot.lane.b32.xlu0 %v457, 12
      %v2406 = vpop.permute.xlu0 %2405
      %2415 = vrot.lane.b32.xlu0 %v724, 16
      %v2416 = vpop.permute.xlu0 %2415
      %2417 = vrot.lane.b32.xlu0 %v727, 16
      %v2418 = vpop.permute.xlu0 %2417
      %2419 = vrot.lane.b32.xlu0 %v730, 16
      %v2420 = vpop.permute.xlu0 %2419
      %2421 = vrot.lane.b32.xlu0 %v733, 16
      %v2422 = vpop.permute.xlu0 %2421
      %2423 = vrot.lane.b32.xlu0 %v736, 16
      %v2424 = vpop.permute.xlu0 %2423
      %2425 = vrot.lane.b32.xlu0 %v739, 16
      %v2426 = vpop.permute.xlu0 %2425
      %2427 = vrot.lane.b32.xlu0 %v742, 16
      %v2428 = vpop.permute.xlu0 %2427
      %2429 = vrot.lane.b32.xlu0 %v771, 16
      %v2430 = vpop.permute.xlu0 %2429
      %2439 = vrot.lane.b32.xlu0 %v748, 20
      %v2440 = vpop.permute.xlu0 %2439
      %2441 = vrot.lane.b32.xlu0 %v751, 20
      %v2442 = vpop.permute.xlu0 %2441
      %2443 = vrot.lane.b32.xlu0 %v754, 20
      %v2444 = vpop.permute.xlu0 %2443
      %2445 = vrot.lane.b32.xlu0 %v757, 20
      %v2446 = vpop.permute.xlu0 %2445
      %2447 = vrot.lane.b32.xlu0 %v760, 20
      %v2448 = vpop.permute.xlu0 %2447
      %2449 = vrot.lane.b32.xlu0 %v763, 20
      %v2450 = vpop.permute.xlu0 %2449
      %2451 = vrot.lane.b32.xlu0 %v766, 20
      %v2452 = vpop.permute.xlu0 %2451
      %2453 = vrot.lane.b32.xlu0 %v774, 20
      %v2454 = vpop.permute.xlu0 %2453
      %2463 = vrot.lane.b32.xlu0 %v445, 24
      %v2464 = vpop.permute.xlu0 %2463
      %2465 = vrot.lane.b32.xlu0 %v447, 24
      %v2466 = vpop.permute.xlu0 %2465
      %2467 = vrot.lane.b32.xlu0 %v449, 24
      %v2468 = vpop.permute.xlu0 %2467
      %2469 = vrot.lane.b32.xlu0 %v451, 24
      %v2470 = vpop.permute.xlu0 %2469
      %2471 = vrot.lane.b32.xlu0 %v453, 24
      %v2472 = vpop.permute.xlu0 %2471
      %2473 = vrot.lane.b32.xlu0 %v455, 24
      %v2474 = vpop.permute.xlu0 %2473
      %2475 = vrot.lane.b32.xlu0 %v457, 24
      %v2476 = vpop.permute.xlu0 %2475
      %2477 = vrot.lane.b32.xlu0 %v459, 24
      %v2478 = vpop.permute.xlu0 %2477
      %2487 = vrot.lane.b32.xlu0 %v727, 28
      %v2488 = vpop.permute.xlu0 %2487
      %2489 = vrot.lane.b32.xlu0 %v730, 28
      %v2490 = vpop.permute.xlu0 %2489
      %2491 = vrot.lane.b32.xlu0 %v733, 28
      %v2492 = vpop.permute.xlu0 %2491
      %2493 = vrot.lane.b32.xlu0 %v736, 28
      %v2494 = vpop.permute.xlu0 %2493
      %2495 = vrot.lane.b32.xlu0 %v739, 28
      %v2496 = vpop.permute.xlu0 %2495
      %2497 = vrot.lane.b32.xlu0 %v742, 28
      %v2498 = vpop.permute.xlu0 %2497
      %2499 = vrot.lane.b32.xlu0 %v771, 28
      %v2500 = vpop.permute.xlu0 %2499
      %2501 = vrot.lane.b32.xlu0 %v779, 28
      %v2502 = vpop.permute.xlu0 %2501
      %2511 = vrot.lane.b32.xlu0 %v751, 32
      %v2512 = vpop.permute.xlu0 %2511
      %2513 = vrot.lane.b32.xlu0 %v754, 32
      %v2514 = vpop.permute.xlu0 %2513
      %2515 = vrot.lane.b32.xlu0 %v757, 32
      %v2516 = vpop.permute.xlu0 %2515
      %2517 = vrot.lane.b32.xlu0 %v760, 32
      %v2518 = vpop.permute.xlu0 %2517
      %2519 = vrot.lane.b32.xlu0 %v763, 32
      %v2520 = vpop.permute.xlu0 %2519
      %2521 = vrot.lane.b32.xlu0 %v766, 32
      %v2522 = vpop.permute.xlu0 %2521
      %2523 = vrot.lane.b32.xlu0 %v774, 32
      %v2524 = vpop.permute.xlu0 %2523
      %2525 = vrot.lane.b32.xlu0 %v790, 32
      %v2526 = vpop.permute.xlu0 %2525
      %2535 = vrot.lane.b32.xlu0 %v461, 36
      %v2536 = vpop.permute.xlu0 %2535
      %2537 = vrot.lane.b32.xlu0 %v463, 36
      %v2538 = vpop.permute.xlu0 %2537
      %2539 = vrot.lane.b32.xlu0 %v465, 36
      %v2540 = vpop.permute.xlu0 %2539
      %2541 = vrot.lane.b32.xlu0 %v467, 36
      %v2542 = vpop.permute.xlu0 %2541
      %2543 = vrot.lane.b32.xlu0 %v469, 36
      %v2544 = vpop.permute.xlu0 %2543
      %2545 = vrot.lane.b32.xlu0 %v471, 36
      %v2546 = vpop.permute.xlu0 %2545
      %2547 = vrot.lane.b32.xlu0 %v473, 36
      %v2548 = vpop.permute.xlu0 %2547
      %2549 = vrot.lane.b32.xlu0 %v475, 36
      %v2550 = vpop.permute.xlu0 %2549
      %2559 = vrot.lane.b32.xlu0 %v809, 40
      %v2560 = vpop.permute.xlu0 %2559
      %2561 = vrot.lane.b32.xlu0 %v812, 40
      %v2562 = vpop.permute.xlu0 %2561
      %2563 = vrot.lane.b32.xlu0 %v815, 40
      %v2564 = vpop.permute.xlu0 %2563
      %2565 = vrot.lane.b32.xlu0 %v818, 40
      %v2566 = vpop.permute.xlu0 %2565
      %2567 = vrot.lane.b32.xlu0 %v821, 40
      %v2568 = vpop.permute.xlu0 %2567
      %2569 = vrot.lane.b32.xlu0 %v824, 40
      %v2570 = vpop.permute.xlu0 %2569
      %2571 = vrot.lane.b32.xlu0 %v827, 40
      %v2572 = vpop.permute.xlu0 %2571
      %2573 = vrot.lane.b32.xlu0 %v830, 40
      %v2574 = vpop.permute.xlu0 %2573
      %2583 = vrot.lane.b32.xlu0 %v833, 44
      %v2584 = vpop.permute.xlu0 %2583
      %2585 = vrot.lane.b32.xlu0 %v836, 44
      %v2586 = vpop.permute.xlu0 %2585
      %2587 = vrot.lane.b32.xlu0 %v839, 44
      %v2588 = vpop.permute.xlu0 %2587
      %2589 = vrot.lane.b32.xlu0 %v842, 44
      %v2590 = vpop.permute.xlu0 %2589
      %2591 = vrot.lane.b32.xlu0 %v845, 44
      %v2592 = vpop.permute.xlu0 %2591
      %2593 = vrot.lane.b32.xlu0 %v848, 44
      %v2594 = vpop.permute.xlu0 %2593
      %2595 = vrot.lane.b32.xlu0 %v851, 44
      %v2596 = vpop.permute.xlu0 %2595
      %2597 = vrot.lane.b32.xlu0 %v854, 44
      %v2598 = vpop.permute.xlu0 %2597
      %2607 = vrot.lane.b32.xlu0 %v463, 48
      %v2608 = vpop.permute.xlu0 %2607
      %2609 = vrot.lane.b32.xlu0 %v465, 48
      %v2610 = vpop.permute.xlu0 %2609
      %2611 = vrot.lane.b32.xlu0 %v467, 48
      %v2612 = vpop.permute.xlu0 %2611
      %2613 = vrot.lane.b32.xlu0 %v469, 48
      %v2614 = vpop.permute.xlu0 %2613
      %2615 = vrot.lane.b32.xlu0 %v471, 48
      %v2616 = vpop.permute.xlu0 %2615
      %2617 = vrot.lane.b32.xlu0 %v473, 48
      %v2618 = vpop.permute.xlu0 %2617
      %2619 = vrot.lane.b32.xlu0 %v475, 48
      %v2620 = vpop.permute.xlu0 %2619
      %2621 = vrot.lane.b32.xlu0 %v477, 48
      %v2622 = vpop.permute.xlu0 %2621
      %2631 = vrot.lane.b32.xlu0 %v812, 52
      %v2632 = vpop.permute.xlu0 %2631
      %2633 = vrot.lane.b32.xlu0 %v815, 52
      %v2634 = vpop.permute.xlu0 %2633
      %2635 = vrot.lane.b32.xlu0 %v818, 52
      %v2636 = vpop.permute.xlu0 %2635
      %2637 = vrot.lane.b32.xlu0 %v821, 52
      %v2638 = vpop.permute.xlu0 %2637
      %2639 = vrot.lane.b32.xlu0 %v824, 52
      %v2640 = vpop.permute.xlu0 %2639
      %2641 = vrot.lane.b32.xlu0 %v827, 52
      %v2642 = vpop.permute.xlu0 %2641
      %2643 = vrot.lane.b32.xlu0 %v830, 52
      %v2644 = vpop.permute.xlu0 %2643
      %2645 = vrot.lane.b32.xlu0 %v859, 52
      %v2646 = vpop.permute.xlu0 %2645
      %2655 = vrot.lane.b32.xlu0 %v836, 56
      %v2656 = vpop.permute.xlu0 %2655
      %2657 = vrot.lane.b32.xlu0 %v839, 56
      %v2658 = vpop.permute.xlu0 %2657
      %2659 = vrot.lane.b32.xlu0 %v842, 56
      %v2660 = vpop.permute.xlu0 %2659
      %2661 = vrot.lane.b32.xlu0 %v845, 56
      %v2662 = vpop.permute.xlu0 %2661
      %2663 = vrot.lane.b32.xlu0 %v848, 56
      %v2664 = vpop.permute.xlu0 %2663
      %2665 = vrot.lane.b32.xlu0 %v851, 56
      %v2666 = vpop.permute.xlu0 %2665
      %2667 = vrot.lane.b32.xlu0 %v854, 56
      %v2668 = vpop.permute.xlu0 %2667
      %2669 = vrot.lane.b32.xlu0 %v862, 56
      %v2670 = vpop.permute.xlu0 %2669
      %2679 = vrot.lane.b32.xlu0 %v465, 60
      %v2680 = vpop.permute.xlu0 %2679
      %2681 = vrot.lane.b32.xlu0 %v467, 60
      %v2682 = vpop.permute.xlu0 %2681
      %2683 = vrot.lane.b32.xlu0 %v469, 60
      %v2684 = vpop.permute.xlu0 %2683
      %2685 = vrot.lane.b32.xlu0 %v471, 60
      %v2686 = vpop.permute.xlu0 %2685
      %2687 = vrot.lane.b32.xlu0 %v473, 60
      %v2688 = vpop.permute.xlu0 %2687
      %2689 = vrot.lane.b32.xlu0 %v475, 60
      %v2690 = vpop.permute.xlu0 %2689
      %2691 = vrot.lane.b32.xlu0 %v477, 60
      %v2692 = vpop.permute.xlu0 %2691
      %2693 = vrot.lane.b32.xlu0 %v479, 60
      %v2694 = vpop.permute.xlu0 %2693
      %v2703 = vsel %vm1847, %v441, %v2344
      %v2704 = vsel %vm1847, %v443, %v2346
      %v2705 = vsel %vm1847, %v445, %v2348
      %v2706 = vsel %vm1847, %v447, %v2350
      %v2707 = vsel %vm1847, %v449, %v2352
      %v2708 = vsel %vm1847, %v451, %v2354
      %v2709 = vsel %vm1847, %v453, %v2356
      %v2710 = vsel %vm1847, %v455, %v2358
      %v2711 = vsel %vm1856, %v2703, %v2368
      %v2712 = vsel %vm1856, %v2704, %v2370
      %v2713 = vsel %vm1856, %v2705, %v2372
      %v2714 = vsel %vm1856, %v2706, %v2374
      %v2715 = vsel %vm1856, %v2707, %v2376
      %v2716 = vsel %vm1856, %v2708, %v2378
      %v2717 = vsel %vm1856, %v2709, %v2380
      %v2718 = vsel %vm1856, %v2710, %v2382
      %v2719 = vsel %vm1865, %v2711, %v2392
      %v2720 = vsel %vm1865, %v2712, %v2394
      %v2721 = vsel %vm1865, %v2713, %v2396
      %v2722 = vsel %vm1865, %v2714, %v2398
      %v2723 = vsel %vm1865, %v2715, %v2400
      %v2724 = vsel %vm1865, %v2716, %v2402
      %v2725 = vsel %vm1865, %v2717, %v2404
      %v2726 = vsel %vm1865, %v2718, %v2406
      %v2727 = vsel %vm1874, %v2719, %v2416
      %v2728 = vsel %vm1874, %v2720, %v2418
      %v2729 = vsel %vm1874, %v2721, %v2420
      %v2730 = vsel %vm1874, %v2722, %v2422
      %v2731 = vsel %vm1874, %v2723, %v2424
      %v2732 = vsel %vm1874, %v2724, %v2426
      %v2733 = vsel %vm1874, %v2725, %v2428
      %v2734 = vsel %vm1874, %v2726, %v2430
      %v2735 = vsel %vm1883, %v2727, %v2440
      %v2736 = vsel %vm1883, %v2728, %v2442
      %v2737 = vsel %vm1883, %v2729, %v2444
      %v2738 = vsel %vm1883, %v2730, %v2446
      %v2739 = vsel %vm1883, %v2731, %v2448
      %v2740 = vsel %vm1883, %v2732, %v2450
      %v2741 = vsel %vm1883, %v2733, %v2452
      %v2742 = vsel %vm1883, %v2734, %v2454
      %v2743 = vsel %vm1892, %v2735, %v2464
      %v2744 = vsel %vm1892, %v2736, %v2466
      %v2745 = vsel %vm1892, %v2737, %v2468
      %v2746 = vsel %vm1892, %v2738, %v2470
      %v2747 = vsel %vm1892, %v2739, %v2472
      %v2748 = vsel %vm1892, %v2740, %v2474
      %v2749 = vsel %vm1892, %v2741, %v2476
      %v2750 = vsel %vm1892, %v2742, %v2478
      %v2751 = vsel %vm1901, %v2743, %v2488
      %v2752 = vsel %vm1901, %v2744, %v2490
      %v2753 = vsel %vm1901, %v2745, %v2492
      %v2754 = vsel %vm1901, %v2746, %v2494
      %v2755 = vsel %vm1901, %v2747, %v2496
      %v2756 = vsel %vm1901, %v2748, %v2498
      %v2757 = vsel %vm1901, %v2749, %v2500
      %v2758 = vsel %vm1901, %v2750, %v2502
      %v2759 = vsel %vm1910, %v2751, %v2512
      %v2760 = vsel %vm1910, %v2752, %v2514
      %v2761 = vsel %vm1910, %v2753, %v2516
      %v2762 = vsel %vm1910, %v2754, %v2518
      %v2763 = vsel %vm1910, %v2755, %v2520
      %v2764 = vsel %vm1910, %v2756, %v2522
      %v2765 = vsel %vm1910, %v2757, %v2524
      %v2766 = vsel %vm1910, %v2758, %v2526
      %v2767 = vsel %vm1919, %v2759, %v2536
      %v2768 = vsel %vm1919, %v2760, %v2538
      %v2769 = vsel %vm1919, %v2761, %v2540
      %v2770 = vsel %vm1919, %v2762, %v2542
      %v2771 = vsel %vm1919, %v2763, %v2544
      %v2772 = vsel %vm1919, %v2764, %v2546
      %v2773 = vsel %vm1919, %v2765, %v2548
      %v2774 = vsel %vm1919, %v2766, %v2550
      %v2775 = vsel %vm1928, %v2767, %v2560
      %v2776 = vsel %vm1928, %v2768, %v2562
      %v2777 = vsel %vm1928, %v2769, %v2564
      %v2778 = vsel %vm1928, %v2770, %v2566
      %v2779 = vsel %vm1928, %v2771, %v2568
      %v2780 = vsel %vm1928, %v2772, %v2570
      %v2781 = vsel %vm1928, %v2773, %v2572
      %v2782 = vsel %vm1928, %v2774, %v2574
      %v2783 = vsel %vm1937, %v2775, %v2584
      %v2784 = vsel %vm1937, %v2776, %v2586
      %v2785 = vsel %vm1937, %v2777, %v2588
      %v2786 = vsel %vm1937, %v2778, %v2590
      %v2787 = vsel %vm1937, %v2779, %v2592
      %v2788 = vsel %vm1937, %v2780, %v2594
      %v2789 = vsel %vm1937, %v2781, %v2596
      %v2790 = vsel %vm1937, %v2782, %v2598
      %v2791 = vsel %vm1946, %v2783, %v2608
      %v2792 = vsel %vm1946, %v2784, %v2610
      %v2793 = vsel %vm1946, %v2785, %v2612
      %v2794 = vsel %vm1946, %v2786, %v2614
      %v2795 = vsel %vm1946, %v2787, %v2616
      %v2796 = vsel %vm1946, %v2788, %v2618
      %v2797 = vsel %vm1946, %v2789, %v2620
      %v2798 = vsel %vm1946, %v2790, %v2622
      %v2799 = vsel %vm1955, %v2791, %v2632
      %v2800 = vsel %vm1955, %v2792, %v2634
      %v2801 = vsel %vm1955, %v2793, %v2636
      %v2802 = vsel %vm1955, %v2794, %v2638
      %v2803 = vsel %vm1955, %v2795, %v2640
      %v2804 = vsel %vm1955, %v2796, %v2642
      %v2805 = vsel %vm1955, %v2797, %v2644
      %v2806 = vsel %vm1955, %v2798, %v2646
      %v2807 = vsel %vm1964, %v2799, %v2656
      %v2808 = vsel %vm1964, %v2800, %v2658
      %v2809 = vsel %vm1964, %v2801, %v2660
      %v2810 = vsel %vm1964, %v2802, %v2662
      %v2811 = vsel %vm1964, %v2803, %v2664
      %v2812 = vsel %vm1964, %v2804, %v2666
      %v2813 = vsel %vm1964, %v2805, %v2668
      %v2814 = vsel %vm1964, %v2806, %v2670
      %v2815 = vsel %vm1973, %v2807, %v2680
      %v2816 = vsel %vm1973, %v2808, %v2682
      %v2817 = vsel %vm1973, %v2809, %v2684
      %v2818 = vsel %vm1973, %v2810, %v2686
      %v2819 = vsel %vm1973, %v2811, %v2688
      %v2820 = vsel %vm1973, %v2812, %v2690
      %v2821 = vsel %vm1973, %v2813, %v2692
      %v2822 = vsel %vm1973, %v2814, %v2694
      %2823 = vrot.lane.b32.xlu0 %v839, 4
      %v2824 = vpop.permute.xlu0 %2823
      %2825 = vrot.lane.b32.xlu0 %v842, 4
      %v2826 = vpop.permute.xlu0 %2825
      %2827 = vrot.lane.b32.xlu0 %v845, 4
      %v2828 = vpop.permute.xlu0 %2827
      %2829 = vrot.lane.b32.xlu0 %v848, 4
      %v2830 = vpop.permute.xlu0 %2829
      %2831 = vrot.lane.b32.xlu0 %v851, 4
      %v2832 = vpop.permute.xlu0 %2831
      %2833 = vrot.lane.b32.xlu0 %v854, 4
      %v2834 = vpop.permute.xlu0 %2833
      %2835 = vrot.lane.b32.xlu0 %v862, 4
      %v2836 = vpop.permute.xlu0 %2835
      %2837 = vrot.lane.b32.xlu0 %v878, 4
      %v2838 = vpop.permute.xlu0 %2837
      %2847 = vrot.lane.b32.xlu0 %v481, 8
      %v2848 = vpop.permute.xlu0 %2847
      %2849 = vrot.lane.b32.xlu0 %v483, 8
      %v2850 = vpop.permute.xlu0 %2849
      %2851 = vrot.lane.b32.xlu0 %v485, 8
      %v2852 = vpop.permute.xlu0 %2851
      %2853 = vrot.lane.b32.xlu0 %v487, 8
      %v2854 = vpop.permute.xlu0 %2853
      %2855 = vrot.lane.b32.xlu0 %v489, 8
      %v2856 = vpop.permute.xlu0 %2855
      %2857 = vrot.lane.b32.xlu0 %v491, 8
      %v2858 = vpop.permute.xlu0 %2857
      %2859 = vrot.lane.b32.xlu0 %v493, 8
      %v2860 = vpop.permute.xlu0 %2859
      %2861 = vrot.lane.b32.xlu0 %v495, 8
      %v2862 = vpop.permute.xlu0 %2861
      %2871 = vrot.lane.b32.xlu0 %v897, 12
      %v2872 = vpop.permute.xlu0 %2871
      %2873 = vrot.lane.b32.xlu0 %v900, 12
      %v2874 = vpop.permute.xlu0 %2873
      %2875 = vrot.lane.b32.xlu0 %v903, 12
      %v2876 = vpop.permute.xlu0 %2875
      %2877 = vrot.lane.b32.xlu0 %v906, 12
      %v2878 = vpop.permute.xlu0 %2877
      %2879 = vrot.lane.b32.xlu0 %v909, 12
      %v2880 = vpop.permute.xlu0 %2879
      %2881 = vrot.lane.b32.xlu0 %v912, 12
      %v2882 = vpop.permute.xlu0 %2881
      %2883 = vrot.lane.b32.xlu0 %v915, 12
      %v2884 = vpop.permute.xlu0 %2883
      %2885 = vrot.lane.b32.xlu0 %v918, 12
      %v2886 = vpop.permute.xlu0 %2885
      %2895 = vrot.lane.b32.xlu0 %v921, 16
      %v2896 = vpop.permute.xlu0 %2895
      %2897 = vrot.lane.b32.xlu0 %v924, 16
      %v2898 = vpop.permute.xlu0 %2897
      %2899 = vrot.lane.b32.xlu0 %v927, 16
      %v2900 = vpop.permute.xlu0 %2899
      %2901 = vrot.lane.b32.xlu0 %v930, 16
      %v2902 = vpop.permute.xlu0 %2901
      %2903 = vrot.lane.b32.xlu0 %v933, 16
      %v2904 = vpop.permute.xlu0 %2903
      %2905 = vrot.lane.b32.xlu0 %v936, 16
      %v2906 = vpop.permute.xlu0 %2905
      %2907 = vrot.lane.b32.xlu0 %v939, 16
      %v2908 = vpop.permute.xlu0 %2907
      %2909 = vrot.lane.b32.xlu0 %v942, 16
      %v2910 = vpop.permute.xlu0 %2909
      %2919 = vrot.lane.b32.xlu0 %v483, 20
      %v2920 = vpop.permute.xlu0 %2919
      %2921 = vrot.lane.b32.xlu0 %v485, 20
      %v2922 = vpop.permute.xlu0 %2921
      %2923 = vrot.lane.b32.xlu0 %v487, 20
      %v2924 = vpop.permute.xlu0 %2923
      %2925 = vrot.lane.b32.xlu0 %v489, 20
      %v2926 = vpop.permute.xlu0 %2925
      %2927 = vrot.lane.b32.xlu0 %v491, 20
      %v2928 = vpop.permute.xlu0 %2927
      %2929 = vrot.lane.b32.xlu0 %v493, 20
      %v2930 = vpop.permute.xlu0 %2929
      %2931 = vrot.lane.b32.xlu0 %v495, 20
      %v2932 = vpop.permute.xlu0 %2931
      %2933 = vrot.lane.b32.xlu0 %v497, 20
      %v2934 = vpop.permute.xlu0 %2933
      %2943 = vrot.lane.b32.xlu0 %v900, 24
      %v2944 = vpop.permute.xlu0 %2943
      %2945 = vrot.lane.b32.xlu0 %v903, 24
      %v2946 = vpop.permute.xlu0 %2945
      %2947 = vrot.lane.b32.xlu0 %v906, 24
      %v2948 = vpop.permute.xlu0 %2947
      %2949 = vrot.lane.b32.xlu0 %v909, 24
      %v2950 = vpop.permute.xlu0 %2949
      %2951 = vrot.lane.b32.xlu0 %v912, 24
      %v2952 = vpop.permute.xlu0 %2951
      %2953 = vrot.lane.b32.xlu0 %v915, 24
      %v2954 = vpop.permute.xlu0 %2953
      %2955 = vrot.lane.b32.xlu0 %v918, 24
      %v2956 = vpop.permute.xlu0 %2955
      %2957 = vrot.lane.b32.xlu0 %v947, 24
      %v2958 = vpop.permute.xlu0 %2957
      %2967 = vrot.lane.b32.xlu0 %v924, 28
      %v2968 = vpop.permute.xlu0 %2967
      %2969 = vrot.lane.b32.xlu0 %v927, 28
      %v2970 = vpop.permute.xlu0 %2969
      %2971 = vrot.lane.b32.xlu0 %v930, 28
      %v2972 = vpop.permute.xlu0 %2971
      %2973 = vrot.lane.b32.xlu0 %v933, 28
      %v2974 = vpop.permute.xlu0 %2973
      %2975 = vrot.lane.b32.xlu0 %v936, 28
      %v2976 = vpop.permute.xlu0 %2975
      %2977 = vrot.lane.b32.xlu0 %v939, 28
      %v2978 = vpop.permute.xlu0 %2977
      %2979 = vrot.lane.b32.xlu0 %v942, 28
      %v2980 = vpop.permute.xlu0 %2979
      %2981 = vrot.lane.b32.xlu0 %v950, 28
      %v2982 = vpop.permute.xlu0 %2981
      %2991 = vrot.lane.b32.xlu0 %v485, 32
      %v2992 = vpop.permute.xlu0 %2991
      %2993 = vrot.lane.b32.xlu0 %v487, 32
      %v2994 = vpop.permute.xlu0 %2993
      %2995 = vrot.lane.b32.xlu0 %v489, 32
      %v2996 = vpop.permute.xlu0 %2995
      %2997 = vrot.lane.b32.xlu0 %v491, 32
      %v2998 = vpop.permute.xlu0 %2997
      %2999 = vrot.lane.b32.xlu0 %v493, 32
      %v3000 = vpop.permute.xlu0 %2999
      %3001 = vrot.lane.b32.xlu0 %v495, 32
      %v3002 = vpop.permute.xlu0 %3001
      %3003 = vrot.lane.b32.xlu0 %v497, 32
      %v3004 = vpop.permute.xlu0 %3003
      %3005 = vrot.lane.b32.xlu0 %v499, 32
      %v3006 = vpop.permute.xlu0 %3005
      %3015 = vrot.lane.b32.xlu0 %v903, 36
      %v3016 = vpop.permute.xlu0 %3015
      %3017 = vrot.lane.b32.xlu0 %v906, 36
      %v3018 = vpop.permute.xlu0 %3017
      %3019 = vrot.lane.b32.xlu0 %v909, 36
      %v3020 = vpop.permute.xlu0 %3019
      %3021 = vrot.lane.b32.xlu0 %v912, 36
      %v3022 = vpop.permute.xlu0 %3021
      %3023 = vrot.lane.b32.xlu0 %v915, 36
      %v3024 = vpop.permute.xlu0 %3023
      %3025 = vrot.lane.b32.xlu0 %v918, 36
      %v3026 = vpop.permute.xlu0 %3025
      %3027 = vrot.lane.b32.xlu0 %v947, 36
      %v3028 = vpop.permute.xlu0 %3027
      %3029 = vrot.lane.b32.xlu0 %v955, 36
      %v3030 = vpop.permute.xlu0 %3029
      %3039 = vrot.lane.b32.xlu0 %v927, 40
      %v3040 = vpop.permute.xlu0 %3039
      %3041 = vrot.lane.b32.xlu0 %v930, 40
      %v3042 = vpop.permute.xlu0 %3041
      %3043 = vrot.lane.b32.xlu0 %v933, 40
      %v3044 = vpop.permute.xlu0 %3043
      %3045 = vrot.lane.b32.xlu0 %v936, 40
      %v3046 = vpop.permute.xlu0 %3045
      %3047 = vrot.lane.b32.xlu0 %v939, 40
      %v3048 = vpop.permute.xlu0 %3047
      %3049 = vrot.lane.b32.xlu0 %v942, 40
      %v3050 = vpop.permute.xlu0 %3049
      %3051 = vrot.lane.b32.xlu0 %v950, 40
      %v3052 = vpop.permute.xlu0 %3051
      %3053 = vrot.lane.b32.xlu0 %v966, 40
      %v3054 = vpop.permute.xlu0 %3053
      %v3063 = vsel %vm1847, %v815, %v2824
      %v3064 = vsel %vm1847, %v818, %v2826
      %v3065 = vsel %vm1847, %v821, %v2828
      %v3066 = vsel %vm1847, %v824, %v2830
      %v3067 = vsel %vm1847, %v827, %v2832
      %v3068 = vsel %vm1847, %v830, %v2834
      %v3069 = vsel %vm1847, %v859, %v2836
      %v3070 = vsel %vm1847, %v867, %v2838
      %v3071 = vsel %vm1856, %v3063, %v2848
      %v3072 = vsel %vm1856, %v3064, %v2850
      %v3073 = vsel %vm1856, %v3065, %v2852
      %v3074 = vsel %vm1856, %v3066, %v2854
      %v3075 = vsel %vm1856, %v3067, %v2856
      %v3076 = vsel %vm1856, %v3068, %v2858
      %v3077 = vsel %vm1856, %v3069, %v2860
      %v3078 = vsel %vm1856, %v3070, %v2862
      %v3079 = vsel %vm1865, %v3071, %v2872
      %v3080 = vsel %vm1865, %v3072, %v2874
      %v3081 = vsel %vm1865, %v3073, %v2876
      %v3082 = vsel %vm1865, %v3074, %v2878
      %v3083 = vsel %vm1865, %v3075, %v2880
      %v3084 = vsel %vm1865, %v3076, %v2882
      %v3085 = vsel %vm1865, %v3077, %v2884
      %v3086 = vsel %vm1865, %v3078, %v2886
      %v3087 = vsel %vm1874, %v3079, %v2896
      %v3088 = vsel %vm1874, %v3080, %v2898
      %v3089 = vsel %vm1874, %v3081, %v2900
      %v3090 = vsel %vm1874, %v3082, %v2902
      %v3091 = vsel %vm1874, %v3083, %v2904
      %v3092 = vsel %vm1874, %v3084, %v2906
      %v3093 = vsel %vm1874, %v3085, %v2908
      %v3094 = vsel %vm1874, %v3086, %v2910
      %v3095 = vsel %vm1883, %v3087, %v2920
      %v3096 = vsel %vm1883, %v3088, %v2922
      %v3097 = vsel %vm1883, %v3089, %v2924
      %v3098 = vsel %vm1883, %v3090, %v2926
      %v3099 = vsel %vm1883, %v3091, %v2928
      %v3100 = vsel %vm1883, %v3092, %v2930
      %v3101 = vsel %vm1883, %v3093, %v2932
      %v3102 = vsel %vm1883, %v3094, %v2934
      %v3103 = vsel %vm1892, %v3095, %v2944
      %v3104 = vsel %vm1892, %v3096, %v2946
      %v3105 = vsel %vm1892, %v3097, %v2948
      %v3106 = vsel %vm1892, %v3098, %v2950
      %v3107 = vsel %vm1892, %v3099, %v2952
      %v3108 = vsel %vm1892, %v3100, %v2954
      %v3109 = vsel %vm1892, %v3101, %v2956
      %v3110 = vsel %vm1892, %v3102, %v2958
      %v3111 = vsel %vm1901, %v3103, %v2968
      %v3112 = vsel %vm1901, %v3104, %v2970
      %v3113 = vsel %vm1901, %v3105, %v2972
      %v3114 = vsel %vm1901, %v3106, %v2974
      %v3115 = vsel %vm1901, %v3107, %v2976
      %v3116 = vsel %vm1901, %v3108, %v2978
      %v3117 = vsel %vm1901, %v3109, %v2980
      %v3118 = vsel %vm1901, %v3110, %v2982
      %v3119 = vsel %vm1910, %v3111, %v2992
      %v3120 = vsel %vm1910, %v3112, %v2994
      %v3121 = vsel %vm1910, %v3113, %v2996
      %v3122 = vsel %vm1910, %v3114, %v2998
      %v3123 = vsel %vm1910, %v3115, %v3000
      %v3124 = vsel %vm1910, %v3116, %v3002
      %v3125 = vsel %vm1910, %v3117, %v3004
      %v3126 = vsel %vm1910, %v3118, %v3006
      %v3127 = vsel %vm1919, %v3119, %v3016
      %v3128 = vsel %vm1919, %v3120, %v3018
      %v3129 = vsel %vm1919, %v3121, %v3020
      %v3130 = vsel %vm1919, %v3122, %v3022
      %v3131 = vsel %vm1919, %v3123, %v3024
      %v3132 = vsel %vm1919, %v3124, %v3026
      %v3133 = vsel %vm1919, %v3125, %v3028
      %v3134 = vsel %vm1919, %v3126, %v3030
      %v3135 = vsel %vm1928, %v3127, %v3040
      %v3136 = vsel %vm1928, %v3128, %v3042
      %v3137 = vsel %vm1928, %v3129, %v3044
      %v3138 = vsel %vm1928, %v3130, %v3046
      %v3139 = vsel %vm1928, %v3131, %v3048
      %v3140 = vsel %vm1928, %v3132, %v3050
      %v3141 = vsel %vm1928, %v3133, %v3052
      %v3142 = vsel %vm1928, %v3134, %v3054
      %3151 = vrot.lane.b32.xlu0 %v3135, 64
      %v3152 = vpop.permute.xlu0 %3151
      %3153 = vrot.lane.b32.xlu0 %v3136, 64
      %v3154 = vpop.permute.xlu0 %3153
      %3155 = vrot.lane.b32.xlu0 %v3137, 64
      %v3156 = vpop.permute.xlu0 %3155
      %3157 = vrot.lane.b32.xlu0 %v3138, 64
      %v3158 = vpop.permute.xlu0 %3157
      %3159 = vrot.lane.b32.xlu0 %v3139, 64
      %v3160 = vpop.permute.xlu0 %3159
      %3161 = vrot.lane.b32.xlu0 %v3140, 64
      %v3162 = vpop.permute.xlu0 %3161
      %3163 = vrot.lane.b32.xlu0 %v3141, 64
      %v3164 = vpop.permute.xlu0 %3163
      %3165 = vrot.lane.b32.xlu0 %v3142, 64
      %v3166 = vpop.permute.xlu0 %3165
      %v3175 = vsel %vm2334, %v2815, %v3152
      %v3176 = vsel %vm2334, %v2816, %v3154
      %v3177 = vsel %vm2334, %v2817, %v3156
      %v3178 = vsel %vm2334, %v2818, %v3158
      %v3179 = vsel %vm2334, %v2819, %v3160
      %v3180 = vsel %vm2334, %v2820, %v3162
      %v3181 = vsel %vm2334, %v2821, %v3164
      %v3182 = vsel %vm2334, %v2822, %v3166
      %3183 = vrot.lane.b32.xlu0 %v809, 4
      %v3184 = vpop.permute.xlu0 %3183
      %3185 = vrot.lane.b32.xlu0 %v812, 4
      %v3186 = vpop.permute.xlu0 %3185
      %3187 = vrot.lane.b32.xlu0 %v815, 4
      %v3188 = vpop.permute.xlu0 %3187
      %3189 = vrot.lane.b32.xlu0 %v818, 4
      %v3190 = vpop.permute.xlu0 %3189
      %3191 = vrot.lane.b32.xlu0 %v821, 4
      %v3192 = vpop.permute.xlu0 %3191
      %3193 = vrot.lane.b32.xlu0 %v824, 4
      %v3194 = vpop.permute.xlu0 %3193
      %3195 = vrot.lane.b32.xlu0 %v827, 4
      %v3196 = vpop.permute.xlu0 %3195
      %3197 = vrot.lane.b32.xlu0 %v830, 4
      %v3198 = vpop.permute.xlu0 %3197
      %3207 = vrot.lane.b32.xlu0 %v833, 8
      %v3208 = vpop.permute.xlu0 %3207
      %3209 = vrot.lane.b32.xlu0 %v836, 8
      %v3210 = vpop.permute.xlu0 %3209
      %3211 = vrot.lane.b32.xlu0 %v839, 8
      %v3212 = vpop.permute.xlu0 %3211
      %3213 = vrot.lane.b32.xlu0 %v842, 8
      %v3214 = vpop.permute.xlu0 %3213
      %3215 = vrot.lane.b32.xlu0 %v845, 8
      %v3216 = vpop.permute.xlu0 %3215
      %3217 = vrot.lane.b32.xlu0 %v848, 8
      %v3218 = vpop.permute.xlu0 %3217
      %3219 = vrot.lane.b32.xlu0 %v851, 8
      %v3220 = vpop.permute.xlu0 %3219
      %3221 = vrot.lane.b32.xlu0 %v854, 8
      %v3222 = vpop.permute.xlu0 %3221
      %3231 = vrot.lane.b32.xlu0 %v463, 12
      %v3232 = vpop.permute.xlu0 %3231
      %3233 = vrot.lane.b32.xlu0 %v465, 12
      %v3234 = vpop.permute.xlu0 %3233
      %3235 = vrot.lane.b32.xlu0 %v467, 12
      %v3236 = vpop.permute.xlu0 %3235
      %3237 = vrot.lane.b32.xlu0 %v469, 12
      %v3238 = vpop.permute.xlu0 %3237
      %3239 = vrot.lane.b32.xlu0 %v471, 12
      %v3240 = vpop.permute.xlu0 %3239
      %3241 = vrot.lane.b32.xlu0 %v473, 12
      %v3242 = vpop.permute.xlu0 %3241
      %3243 = vrot.lane.b32.xlu0 %v475, 12
      %v3244 = vpop.permute.xlu0 %3243
      %3245 = vrot.lane.b32.xlu0 %v477, 12
      %v3246 = vpop.permute.xlu0 %3245
      %3255 = vrot.lane.b32.xlu0 %v812, 16
      %v3256 = vpop.permute.xlu0 %3255
      %3257 = vrot.lane.b32.xlu0 %v815, 16
      %v3258 = vpop.permute.xlu0 %3257
      %3259 = vrot.lane.b32.xlu0 %v818, 16
      %v3260 = vpop.permute.xlu0 %3259
      %3261 = vrot.lane.b32.xlu0 %v821, 16
      %v3262 = vpop.permute.xlu0 %3261
      %3263 = vrot.lane.b32.xlu0 %v824, 16
      %v3264 = vpop.permute.xlu0 %3263
      %3265 = vrot.lane.b32.xlu0 %v827, 16
      %v3266 = vpop.permute.xlu0 %3265
      %3267 = vrot.lane.b32.xlu0 %v830, 16
      %v3268 = vpop.permute.xlu0 %3267
      %3269 = vrot.lane.b32.xlu0 %v859, 16
      %v3270 = vpop.permute.xlu0 %3269
      %3279 = vrot.lane.b32.xlu0 %v836, 20
      %v3280 = vpop.permute.xlu0 %3279
      %3281 = vrot.lane.b32.xlu0 %v839, 20
      %v3282 = vpop.permute.xlu0 %3281
      %3283 = vrot.lane.b32.xlu0 %v842, 20
      %v3284 = vpop.permute.xlu0 %3283
      %3285 = vrot.lane.b32.xlu0 %v845, 20
      %v3286 = vpop.permute.xlu0 %3285
      %3287 = vrot.lane.b32.xlu0 %v848, 20
      %v3288 = vpop.permute.xlu0 %3287
      %3289 = vrot.lane.b32.xlu0 %v851, 20
      %v3290 = vpop.permute.xlu0 %3289
      %3291 = vrot.lane.b32.xlu0 %v854, 20
      %v3292 = vpop.permute.xlu0 %3291
      %3293 = vrot.lane.b32.xlu0 %v862, 20
      %v3294 = vpop.permute.xlu0 %3293
      %3303 = vrot.lane.b32.xlu0 %v465, 24
      %v3304 = vpop.permute.xlu0 %3303
      %3305 = vrot.lane.b32.xlu0 %v467, 24
      %v3306 = vpop.permute.xlu0 %3305
      %3307 = vrot.lane.b32.xlu0 %v469, 24
      %v3308 = vpop.permute.xlu0 %3307
      %3309 = vrot.lane.b32.xlu0 %v471, 24
      %v3310 = vpop.permute.xlu0 %3309
      %3311 = vrot.lane.b32.xlu0 %v473, 24
      %v3312 = vpop.permute.xlu0 %3311
      %3313 = vrot.lane.b32.xlu0 %v475, 24
      %v3314 = vpop.permute.xlu0 %3313
      %3315 = vrot.lane.b32.xlu0 %v477, 24
      %v3316 = vpop.permute.xlu0 %3315
      %3317 = vrot.lane.b32.xlu0 %v479, 24
      %v3318 = vpop.permute.xlu0 %3317
      %3327 = vrot.lane.b32.xlu0 %v815, 28
      %v3328 = vpop.permute.xlu0 %3327
      %3329 = vrot.lane.b32.xlu0 %v818, 28
      %v3330 = vpop.permute.xlu0 %3329
      %3331 = vrot.lane.b32.xlu0 %v821, 28
      %v3332 = vpop.permute.xlu0 %3331
      %3333 = vrot.lane.b32.xlu0 %v824, 28
      %v3334 = vpop.permute.xlu0 %3333
      %3335 = vrot.lane.b32.xlu0 %v827, 28
      %v3336 = vpop.permute.xlu0 %3335
      %3337 = vrot.lane.b32.xlu0 %v830, 28
      %v3338 = vpop.permute.xlu0 %3337
      %3339 = vrot.lane.b32.xlu0 %v859, 28
      %v3340 = vpop.permute.xlu0 %3339
      %3341 = vrot.lane.b32.xlu0 %v867, 28
      %v3342 = vpop.permute.xlu0 %3341
      %3351 = vrot.lane.b32.xlu0 %v839, 32
      %v3352 = vpop.permute.xlu0 %3351
      %3353 = vrot.lane.b32.xlu0 %v842, 32
      %v3354 = vpop.permute.xlu0 %3353
      %3355 = vrot.lane.b32.xlu0 %v845, 32
      %v3356 = vpop.permute.xlu0 %3355
      %3357 = vrot.lane.b32.xlu0 %v848, 32
      %v3358 = vpop.permute.xlu0 %3357
      %3359 = vrot.lane.b32.xlu0 %v851, 32
      %v3360 = vpop.permute.xlu0 %3359
      %3361 = vrot.lane.b32.xlu0 %v854, 32
      %v3362 = vpop.permute.xlu0 %3361
      %3363 = vrot.lane.b32.xlu0 %v862, 32
      %v3364 = vpop.permute.xlu0 %3363
      %3365 = vrot.lane.b32.xlu0 %v878, 32
      %v3366 = vpop.permute.xlu0 %3365
      %3375 = vrot.lane.b32.xlu0 %v481, 36
      %v3376 = vpop.permute.xlu0 %3375
      %3377 = vrot.lane.b32.xlu0 %v483, 36
      %v3378 = vpop.permute.xlu0 %3377
      %3379 = vrot.lane.b32.xlu0 %v485, 36
      %v3380 = vpop.permute.xlu0 %3379
      %3381 = vrot.lane.b32.xlu0 %v487, 36
      %v3382 = vpop.permute.xlu0 %3381
      %3383 = vrot.lane.b32.xlu0 %v489, 36
      %v3384 = vpop.permute.xlu0 %3383
      %3385 = vrot.lane.b32.xlu0 %v491, 36
      %v3386 = vpop.permute.xlu0 %3385
      %3387 = vrot.lane.b32.xlu0 %v493, 36
      %v3388 = vpop.permute.xlu0 %3387
      %3389 = vrot.lane.b32.xlu0 %v495, 36
      %v3390 = vpop.permute.xlu0 %3389
      %3399 = vrot.lane.b32.xlu0 %v897, 40
      %v3400 = vpop.permute.xlu0 %3399
      %3401 = vrot.lane.b32.xlu0 %v900, 40
      %v3402 = vpop.permute.xlu0 %3401
      %3403 = vrot.lane.b32.xlu0 %v903, 40
      %v3404 = vpop.permute.xlu0 %3403
      %3405 = vrot.lane.b32.xlu0 %v906, 40
      %v3406 = vpop.permute.xlu0 %3405
      %3407 = vrot.lane.b32.xlu0 %v909, 40
      %v3408 = vpop.permute.xlu0 %3407
      %3409 = vrot.lane.b32.xlu0 %v912, 40
      %v3410 = vpop.permute.xlu0 %3409
      %3411 = vrot.lane.b32.xlu0 %v915, 40
      %v3412 = vpop.permute.xlu0 %3411
      %3413 = vrot.lane.b32.xlu0 %v918, 40
      %v3414 = vpop.permute.xlu0 %3413
      %3423 = vrot.lane.b32.xlu0 %v921, 44
      %v3424 = vpop.permute.xlu0 %3423
      %3425 = vrot.lane.b32.xlu0 %v924, 44
      %v3426 = vpop.permute.xlu0 %3425
      %3427 = vrot.lane.b32.xlu0 %v927, 44
      %v3428 = vpop.permute.xlu0 %3427
      %3429 = vrot.lane.b32.xlu0 %v930, 44
      %v3430 = vpop.permute.xlu0 %3429
      %3431 = vrot.lane.b32.xlu0 %v933, 44
      %v3432 = vpop.permute.xlu0 %3431
      %3433 = vrot.lane.b32.xlu0 %v936, 44
      %v3434 = vpop.permute.xlu0 %3433
      %3435 = vrot.lane.b32.xlu0 %v939, 44
      %v3436 = vpop.permute.xlu0 %3435
      %3437 = vrot.lane.b32.xlu0 %v942, 44
      %v3438 = vpop.permute.xlu0 %3437
      %3447 = vrot.lane.b32.xlu0 %v483, 48
      %v3448 = vpop.permute.xlu0 %3447
      %3449 = vrot.lane.b32.xlu0 %v485, 48
      %v3450 = vpop.permute.xlu0 %3449
      %3451 = vrot.lane.b32.xlu0 %v487, 48
      %v3452 = vpop.permute.xlu0 %3451
      %3453 = vrot.lane.b32.xlu0 %v489, 48
      %v3454 = vpop.permute.xlu0 %3453
      %3455 = vrot.lane.b32.xlu0 %v491, 48
      %v3456 = vpop.permute.xlu0 %3455
      %3457 = vrot.lane.b32.xlu0 %v493, 48
      %v3458 = vpop.permute.xlu0 %3457
      %3459 = vrot.lane.b32.xlu0 %v495, 48
      %v3460 = vpop.permute.xlu0 %3459
      %3461 = vrot.lane.b32.xlu0 %v497, 48
      %v3462 = vpop.permute.xlu0 %3461
      %3471 = vrot.lane.b32.xlu0 %v900, 52
      %v3472 = vpop.permute.xlu0 %3471
      %3473 = vrot.lane.b32.xlu0 %v903, 52
      %v3474 = vpop.permute.xlu0 %3473
      %3475 = vrot.lane.b32.xlu0 %v906, 52
      %v3476 = vpop.permute.xlu0 %3475
      %3477 = vrot.lane.b32.xlu0 %v909, 52
      %v3478 = vpop.permute.xlu0 %3477
      %3479 = vrot.lane.b32.xlu0 %v912, 52
      %v3480 = vpop.permute.xlu0 %3479
      %3481 = vrot.lane.b32.xlu0 %v915, 52
      %v3482 = vpop.permute.xlu0 %3481
      %3483 = vrot.lane.b32.xlu0 %v918, 52
      %v3484 = vpop.permute.xlu0 %3483
      %3485 = vrot.lane.b32.xlu0 %v947, 52
      %v3486 = vpop.permute.xlu0 %3485
      %3495 = vrot.lane.b32.xlu0 %v924, 56
      %v3496 = vpop.permute.xlu0 %3495
      %3497 = vrot.lane.b32.xlu0 %v927, 56
      %v3498 = vpop.permute.xlu0 %3497
      %3499 = vrot.lane.b32.xlu0 %v930, 56
      %v3500 = vpop.permute.xlu0 %3499
      %3501 = vrot.lane.b32.xlu0 %v933, 56
      %v3502 = vpop.permute.xlu0 %3501
      %3503 = vrot.lane.b32.xlu0 %v936, 56
      %v3504 = vpop.permute.xlu0 %3503
      %3505 = vrot.lane.b32.xlu0 %v939, 56
      %v3506 = vpop.permute.xlu0 %3505
      %3507 = vrot.lane.b32.xlu0 %v942, 56
      %v3508 = vpop.permute.xlu0 %3507
      %3509 = vrot.lane.b32.xlu0 %v950, 56
      %v3510 = vpop.permute.xlu0 %3509
      %3519 = vrot.lane.b32.xlu0 %v485, 60
      %v3520 = vpop.permute.xlu0 %3519
      %3521 = vrot.lane.b32.xlu0 %v487, 60
      %v3522 = vpop.permute.xlu0 %3521
      %3523 = vrot.lane.b32.xlu0 %v489, 60
      %v3524 = vpop.permute.xlu0 %3523
      %3525 = vrot.lane.b32.xlu0 %v491, 60
      %v3526 = vpop.permute.xlu0 %3525
      %3527 = vrot.lane.b32.xlu0 %v493, 60
      %v3528 = vpop.permute.xlu0 %3527
      %3529 = vrot.lane.b32.xlu0 %v495, 60
      %v3530 = vpop.permute.xlu0 %3529
      %3531 = vrot.lane.b32.xlu0 %v497, 60
      %v3532 = vpop.permute.xlu0 %3531
      %3533 = vrot.lane.b32.xlu0 %v499, 60
      %v3534 = vpop.permute.xlu0 %3533
      %v3543 = vsel %vm1847, %v461, %v3184
      %v3544 = vsel %vm1847, %v463, %v3186
      %v3545 = vsel %vm1847, %v465, %v3188
      %v3546 = vsel %vm1847, %v467, %v3190
      %v3547 = vsel %vm1847, %v469, %v3192
      %v3548 = vsel %vm1847, %v471, %v3194
      %v3549 = vsel %vm1847, %v473, %v3196
      %v3550 = vsel %vm1847, %v475, %v3198
      %v3551 = vsel %vm1856, %v3543, %v3208
      %v3552 = vsel %vm1856, %v3544, %v3210
      %v3553 = vsel %vm1856, %v3545, %v3212
      %v3554 = vsel %vm1856, %v3546, %v3214
      %v3555 = vsel %vm1856, %v3547, %v3216
      %v3556 = vsel %vm1856, %v3548, %v3218
      %v3557 = vsel %vm1856, %v3549, %v3220
      %v3558 = vsel %vm1856, %v3550, %v3222
      %v3559 = vsel %vm1865, %v3551, %v3232
      %v3560 = vsel %vm1865, %v3552, %v3234
      %v3561 = vsel %vm1865, %v3553, %v3236
      %v3562 = vsel %vm1865, %v3554, %v3238
      %v3563 = vsel %vm1865, %v3555, %v3240
      %v3564 = vsel %vm1865, %v3556, %v3242
      %v3565 = vsel %vm1865, %v3557, %v3244
      %v3566 = vsel %vm1865, %v3558, %v3246
      %v3567 = vsel %vm1874, %v3559, %v3256
      %v3568 = vsel %vm1874, %v3560, %v3258
      %v3569 = vsel %vm1874, %v3561, %v3260
      %v3570 = vsel %vm1874, %v3562, %v3262
      %v3571 = vsel %vm1874, %v3563, %v3264
      %v3572 = vsel %vm1874, %v3564, %v3266
      %v3573 = vsel %vm1874, %v3565, %v3268
      %v3574 = vsel %vm1874, %v3566, %v3270
      %v3575 = vsel %vm1883, %v3567, %v3280
      %v3576 = vsel %vm1883, %v3568, %v3282
      %v3577 = vsel %vm1883, %v3569, %v3284
      %v3578 = vsel %vm1883, %v3570, %v3286
      %v3579 = vsel %vm1883, %v3571, %v3288
      %v3580 = vsel %vm1883, %v3572, %v3290
      %v3581 = vsel %vm1883, %v3573, %v3292
      %v3582 = vsel %vm1883, %v3574, %v3294
      %v3583 = vsel %vm1892, %v3575, %v3304
      %v3584 = vsel %vm1892, %v3576, %v3306
      %v3585 = vsel %vm1892, %v3577, %v3308
      %v3586 = vsel %vm1892, %v3578, %v3310
      %v3587 = vsel %vm1892, %v3579, %v3312
      %v3588 = vsel %vm1892, %v3580, %v3314
      %v3589 = vsel %vm1892, %v3581, %v3316
      %v3590 = vsel %vm1892, %v3582, %v3318
      %v3591 = vsel %vm1901, %v3583, %v3328
      %v3592 = vsel %vm1901, %v3584, %v3330
      %v3593 = vsel %vm1901, %v3585, %v3332
      %v3594 = vsel %vm1901, %v3586, %v3334
      %v3595 = vsel %vm1901, %v3587, %v3336
      %v3596 = vsel %vm1901, %v3588, %v3338
      %v3597 = vsel %vm1901, %v3589, %v3340
      %v3598 = vsel %vm1901, %v3590, %v3342
      %v3599 = vsel %vm1910, %v3591, %v3352
      %v3600 = vsel %vm1910, %v3592, %v3354
      %v3601 = vsel %vm1910, %v3593, %v3356
      %v3602 = vsel %vm1910, %v3594, %v3358
      %v3603 = vsel %vm1910, %v3595, %v3360
      %v3604 = vsel %vm1910, %v3596, %v3362
      %v3605 = vsel %vm1910, %v3597, %v3364
      %v3606 = vsel %vm1910, %v3598, %v3366
      %v3607 = vsel %vm1919, %v3599, %v3376
      %v3608 = vsel %vm1919, %v3600, %v3378
      %v3609 = vsel %vm1919, %v3601, %v3380
      %v3610 = vsel %vm1919, %v3602, %v3382
      %v3611 = vsel %vm1919, %v3603, %v3384
      %v3612 = vsel %vm1919, %v3604, %v3386
      %v3613 = vsel %vm1919, %v3605, %v3388
      %v3614 = vsel %vm1919, %v3606, %v3390
      %v3615 = vsel %vm1928, %v3607, %v3400
      %v3616 = vsel %vm1928, %v3608, %v3402
      %v3617 = vsel %vm1928, %v3609, %v3404
      %v3618 = vsel %vm1928, %v3610, %v3406
      %v3619 = vsel %vm1928, %v3611, %v3408
      %v3620 = vsel %vm1928, %v3612, %v3410
      %v3621 = vsel %vm1928, %v3613, %v3412
      %v3622 = vsel %vm1928, %v3614, %v3414
      %v3623 = vsel %vm1937, %v3615, %v3424
      %v3624 = vsel %vm1937, %v3616, %v3426
      %v3625 = vsel %vm1937, %v3617, %v3428
      %v3626 = vsel %vm1937, %v3618, %v3430
      %v3627 = vsel %vm1937, %v3619, %v3432
      %v3628 = vsel %vm1937, %v3620, %v3434
      %v3629 = vsel %vm1937, %v3621, %v3436
      %v3630 = vsel %vm1937, %v3622, %v3438
      %v3631 = vsel %vm1946, %v3623, %v3448
      %v3632 = vsel %vm1946, %v3624, %v3450
      %v3633 = vsel %vm1946, %v3625, %v3452
      %v3634 = vsel %vm1946, %v3626, %v3454
      %v3635 = vsel %vm1946, %v3627, %v3456
      %v3636 = vsel %vm1946, %v3628, %v3458
      %v3637 = vsel %vm1946, %v3629, %v3460
      %v3638 = vsel %vm1946, %v3630, %v3462
      %v3639 = vsel %vm1955, %v3631, %v3472
      %v3640 = vsel %vm1955, %v3632, %v3474
      %v3641 = vsel %vm1955, %v3633, %v3476
      %v3642 = vsel %vm1955, %v3634, %v3478
      %v3643 = vsel %vm1955, %v3635, %v3480
      %v3644 = vsel %vm1955, %v3636, %v3482
      %v3645 = vsel %vm1955, %v3637, %v3484
      %v3646 = vsel %vm1955, %v3638, %v3486
      %v3647 = vsel %vm1964, %v3639, %v3496
      %v3648 = vsel %vm1964, %v3640, %v3498
      %v3649 = vsel %vm1964, %v3641, %v3500
      %v3650 = vsel %vm1964, %v3642, %v3502
      %v3651 = vsel %vm1964, %v3643, %v3504
      %v3652 = vsel %vm1964, %v3644, %v3506
      %v3653 = vsel %vm1964, %v3645, %v3508
      %v3654 = vsel %vm1964, %v3646, %v3510
      %v3655 = vsel %vm1973, %v3647, %v3520
      %v3656 = vsel %vm1973, %v3648, %v3522
      %v3657 = vsel %vm1973, %v3649, %v3524
      %v3658 = vsel %vm1973, %v3650, %v3526
      %v3659 = vsel %vm1973, %v3651, %v3528
      %v3660 = vsel %vm1973, %v3652, %v3530
      %v3661 = vsel %vm1973, %v3653, %v3532
      %v3662 = vsel %vm1973, %v3654, %v3534
      %3663 = vrot.lane.b32.xlu0 %v927, 4
      %v3664 = vpop.permute.xlu0 %3663
      %3665 = vrot.lane.b32.xlu0 %v930, 4
      %v3666 = vpop.permute.xlu0 %3665
      %3667 = vrot.lane.b32.xlu0 %v933, 4
      %v3668 = vpop.permute.xlu0 %3667
      %3669 = vrot.lane.b32.xlu0 %v936, 4
      %v3670 = vpop.permute.xlu0 %3669
      %3671 = vrot.lane.b32.xlu0 %v939, 4
      %v3672 = vpop.permute.xlu0 %3671
      %3673 = vrot.lane.b32.xlu0 %v942, 4
      %v3674 = vpop.permute.xlu0 %3673
      %3675 = vrot.lane.b32.xlu0 %v950, 4
      %v3676 = vpop.permute.xlu0 %3675
      %3677 = vrot.lane.b32.xlu0 %v966, 4
      %v3678 = vpop.permute.xlu0 %3677
      %3687 = vrot.lane.b32.xlu0 %v501, 8
      %v3688 = vpop.permute.xlu0 %3687
      %3689 = vrot.lane.b32.xlu0 %v503, 8
      %v3690 = vpop.permute.xlu0 %3689
      %3691 = vrot.lane.b32.xlu0 %v505, 8
      %v3692 = vpop.permute.xlu0 %3691
      %3693 = vrot.lane.b32.xlu0 %v507, 8
      %v3694 = vpop.permute.xlu0 %3693
      %3695 = vrot.lane.b32.xlu0 %v509, 8
      %v3696 = vpop.permute.xlu0 %3695
      %3697 = vrot.lane.b32.xlu0 %v511, 8
      %v3698 = vpop.permute.xlu0 %3697
      %3699 = vrot.lane.b32.xlu0 %v513, 8
      %v3700 = vpop.permute.xlu0 %3699
      %3701 = vrot.lane.b32.xlu0 %v515, 8
      %v3702 = vpop.permute.xlu0 %3701
      %3711 = vrot.lane.b32.xlu0 %v985, 12
      %v3712 = vpop.permute.xlu0 %3711
      %3713 = vrot.lane.b32.xlu0 %v988, 12
      %v3714 = vpop.permute.xlu0 %3713
      %3715 = vrot.lane.b32.xlu0 %v991, 12
      %v3716 = vpop.permute.xlu0 %3715
      %3717 = vrot.lane.b32.xlu0 %v994, 12
      %v3718 = vpop.permute.xlu0 %3717
      %3719 = vrot.lane.b32.xlu0 %v997, 12
      %v3720 = vpop.permute.xlu0 %3719
      %3721 = vrot.lane.b32.xlu0 %v1000, 12
      %v3722 = vpop.permute.xlu0 %3721
      %3723 = vrot.lane.b32.xlu0 %v1003, 12
      %v3724 = vpop.permute.xlu0 %3723
      %3725 = vrot.lane.b32.xlu0 %v1006, 12
      %v3726 = vpop.permute.xlu0 %3725
      %3735 = vrot.lane.b32.xlu0 %v1009, 16
      %v3736 = vpop.permute.xlu0 %3735
      %3737 = vrot.lane.b32.xlu0 %v1012, 16
      %v3738 = vpop.permute.xlu0 %3737
      %3739 = vrot.lane.b32.xlu0 %v1015, 16
      %v3740 = vpop.permute.xlu0 %3739
      %3741 = vrot.lane.b32.xlu0 %v1018, 16
      %v3742 = vpop.permute.xlu0 %3741
      %3743 = vrot.lane.b32.xlu0 %v1021, 16
      %v3744 = vpop.permute.xlu0 %3743
      %3745 = vrot.lane.b32.xlu0 %v1024, 16
      %v3746 = vpop.permute.xlu0 %3745
      %3747 = vrot.lane.b32.xlu0 %v1027, 16
      %v3748 = vpop.permute.xlu0 %3747
      %3749 = vrot.lane.b32.xlu0 %v1030, 16
      %v3750 = vpop.permute.xlu0 %3749
      %3759 = vrot.lane.b32.xlu0 %v503, 20
      %v3760 = vpop.permute.xlu0 %3759
      %3761 = vrot.lane.b32.xlu0 %v505, 20
      %v3762 = vpop.permute.xlu0 %3761
      %3763 = vrot.lane.b32.xlu0 %v507, 20
      %v3764 = vpop.permute.xlu0 %3763
      %3765 = vrot.lane.b32.xlu0 %v509, 20
      %v3766 = vpop.permute.xlu0 %3765
      %3767 = vrot.lane.b32.xlu0 %v511, 20
      %v3768 = vpop.permute.xlu0 %3767
      %3769 = vrot.lane.b32.xlu0 %v513, 20
      %v3770 = vpop.permute.xlu0 %3769
      %3771 = vrot.lane.b32.xlu0 %v515, 20
      %v3772 = vpop.permute.xlu0 %3771
      %3773 = vrot.lane.b32.xlu0 %v517, 20
      %v3774 = vpop.permute.xlu0 %3773
      %3783 = vrot.lane.b32.xlu0 %v988, 24
      %v3784 = vpop.permute.xlu0 %3783
      %3785 = vrot.lane.b32.xlu0 %v991, 24
      %v3786 = vpop.permute.xlu0 %3785
      %3787 = vrot.lane.b32.xlu0 %v994, 24
      %v3788 = vpop.permute.xlu0 %3787
      %3789 = vrot.lane.b32.xlu0 %v997, 24
      %v3790 = vpop.permute.xlu0 %3789
      %3791 = vrot.lane.b32.xlu0 %v1000, 24
      %v3792 = vpop.permute.xlu0 %3791
      %3793 = vrot.lane.b32.xlu0 %v1003, 24
      %v3794 = vpop.permute.xlu0 %3793
      %3795 = vrot.lane.b32.xlu0 %v1006, 24
      %v3796 = vpop.permute.xlu0 %3795
      %3797 = vrot.lane.b32.xlu0 %v1035, 24
      %v3798 = vpop.permute.xlu0 %3797
      %3807 = vrot.lane.b32.xlu0 %v1012, 28
      %v3808 = vpop.permute.xlu0 %3807
      %3809 = vrot.lane.b32.xlu0 %v1015, 28
      %v3810 = vpop.permute.xlu0 %3809
      %3811 = vrot.lane.b32.xlu0 %v1018, 28
      %v3812 = vpop.permute.xlu0 %3811
      %3813 = vrot.lane.b32.xlu0 %v1021, 28
      %v3814 = vpop.permute.xlu0 %3813
      %3815 = vrot.lane.b32.xlu0 %v1024, 28
      %v3816 = vpop.permute.xlu0 %3815
      %3817 = vrot.lane.b32.xlu0 %v1027, 28
      %v3818 = vpop.permute.xlu0 %3817
      %3819 = vrot.lane.b32.xlu0 %v1030, 28
      %v3820 = vpop.permute.xlu0 %3819
      %3821 = vrot.lane.b32.xlu0 %v1038, 28
      %v3822 = vpop.permute.xlu0 %3821
      %3831 = vrot.lane.b32.xlu0 %v505, 32
      %v3832 = vpop.permute.xlu0 %3831
      %3833 = vrot.lane.b32.xlu0 %v507, 32
      %v3834 = vpop.permute.xlu0 %3833
      %3835 = vrot.lane.b32.xlu0 %v509, 32
      %v3836 = vpop.permute.xlu0 %3835
      %3837 = vrot.lane.b32.xlu0 %v511, 32
      %v3838 = vpop.permute.xlu0 %3837
      %3839 = vrot.lane.b32.xlu0 %v513, 32
      %v3840 = vpop.permute.xlu0 %3839
      %3841 = vrot.lane.b32.xlu0 %v515, 32
      %v3842 = vpop.permute.xlu0 %3841
      %3843 = vrot.lane.b32.xlu0 %v517, 32
      %v3844 = vpop.permute.xlu0 %3843
      %3845 = vrot.lane.b32.xlu0 %v519, 32
      %v3846 = vpop.permute.xlu0 %3845
      %3855 = vrot.lane.b32.xlu0 %v991, 36
      %v3856 = vpop.permute.xlu0 %3855
      %3857 = vrot.lane.b32.xlu0 %v994, 36
      %v3858 = vpop.permute.xlu0 %3857
      %3859 = vrot.lane.b32.xlu0 %v997, 36
      %v3860 = vpop.permute.xlu0 %3859
      %3861 = vrot.lane.b32.xlu0 %v1000, 36
      %v3862 = vpop.permute.xlu0 %3861
      %3863 = vrot.lane.b32.xlu0 %v1003, 36
      %v3864 = vpop.permute.xlu0 %3863
      %3865 = vrot.lane.b32.xlu0 %v1006, 36
      %v3866 = vpop.permute.xlu0 %3865
      %3867 = vrot.lane.b32.xlu0 %v1035, 36
      %v3868 = vpop.permute.xlu0 %3867
      %3869 = vrot.lane.b32.xlu0 %v1043, 36
      %v3870 = vpop.permute.xlu0 %3869
      %3879 = vrot.lane.b32.xlu0 %v1015, 40
      %v3880 = vpop.permute.xlu0 %3879
      %3881 = vrot.lane.b32.xlu0 %v1018, 40
      %v3882 = vpop.permute.xlu0 %3881
      %3883 = vrot.lane.b32.xlu0 %v1021, 40
      %v3884 = vpop.permute.xlu0 %3883
      %3885 = vrot.lane.b32.xlu0 %v1024, 40
      %v3886 = vpop.permute.xlu0 %3885
      %3887 = vrot.lane.b32.xlu0 %v1027, 40
      %v3888 = vpop.permute.xlu0 %3887
      %3889 = vrot.lane.b32.xlu0 %v1030, 40
      %v3890 = vpop.permute.xlu0 %3889
      %3891 = vrot.lane.b32.xlu0 %v1038, 40
      %v3892 = vpop.permute.xlu0 %3891
      %3893 = vrot.lane.b32.xlu0 %v1054, 40
      %v3894 = vpop.permute.xlu0 %3893
      %v3903 = vsel %vm1847, %v903, %v3664
      %v3904 = vsel %vm1847, %v906, %v3666
      %v3905 = vsel %vm1847, %v909, %v3668
      %v3906 = vsel %vm1847, %v912, %v3670
      %v3907 = vsel %vm1847, %v915, %v3672
      %v3908 = vsel %vm1847, %v918, %v3674
      %v3909 = vsel %vm1847, %v947, %v3676
      %v3910 = vsel %vm1847, %v955, %v3678
      %v3911 = vsel %vm1856, %v3903, %v3688
      %v3912 = vsel %vm1856, %v3904, %v3690
      %v3913 = vsel %vm1856, %v3905, %v3692
      %v3914 = vsel %vm1856, %v3906, %v3694
      %v3915 = vsel %vm1856, %v3907, %v3696
      %v3916 = vsel %vm1856, %v3908, %v3698
      %v3917 = vsel %vm1856, %v3909, %v3700
      %v3918 = vsel %vm1856, %v3910, %v3702
      %v3919 = vsel %vm1865, %v3911, %v3712
      %v3920 = vsel %vm1865, %v3912, %v3714
      %v3921 = vsel %vm1865, %v3913, %v3716
      %v3922 = vsel %vm1865, %v3914, %v3718
      %v3923 = vsel %vm1865, %v3915, %v3720
      %v3924 = vsel %vm1865, %v3916, %v3722
      %v3925 = vsel %vm1865, %v3917, %v3724
      %v3926 = vsel %vm1865, %v3918, %v3726
      %v3927 = vsel %vm1874, %v3919, %v3736
      %v3928 = vsel %vm1874, %v3920, %v3738
      %v3929 = vsel %vm1874, %v3921, %v3740
      %v3930 = vsel %vm1874, %v3922, %v3742
      %v3931 = vsel %vm1874, %v3923, %v3744
      %v3932 = vsel %vm1874, %v3924, %v3746
      %v3933 = vsel %vm1874, %v3925, %v3748
      %v3934 = vsel %vm1874, %v3926, %v3750
      %v3935 = vsel %vm1883, %v3927, %v3760
      %v3936 = vsel %vm1883, %v3928, %v3762
      %v3937 = vsel %vm1883, %v3929, %v3764
      %v3938 = vsel %vm1883, %v3930, %v3766
      %v3939 = vsel %vm1883, %v3931, %v3768
      %v3940 = vsel %vm1883, %v3932, %v3770
      %v3941 = vsel %vm1883, %v3933, %v3772
      %v3942 = vsel %vm1883, %v3934, %v3774
      %v3943 = vsel %vm1892, %v3935, %v3784
      %v3944 = vsel %vm1892, %v3936, %v3786
      %v3945 = vsel %vm1892, %v3937, %v3788
      %v3946 = vsel %vm1892, %v3938, %v3790
      %v3947 = vsel %vm1892, %v3939, %v3792
      %v3948 = vsel %vm1892, %v3940, %v3794
      %v3949 = vsel %vm1892, %v3941, %v3796
      %v3950 = vsel %vm1892, %v3942, %v3798
      %v3951 = vsel %vm1901, %v3943, %v3808
      %v3952 = vsel %vm1901, %v3944, %v3810
      %v3953 = vsel %vm1901, %v3945, %v3812
      %v3954 = vsel %vm1901, %v3946, %v3814
      %v3955 = vsel %vm1901, %v3947, %v3816
      %v3956 = vsel %vm1901, %v3948, %v3818
      %v3957 = vsel %vm1901, %v3949, %v3820
      %v3958 = vsel %vm1901, %v3950, %v3822
      %v3959 = vsel %vm1910, %v3951, %v3832
      %v3960 = vsel %vm1910, %v3952, %v3834
      %v3961 = vsel %vm1910, %v3953, %v3836
      %v3962 = vsel %vm1910, %v3954, %v3838
      %v3963 = vsel %vm1910, %v3955, %v3840
      %v3964 = vsel %vm1910, %v3956, %v3842
      %v3965 = vsel %vm1910, %v3957, %v3844
      %v3966 = vsel %vm1910, %v3958, %v3846
      %v3967 = vsel %vm1919, %v3959, %v3856
      %v3968 = vsel %vm1919, %v3960, %v3858
      %v3969 = vsel %vm1919, %v3961, %v3860
      %v3970 = vsel %vm1919, %v3962, %v3862
      %v3971 = vsel %vm1919, %v3963, %v3864
      %v3972 = vsel %vm1919, %v3964, %v3866
      %v3973 = vsel %vm1919, %v3965, %v3868
      %v3974 = vsel %vm1919, %v3966, %v3870
      %v3975 = vsel %vm1928, %v3967, %v3880
      %v3976 = vsel %vm1928, %v3968, %v3882
      %v3977 = vsel %vm1928, %v3969, %v3884
      %v3978 = vsel %vm1928, %v3970, %v3886
      %v3979 = vsel %vm1928, %v3971, %v3888
      %v3980 = vsel %vm1928, %v3972, %v3890
      %v3981 = vsel %vm1928, %v3973, %v3892
      %v3982 = vsel %vm1928, %v3974, %v3894
      %3991 = vrot.lane.b32.xlu0 %v3975, 64
      %v3992 = vpop.permute.xlu0 %3991
      %3993 = vrot.lane.b32.xlu0 %v3976, 64
      %v3994 = vpop.permute.xlu0 %3993
      %3995 = vrot.lane.b32.xlu0 %v3977, 64
      %v3996 = vpop.permute.xlu0 %3995
      %3997 = vrot.lane.b32.xlu0 %v3978, 64
      %v3998 = vpop.permute.xlu0 %3997
      %3999 = vrot.lane.b32.xlu0 %v3979, 64
      %v4000 = vpop.permute.xlu0 %3999
      %4001 = vrot.lane.b32.xlu0 %v3980, 64
      %v4002 = vpop.permute.xlu0 %4001
      %4003 = vrot.lane.b32.xlu0 %v3981, 64
      %v4004 = vpop.permute.xlu0 %4003
      %4005 = vrot.lane.b32.xlu0 %v3982, 64
      %v4006 = vpop.permute.xlu0 %4005
      %v4015 = vsel %vm2334, %v3655, %v3992
      %v4016 = vsel %vm2334, %v3656, %v3994
      %v4017 = vsel %vm2334, %v3657, %v3996
      %v4018 = vsel %vm2334, %v3658, %v3998
      %v4019 = vsel %vm2334, %v3659, %v4000
      %v4020 = vsel %vm2334, %v3660, %v4002
      %v4021 = vsel %vm2334, %v3661, %v4004
      %v4022 = vsel %vm2334, %v3662, %v4006
      %4023 = vrot.lane.b32.xlu0 %v897, 4
      %v4024 = vpop.permute.xlu0 %4023
      %4025 = vrot.lane.b32.xlu0 %v900, 4
      %v4026 = vpop.permute.xlu0 %4025
      %4027 = vrot.lane.b32.xlu0 %v903, 4
      %v4028 = vpop.permute.xlu0 %4027
      %4029 = vrot.lane.b32.xlu0 %v906, 4
      %v4030 = vpop.permute.xlu0 %4029
      %4031 = vrot.lane.b32.xlu0 %v909, 4
      %v4032 = vpop.permute.xlu0 %4031
      %4033 = vrot.lane.b32.xlu0 %v912, 4
      %v4034 = vpop.permute.xlu0 %4033
      %4035 = vrot.lane.b32.xlu0 %v915, 4
      %v4036 = vpop.permute.xlu0 %4035
      %4037 = vrot.lane.b32.xlu0 %v918, 4
      %v4038 = vpop.permute.xlu0 %4037
      %4047 = vrot.lane.b32.xlu0 %v921, 8
      %v4048 = vpop.permute.xlu0 %4047
      %4049 = vrot.lane.b32.xlu0 %v924, 8
      %v4050 = vpop.permute.xlu0 %4049
      %4051 = vrot.lane.b32.xlu0 %v927, 8
      %v4052 = vpop.permute.xlu0 %4051
      %4053 = vrot.lane.b32.xlu0 %v930, 8
      %v4054 = vpop.permute.xlu0 %4053
      %4055 = vrot.lane.b32.xlu0 %v933, 8
      %v4056 = vpop.permute.xlu0 %4055
      %4057 = vrot.lane.b32.xlu0 %v936, 8
      %v4058 = vpop.permute.xlu0 %4057
      %4059 = vrot.lane.b32.xlu0 %v939, 8
      %v4060 = vpop.permute.xlu0 %4059
      %4061 = vrot.lane.b32.xlu0 %v942, 8
      %v4062 = vpop.permute.xlu0 %4061
      %4071 = vrot.lane.b32.xlu0 %v483, 12
      %v4072 = vpop.permute.xlu0 %4071
      %4073 = vrot.lane.b32.xlu0 %v485, 12
      %v4074 = vpop.permute.xlu0 %4073
      %4075 = vrot.lane.b32.xlu0 %v487, 12
      %v4076 = vpop.permute.xlu0 %4075
      %4077 = vrot.lane.b32.xlu0 %v489, 12
      %v4078 = vpop.permute.xlu0 %4077
      %4079 = vrot.lane.b32.xlu0 %v491, 12
      %v4080 = vpop.permute.xlu0 %4079
      %4081 = vrot.lane.b32.xlu0 %v493, 12
      %v4082 = vpop.permute.xlu0 %4081
      %4083 = vrot.lane.b32.xlu0 %v495, 12
      %v4084 = vpop.permute.xlu0 %4083
      %4085 = vrot.lane.b32.xlu0 %v497, 12
      %v4086 = vpop.permute.xlu0 %4085
      %4095 = vrot.lane.b32.xlu0 %v900, 16
      %v4096 = vpop.permute.xlu0 %4095
      %4097 = vrot.lane.b32.xlu0 %v903, 16
      %v4098 = vpop.permute.xlu0 %4097
      %4099 = vrot.lane.b32.xlu0 %v906, 16
      %v4100 = vpop.permute.xlu0 %4099
      %4101 = vrot.lane.b32.xlu0 %v909, 16
      %v4102 = vpop.permute.xlu0 %4101
      %4103 = vrot.lane.b32.xlu0 %v912, 16
      %v4104 = vpop.permute.xlu0 %4103
      %4105 = vrot.lane.b32.xlu0 %v915, 16
      %v4106 = vpop.permute.xlu0 %4105
      %4107 = vrot.lane.b32.xlu0 %v918, 16
      %v4108 = vpop.permute.xlu0 %4107
      %4109 = vrot.lane.b32.xlu0 %v947, 16
      %v4110 = vpop.permute.xlu0 %4109
      %4119 = vrot.lane.b32.xlu0 %v924, 20
      %v4120 = vpop.permute.xlu0 %4119
      %4121 = vrot.lane.b32.xlu0 %v927, 20
      %v4122 = vpop.permute.xlu0 %4121
      %4123 = vrot.lane.b32.xlu0 %v930, 20
      %v4124 = vpop.permute.xlu0 %4123
      %4125 = vrot.lane.b32.xlu0 %v933, 20
      %v4126 = vpop.permute.xlu0 %4125
      %4127 = vrot.lane.b32.xlu0 %v936, 20
      %v4128 = vpop.permute.xlu0 %4127
      %4129 = vrot.lane.b32.xlu0 %v939, 20
      %v4130 = vpop.permute.xlu0 %4129
      %4131 = vrot.lane.b32.xlu0 %v942, 20
      %v4132 = vpop.permute.xlu0 %4131
      %4133 = vrot.lane.b32.xlu0 %v950, 20
      %v4134 = vpop.permute.xlu0 %4133
      %4143 = vrot.lane.b32.xlu0 %v485, 24
      %v4144 = vpop.permute.xlu0 %4143
      %4145 = vrot.lane.b32.xlu0 %v487, 24
      %v4146 = vpop.permute.xlu0 %4145
      %4147 = vrot.lane.b32.xlu0 %v489, 24
      %v4148 = vpop.permute.xlu0 %4147
      %4149 = vrot.lane.b32.xlu0 %v491, 24
      %v4150 = vpop.permute.xlu0 %4149
      %4151 = vrot.lane.b32.xlu0 %v493, 24
      %v4152 = vpop.permute.xlu0 %4151
      %4153 = vrot.lane.b32.xlu0 %v495, 24
      %v4154 = vpop.permute.xlu0 %4153
      %4155 = vrot.lane.b32.xlu0 %v497, 24
      %v4156 = vpop.permute.xlu0 %4155
      %4157 = vrot.lane.b32.xlu0 %v499, 24
      %v4158 = vpop.permute.xlu0 %4157
      %4167 = vrot.lane.b32.xlu0 %v903, 28
      %v4168 = vpop.permute.xlu0 %4167
      %4169 = vrot.lane.b32.xlu0 %v906, 28
      %v4170 = vpop.permute.xlu0 %4169
      %4171 = vrot.lane.b32.xlu0 %v909, 28
      %v4172 = vpop.permute.xlu0 %4171
      %4173 = vrot.lane.b32.xlu0 %v912, 28
      %v4174 = vpop.permute.xlu0 %4173
      %4175 = vrot.lane.b32.xlu0 %v915, 28
      %v4176 = vpop.permute.xlu0 %4175
      %4177 = vrot.lane.b32.xlu0 %v918, 28
      %v4178 = vpop.permute.xlu0 %4177
      %4179 = vrot.lane.b32.xlu0 %v947, 28
      %v4180 = vpop.permute.xlu0 %4179
      %4181 = vrot.lane.b32.xlu0 %v955, 28
      %v4182 = vpop.permute.xlu0 %4181
      %4191 = vrot.lane.b32.xlu0 %v927, 32
      %v4192 = vpop.permute.xlu0 %4191
      %4193 = vrot.lane.b32.xlu0 %v930, 32
      %v4194 = vpop.permute.xlu0 %4193
      %4195 = vrot.lane.b32.xlu0 %v933, 32
      %v4196 = vpop.permute.xlu0 %4195
      %4197 = vrot.lane.b32.xlu0 %v936, 32
      %v4198 = vpop.permute.xlu0 %4197
      %4199 = vrot.lane.b32.xlu0 %v939, 32
      %v4200 = vpop.permute.xlu0 %4199
      %4201 = vrot.lane.b32.xlu0 %v942, 32
      %v4202 = vpop.permute.xlu0 %4201
      %4203 = vrot.lane.b32.xlu0 %v950, 32
      %v4204 = vpop.permute.xlu0 %4203
      %4205 = vrot.lane.b32.xlu0 %v966, 32
      %v4206 = vpop.permute.xlu0 %4205
      %4215 = vrot.lane.b32.xlu0 %v501, 36
      %v4216 = vpop.permute.xlu0 %4215
      %4217 = vrot.lane.b32.xlu0 %v503, 36
      %v4218 = vpop.permute.xlu0 %4217
      %4219 = vrot.lane.b32.xlu0 %v505, 36
      %v4220 = vpop.permute.xlu0 %4219
      %4221 = vrot.lane.b32.xlu0 %v507, 36
      %v4222 = vpop.permute.xlu0 %4221
      %4223 = vrot.lane.b32.xlu0 %v509, 36
      %v4224 = vpop.permute.xlu0 %4223
      %4225 = vrot.lane.b32.xlu0 %v511, 36
      %v4226 = vpop.permute.xlu0 %4225
      %4227 = vrot.lane.b32.xlu0 %v513, 36
      %v4228 = vpop.permute.xlu0 %4227
      %4229 = vrot.lane.b32.xlu0 %v515, 36
      %v4230 = vpop.permute.xlu0 %4229
      %4239 = vrot.lane.b32.xlu0 %v985, 40
      %v4240 = vpop.permute.xlu0 %4239
      %4241 = vrot.lane.b32.xlu0 %v988, 40
      %v4242 = vpop.permute.xlu0 %4241
      %4243 = vrot.lane.b32.xlu0 %v991, 40
      %v4244 = vpop.permute.xlu0 %4243
      %4245 = vrot.lane.b32.xlu0 %v994, 40
      %v4246 = vpop.permute.xlu0 %4245
      %4247 = vrot.lane.b32.xlu0 %v997, 40
      %v4248 = vpop.permute.xlu0 %4247
      %4249 = vrot.lane.b32.xlu0 %v1000, 40
      %v4250 = vpop.permute.xlu0 %4249
      %4251 = vrot.lane.b32.xlu0 %v1003, 40
      %v4252 = vpop.permute.xlu0 %4251
      %4253 = vrot.lane.b32.xlu0 %v1006, 40
      %v4254 = vpop.permute.xlu0 %4253
      %4263 = vrot.lane.b32.xlu0 %v1009, 44
      %v4264 = vpop.permute.xlu0 %4263
      %4265 = vrot.lane.b32.xlu0 %v1012, 44
      %v4266 = vpop.permute.xlu0 %4265
      %4267 = vrot.lane.b32.xlu0 %v1015, 44
      %v4268 = vpop.permute.xlu0 %4267
      %4269 = vrot.lane.b32.xlu0 %v1018, 44
      %v4270 = vpop.permute.xlu0 %4269
      %4271 = vrot.lane.b32.xlu0 %v1021, 44
      %v4272 = vpop.permute.xlu0 %4271
      %4273 = vrot.lane.b32.xlu0 %v1024, 44
      %v4274 = vpop.permute.xlu0 %4273
      %4275 = vrot.lane.b32.xlu0 %v1027, 44
      %v4276 = vpop.permute.xlu0 %4275
      %4277 = vrot.lane.b32.xlu0 %v1030, 44
      %v4278 = vpop.permute.xlu0 %4277
      %4287 = vrot.lane.b32.xlu0 %v503, 48
      %v4288 = vpop.permute.xlu0 %4287
      %4289 = vrot.lane.b32.xlu0 %v505, 48
      %v4290 = vpop.permute.xlu0 %4289
      %4291 = vrot.lane.b32.xlu0 %v507, 48
      %v4292 = vpop.permute.xlu0 %4291
      %4293 = vrot.lane.b32.xlu0 %v509, 48
      %v4294 = vpop.permute.xlu0 %4293
      %4295 = vrot.lane.b32.xlu0 %v511, 48
      %v4296 = vpop.permute.xlu0 %4295
      %4297 = vrot.lane.b32.xlu0 %v513, 48
      %v4298 = vpop.permute.xlu0 %4297
      %4299 = vrot.lane.b32.xlu0 %v515, 48
      %v4300 = vpop.permute.xlu0 %4299
      %4301 = vrot.lane.b32.xlu0 %v517, 48
      %v4302 = vpop.permute.xlu0 %4301
      %4311 = vrot.lane.b32.xlu0 %v988, 52
      %v4312 = vpop.permute.xlu0 %4311
      %4313 = vrot.lane.b32.xlu0 %v991, 52
      %v4314 = vpop.permute.xlu0 %4313
      %4315 = vrot.lane.b32.xlu0 %v994, 52
      %v4316 = vpop.permute.xlu0 %4315
      %4317 = vrot.lane.b32.xlu0 %v997, 52
      %v4318 = vpop.permute.xlu0 %4317
      %4319 = vrot.lane.b32.xlu0 %v1000, 52
      %v4320 = vpop.permute.xlu0 %4319
      %4321 = vrot.lane.b32.xlu0 %v1003, 52
      %v4322 = vpop.permute.xlu0 %4321
      %4323 = vrot.lane.b32.xlu0 %v1006, 52
      %v4324 = vpop.permute.xlu0 %4323
      %4325 = vrot.lane.b32.xlu0 %v1035, 52
      %v4326 = vpop.permute.xlu0 %4325
      %4335 = vrot.lane.b32.xlu0 %v1012, 56
      %v4336 = vpop.permute.xlu0 %4335
      %4337 = vrot.lane.b32.xlu0 %v1015, 56
      %v4338 = vpop.permute.xlu0 %4337
      %4339 = vrot.lane.b32.xlu0 %v1018, 56
      %v4340 = vpop.permute.xlu0 %4339
      %4341 = vrot.lane.b32.xlu0 %v1021, 56
      %v4342 = vpop.permute.xlu0 %4341
      %4343 = vrot.lane.b32.xlu0 %v1024, 56
      %v4344 = vpop.permute.xlu0 %4343
      %4345 = vrot.lane.b32.xlu0 %v1027, 56
      %v4346 = vpop.permute.xlu0 %4345
      %4347 = vrot.lane.b32.xlu0 %v1030, 56
      %v4348 = vpop.permute.xlu0 %4347
      %4349 = vrot.lane.b32.xlu0 %v1038, 56
      %v4350 = vpop.permute.xlu0 %4349
      %4359 = vrot.lane.b32.xlu0 %v505, 60
      %v4360 = vpop.permute.xlu0 %4359
      %4361 = vrot.lane.b32.xlu0 %v507, 60
      %v4362 = vpop.permute.xlu0 %4361
      %4363 = vrot.lane.b32.xlu0 %v509, 60
      %v4364 = vpop.permute.xlu0 %4363
      %4365 = vrot.lane.b32.xlu0 %v511, 60
      %v4366 = vpop.permute.xlu0 %4365
      %4367 = vrot.lane.b32.xlu0 %v513, 60
      %v4368 = vpop.permute.xlu0 %4367
      %4369 = vrot.lane.b32.xlu0 %v515, 60
      %v4370 = vpop.permute.xlu0 %4369
      %4371 = vrot.lane.b32.xlu0 %v517, 60
      %v4372 = vpop.permute.xlu0 %4371
      %4373 = vrot.lane.b32.xlu0 %v519, 60
      %v4374 = vpop.permute.xlu0 %4373
      %v4383 = vsel %vm1847, %v481, %v4024
      %v4384 = vsel %vm1847, %v483, %v4026
      %v4385 = vsel %vm1847, %v485, %v4028
      %v4386 = vsel %vm1847, %v487, %v4030
      %v4387 = vsel %vm1847, %v489, %v4032
      %v4388 = vsel %vm1847, %v491, %v4034
      %v4389 = vsel %vm1847, %v493, %v4036
      %v4390 = vsel %vm1847, %v495, %v4038
      %v4391 = vsel %vm1856, %v4383, %v4048
      %v4392 = vsel %vm1856, %v4384, %v4050
      %v4393 = vsel %vm1856, %v4385, %v4052
      %v4394 = vsel %vm1856, %v4386, %v4054
      %v4395 = vsel %vm1856, %v4387, %v4056
      %v4396 = vsel %vm1856, %v4388, %v4058
      %v4397 = vsel %vm1856, %v4389, %v4060
      %v4398 = vsel %vm1856, %v4390, %v4062
      %v4399 = vsel %vm1865, %v4391, %v4072
      %v4400 = vsel %vm1865, %v4392, %v4074
      %v4401 = vsel %vm1865, %v4393, %v4076
      %v4402 = vsel %vm1865, %v4394, %v4078
      %v4403 = vsel %vm1865, %v4395, %v4080
      %v4404 = vsel %vm1865, %v4396, %v4082
      %v4405 = vsel %vm1865, %v4397, %v4084
      %v4406 = vsel %vm1865, %v4398, %v4086
      %v4407 = vsel %vm1874, %v4399, %v4096
      %v4408 = vsel %vm1874, %v4400, %v4098
      %v4409 = vsel %vm1874, %v4401, %v4100
      %v4410 = vsel %vm1874, %v4402, %v4102
      %v4411 = vsel %vm1874, %v4403, %v4104
      %v4412 = vsel %vm1874, %v4404, %v4106
      %v4413 = vsel %vm1874, %v4405, %v4108
      %v4414 = vsel %vm1874, %v4406, %v4110
      %v4415 = vsel %vm1883, %v4407, %v4120
      %v4416 = vsel %vm1883, %v4408, %v4122
      %v4417 = vsel %vm1883, %v4409, %v4124
      %v4418 = vsel %vm1883, %v4410, %v4126
      %v4419 = vsel %vm1883, %v4411, %v4128
      %v4420 = vsel %vm1883, %v4412, %v4130
      %v4421 = vsel %vm1883, %v4413, %v4132
      %v4422 = vsel %vm1883, %v4414, %v4134
      %v4423 = vsel %vm1892, %v4415, %v4144
      %v4424 = vsel %vm1892, %v4416, %v4146
      %v4425 = vsel %vm1892, %v4417, %v4148
      %v4426 = vsel %vm1892, %v4418, %v4150
      %v4427 = vsel %vm1892, %v4419, %v4152
      %v4428 = vsel %vm1892, %v4420, %v4154
      %v4429 = vsel %vm1892, %v4421, %v4156
      %v4430 = vsel %vm1892, %v4422, %v4158
      %v4431 = vsel %vm1901, %v4423, %v4168
      %v4432 = vsel %vm1901, %v4424, %v4170
      %v4433 = vsel %vm1901, %v4425, %v4172
      %v4434 = vsel %vm1901, %v4426, %v4174
      %v4435 = vsel %vm1901, %v4427, %v4176
      %v4436 = vsel %vm1901, %v4428, %v4178
      %v4437 = vsel %vm1901, %v4429, %v4180
      %v4438 = vsel %vm1901, %v4430, %v4182
      %v4439 = vsel %vm1910, %v4431, %v4192
      %v4440 = vsel %vm1910, %v4432, %v4194
      %v4441 = vsel %vm1910, %v4433, %v4196
      %v4442 = vsel %vm1910, %v4434, %v4198
      %v4443 = vsel %vm1910, %v4435, %v4200
      %v4444 = vsel %vm1910, %v4436, %v4202
      %v4445 = vsel %vm1910, %v4437, %v4204
      %v4446 = vsel %vm1910, %v4438, %v4206
      %v4447 = vsel %vm1919, %v4439, %v4216
      %v4448 = vsel %vm1919, %v4440, %v4218
      %v4449 = vsel %vm1919, %v4441, %v4220
      %v4450 = vsel %vm1919, %v4442, %v4222
      %v4451 = vsel %vm1919, %v4443, %v4224
      %v4452 = vsel %vm1919, %v4444, %v4226
      %v4453 = vsel %vm1919, %v4445, %v4228
      %v4454 = vsel %vm1919, %v4446, %v4230
      %v4455 = vsel %vm1928, %v4447, %v4240
      %v4456 = vsel %vm1928, %v4448, %v4242
      %v4457 = vsel %vm1928, %v4449, %v4244
      %v4458 = vsel %vm1928, %v4450, %v4246
      %v4459 = vsel %vm1928, %v4451, %v4248
      %v4460 = vsel %vm1928, %v4452, %v4250
      %v4461 = vsel %vm1928, %v4453, %v4252
      %v4462 = vsel %vm1928, %v4454, %v4254
      %v4463 = vsel %vm1937, %v4455, %v4264
      %v4464 = vsel %vm1937, %v4456, %v4266
      %v4465 = vsel %vm1937, %v4457, %v4268
      %v4466 = vsel %vm1937, %v4458, %v4270
      %v4467 = vsel %vm1937, %v4459, %v4272
      %v4468 = vsel %vm1937, %v4460, %v4274
      %v4469 = vsel %vm1937, %v4461, %v4276
      %v4470 = vsel %vm1937, %v4462, %v4278
      %v4471 = vsel %vm1946, %v4463, %v4288
      %v4472 = vsel %vm1946, %v4464, %v4290
      %v4473 = vsel %vm1946, %v4465, %v4292
      %v4474 = vsel %vm1946, %v4466, %v4294
      %v4475 = vsel %vm1946, %v4467, %v4296
      %v4476 = vsel %vm1946, %v4468, %v4298
      %v4477 = vsel %vm1946, %v4469, %v4300
      %v4478 = vsel %vm1946, %v4470, %v4302
      %v4479 = vsel %vm1955, %v4471, %v4312
      %v4480 = vsel %vm1955, %v4472, %v4314
      %v4481 = vsel %vm1955, %v4473, %v4316
      %v4482 = vsel %vm1955, %v4474, %v4318
      %v4483 = vsel %vm1955, %v4475, %v4320
      %v4484 = vsel %vm1955, %v4476, %v4322
      %v4485 = vsel %vm1955, %v4477, %v4324
      %v4486 = vsel %vm1955, %v4478, %v4326
      %v4487 = vsel %vm1964, %v4479, %v4336
      %v4488 = vsel %vm1964, %v4480, %v4338
      %v4489 = vsel %vm1964, %v4481, %v4340
      %v4490 = vsel %vm1964, %v4482, %v4342
      %v4491 = vsel %vm1964, %v4483, %v4344
      %v4492 = vsel %vm1964, %v4484, %v4346
      %v4493 = vsel %vm1964, %v4485, %v4348
      %v4494 = vsel %vm1964, %v4486, %v4350
      %v4495 = vsel %vm1973, %v4487, %v4360
      %v4496 = vsel %vm1973, %v4488, %v4362
      %v4497 = vsel %vm1973, %v4489, %v4364
      %v4498 = vsel %vm1973, %v4490, %v4366
      %v4499 = vsel %vm1973, %v4491, %v4368
      %v4500 = vsel %vm1973, %v4492, %v4370
      %v4501 = vsel %vm1973, %v4493, %v4372
      %v4502 = vsel %vm1973, %v4494, %v4374
      %4503 = vrot.lane.b32.xlu0 %v1015, 4
      %v4504 = vpop.permute.xlu0 %4503
      %4505 = vrot.lane.b32.xlu0 %v1018, 4
      %v4506 = vpop.permute.xlu0 %4505
      %4507 = vrot.lane.b32.xlu0 %v1021, 4
      %v4508 = vpop.permute.xlu0 %4507
      %4509 = vrot.lane.b32.xlu0 %v1024, 4
      %v4510 = vpop.permute.xlu0 %4509
      %4511 = vrot.lane.b32.xlu0 %v1027, 4
      %v4512 = vpop.permute.xlu0 %4511
      %4513 = vrot.lane.b32.xlu0 %v1030, 4
      %v4514 = vpop.permute.xlu0 %4513
      %4515 = vrot.lane.b32.xlu0 %v1038, 4
      %v4516 = vpop.permute.xlu0 %4515
      %4517 = vrot.lane.b32.xlu0 %v1054, 4
      %v4518 = vpop.permute.xlu0 %4517
      %4527 = vrot.lane.b32.xlu0 %v521, 8
      %v4528 = vpop.permute.xlu0 %4527
      %4529 = vrot.lane.b32.xlu0 %v523, 8
      %v4530 = vpop.permute.xlu0 %4529
      %4531 = vrot.lane.b32.xlu0 %v525, 8
      %v4532 = vpop.permute.xlu0 %4531
      %4533 = vrot.lane.b32.xlu0 %v527, 8
      %v4534 = vpop.permute.xlu0 %4533
      %4535 = vrot.lane.b32.xlu0 %v529, 8
      %v4536 = vpop.permute.xlu0 %4535
      %4537 = vrot.lane.b32.xlu0 %v531, 8
      %v4538 = vpop.permute.xlu0 %4537
      %4539 = vrot.lane.b32.xlu0 %v533, 8
      %v4540 = vpop.permute.xlu0 %4539
      %4541 = vrot.lane.b32.xlu0 %v535, 8
      %v4542 = vpop.permute.xlu0 %4541
      %4551 = vrot.lane.b32.xlu0 %v1073, 12
      %v4552 = vpop.permute.xlu0 %4551
      %4553 = vrot.lane.b32.xlu0 %v1076, 12
      %v4554 = vpop.permute.xlu0 %4553
      %4555 = vrot.lane.b32.xlu0 %v1079, 12
      %v4556 = vpop.permute.xlu0 %4555
      %4557 = vrot.lane.b32.xlu0 %v1082, 12
      %v4558 = vpop.permute.xlu0 %4557
      %4559 = vrot.lane.b32.xlu0 %v1085, 12
      %v4560 = vpop.permute.xlu0 %4559
      %4561 = vrot.lane.b32.xlu0 %v1088, 12
      %v4562 = vpop.permute.xlu0 %4561
      %4563 = vrot.lane.b32.xlu0 %v1091, 12
      %v4564 = vpop.permute.xlu0 %4563
      %4565 = vrot.lane.b32.xlu0 %v1094, 12
      %v4566 = vpop.permute.xlu0 %4565
      %4575 = vrot.lane.b32.xlu0 %v1097, 16
      %v4576 = vpop.permute.xlu0 %4575
      %4577 = vrot.lane.b32.xlu0 %v1100, 16
      %v4578 = vpop.permute.xlu0 %4577
      %4579 = vrot.lane.b32.xlu0 %v1103, 16
      %v4580 = vpop.permute.xlu0 %4579
      %4581 = vrot.lane.b32.xlu0 %v1106, 16
      %v4582 = vpop.permute.xlu0 %4581
      %4583 = vrot.lane.b32.xlu0 %v1109, 16
      %v4584 = vpop.permute.xlu0 %4583
      %4585 = vrot.lane.b32.xlu0 %v1112, 16
      %v4586 = vpop.permute.xlu0 %4585
      %4587 = vrot.lane.b32.xlu0 %v1115, 16
      %v4588 = vpop.permute.xlu0 %4587
      %4589 = vrot.lane.b32.xlu0 %v1118, 16
      %v4590 = vpop.permute.xlu0 %4589
      %4599 = vrot.lane.b32.xlu0 %v523, 20
      %v4600 = vpop.permute.xlu0 %4599
      %4601 = vrot.lane.b32.xlu0 %v525, 20
      %v4602 = vpop.permute.xlu0 %4601
      %4603 = vrot.lane.b32.xlu0 %v527, 20
      %v4604 = vpop.permute.xlu0 %4603
      %4605 = vrot.lane.b32.xlu0 %v529, 20
      %v4606 = vpop.permute.xlu0 %4605
      %4607 = vrot.lane.b32.xlu0 %v531, 20
      %v4608 = vpop.permute.xlu0 %4607
      %4609 = vrot.lane.b32.xlu0 %v533, 20
      %v4610 = vpop.permute.xlu0 %4609
      %4611 = vrot.lane.b32.xlu0 %v535, 20
      %v4612 = vpop.permute.xlu0 %4611
      %4613 = vrot.lane.b32.xlu0 %v537, 20
      %v4614 = vpop.permute.xlu0 %4613
      %4623 = vrot.lane.b32.xlu0 %v1076, 24
      %v4624 = vpop.permute.xlu0 %4623
      %4625 = vrot.lane.b32.xlu0 %v1079, 24
      %v4626 = vpop.permute.xlu0 %4625
      %4627 = vrot.lane.b32.xlu0 %v1082, 24
      %v4628 = vpop.permute.xlu0 %4627
      %4629 = vrot.lane.b32.xlu0 %v1085, 24
      %v4630 = vpop.permute.xlu0 %4629
      %4631 = vrot.lane.b32.xlu0 %v1088, 24
      %v4632 = vpop.permute.xlu0 %4631
      %4633 = vrot.lane.b32.xlu0 %v1091, 24
      %v4634 = vpop.permute.xlu0 %4633
      %4635 = vrot.lane.b32.xlu0 %v1094, 24
      %v4636 = vpop.permute.xlu0 %4635
      %4637 = vrot.lane.b32.xlu0 %v1123, 24
      %v4638 = vpop.permute.xlu0 %4637
      %4647 = vrot.lane.b32.xlu0 %v1100, 28
      %v4648 = vpop.permute.xlu0 %4647
      %4649 = vrot.lane.b32.xlu0 %v1103, 28
      %v4650 = vpop.permute.xlu0 %4649
      %4651 = vrot.lane.b32.xlu0 %v1106, 28
      %v4652 = vpop.permute.xlu0 %4651
      %4653 = vrot.lane.b32.xlu0 %v1109, 28
      %v4654 = vpop.permute.xlu0 %4653
      %4655 = vrot.lane.b32.xlu0 %v1112, 28
      %v4656 = vpop.permute.xlu0 %4655
      %4657 = vrot.lane.b32.xlu0 %v1115, 28
      %v4658 = vpop.permute.xlu0 %4657
      %4659 = vrot.lane.b32.xlu0 %v1118, 28
      %v4660 = vpop.permute.xlu0 %4659
      %4661 = vrot.lane.b32.xlu0 %v1126, 28
      %v4662 = vpop.permute.xlu0 %4661
      %4671 = vrot.lane.b32.xlu0 %v525, 32
      %v4672 = vpop.permute.xlu0 %4671
      %4673 = vrot.lane.b32.xlu0 %v527, 32
      %v4674 = vpop.permute.xlu0 %4673
      %4675 = vrot.lane.b32.xlu0 %v529, 32
      %v4676 = vpop.permute.xlu0 %4675
      %4677 = vrot.lane.b32.xlu0 %v531, 32
      %v4678 = vpop.permute.xlu0 %4677
      %4679 = vrot.lane.b32.xlu0 %v533, 32
      %v4680 = vpop.permute.xlu0 %4679
      %4681 = vrot.lane.b32.xlu0 %v535, 32
      %v4682 = vpop.permute.xlu0 %4681
      %4683 = vrot.lane.b32.xlu0 %v537, 32
      %v4684 = vpop.permute.xlu0 %4683
      %4685 = vrot.lane.b32.xlu0 %v539, 32
      %v4686 = vpop.permute.xlu0 %4685
      %4695 = vrot.lane.b32.xlu0 %v1079, 36
      %v4696 = vpop.permute.xlu0 %4695
      %4697 = vrot.lane.b32.xlu0 %v1082, 36
      %v4698 = vpop.permute.xlu0 %4697
      %4699 = vrot.lane.b32.xlu0 %v1085, 36
      %v4700 = vpop.permute.xlu0 %4699
      %4701 = vrot.lane.b32.xlu0 %v1088, 36
      %v4702 = vpop.permute.xlu0 %4701
      %4703 = vrot.lane.b32.xlu0 %v1091, 36
      %v4704 = vpop.permute.xlu0 %4703
      %4705 = vrot.lane.b32.xlu0 %v1094, 36
      %v4706 = vpop.permute.xlu0 %4705
      %4707 = vrot.lane.b32.xlu0 %v1123, 36
      %v4708 = vpop.permute.xlu0 %4707
      %4709 = vrot.lane.b32.xlu0 %v1131, 36
      %v4710 = vpop.permute.xlu0 %4709
      %4719 = vrot.lane.b32.xlu0 %v1103, 40
      %v4720 = vpop.permute.xlu0 %4719
      %4721 = vrot.lane.b32.xlu0 %v1106, 40
      %v4722 = vpop.permute.xlu0 %4721
      %4723 = vrot.lane.b32.xlu0 %v1109, 40
      %v4724 = vpop.permute.xlu0 %4723
      %4725 = vrot.lane.b32.xlu0 %v1112, 40
      %v4726 = vpop.permute.xlu0 %4725
      %4727 = vrot.lane.b32.xlu0 %v1115, 40
      %v4728 = vpop.permute.xlu0 %4727
      %4729 = vrot.lane.b32.xlu0 %v1118, 40
      %v4730 = vpop.permute.xlu0 %4729
      %4731 = vrot.lane.b32.xlu0 %v1126, 40
      %v4732 = vpop.permute.xlu0 %4731
      %4733 = vrot.lane.b32.xlu0 %v1142, 40
      %v4734 = vpop.permute.xlu0 %4733
      %v4743 = vsel %vm1847, %v991, %v4504
      %v4744 = vsel %vm1847, %v994, %v4506
      %v4745 = vsel %vm1847, %v997, %v4508
      %v4746 = vsel %vm1847, %v1000, %v4510
      %v4747 = vsel %vm1847, %v1003, %v4512
      %v4748 = vsel %vm1847, %v1006, %v4514
      %v4749 = vsel %vm1847, %v1035, %v4516
      %v4750 = vsel %vm1847, %v1043, %v4518
      %v4751 = vsel %vm1856, %v4743, %v4528
      %v4752 = vsel %vm1856, %v4744, %v4530
      %v4753 = vsel %vm1856, %v4745, %v4532
      %v4754 = vsel %vm1856, %v4746, %v4534
      %v4755 = vsel %vm1856, %v4747, %v4536
      %v4756 = vsel %vm1856, %v4748, %v4538
      %v4757 = vsel %vm1856, %v4749, %v4540
      %v4758 = vsel %vm1856, %v4750, %v4542
      %v4759 = vsel %vm1865, %v4751, %v4552
      %v4760 = vsel %vm1865, %v4752, %v4554
      %v4761 = vsel %vm1865, %v4753, %v4556
      %v4762 = vsel %vm1865, %v4754, %v4558
      %v4763 = vsel %vm1865, %v4755, %v4560
      %v4764 = vsel %vm1865, %v4756, %v4562
      %v4765 = vsel %vm1865, %v4757, %v4564
      %v4766 = vsel %vm1865, %v4758, %v4566
      %v4767 = vsel %vm1874, %v4759, %v4576
      %v4768 = vsel %vm1874, %v4760, %v4578
      %v4769 = vsel %vm1874, %v4761, %v4580
      %v4770 = vsel %vm1874, %v4762, %v4582
      %v4771 = vsel %vm1874, %v4763, %v4584
      %v4772 = vsel %vm1874, %v4764, %v4586
      %v4773 = vsel %vm1874, %v4765, %v4588
      %v4774 = vsel %vm1874, %v4766, %v4590
      %v4775 = vsel %vm1883, %v4767, %v4600
      %v4776 = vsel %vm1883, %v4768, %v4602
      %v4777 = vsel %vm1883, %v4769, %v4604
      %v4778 = vsel %vm1883, %v4770, %v4606
      %v4779 = vsel %vm1883, %v4771, %v4608
      %v4780 = vsel %vm1883, %v4772, %v4610
      %v4781 = vsel %vm1883, %v4773, %v4612
      %v4782 = vsel %vm1883, %v4774, %v4614
      %v4783 = vsel %vm1892, %v4775, %v4624
      %v4784 = vsel %vm1892, %v4776, %v4626
      %v4785 = vsel %vm1892, %v4777, %v4628
      %v4786 = vsel %vm1892, %v4778, %v4630
      %v4787 = vsel %vm1892, %v4779, %v4632
      %v4788 = vsel %vm1892, %v4780, %v4634
      %v4789 = vsel %vm1892, %v4781, %v4636
      %v4790 = vsel %vm1892, %v4782, %v4638
      %v4791 = vsel %vm1901, %v4783, %v4648
      %v4792 = vsel %vm1901, %v4784, %v4650
      %v4793 = vsel %vm1901, %v4785, %v4652
      %v4794 = vsel %vm1901, %v4786, %v4654
      %v4795 = vsel %vm1901, %v4787, %v4656
      %v4796 = vsel %vm1901, %v4788, %v4658
      %v4797 = vsel %vm1901, %v4789, %v4660
      %v4798 = vsel %vm1901, %v4790, %v4662
      %v4799 = vsel %vm1910, %v4791, %v4672
      %v4800 = vsel %vm1910, %v4792, %v4674
      %v4801 = vsel %vm1910, %v4793, %v4676
      %v4802 = vsel %vm1910, %v4794, %v4678
      %v4803 = vsel %vm1910, %v4795, %v4680
      %v4804 = vsel %vm1910, %v4796, %v4682
      %v4805 = vsel %vm1910, %v4797, %v4684
      %v4806 = vsel %vm1910, %v4798, %v4686
      %v4807 = vsel %vm1919, %v4799, %v4696
      %v4808 = vsel %vm1919, %v4800, %v4698
      %v4809 = vsel %vm1919, %v4801, %v4700
      %v4810 = vsel %vm1919, %v4802, %v4702
      %v4811 = vsel %vm1919, %v4803, %v4704
      %v4812 = vsel %vm1919, %v4804, %v4706
      %v4813 = vsel %vm1919, %v4805, %v4708
      %v4814 = vsel %vm1919, %v4806, %v4710
      %v4815 = vsel %vm1928, %v4807, %v4720
      %v4816 = vsel %vm1928, %v4808, %v4722
      %v4817 = vsel %vm1928, %v4809, %v4724
      %v4818 = vsel %vm1928, %v4810, %v4726
      %v4819 = vsel %vm1928, %v4811, %v4728
      %v4820 = vsel %vm1928, %v4812, %v4730
      %v4821 = vsel %vm1928, %v4813, %v4732
      %v4822 = vsel %vm1928, %v4814, %v4734
      %4831 = vrot.lane.b32.xlu0 %v4815, 64
      %v4832 = vpop.permute.xlu0 %4831
      %4833 = vrot.lane.b32.xlu0 %v4816, 64
      %v4834 = vpop.permute.xlu0 %4833
      %4835 = vrot.lane.b32.xlu0 %v4817, 64
      %v4836 = vpop.permute.xlu0 %4835
      %4837 = vrot.lane.b32.xlu0 %v4818, 64
      %v4838 = vpop.permute.xlu0 %4837
      %4839 = vrot.lane.b32.xlu0 %v4819, 64
      %v4840 = vpop.permute.xlu0 %4839
      %4841 = vrot.lane.b32.xlu0 %v4820, 64
      %v4842 = vpop.permute.xlu0 %4841
      %4843 = vrot.lane.b32.xlu0 %v4821, 64
      %v4844 = vpop.permute.xlu0 %4843
      %4845 = vrot.lane.b32.xlu0 %v4822, 64
      %v4846 = vpop.permute.xlu0 %4845
      %v4855 = vsel %vm2334, %v4495, %v4832
      %v4856 = vsel %vm2334, %v4496, %v4834
      %v4857 = vsel %vm2334, %v4497, %v4836
      %v4858 = vsel %vm2334, %v4498, %v4838
      %v4859 = vsel %vm2334, %v4499, %v4840
      %v4860 = vsel %vm2334, %v4500, %v4842
      %v4861 = vsel %vm2334, %v4501, %v4844
      %v4862 = vsel %vm2334, %v4502, %v4846
      %4863 = vrot.lane.b32.xlu0 %v985, 4
      %v4864 = vpop.permute.xlu0 %4863
      %4865 = vrot.lane.b32.xlu0 %v988, 4
      %v4866 = vpop.permute.xlu0 %4865
      %4867 = vrot.lane.b32.xlu0 %v991, 4
      %v4868 = vpop.permute.xlu0 %4867
      %4869 = vrot.lane.b32.xlu0 %v994, 4
      %v4870 = vpop.permute.xlu0 %4869
      %4871 = vrot.lane.b32.xlu0 %v997, 4
      %v4872 = vpop.permute.xlu0 %4871
      %4873 = vrot.lane.b32.xlu0 %v1000, 4
      %v4874 = vpop.permute.xlu0 %4873
      %4875 = vrot.lane.b32.xlu0 %v1003, 4
      %v4876 = vpop.permute.xlu0 %4875
      %4877 = vrot.lane.b32.xlu0 %v1006, 4
      %v4878 = vpop.permute.xlu0 %4877
      %4887 = vrot.lane.b32.xlu0 %v1009, 8
      %v4888 = vpop.permute.xlu0 %4887
      %4889 = vrot.lane.b32.xlu0 %v1012, 8
      %v4890 = vpop.permute.xlu0 %4889
      %4891 = vrot.lane.b32.xlu0 %v1015, 8
      %v4892 = vpop.permute.xlu0 %4891
      %4893 = vrot.lane.b32.xlu0 %v1018, 8
      %v4894 = vpop.permute.xlu0 %4893
      %4895 = vrot.lane.b32.xlu0 %v1021, 8
      %v4896 = vpop.permute.xlu0 %4895
      %4897 = vrot.lane.b32.xlu0 %v1024, 8
      %v4898 = vpop.permute.xlu0 %4897
      %4899 = vrot.lane.b32.xlu0 %v1027, 8
      %v4900 = vpop.permute.xlu0 %4899
      %4901 = vrot.lane.b32.xlu0 %v1030, 8
      %v4902 = vpop.permute.xlu0 %4901
      %4911 = vrot.lane.b32.xlu0 %v503, 12
      %v4912 = vpop.permute.xlu0 %4911
      %4913 = vrot.lane.b32.xlu0 %v505, 12
      %v4914 = vpop.permute.xlu0 %4913
      %4915 = vrot.lane.b32.xlu0 %v507, 12
      %v4916 = vpop.permute.xlu0 %4915
      %4917 = vrot.lane.b32.xlu0 %v509, 12
      %v4918 = vpop.permute.xlu0 %4917
      %4919 = vrot.lane.b32.xlu0 %v511, 12
      %v4920 = vpop.permute.xlu0 %4919
      %4921 = vrot.lane.b32.xlu0 %v513, 12
      %v4922 = vpop.permute.xlu0 %4921
      %4923 = vrot.lane.b32.xlu0 %v515, 12
      %v4924 = vpop.permute.xlu0 %4923
      %4925 = vrot.lane.b32.xlu0 %v517, 12
      %v4926 = vpop.permute.xlu0 %4925
      %4935 = vrot.lane.b32.xlu0 %v988, 16
      %v4936 = vpop.permute.xlu0 %4935
      %4937 = vrot.lane.b32.xlu0 %v991, 16
      %v4938 = vpop.permute.xlu0 %4937
      %4939 = vrot.lane.b32.xlu0 %v994, 16
      %v4940 = vpop.permute.xlu0 %4939
      %4941 = vrot.lane.b32.xlu0 %v997, 16
      %v4942 = vpop.permute.xlu0 %4941
      %4943 = vrot.lane.b32.xlu0 %v1000, 16
      %v4944 = vpop.permute.xlu0 %4943
      %4945 = vrot.lane.b32.xlu0 %v1003, 16
      %v4946 = vpop.permute.xlu0 %4945
      %4947 = vrot.lane.b32.xlu0 %v1006, 16
      %v4948 = vpop.permute.xlu0 %4947
      %4949 = vrot.lane.b32.xlu0 %v1035, 16
      %v4950 = vpop.permute.xlu0 %4949
      %4959 = vrot.lane.b32.xlu0 %v1012, 20
      %v4960 = vpop.permute.xlu0 %4959
      %4961 = vrot.lane.b32.xlu0 %v1015, 20
      %v4962 = vpop.permute.xlu0 %4961
      %4963 = vrot.lane.b32.xlu0 %v1018, 20
      %v4964 = vpop.permute.xlu0 %4963
      %4965 = vrot.lane.b32.xlu0 %v1021, 20
      %v4966 = vpop.permute.xlu0 %4965
      %4967 = vrot.lane.b32.xlu0 %v1024, 20
      %v4968 = vpop.permute.xlu0 %4967
      %4969 = vrot.lane.b32.xlu0 %v1027, 20
      %v4970 = vpop.permute.xlu0 %4969
      %4971 = vrot.lane.b32.xlu0 %v1030, 20
      %v4972 = vpop.permute.xlu0 %4971
      %4973 = vrot.lane.b32.xlu0 %v1038, 20
      %v4974 = vpop.permute.xlu0 %4973
      %4983 = vrot.lane.b32.xlu0 %v505, 24
      %v4984 = vpop.permute.xlu0 %4983
      %4985 = vrot.lane.b32.xlu0 %v507, 24
      %v4986 = vpop.permute.xlu0 %4985
      %4987 = vrot.lane.b32.xlu0 %v509, 24
      %v4988 = vpop.permute.xlu0 %4987
      %4989 = vrot.lane.b32.xlu0 %v511, 24
      %v4990 = vpop.permute.xlu0 %4989
      %4991 = vrot.lane.b32.xlu0 %v513, 24
      %v4992 = vpop.permute.xlu0 %4991
      %4993 = vrot.lane.b32.xlu0 %v515, 24
      %v4994 = vpop.permute.xlu0 %4993
      %4995 = vrot.lane.b32.xlu0 %v517, 24
      %v4996 = vpop.permute.xlu0 %4995
      %4997 = vrot.lane.b32.xlu0 %v519, 24
      %v4998 = vpop.permute.xlu0 %4997
      %5007 = vrot.lane.b32.xlu0 %v991, 28
      %v5008 = vpop.permute.xlu0 %5007
      %5009 = vrot.lane.b32.xlu0 %v994, 28
      %v5010 = vpop.permute.xlu0 %5009
      %5011 = vrot.lane.b32.xlu0 %v997, 28
      %v5012 = vpop.permute.xlu0 %5011
      %5013 = vrot.lane.b32.xlu0 %v1000, 28
      %v5014 = vpop.permute.xlu0 %5013
      %5015 = vrot.lane.b32.xlu0 %v1003, 28
      %v5016 = vpop.permute.xlu0 %5015
      %5017 = vrot.lane.b32.xlu0 %v1006, 28
      %v5018 = vpop.permute.xlu0 %5017
      %5019 = vrot.lane.b32.xlu0 %v1035, 28
      %v5020 = vpop.permute.xlu0 %5019
      %5021 = vrot.lane.b32.xlu0 %v1043, 28
      %v5022 = vpop.permute.xlu0 %5021
      %5031 = vrot.lane.b32.xlu0 %v1015, 32
      %v5032 = vpop.permute.xlu0 %5031
      %5033 = vrot.lane.b32.xlu0 %v1018, 32
      %v5034 = vpop.permute.xlu0 %5033
      %5035 = vrot.lane.b32.xlu0 %v1021, 32
      %v5036 = vpop.permute.xlu0 %5035
      %5037 = vrot.lane.b32.xlu0 %v1024, 32
      %v5038 = vpop.permute.xlu0 %5037
      %5039 = vrot.lane.b32.xlu0 %v1027, 32
      %v5040 = vpop.permute.xlu0 %5039
      %5041 = vrot.lane.b32.xlu0 %v1030, 32
      %v5042 = vpop.permute.xlu0 %5041
      %5043 = vrot.lane.b32.xlu0 %v1038, 32
      %v5044 = vpop.permute.xlu0 %5043
      %5045 = vrot.lane.b32.xlu0 %v1054, 32
      %v5046 = vpop.permute.xlu0 %5045
      %5055 = vrot.lane.b32.xlu0 %v521, 36
      %v5056 = vpop.permute.xlu0 %5055
      %5057 = vrot.lane.b32.xlu0 %v523, 36
      %v5058 = vpop.permute.xlu0 %5057
      %5059 = vrot.lane.b32.xlu0 %v525, 36
      %v5060 = vpop.permute.xlu0 %5059
      %5061 = vrot.lane.b32.xlu0 %v527, 36
      %v5062 = vpop.permute.xlu0 %5061
      %5063 = vrot.lane.b32.xlu0 %v529, 36
      %v5064 = vpop.permute.xlu0 %5063
      %5065 = vrot.lane.b32.xlu0 %v531, 36
      %v5066 = vpop.permute.xlu0 %5065
      %5067 = vrot.lane.b32.xlu0 %v533, 36
      %v5068 = vpop.permute.xlu0 %5067
      %5069 = vrot.lane.b32.xlu0 %v535, 36
      %v5070 = vpop.permute.xlu0 %5069
      %5079 = vrot.lane.b32.xlu0 %v1073, 40
      %v5080 = vpop.permute.xlu0 %5079
      %5081 = vrot.lane.b32.xlu0 %v1076, 40
      %v5082 = vpop.permute.xlu0 %5081
      %5083 = vrot.lane.b32.xlu0 %v1079, 40
      %v5084 = vpop.permute.xlu0 %5083
      %5085 = vrot.lane.b32.xlu0 %v1082, 40
      %v5086 = vpop.permute.xlu0 %5085
      %5087 = vrot.lane.b32.xlu0 %v1085, 40
      %v5088 = vpop.permute.xlu0 %5087
      %5089 = vrot.lane.b32.xlu0 %v1088, 40
      %v5090 = vpop.permute.xlu0 %5089
      %5091 = vrot.lane.b32.xlu0 %v1091, 40
      %v5092 = vpop.permute.xlu0 %5091
      %5093 = vrot.lane.b32.xlu0 %v1094, 40
      %v5094 = vpop.permute.xlu0 %5093
      %5103 = vrot.lane.b32.xlu0 %v1097, 44
      %v5104 = vpop.permute.xlu0 %5103
      %5105 = vrot.lane.b32.xlu0 %v1100, 44
      %v5106 = vpop.permute.xlu0 %5105
      %5107 = vrot.lane.b32.xlu0 %v1103, 44
      %v5108 = vpop.permute.xlu0 %5107
      %5109 = vrot.lane.b32.xlu0 %v1106, 44
      %v5110 = vpop.permute.xlu0 %5109
      %5111 = vrot.lane.b32.xlu0 %v1109, 44
      %v5112 = vpop.permute.xlu0 %5111
      %5113 = vrot.lane.b32.xlu0 %v1112, 44
      %v5114 = vpop.permute.xlu0 %5113
      %5115 = vrot.lane.b32.xlu0 %v1115, 44
      %v5116 = vpop.permute.xlu0 %5115
      %5117 = vrot.lane.b32.xlu0 %v1118, 44
      %v5118 = vpop.permute.xlu0 %5117
      %5127 = vrot.lane.b32.xlu0 %v523, 48
      %v5128 = vpop.permute.xlu0 %5127
      %5129 = vrot.lane.b32.xlu0 %v525, 48
      %v5130 = vpop.permute.xlu0 %5129
      %5131 = vrot.lane.b32.xlu0 %v527, 48
      %v5132 = vpop.permute.xlu0 %5131
      %5133 = vrot.lane.b32.xlu0 %v529, 48
      %v5134 = vpop.permute.xlu0 %5133
      %5135 = vrot.lane.b32.xlu0 %v531, 48
      %v5136 = vpop.permute.xlu0 %5135
      %5137 = vrot.lane.b32.xlu0 %v533, 48
      %v5138 = vpop.permute.xlu0 %5137
      %5139 = vrot.lane.b32.xlu0 %v535, 48
      %v5140 = vpop.permute.xlu0 %5139
      %5141 = vrot.lane.b32.xlu0 %v537, 48
      %v5142 = vpop.permute.xlu0 %5141
      %5151 = vrot.lane.b32.xlu0 %v1076, 52
      %v5152 = vpop.permute.xlu0 %5151
      %5153 = vrot.lane.b32.xlu0 %v1079, 52
      %v5154 = vpop.permute.xlu0 %5153
      %5155 = vrot.lane.b32.xlu0 %v1082, 52
      %v5156 = vpop.permute.xlu0 %5155
      %5157 = vrot.lane.b32.xlu0 %v1085, 52
      %v5158 = vpop.permute.xlu0 %5157
      %5159 = vrot.lane.b32.xlu0 %v1088, 52
      %v5160 = vpop.permute.xlu0 %5159
      %5161 = vrot.lane.b32.xlu0 %v1091, 52
      %v5162 = vpop.permute.xlu0 %5161
      %5163 = vrot.lane.b32.xlu0 %v1094, 52
      %v5164 = vpop.permute.xlu0 %5163
      %5165 = vrot.lane.b32.xlu0 %v1123, 52
      %v5166 = vpop.permute.xlu0 %5165
      %5175 = vrot.lane.b32.xlu0 %v1100, 56
      %v5176 = vpop.permute.xlu0 %5175
      %5177 = vrot.lane.b32.xlu0 %v1103, 56
      %v5178 = vpop.permute.xlu0 %5177
      %5179 = vrot.lane.b32.xlu0 %v1106, 56
      %v5180 = vpop.permute.xlu0 %5179
      %5181 = vrot.lane.b32.xlu0 %v1109, 56
      %v5182 = vpop.permute.xlu0 %5181
      %5183 = vrot.lane.b32.xlu0 %v1112, 56
      %v5184 = vpop.permute.xlu0 %5183
      %5185 = vrot.lane.b32.xlu0 %v1115, 56
      %v5186 = vpop.permute.xlu0 %5185
      %5187 = vrot.lane.b32.xlu0 %v1118, 56
      %v5188 = vpop.permute.xlu0 %5187
      %5189 = vrot.lane.b32.xlu0 %v1126, 56
      %v5190 = vpop.permute.xlu0 %5189
      %5199 = vrot.lane.b32.xlu0 %v525, 60
      %v5200 = vpop.permute.xlu0 %5199
      %5201 = vrot.lane.b32.xlu0 %v527, 60
      %v5202 = vpop.permute.xlu0 %5201
      %5203 = vrot.lane.b32.xlu0 %v529, 60
      %v5204 = vpop.permute.xlu0 %5203
      %5205 = vrot.lane.b32.xlu0 %v531, 60
      %v5206 = vpop.permute.xlu0 %5205
      %5207 = vrot.lane.b32.xlu0 %v533, 60
      %v5208 = vpop.permute.xlu0 %5207
      %5209 = vrot.lane.b32.xlu0 %v535, 60
      %v5210 = vpop.permute.xlu0 %5209
      %5211 = vrot.lane.b32.xlu0 %v537, 60
      %v5212 = vpop.permute.xlu0 %5211
      %5213 = vrot.lane.b32.xlu0 %v539, 60
      %v5214 = vpop.permute.xlu0 %5213
      %v5223 = vsel %vm1847, %v501, %v4864
      %v5224 = vsel %vm1847, %v503, %v4866
      %v5225 = vsel %vm1847, %v505, %v4868
      %v5226 = vsel %vm1847, %v507, %v4870
      %v5227 = vsel %vm1847, %v509, %v4872
      %v5228 = vsel %vm1847, %v511, %v4874
      %v5229 = vsel %vm1847, %v513, %v4876
      %v5230 = vsel %vm1847, %v515, %v4878
      %v5231 = vsel %vm1856, %v5223, %v4888
      %v5232 = vsel %vm1856, %v5224, %v4890
      %v5233 = vsel %vm1856, %v5225, %v4892
      %v5234 = vsel %vm1856, %v5226, %v4894
      %v5235 = vsel %vm1856, %v5227, %v4896
      %v5236 = vsel %vm1856, %v5228, %v4898
      %v5237 = vsel %vm1856, %v5229, %v4900
      %v5238 = vsel %vm1856, %v5230, %v4902
      %v5239 = vsel %vm1865, %v5231, %v4912
      %v5240 = vsel %vm1865, %v5232, %v4914
      %v5241 = vsel %vm1865, %v5233, %v4916
      %v5242 = vsel %vm1865, %v5234, %v4918
      %v5243 = vsel %vm1865, %v5235, %v4920
      %v5244 = vsel %vm1865, %v5236, %v4922
      %v5245 = vsel %vm1865, %v5237, %v4924
      %v5246 = vsel %vm1865, %v5238, %v4926
      %v5247 = vsel %vm1874, %v5239, %v4936
      %v5248 = vsel %vm1874, %v5240, %v4938
      %v5249 = vsel %vm1874, %v5241, %v4940
      %v5250 = vsel %vm1874, %v5242, %v4942
      %v5251 = vsel %vm1874, %v5243, %v4944
      %v5252 = vsel %vm1874, %v5244, %v4946
      %v5253 = vsel %vm1874, %v5245, %v4948
      %v5254 = vsel %vm1874, %v5246, %v4950
      %v5255 = vsel %vm1883, %v5247, %v4960
      %v5256 = vsel %vm1883, %v5248, %v4962
      %v5257 = vsel %vm1883, %v5249, %v4964
      %v5258 = vsel %vm1883, %v5250, %v4966
      %v5259 = vsel %vm1883, %v5251, %v4968
      %v5260 = vsel %vm1883, %v5252, %v4970
      %v5261 = vsel %vm1883, %v5253, %v4972
      %v5262 = vsel %vm1883, %v5254, %v4974
      %v5263 = vsel %vm1892, %v5255, %v4984
      %v5264 = vsel %vm1892, %v5256, %v4986
      %v5265 = vsel %vm1892, %v5257, %v4988
      %v5266 = vsel %vm1892, %v5258, %v4990
      %v5267 = vsel %vm1892, %v5259, %v4992
      %v5268 = vsel %vm1892, %v5260, %v4994
      %v5269 = vsel %vm1892, %v5261, %v4996
      %v5270 = vsel %vm1892, %v5262, %v4998
      %v5271 = vsel %vm1901, %v5263, %v5008
      %v5272 = vsel %vm1901, %v5264, %v5010
      %v5273 = vsel %vm1901, %v5265, %v5012
      %v5274 = vsel %vm1901, %v5266, %v5014
      %v5275 = vsel %vm1901, %v5267, %v5016
      %v5276 = vsel %vm1901, %v5268, %v5018
      %v5277 = vsel %vm1901, %v5269, %v5020
      %v5278 = vsel %vm1901, %v5270, %v5022
      %v5279 = vsel %vm1910, %v5271, %v5032
      %v5280 = vsel %vm1910, %v5272, %v5034
      %v5281 = vsel %vm1910, %v5273, %v5036
      %v5282 = vsel %vm1910, %v5274, %v5038
      %v5283 = vsel %vm1910, %v5275, %v5040
      %v5284 = vsel %vm1910, %v5276, %v5042
      %v5285 = vsel %vm1910, %v5277, %v5044
      %v5286 = vsel %vm1910, %v5278, %v5046
      %v5287 = vsel %vm1919, %v5279, %v5056
      %v5288 = vsel %vm1919, %v5280, %v5058
      %v5289 = vsel %vm1919, %v5281, %v5060
      %v5290 = vsel %vm1919, %v5282, %v5062
      %v5291 = vsel %vm1919, %v5283, %v5064
      %v5292 = vsel %vm1919, %v5284, %v5066
      %v5293 = vsel %vm1919, %v5285, %v5068
      %v5294 = vsel %vm1919, %v5286, %v5070
      %v5295 = vsel %vm1928, %v5287, %v5080
      %v5296 = vsel %vm1928, %v5288, %v5082
      %v5297 = vsel %vm1928, %v5289, %v5084
      %v5298 = vsel %vm1928, %v5290, %v5086
      %v5299 = vsel %vm1928, %v5291, %v5088
      %v5300 = vsel %vm1928, %v5292, %v5090
      %v5301 = vsel %vm1928, %v5293, %v5092
      %v5302 = vsel %vm1928, %v5294, %v5094
      %v5303 = vsel %vm1937, %v5295, %v5104
      %v5304 = vsel %vm1937, %v5296, %v5106
      %v5305 = vsel %vm1937, %v5297, %v5108
      %v5306 = vsel %vm1937, %v5298, %v5110
      %v5307 = vsel %vm1937, %v5299, %v5112
      %v5308 = vsel %vm1937, %v5300, %v5114
      %v5309 = vsel %vm1937, %v5301, %v5116
      %v5310 = vsel %vm1937, %v5302, %v5118
      %v5311 = vsel %vm1946, %v5303, %v5128
      %v5312 = vsel %vm1946, %v5304, %v5130
      %v5313 = vsel %vm1946, %v5305, %v5132
      %v5314 = vsel %vm1946, %v5306, %v5134
      %v5315 = vsel %vm1946, %v5307, %v5136
      %v5316 = vsel %vm1946, %v5308, %v5138
      %v5317 = vsel %vm1946, %v5309, %v5140
      %v5318 = vsel %vm1946, %v5310, %v5142
      %v5319 = vsel %vm1955, %v5311, %v5152
      %v5320 = vsel %vm1955, %v5312, %v5154
      %v5321 = vsel %vm1955, %v5313, %v5156
      %v5322 = vsel %vm1955, %v5314, %v5158
      %v5323 = vsel %vm1955, %v5315, %v5160
      %v5324 = vsel %vm1955, %v5316, %v5162
      %v5325 = vsel %vm1955, %v5317, %v5164
      %v5326 = vsel %vm1955, %v5318, %v5166
      %v5327 = vsel %vm1964, %v5319, %v5176
      %v5328 = vsel %vm1964, %v5320, %v5178
      %v5329 = vsel %vm1964, %v5321, %v5180
      %v5330 = vsel %vm1964, %v5322, %v5182
      %v5331 = vsel %vm1964, %v5323, %v5184
      %v5332 = vsel %vm1964, %v5324, %v5186
      %v5333 = vsel %vm1964, %v5325, %v5188
      %v5334 = vsel %vm1964, %v5326, %v5190
      %v5335 = vsel %vm1973, %v5327, %v5200
      %v5336 = vsel %vm1973, %v5328, %v5202
      %v5337 = vsel %vm1973, %v5329, %v5204
      %v5338 = vsel %vm1973, %v5330, %v5206
      %v5339 = vsel %vm1973, %v5331, %v5208
      %v5340 = vsel %vm1973, %v5332, %v5210
      %v5341 = vsel %vm1973, %v5333, %v5212
      %v5342 = vsel %vm1973, %v5334, %v5214
      %5343 = vrot.lane.b32.xlu0 %v1103, 4
      %v5344 = vpop.permute.xlu0 %5343
      %5345 = vrot.lane.b32.xlu0 %v1106, 4
      %v5346 = vpop.permute.xlu0 %5345
      %5347 = vrot.lane.b32.xlu0 %v1109, 4
      %v5348 = vpop.permute.xlu0 %5347
      %5349 = vrot.lane.b32.xlu0 %v1112, 4
      %v5350 = vpop.permute.xlu0 %5349
      %5351 = vrot.lane.b32.xlu0 %v1115, 4
      %v5352 = vpop.permute.xlu0 %5351
      %5353 = vrot.lane.b32.xlu0 %v1118, 4
      %v5354 = vpop.permute.xlu0 %5353
      %5355 = vrot.lane.b32.xlu0 %v1126, 4
      %v5356 = vpop.permute.xlu0 %5355
      %5357 = vrot.lane.b32.xlu0 %v1142, 4
      %v5358 = vpop.permute.xlu0 %5357
      %5367 = vrot.lane.b32.xlu0 %v541, 8
      %v5368 = vpop.permute.xlu0 %5367
      %5369 = vrot.lane.b32.xlu0 %v543, 8
      %v5370 = vpop.permute.xlu0 %5369
      %5371 = vrot.lane.b32.xlu0 %v545, 8
      %v5372 = vpop.permute.xlu0 %5371
      %5373 = vrot.lane.b32.xlu0 %v547, 8
      %v5374 = vpop.permute.xlu0 %5373
      %5375 = vrot.lane.b32.xlu0 %v549, 8
      %v5376 = vpop.permute.xlu0 %5375
      %5377 = vrot.lane.b32.xlu0 %v551, 8
      %v5378 = vpop.permute.xlu0 %5377
      %5379 = vrot.lane.b32.xlu0 %v553, 8
      %v5380 = vpop.permute.xlu0 %5379
      %5381 = vrot.lane.b32.xlu0 %v555, 8
      %v5382 = vpop.permute.xlu0 %5381
      %5391 = vrot.lane.b32.xlu0 %v1161, 12
      %v5392 = vpop.permute.xlu0 %5391
      %5393 = vrot.lane.b32.xlu0 %v1164, 12
      %v5394 = vpop.permute.xlu0 %5393
      %5395 = vrot.lane.b32.xlu0 %v1167, 12
      %v5396 = vpop.permute.xlu0 %5395
      %5397 = vrot.lane.b32.xlu0 %v1170, 12
      %v5398 = vpop.permute.xlu0 %5397
      %5399 = vrot.lane.b32.xlu0 %v1173, 12
      %v5400 = vpop.permute.xlu0 %5399
      %5401 = vrot.lane.b32.xlu0 %v1176, 12
      %v5402 = vpop.permute.xlu0 %5401
      %5403 = vrot.lane.b32.xlu0 %v1179, 12
      %v5404 = vpop.permute.xlu0 %5403
      %5405 = vrot.lane.b32.xlu0 %v1182, 12
      %v5406 = vpop.permute.xlu0 %5405
      %5415 = vrot.lane.b32.xlu0 %v1185, 16
      %v5416 = vpop.permute.xlu0 %5415
      %5417 = vrot.lane.b32.xlu0 %v1188, 16
      %v5418 = vpop.permute.xlu0 %5417
      %5419 = vrot.lane.b32.xlu0 %v1191, 16
      %v5420 = vpop.permute.xlu0 %5419
      %5421 = vrot.lane.b32.xlu0 %v1194, 16
      %v5422 = vpop.permute.xlu0 %5421
      %5423 = vrot.lane.b32.xlu0 %v1197, 16
      %v5424 = vpop.permute.xlu0 %5423
      %5425 = vrot.lane.b32.xlu0 %v1200, 16
      %v5426 = vpop.permute.xlu0 %5425
      %5427 = vrot.lane.b32.xlu0 %v1203, 16
      %v5428 = vpop.permute.xlu0 %5427
      %5429 = vrot.lane.b32.xlu0 %v1206, 16
      %v5430 = vpop.permute.xlu0 %5429
      %5439 = vrot.lane.b32.xlu0 %v543, 20
      %v5440 = vpop.permute.xlu0 %5439
      %5441 = vrot.lane.b32.xlu0 %v545, 20
      %v5442 = vpop.permute.xlu0 %5441
      %5443 = vrot.lane.b32.xlu0 %v547, 20
      %v5444 = vpop.permute.xlu0 %5443
      %5445 = vrot.lane.b32.xlu0 %v549, 20
      %v5446 = vpop.permute.xlu0 %5445
      %5447 = vrot.lane.b32.xlu0 %v551, 20
      %v5448 = vpop.permute.xlu0 %5447
      %5449 = vrot.lane.b32.xlu0 %v553, 20
      %v5450 = vpop.permute.xlu0 %5449
      %5451 = vrot.lane.b32.xlu0 %v555, 20
      %v5452 = vpop.permute.xlu0 %5451
      %5453 = vrot.lane.b32.xlu0 %v557, 20
      %v5454 = vpop.permute.xlu0 %5453
      %5463 = vrot.lane.b32.xlu0 %v1164, 24
      %v5464 = vpop.permute.xlu0 %5463
      %5465 = vrot.lane.b32.xlu0 %v1167, 24
      %v5466 = vpop.permute.xlu0 %5465
      %5467 = vrot.lane.b32.xlu0 %v1170, 24
      %v5468 = vpop.permute.xlu0 %5467
      %5469 = vrot.lane.b32.xlu0 %v1173, 24
      %v5470 = vpop.permute.xlu0 %5469
      %5471 = vrot.lane.b32.xlu0 %v1176, 24
      %v5472 = vpop.permute.xlu0 %5471
      %5473 = vrot.lane.b32.xlu0 %v1179, 24
      %v5474 = vpop.permute.xlu0 %5473
      %5475 = vrot.lane.b32.xlu0 %v1182, 24
      %v5476 = vpop.permute.xlu0 %5475
      %5477 = vrot.lane.b32.xlu0 %v1211, 24
      %v5478 = vpop.permute.xlu0 %5477
      %5487 = vrot.lane.b32.xlu0 %v1188, 28
      %v5488 = vpop.permute.xlu0 %5487
      %5489 = vrot.lane.b32.xlu0 %v1191, 28
      %v5490 = vpop.permute.xlu0 %5489
      %5491 = vrot.lane.b32.xlu0 %v1194, 28
      %v5492 = vpop.permute.xlu0 %5491
      %5493 = vrot.lane.b32.xlu0 %v1197, 28
      %v5494 = vpop.permute.xlu0 %5493
      %5495 = vrot.lane.b32.xlu0 %v1200, 28
      %v5496 = vpop.permute.xlu0 %5495
      %5497 = vrot.lane.b32.xlu0 %v1203, 28
      %v5498 = vpop.permute.xlu0 %5497
      %5499 = vrot.lane.b32.xlu0 %v1206, 28
      %v5500 = vpop.permute.xlu0 %5499
      %5501 = vrot.lane.b32.xlu0 %v1214, 28
      %v5502 = vpop.permute.xlu0 %5501
      %5511 = vrot.lane.b32.xlu0 %v545, 32
      %v5512 = vpop.permute.xlu0 %5511
      %5513 = vrot.lane.b32.xlu0 %v547, 32
      %v5514 = vpop.permute.xlu0 %5513
      %5515 = vrot.lane.b32.xlu0 %v549, 32
      %v5516 = vpop.permute.xlu0 %5515
      %5517 = vrot.lane.b32.xlu0 %v551, 32
      %v5518 = vpop.permute.xlu0 %5517
      %5519 = vrot.lane.b32.xlu0 %v553, 32
      %v5520 = vpop.permute.xlu0 %5519
      %5521 = vrot.lane.b32.xlu0 %v555, 32
      %v5522 = vpop.permute.xlu0 %5521
      %5523 = vrot.lane.b32.xlu0 %v557, 32
      %v5524 = vpop.permute.xlu0 %5523
      %5525 = vrot.lane.b32.xlu0 %v559, 32
      %v5526 = vpop.permute.xlu0 %5525
      %5535 = vrot.lane.b32.xlu0 %v1167, 36
      %v5536 = vpop.permute.xlu0 %5535
      %5537 = vrot.lane.b32.xlu0 %v1170, 36
      %v5538 = vpop.permute.xlu0 %5537
      %5539 = vrot.lane.b32.xlu0 %v1173, 36
      %v5540 = vpop.permute.xlu0 %5539
      %5541 = vrot.lane.b32.xlu0 %v1176, 36
      %v5542 = vpop.permute.xlu0 %5541
      %5543 = vrot.lane.b32.xlu0 %v1179, 36
      %v5544 = vpop.permute.xlu0 %5543
      %5545 = vrot.lane.b32.xlu0 %v1182, 36
      %v5546 = vpop.permute.xlu0 %5545
      %5547 = vrot.lane.b32.xlu0 %v1211, 36
      %v5548 = vpop.permute.xlu0 %5547
      %5549 = vrot.lane.b32.xlu0 %v1219, 36
      %v5550 = vpop.permute.xlu0 %5549
      %5559 = vrot.lane.b32.xlu0 %v1191, 40
      %v5560 = vpop.permute.xlu0 %5559
      %5561 = vrot.lane.b32.xlu0 %v1194, 40
      %v5562 = vpop.permute.xlu0 %5561
      %5563 = vrot.lane.b32.xlu0 %v1197, 40
      %v5564 = vpop.permute.xlu0 %5563
      %5565 = vrot.lane.b32.xlu0 %v1200, 40
      %v5566 = vpop.permute.xlu0 %5565
      %5567 = vrot.lane.b32.xlu0 %v1203, 40
      %v5568 = vpop.permute.xlu0 %5567
      %5569 = vrot.lane.b32.xlu0 %v1206, 40
      %v5570 = vpop.permute.xlu0 %5569
      %5571 = vrot.lane.b32.xlu0 %v1214, 40
      %v5572 = vpop.permute.xlu0 %5571
      %5573 = vrot.lane.b32.xlu0 %v1230, 40
      %v5574 = vpop.permute.xlu0 %5573
      %v5583 = vsel %vm1847, %v1079, %v5344
      %v5584 = vsel %vm1847, %v1082, %v5346
      %v5585 = vsel %vm1847, %v1085, %v5348
      %v5586 = vsel %vm1847, %v1088, %v5350
      %v5587 = vsel %vm1847, %v1091, %v5352
      %v5588 = vsel %vm1847, %v1094, %v5354
      %v5589 = vsel %vm1847, %v1123, %v5356
      %v5590 = vsel %vm1847, %v1131, %v5358
      %v5591 = vsel %vm1856, %v5583, %v5368
      %v5592 = vsel %vm1856, %v5584, %v5370
      %v5593 = vsel %vm1856, %v5585, %v5372
      %v5594 = vsel %vm1856, %v5586, %v5374
      %v5595 = vsel %vm1856, %v5587, %v5376
      %v5596 = vsel %vm1856, %v5588, %v5378
      %v5597 = vsel %vm1856, %v5589, %v5380
      %v5598 = vsel %vm1856, %v5590, %v5382
      %v5599 = vsel %vm1865, %v5591, %v5392
      %v5600 = vsel %vm1865, %v5592, %v5394
      %v5601 = vsel %vm1865, %v5593, %v5396
      %v5602 = vsel %vm1865, %v5594, %v5398
      %v5603 = vsel %vm1865, %v5595, %v5400
      %v5604 = vsel %vm1865, %v5596, %v5402
      %v5605 = vsel %vm1865, %v5597, %v5404
      %v5606 = vsel %vm1865, %v5598, %v5406
      %v5607 = vsel %vm1874, %v5599, %v5416
      %v5608 = vsel %vm1874, %v5600, %v5418
      %v5609 = vsel %vm1874, %v5601, %v5420
      %v5610 = vsel %vm1874, %v5602, %v5422
      %v5611 = vsel %vm1874, %v5603, %v5424
      %v5612 = vsel %vm1874, %v5604, %v5426
      %v5613 = vsel %vm1874, %v5605, %v5428
      %v5614 = vsel %vm1874, %v5606, %v5430
      %v5615 = vsel %vm1883, %v5607, %v5440
      %v5616 = vsel %vm1883, %v5608, %v5442
      %v5617 = vsel %vm1883, %v5609, %v5444
      %v5618 = vsel %vm1883, %v5610, %v5446
      %v5619 = vsel %vm1883, %v5611, %v5448
      %v5620 = vsel %vm1883, %v5612, %v5450
      %v5621 = vsel %vm1883, %v5613, %v5452
      %v5622 = vsel %vm1883, %v5614, %v5454
      %v5623 = vsel %vm1892, %v5615, %v5464
      %v5624 = vsel %vm1892, %v5616, %v5466
      %v5625 = vsel %vm1892, %v5617, %v5468
      %v5626 = vsel %vm1892, %v5618, %v5470
      %v5627 = vsel %vm1892, %v5619, %v5472
      %v5628 = vsel %vm1892, %v5620, %v5474
      %v5629 = vsel %vm1892, %v5621, %v5476
      %v5630 = vsel %vm1892, %v5622, %v5478
      %v5631 = vsel %vm1901, %v5623, %v5488
      %v5632 = vsel %vm1901, %v5624, %v5490
      %v5633 = vsel %vm1901, %v5625, %v5492
      %v5634 = vsel %vm1901, %v5626, %v5494
      %v5635 = vsel %vm1901, %v5627, %v5496
      %v5636 = vsel %vm1901, %v5628, %v5498
      %v5637 = vsel %vm1901, %v5629, %v5500
      %v5638 = vsel %vm1901, %v5630, %v5502
      %v5639 = vsel %vm1910, %v5631, %v5512
      %v5640 = vsel %vm1910, %v5632, %v5514
      %v5641 = vsel %vm1910, %v5633, %v5516
      %v5642 = vsel %vm1910, %v5634, %v5518
      %v5643 = vsel %vm1910, %v5635, %v5520
      %v5644 = vsel %vm1910, %v5636, %v5522
      %v5645 = vsel %vm1910, %v5637, %v5524
      %v5646 = vsel %vm1910, %v5638, %v5526
      %v5647 = vsel %vm1919, %v5639, %v5536
      %v5648 = vsel %vm1919, %v5640, %v5538
      %v5649 = vsel %vm1919, %v5641, %v5540
      %v5650 = vsel %vm1919, %v5642, %v5542
      %v5651 = vsel %vm1919, %v5643, %v5544
      %v5652 = vsel %vm1919, %v5644, %v5546
      %v5653 = vsel %vm1919, %v5645, %v5548
      %v5654 = vsel %vm1919, %v5646, %v5550
      %v5655 = vsel %vm1928, %v5647, %v5560
      %v5656 = vsel %vm1928, %v5648, %v5562
      %v5657 = vsel %vm1928, %v5649, %v5564
      %v5658 = vsel %vm1928, %v5650, %v5566
      %v5659 = vsel %vm1928, %v5651, %v5568
      %v5660 = vsel %vm1928, %v5652, %v5570
      %v5661 = vsel %vm1928, %v5653, %v5572
      %v5662 = vsel %vm1928, %v5654, %v5574
      %5671 = vrot.lane.b32.xlu0 %v5655, 64
      %v5672 = vpop.permute.xlu0 %5671
      %5673 = vrot.lane.b32.xlu0 %v5656, 64
      %v5674 = vpop.permute.xlu0 %5673
      %5675 = vrot.lane.b32.xlu0 %v5657, 64
      %v5676 = vpop.permute.xlu0 %5675
      %5677 = vrot.lane.b32.xlu0 %v5658, 64
      %v5678 = vpop.permute.xlu0 %5677
      %5679 = vrot.lane.b32.xlu0 %v5659, 64
      %v5680 = vpop.permute.xlu0 %5679
      %5681 = vrot.lane.b32.xlu0 %v5660, 64
      %v5682 = vpop.permute.xlu0 %5681
      %5683 = vrot.lane.b32.xlu0 %v5661, 64
      %v5684 = vpop.permute.xlu0 %5683
      %5685 = vrot.lane.b32.xlu0 %v5662, 64
      %v5686 = vpop.permute.xlu0 %5685
      %v5695 = vsel %vm2334, %v5335, %v5672
      %v5696 = vsel %vm2334, %v5336, %v5674
      %v5697 = vsel %vm2334, %v5337, %v5676
      %v5698 = vsel %vm2334, %v5338, %v5678
      %v5699 = vsel %vm2334, %v5339, %v5680
      %v5700 = vsel %vm2334, %v5340, %v5682
      %v5701 = vsel %vm2334, %v5341, %v5684
      %v5702 = vsel %vm2334, %v5342, %v5686
      %5703 = vrot.lane.b32.xlu0 %v1073, 4
      %v5704 = vpop.permute.xlu0 %5703
      %5705 = vrot.lane.b32.xlu0 %v1076, 4
      %v5706 = vpop.permute.xlu0 %5705
      %5707 = vrot.lane.b32.xlu0 %v1079, 4
      %v5708 = vpop.permute.xlu0 %5707
      %5709 = vrot.lane.b32.xlu0 %v1082, 4
      %v5710 = vpop.permute.xlu0 %5709
      %5711 = vrot.lane.b32.xlu0 %v1085, 4
      %v5712 = vpop.permute.xlu0 %5711
      %5713 = vrot.lane.b32.xlu0 %v1088, 4
      %v5714 = vpop.permute.xlu0 %5713
      %5715 = vrot.lane.b32.xlu0 %v1091, 4
      %v5716 = vpop.permute.xlu0 %5715
      %5717 = vrot.lane.b32.xlu0 %v1094, 4
      %v5718 = vpop.permute.xlu0 %5717
      %5727 = vrot.lane.b32.xlu0 %v1097, 8
      %v5728 = vpop.permute.xlu0 %5727
      %5729 = vrot.lane.b32.xlu0 %v1100, 8
      %v5730 = vpop.permute.xlu0 %5729
      %5731 = vrot.lane.b32.xlu0 %v1103, 8
      %v5732 = vpop.permute.xlu0 %5731
      %5733 = vrot.lane.b32.xlu0 %v1106, 8
      %v5734 = vpop.permute.xlu0 %5733
      %5735 = vrot.lane.b32.xlu0 %v1109, 8
      %v5736 = vpop.permute.xlu0 %5735
      %5737 = vrot.lane.b32.xlu0 %v1112, 8
      %v5738 = vpop.permute.xlu0 %5737
      %5739 = vrot.lane.b32.xlu0 %v1115, 8
      %v5740 = vpop.permute.xlu0 %5739
      %5741 = vrot.lane.b32.xlu0 %v1118, 8
      %v5742 = vpop.permute.xlu0 %5741
      %5751 = vrot.lane.b32.xlu0 %v523, 12
      %v5752 = vpop.permute.xlu0 %5751
      %5753 = vrot.lane.b32.xlu0 %v525, 12
      %v5754 = vpop.permute.xlu0 %5753
      %5755 = vrot.lane.b32.xlu0 %v527, 12
      %v5756 = vpop.permute.xlu0 %5755
      %5757 = vrot.lane.b32.xlu0 %v529, 12
      %v5758 = vpop.permute.xlu0 %5757
      %5759 = vrot.lane.b32.xlu0 %v531, 12
      %v5760 = vpop.permute.xlu0 %5759
      %5761 = vrot.lane.b32.xlu0 %v533, 12
      %v5762 = vpop.permute.xlu0 %5761
      %5763 = vrot.lane.b32.xlu0 %v535, 12
      %v5764 = vpop.permute.xlu0 %5763
      %5765 = vrot.lane.b32.xlu0 %v537, 12
      %v5766 = vpop.permute.xlu0 %5765
      %5775 = vrot.lane.b32.xlu0 %v1076, 16
      %v5776 = vpop.permute.xlu0 %5775
      %5777 = vrot.lane.b32.xlu0 %v1079, 16
      %v5778 = vpop.permute.xlu0 %5777
      %5779 = vrot.lane.b32.xlu0 %v1082, 16
      %v5780 = vpop.permute.xlu0 %5779
      %5781 = vrot.lane.b32.xlu0 %v1085, 16
      %v5782 = vpop.permute.xlu0 %5781
      %5783 = vrot.lane.b32.xlu0 %v1088, 16
      %v5784 = vpop.permute.xlu0 %5783
      %5785 = vrot.lane.b32.xlu0 %v1091, 16
      %v5786 = vpop.permute.xlu0 %5785
      %5787 = vrot.lane.b32.xlu0 %v1094, 16
      %v5788 = vpop.permute.xlu0 %5787
      %5789 = vrot.lane.b32.xlu0 %v1123, 16
      %v5790 = vpop.permute.xlu0 %5789
      %5799 = vrot.lane.b32.xlu0 %v1100, 20
      %v5800 = vpop.permute.xlu0 %5799
      %5801 = vrot.lane.b32.xlu0 %v1103, 20
      %v5802 = vpop.permute.xlu0 %5801
      %5803 = vrot.lane.b32.xlu0 %v1106, 20
      %v5804 = vpop.permute.xlu0 %5803
      %5805 = vrot.lane.b32.xlu0 %v1109, 20
      %v5806 = vpop.permute.xlu0 %5805
      %5807 = vrot.lane.b32.xlu0 %v1112, 20
      %v5808 = vpop.permute.xlu0 %5807
      %5809 = vrot.lane.b32.xlu0 %v1115, 20
      %v5810 = vpop.permute.xlu0 %5809
      %5811 = vrot.lane.b32.xlu0 %v1118, 20
      %v5812 = vpop.permute.xlu0 %5811
      %5813 = vrot.lane.b32.xlu0 %v1126, 20
      %v5814 = vpop.permute.xlu0 %5813
      %5823 = vrot.lane.b32.xlu0 %v525, 24
      %v5824 = vpop.permute.xlu0 %5823
      %5825 = vrot.lane.b32.xlu0 %v527, 24
      %v5826 = vpop.permute.xlu0 %5825
      %5827 = vrot.lane.b32.xlu0 %v529, 24
      %v5828 = vpop.permute.xlu0 %5827
      %5829 = vrot.lane.b32.xlu0 %v531, 24
      %v5830 = vpop.permute.xlu0 %5829
      %5831 = vrot.lane.b32.xlu0 %v533, 24
      %v5832 = vpop.permute.xlu0 %5831
      %5833 = vrot.lane.b32.xlu0 %v535, 24
      %v5834 = vpop.permute.xlu0 %5833
      %5835 = vrot.lane.b32.xlu0 %v537, 24
      %v5836 = vpop.permute.xlu0 %5835
      %5837 = vrot.lane.b32.xlu0 %v539, 24
      %v5838 = vpop.permute.xlu0 %5837
      %5847 = vrot.lane.b32.xlu0 %v1079, 28
      %v5848 = vpop.permute.xlu0 %5847
      %5849 = vrot.lane.b32.xlu0 %v1082, 28
      %v5850 = vpop.permute.xlu0 %5849
      %5851 = vrot.lane.b32.xlu0 %v1085, 28
      %v5852 = vpop.permute.xlu0 %5851
      %5853 = vrot.lane.b32.xlu0 %v1088, 28
      %v5854 = vpop.permute.xlu0 %5853
      %5855 = vrot.lane.b32.xlu0 %v1091, 28
      %v5856 = vpop.permute.xlu0 %5855
      %5857 = vrot.lane.b32.xlu0 %v1094, 28
      %v5858 = vpop.permute.xlu0 %5857
      %5859 = vrot.lane.b32.xlu0 %v1123, 28
      %v5860 = vpop.permute.xlu0 %5859
      %5861 = vrot.lane.b32.xlu0 %v1131, 28
      %v5862 = vpop.permute.xlu0 %5861
      %5871 = vrot.lane.b32.xlu0 %v1103, 32
      %v5872 = vpop.permute.xlu0 %5871
      %5873 = vrot.lane.b32.xlu0 %v1106, 32
      %v5874 = vpop.permute.xlu0 %5873
      %5875 = vrot.lane.b32.xlu0 %v1109, 32
      %v5876 = vpop.permute.xlu0 %5875
      %5877 = vrot.lane.b32.xlu0 %v1112, 32
      %v5878 = vpop.permute.xlu0 %5877
      %5879 = vrot.lane.b32.xlu0 %v1115, 32
      %v5880 = vpop.permute.xlu0 %5879
      %5881 = vrot.lane.b32.xlu0 %v1118, 32
      %v5882 = vpop.permute.xlu0 %5881
      %5883 = vrot.lane.b32.xlu0 %v1126, 32
      %v5884 = vpop.permute.xlu0 %5883
      %5885 = vrot.lane.b32.xlu0 %v1142, 32
      %v5886 = vpop.permute.xlu0 %5885
      %5895 = vrot.lane.b32.xlu0 %v541, 36
      %v5896 = vpop.permute.xlu0 %5895
      %5897 = vrot.lane.b32.xlu0 %v543, 36
      %v5898 = vpop.permute.xlu0 %5897
      %5899 = vrot.lane.b32.xlu0 %v545, 36
      %v5900 = vpop.permute.xlu0 %5899
      %5901 = vrot.lane.b32.xlu0 %v547, 36
      %v5902 = vpop.permute.xlu0 %5901
      %5903 = vrot.lane.b32.xlu0 %v549, 36
      %v5904 = vpop.permute.xlu0 %5903
      %5905 = vrot.lane.b32.xlu0 %v551, 36
      %v5906 = vpop.permute.xlu0 %5905
      %5907 = vrot.lane.b32.xlu0 %v553, 36
      %v5908 = vpop.permute.xlu0 %5907
      %5909 = vrot.lane.b32.xlu0 %v555, 36
      %v5910 = vpop.permute.xlu0 %5909
      %5919 = vrot.lane.b32.xlu0 %v1161, 40
      %v5920 = vpop.permute.xlu0 %5919
      %5921 = vrot.lane.b32.xlu0 %v1164, 40
      %v5922 = vpop.permute.xlu0 %5921
      %5923 = vrot.lane.b32.xlu0 %v1167, 40
      %v5924 = vpop.permute.xlu0 %5923
      %5925 = vrot.lane.b32.xlu0 %v1170, 40
      %v5926 = vpop.permute.xlu0 %5925
      %5927 = vrot.lane.b32.xlu0 %v1173, 40
      %v5928 = vpop.permute.xlu0 %5927
      %5929 = vrot.lane.b32.xlu0 %v1176, 40
      %v5930 = vpop.permute.xlu0 %5929
      %5931 = vrot.lane.b32.xlu0 %v1179, 40
      %v5932 = vpop.permute.xlu0 %5931
      %5933 = vrot.lane.b32.xlu0 %v1182, 40
      %v5934 = vpop.permute.xlu0 %5933
      %5943 = vrot.lane.b32.xlu0 %v1185, 44
      %v5944 = vpop.permute.xlu0 %5943
      %5945 = vrot.lane.b32.xlu0 %v1188, 44
      %v5946 = vpop.permute.xlu0 %5945
      %5947 = vrot.lane.b32.xlu0 %v1191, 44
      %v5948 = vpop.permute.xlu0 %5947
      %5949 = vrot.lane.b32.xlu0 %v1194, 44
      %v5950 = vpop.permute.xlu0 %5949
      %5951 = vrot.lane.b32.xlu0 %v1197, 44
      %v5952 = vpop.permute.xlu0 %5951
      %5953 = vrot.lane.b32.xlu0 %v1200, 44
      %v5954 = vpop.permute.xlu0 %5953
      %5955 = vrot.lane.b32.xlu0 %v1203, 44
      %v5956 = vpop.permute.xlu0 %5955
      %5957 = vrot.lane.b32.xlu0 %v1206, 44
      %v5958 = vpop.permute.xlu0 %5957
      %5967 = vrot.lane.b32.xlu0 %v543, 48
      %v5968 = vpop.permute.xlu0 %5967
      %5969 = vrot.lane.b32.xlu0 %v545, 48
      %v5970 = vpop.permute.xlu0 %5969
      %5971 = vrot.lane.b32.xlu0 %v547, 48
      %v5972 = vpop.permute.xlu0 %5971
      %5973 = vrot.lane.b32.xlu0 %v549, 48
      %v5974 = vpop.permute.xlu0 %5973
      %5975 = vrot.lane.b32.xlu0 %v551, 48
      %v5976 = vpop.permute.xlu0 %5975
      %5977 = vrot.lane.b32.xlu0 %v553, 48
      %v5978 = vpop.permute.xlu0 %5977
      %5979 = vrot.lane.b32.xlu0 %v555, 48
      %v5980 = vpop.permute.xlu0 %5979
      %5981 = vrot.lane.b32.xlu0 %v557, 48
      %v5982 = vpop.permute.xlu0 %5981
      %5991 = vrot.lane.b32.xlu0 %v1164, 52
      %v5992 = vpop.permute.xlu0 %5991
      %5993 = vrot.lane.b32.xlu0 %v1167, 52
      %v5994 = vpop.permute.xlu0 %5993
      %5995 = vrot.lane.b32.xlu0 %v1170, 52
      %v5996 = vpop.permute.xlu0 %5995
      %5997 = vrot.lane.b32.xlu0 %v1173, 52
      %v5998 = vpop.permute.xlu0 %5997
      %5999 = vrot.lane.b32.xlu0 %v1176, 52
      %v6000 = vpop.permute.xlu0 %5999
      %6001 = vrot.lane.b32.xlu0 %v1179, 52
      %v6002 = vpop.permute.xlu0 %6001
      %6003 = vrot.lane.b32.xlu0 %v1182, 52
      %v6004 = vpop.permute.xlu0 %6003
      %6005 = vrot.lane.b32.xlu0 %v1211, 52
      %v6006 = vpop.permute.xlu0 %6005
      %6015 = vrot.lane.b32.xlu0 %v1188, 56
      %v6016 = vpop.permute.xlu0 %6015
      %6017 = vrot.lane.b32.xlu0 %v1191, 56
      %v6018 = vpop.permute.xlu0 %6017
      %6019 = vrot.lane.b32.xlu0 %v1194, 56
      %v6020 = vpop.permute.xlu0 %6019
      %6021 = vrot.lane.b32.xlu0 %v1197, 56
      %v6022 = vpop.permute.xlu0 %6021
      %6023 = vrot.lane.b32.xlu0 %v1200, 56
      %v6024 = vpop.permute.xlu0 %6023
      %6025 = vrot.lane.b32.xlu0 %v1203, 56
      %v6026 = vpop.permute.xlu0 %6025
      %6027 = vrot.lane.b32.xlu0 %v1206, 56
      %v6028 = vpop.permute.xlu0 %6027
      %6029 = vrot.lane.b32.xlu0 %v1214, 56
      %v6030 = vpop.permute.xlu0 %6029
      %6039 = vrot.lane.b32.xlu0 %v545, 60
      %v6040 = vpop.permute.xlu0 %6039
      %6041 = vrot.lane.b32.xlu0 %v547, 60
      %v6042 = vpop.permute.xlu0 %6041
      %6043 = vrot.lane.b32.xlu0 %v549, 60
      %v6044 = vpop.permute.xlu0 %6043
      %6045 = vrot.lane.b32.xlu0 %v551, 60
      %v6046 = vpop.permute.xlu0 %6045
      %6047 = vrot.lane.b32.xlu0 %v553, 60
      %v6048 = vpop.permute.xlu0 %6047
      %6049 = vrot.lane.b32.xlu0 %v555, 60
      %v6050 = vpop.permute.xlu0 %6049
      %6051 = vrot.lane.b32.xlu0 %v557, 60
      %v6052 = vpop.permute.xlu0 %6051
      %6053 = vrot.lane.b32.xlu0 %v559, 60
      %v6054 = vpop.permute.xlu0 %6053
      %v6063 = vsel %vm1847, %v521, %v5704
      %v6064 = vsel %vm1847, %v523, %v5706
      %v6065 = vsel %vm1847, %v525, %v5708
      %v6066 = vsel %vm1847, %v527, %v5710
      %v6067 = vsel %vm1847, %v529, %v5712
      %v6068 = vsel %vm1847, %v531, %v5714
      %v6069 = vsel %vm1847, %v533, %v5716
      %v6070 = vsel %vm1847, %v535, %v5718
      %v6071 = vsel %vm1856, %v6063, %v5728
      %v6072 = vsel %vm1856, %v6064, %v5730
      %v6073 = vsel %vm1856, %v6065, %v5732
      %v6074 = vsel %vm1856, %v6066, %v5734
      %v6075 = vsel %vm1856, %v6067, %v5736
      %v6076 = vsel %vm1856, %v6068, %v5738
      %v6077 = vsel %vm1856, %v6069, %v5740
      %v6078 = vsel %vm1856, %v6070, %v5742
      %v6079 = vsel %vm1865, %v6071, %v5752
      %v6080 = vsel %vm1865, %v6072, %v5754
      %v6081 = vsel %vm1865, %v6073, %v5756
      %v6082 = vsel %vm1865, %v6074, %v5758
      %v6083 = vsel %vm1865, %v6075, %v5760
      %v6084 = vsel %vm1865, %v6076, %v5762
      %v6085 = vsel %vm1865, %v6077, %v5764
      %v6086 = vsel %vm1865, %v6078, %v5766
      %v6087 = vsel %vm1874, %v6079, %v5776
      %v6088 = vsel %vm1874, %v6080, %v5778
      %v6089 = vsel %vm1874, %v6081, %v5780
      %v6090 = vsel %vm1874, %v6082, %v5782
      %v6091 = vsel %vm1874, %v6083, %v5784
      %v6092 = vsel %vm1874, %v6084, %v5786
      %v6093 = vsel %vm1874, %v6085, %v5788
      %v6094 = vsel %vm1874, %v6086, %v5790
      %v6095 = vsel %vm1883, %v6087, %v5800
      %v6096 = vsel %vm1883, %v6088, %v5802
      %v6097 = vsel %vm1883, %v6089, %v5804
      %v6098 = vsel %vm1883, %v6090, %v5806
      %v6099 = vsel %vm1883, %v6091, %v5808
      %v6100 = vsel %vm1883, %v6092, %v5810
      %v6101 = vsel %vm1883, %v6093, %v5812
      %v6102 = vsel %vm1883, %v6094, %v5814
      %v6103 = vsel %vm1892, %v6095, %v5824
      %v6104 = vsel %vm1892, %v6096, %v5826
      %v6105 = vsel %vm1892, %v6097, %v5828
      %v6106 = vsel %vm1892, %v6098, %v5830
      %v6107 = vsel %vm1892, %v6099, %v5832
      %v6108 = vsel %vm1892, %v6100, %v5834
      %v6109 = vsel %vm1892, %v6101, %v5836
      %v6110 = vsel %vm1892, %v6102, %v5838
      %v6111 = vsel %vm1901, %v6103, %v5848
      %v6112 = vsel %vm1901, %v6104, %v5850
      %v6113 = vsel %vm1901, %v6105, %v5852
      %v6114 = vsel %vm1901, %v6106, %v5854
      %v6115 = vsel %vm1901, %v6107, %v5856
      %v6116 = vsel %vm1901, %v6108, %v5858
      %v6117 = vsel %vm1901, %v6109, %v5860
      %v6118 = vsel %vm1901, %v6110, %v5862
      %v6119 = vsel %vm1910, %v6111, %v5872
      %v6120 = vsel %vm1910, %v6112, %v5874
      %v6121 = vsel %vm1910, %v6113, %v5876
      %v6122 = vsel %vm1910, %v6114, %v5878
      %v6123 = vsel %vm1910, %v6115, %v5880
      %v6124 = vsel %vm1910, %v6116, %v5882
      %v6125 = vsel %vm1910, %v6117, %v5884
      %v6126 = vsel %vm1910, %v6118, %v5886
      %v6127 = vsel %vm1919, %v6119, %v5896
      %v6128 = vsel %vm1919, %v6120, %v5898
      %v6129 = vsel %vm1919, %v6121, %v5900
      %v6130 = vsel %vm1919, %v6122, %v5902
      %v6131 = vsel %vm1919, %v6123, %v5904
      %v6132 = vsel %vm1919, %v6124, %v5906
      %v6133 = vsel %vm1919, %v6125, %v5908
      %v6134 = vsel %vm1919, %v6126, %v5910
      %v6135 = vsel %vm1928, %v6127, %v5920
      %v6136 = vsel %vm1928, %v6128, %v5922
      %v6137 = vsel %vm1928, %v6129, %v5924
      %v6138 = vsel %vm1928, %v6130, %v5926
      %v6139 = vsel %vm1928, %v6131, %v5928
      %v6140 = vsel %vm1928, %v6132, %v5930
      %v6141 = vsel %vm1928, %v6133, %v5932
      %v6142 = vsel %vm1928, %v6134, %v5934
      %v6143 = vsel %vm1937, %v6135, %v5944
      %v6144 = vsel %vm1937, %v6136, %v5946
      %v6145 = vsel %vm1937, %v6137, %v5948
      %v6146 = vsel %vm1937, %v6138, %v5950
      %v6147 = vsel %vm1937, %v6139, %v5952
      %v6148 = vsel %vm1937, %v6140, %v5954
      %v6149 = vsel %vm1937, %v6141, %v5956
      %v6150 = vsel %vm1937, %v6142, %v5958
      %v6151 = vsel %vm1946, %v6143, %v5968
      %v6152 = vsel %vm1946, %v6144, %v5970
      %v6153 = vsel %vm1946, %v6145, %v5972
      %v6154 = vsel %vm1946, %v6146, %v5974
      %v6155 = vsel %vm1946, %v6147, %v5976
      %v6156 = vsel %vm1946, %v6148, %v5978
      %v6157 = vsel %vm1946, %v6149, %v5980
      %v6158 = vsel %vm1946, %v6150, %v5982
      %v6159 = vsel %vm1955, %v6151, %v5992
      %v6160 = vsel %vm1955, %v6152, %v5994
      %v6161 = vsel %vm1955, %v6153, %v5996
      %v6162 = vsel %vm1955, %v6154, %v5998
      %v6163 = vsel %vm1955, %v6155, %v6000
      %v6164 = vsel %vm1955, %v6156, %v6002
      %v6165 = vsel %vm1955, %v6157, %v6004
      %v6166 = vsel %vm1955, %v6158, %v6006
      %v6167 = vsel %vm1964, %v6159, %v6016
      %v6168 = vsel %vm1964, %v6160, %v6018
      %v6169 = vsel %vm1964, %v6161, %v6020
      %v6170 = vsel %vm1964, %v6162, %v6022
      %v6171 = vsel %vm1964, %v6163, %v6024
      %v6172 = vsel %vm1964, %v6164, %v6026
      %v6173 = vsel %vm1964, %v6165, %v6028
      %v6174 = vsel %vm1964, %v6166, %v6030
      %v6175 = vsel %vm1973, %v6167, %v6040
      %v6176 = vsel %vm1973, %v6168, %v6042
      %v6177 = vsel %vm1973, %v6169, %v6044
      %v6178 = vsel %vm1973, %v6170, %v6046
      %v6179 = vsel %vm1973, %v6171, %v6048
      %v6180 = vsel %vm1973, %v6172, %v6050
      %v6181 = vsel %vm1973, %v6173, %v6052
      %v6182 = vsel %vm1973, %v6174, %v6054
      %6183 = vrot.lane.b32.xlu0 %v1191, 4
      %v6184 = vpop.permute.xlu0 %6183
      %6185 = vrot.lane.b32.xlu0 %v1194, 4
      %v6186 = vpop.permute.xlu0 %6185
      %6187 = vrot.lane.b32.xlu0 %v1197, 4
      %v6188 = vpop.permute.xlu0 %6187
      %6189 = vrot.lane.b32.xlu0 %v1200, 4
      %v6190 = vpop.permute.xlu0 %6189
      %6191 = vrot.lane.b32.xlu0 %v1203, 4
      %v6192 = vpop.permute.xlu0 %6191
      %6193 = vrot.lane.b32.xlu0 %v1206, 4
      %v6194 = vpop.permute.xlu0 %6193
      %6195 = vrot.lane.b32.xlu0 %v1214, 4
      %v6196 = vpop.permute.xlu0 %6195
      %6197 = vrot.lane.b32.xlu0 %v1230, 4
      %v6198 = vpop.permute.xlu0 %6197
      %6207 = vrot.lane.b32.xlu0 %v561, 8
      %v6208 = vpop.permute.xlu0 %6207
      %6209 = vrot.lane.b32.xlu0 %v563, 8
      %v6210 = vpop.permute.xlu0 %6209
      %6211 = vrot.lane.b32.xlu0 %v565, 8
      %v6212 = vpop.permute.xlu0 %6211
      %6213 = vrot.lane.b32.xlu0 %v567, 8
      %v6214 = vpop.permute.xlu0 %6213
      %6215 = vrot.lane.b32.xlu0 %v569, 8
      %v6216 = vpop.permute.xlu0 %6215
      %6217 = vrot.lane.b32.xlu0 %v571, 8
      %v6218 = vpop.permute.xlu0 %6217
      %6219 = vrot.lane.b32.xlu0 %v573, 8
      %v6220 = vpop.permute.xlu0 %6219
      %6221 = vrot.lane.b32.xlu0 %v575, 8
      %v6222 = vpop.permute.xlu0 %6221
      %6231 = vrot.lane.b32.xlu0 %v1249, 12
      %v6232 = vpop.permute.xlu0 %6231
      %6233 = vrot.lane.b32.xlu0 %v1252, 12
      %v6234 = vpop.permute.xlu0 %6233
      %6235 = vrot.lane.b32.xlu0 %v1255, 12
      %v6236 = vpop.permute.xlu0 %6235
      %6237 = vrot.lane.b32.xlu0 %v1258, 12
      %v6238 = vpop.permute.xlu0 %6237
      %6239 = vrot.lane.b32.xlu0 %v1261, 12
      %v6240 = vpop.permute.xlu0 %6239
      %6241 = vrot.lane.b32.xlu0 %v1264, 12
      %v6242 = vpop.permute.xlu0 %6241
      %6243 = vrot.lane.b32.xlu0 %v1267, 12
      %v6244 = vpop.permute.xlu0 %6243
      %6245 = vrot.lane.b32.xlu0 %v1270, 12
      %v6246 = vpop.permute.xlu0 %6245
      %6255 = vrot.lane.b32.xlu0 %v1273, 16
      %v6256 = vpop.permute.xlu0 %6255
      %6257 = vrot.lane.b32.xlu0 %v1276, 16
      %v6258 = vpop.permute.xlu0 %6257
      %6259 = vrot.lane.b32.xlu0 %v1279, 16
      %v6260 = vpop.permute.xlu0 %6259
      %6261 = vrot.lane.b32.xlu0 %v1282, 16
      %v6262 = vpop.permute.xlu0 %6261
      %6263 = vrot.lane.b32.xlu0 %v1285, 16
      %v6264 = vpop.permute.xlu0 %6263
      %6265 = vrot.lane.b32.xlu0 %v1288, 16
      %v6266 = vpop.permute.xlu0 %6265
      %6267 = vrot.lane.b32.xlu0 %v1291, 16
      %v6268 = vpop.permute.xlu0 %6267
      %6269 = vrot.lane.b32.xlu0 %v1294, 16
      %v6270 = vpop.permute.xlu0 %6269
      %6279 = vrot.lane.b32.xlu0 %v563, 20
      %v6280 = vpop.permute.xlu0 %6279
      %6281 = vrot.lane.b32.xlu0 %v565, 20
      %v6282 = vpop.permute.xlu0 %6281
      %6283 = vrot.lane.b32.xlu0 %v567, 20
      %v6284 = vpop.permute.xlu0 %6283
      %6285 = vrot.lane.b32.xlu0 %v569, 20
      %v6286 = vpop.permute.xlu0 %6285
      %6287 = vrot.lane.b32.xlu0 %v571, 20
      %v6288 = vpop.permute.xlu0 %6287
      %6289 = vrot.lane.b32.xlu0 %v573, 20
      %v6290 = vpop.permute.xlu0 %6289
      %6291 = vrot.lane.b32.xlu0 %v575, 20
      %v6292 = vpop.permute.xlu0 %6291
      %6293 = vrot.lane.b32.xlu0 %v577, 20
      %v6294 = vpop.permute.xlu0 %6293
      %6303 = vrot.lane.b32.xlu0 %v1252, 24
      %v6304 = vpop.permute.xlu0 %6303
      %6305 = vrot.lane.b32.xlu0 %v1255, 24
      %v6306 = vpop.permute.xlu0 %6305
      %6307 = vrot.lane.b32.xlu0 %v1258, 24
      %v6308 = vpop.permute.xlu0 %6307
      %6309 = vrot.lane.b32.xlu0 %v1261, 24
      %v6310 = vpop.permute.xlu0 %6309
      %6311 = vrot.lane.b32.xlu0 %v1264, 24
      %v6312 = vpop.permute.xlu0 %6311
      %6313 = vrot.lane.b32.xlu0 %v1267, 24
      %v6314 = vpop.permute.xlu0 %6313
      %6315 = vrot.lane.b32.xlu0 %v1270, 24
      %v6316 = vpop.permute.xlu0 %6315
      %6317 = vrot.lane.b32.xlu0 %v1299, 24
      %v6318 = vpop.permute.xlu0 %6317
      %6327 = vrot.lane.b32.xlu0 %v1276, 28
      %v6328 = vpop.permute.xlu0 %6327
      %6329 = vrot.lane.b32.xlu0 %v1279, 28
      %v6330 = vpop.permute.xlu0 %6329
      %6331 = vrot.lane.b32.xlu0 %v1282, 28
      %v6332 = vpop.permute.xlu0 %6331
      %6333 = vrot.lane.b32.xlu0 %v1285, 28
      %v6334 = vpop.permute.xlu0 %6333
      %6335 = vrot.lane.b32.xlu0 %v1288, 28
      %v6336 = vpop.permute.xlu0 %6335
      %6337 = vrot.lane.b32.xlu0 %v1291, 28
      %v6338 = vpop.permute.xlu0 %6337
      %6339 = vrot.lane.b32.xlu0 %v1294, 28
      %v6340 = vpop.permute.xlu0 %6339
      %6341 = vrot.lane.b32.xlu0 %v1302, 28
      %v6342 = vpop.permute.xlu0 %6341
      %6351 = vrot.lane.b32.xlu0 %v565, 32
      %v6352 = vpop.permute.xlu0 %6351
      %6353 = vrot.lane.b32.xlu0 %v567, 32
      %v6354 = vpop.permute.xlu0 %6353
      %6355 = vrot.lane.b32.xlu0 %v569, 32
      %v6356 = vpop.permute.xlu0 %6355
      %6357 = vrot.lane.b32.xlu0 %v571, 32
      %v6358 = vpop.permute.xlu0 %6357
      %6359 = vrot.lane.b32.xlu0 %v573, 32
      %v6360 = vpop.permute.xlu0 %6359
      %6361 = vrot.lane.b32.xlu0 %v575, 32
      %v6362 = vpop.permute.xlu0 %6361
      %6363 = vrot.lane.b32.xlu0 %v577, 32
      %v6364 = vpop.permute.xlu0 %6363
      %6365 = vrot.lane.b32.xlu0 %v579, 32
      %v6366 = vpop.permute.xlu0 %6365
      %6375 = vrot.lane.b32.xlu0 %v1255, 36
      %v6376 = vpop.permute.xlu0 %6375
      %6377 = vrot.lane.b32.xlu0 %v1258, 36
      %v6378 = vpop.permute.xlu0 %6377
      %6379 = vrot.lane.b32.xlu0 %v1261, 36
      %v6380 = vpop.permute.xlu0 %6379
      %6381 = vrot.lane.b32.xlu0 %v1264, 36
      %v6382 = vpop.permute.xlu0 %6381
      %6383 = vrot.lane.b32.xlu0 %v1267, 36
      %v6384 = vpop.permute.xlu0 %6383
      %6385 = vrot.lane.b32.xlu0 %v1270, 36
      %v6386 = vpop.permute.xlu0 %6385
      %6387 = vrot.lane.b32.xlu0 %v1299, 36
      %v6388 = vpop.permute.xlu0 %6387
      %6389 = vrot.lane.b32.xlu0 %v1307, 36
      %v6390 = vpop.permute.xlu0 %6389
      %6399 = vrot.lane.b32.xlu0 %v1279, 40
      %v6400 = vpop.permute.xlu0 %6399
      %6401 = vrot.lane.b32.xlu0 %v1282, 40
      %v6402 = vpop.permute.xlu0 %6401
      %6403 = vrot.lane.b32.xlu0 %v1285, 40
      %v6404 = vpop.permute.xlu0 %6403
      %6405 = vrot.lane.b32.xlu0 %v1288, 40
      %v6406 = vpop.permute.xlu0 %6405
      %6407 = vrot.lane.b32.xlu0 %v1291, 40
      %v6408 = vpop.permute.xlu0 %6407
      %6409 = vrot.lane.b32.xlu0 %v1294, 40
      %v6410 = vpop.permute.xlu0 %6409
      %6411 = vrot.lane.b32.xlu0 %v1302, 40
      %v6412 = vpop.permute.xlu0 %6411
      %6413 = vrot.lane.b32.xlu0 %v1318, 40
      %v6414 = vpop.permute.xlu0 %6413
      %v6423 = vsel %vm1847, %v1167, %v6184
      %v6424 = vsel %vm1847, %v1170, %v6186
      %v6425 = vsel %vm1847, %v1173, %v6188
      %v6426 = vsel %vm1847, %v1176, %v6190
      %v6427 = vsel %vm1847, %v1179, %v6192
      %v6428 = vsel %vm1847, %v1182, %v6194
      %v6429 = vsel %vm1847, %v1211, %v6196
      %v6430 = vsel %vm1847, %v1219, %v6198
      %v6431 = vsel %vm1856, %v6423, %v6208
      %v6432 = vsel %vm1856, %v6424, %v6210
      %v6433 = vsel %vm1856, %v6425, %v6212
      %v6434 = vsel %vm1856, %v6426, %v6214
      %v6435 = vsel %vm1856, %v6427, %v6216
      %v6436 = vsel %vm1856, %v6428, %v6218
      %v6437 = vsel %vm1856, %v6429, %v6220
      %v6438 = vsel %vm1856, %v6430, %v6222
      %v6439 = vsel %vm1865, %v6431, %v6232
      %v6440 = vsel %vm1865, %v6432, %v6234
      %v6441 = vsel %vm1865, %v6433, %v6236
      %v6442 = vsel %vm1865, %v6434, %v6238
      %v6443 = vsel %vm1865, %v6435, %v6240
      %v6444 = vsel %vm1865, %v6436, %v6242
      %v6445 = vsel %vm1865, %v6437, %v6244
      %v6446 = vsel %vm1865, %v6438, %v6246
      %v6447 = vsel %vm1874, %v6439, %v6256
      %v6448 = vsel %vm1874, %v6440, %v6258
      %v6449 = vsel %vm1874, %v6441, %v6260
      %v6450 = vsel %vm1874, %v6442, %v6262
      %v6451 = vsel %vm1874, %v6443, %v6264
      %v6452 = vsel %vm1874, %v6444, %v6266
      %v6453 = vsel %vm1874, %v6445, %v6268
      %v6454 = vsel %vm1874, %v6446, %v6270
      %v6455 = vsel %vm1883, %v6447, %v6280
      %v6456 = vsel %vm1883, %v6448, %v6282
      %v6457 = vsel %vm1883, %v6449, %v6284
      %v6458 = vsel %vm1883, %v6450, %v6286
      %v6459 = vsel %vm1883, %v6451, %v6288
      %v6460 = vsel %vm1883, %v6452, %v6290
      %v6461 = vsel %vm1883, %v6453, %v6292
      %v6462 = vsel %vm1883, %v6454, %v6294
      %v6463 = vsel %vm1892, %v6455, %v6304
      %v6464 = vsel %vm1892, %v6456, %v6306
      %v6465 = vsel %vm1892, %v6457, %v6308
      %v6466 = vsel %vm1892, %v6458, %v6310
      %v6467 = vsel %vm1892, %v6459, %v6312
      %v6468 = vsel %vm1892, %v6460, %v6314
      %v6469 = vsel %vm1892, %v6461, %v6316
      %v6470 = vsel %vm1892, %v6462, %v6318
      %v6471 = vsel %vm1901, %v6463, %v6328
      %v6472 = vsel %vm1901, %v6464, %v6330
      %v6473 = vsel %vm1901, %v6465, %v6332
      %v6474 = vsel %vm1901, %v6466, %v6334
      %v6475 = vsel %vm1901, %v6467, %v6336
      %v6476 = vsel %vm1901, %v6468, %v6338
      %v6477 = vsel %vm1901, %v6469, %v6340
      %v6478 = vsel %vm1901, %v6470, %v6342
      %v6479 = vsel %vm1910, %v6471, %v6352
      %v6480 = vsel %vm1910, %v6472, %v6354
      %v6481 = vsel %vm1910, %v6473, %v6356
      %v6482 = vsel %vm1910, %v6474, %v6358
      %v6483 = vsel %vm1910, %v6475, %v6360
      %v6484 = vsel %vm1910, %v6476, %v6362
      %v6485 = vsel %vm1910, %v6477, %v6364
      %v6486 = vsel %vm1910, %v6478, %v6366
      %v6487 = vsel %vm1919, %v6479, %v6376
      %v6488 = vsel %vm1919, %v6480, %v6378
      %v6489 = vsel %vm1919, %v6481, %v6380
      %v6490 = vsel %vm1919, %v6482, %v6382
      %v6491 = vsel %vm1919, %v6483, %v6384
      %v6492 = vsel %vm1919, %v6484, %v6386
      %v6493 = vsel %vm1919, %v6485, %v6388
      %v6494 = vsel %vm1919, %v6486, %v6390
      %v6495 = vsel %vm1928, %v6487, %v6400
      %v6496 = vsel %vm1928, %v6488, %v6402
      %v6497 = vsel %vm1928, %v6489, %v6404
      %v6498 = vsel %vm1928, %v6490, %v6406
      %v6499 = vsel %vm1928, %v6491, %v6408
      %v6500 = vsel %vm1928, %v6492, %v6410
      %v6501 = vsel %vm1928, %v6493, %v6412
      %v6502 = vsel %vm1928, %v6494, %v6414
      %6511 = vrot.lane.b32.xlu0 %v6495, 64
      %v6512 = vpop.permute.xlu0 %6511
      %6513 = vrot.lane.b32.xlu0 %v6496, 64
      %v6514 = vpop.permute.xlu0 %6513
      %6515 = vrot.lane.b32.xlu0 %v6497, 64
      %v6516 = vpop.permute.xlu0 %6515
      %6517 = vrot.lane.b32.xlu0 %v6498, 64
      %v6518 = vpop.permute.xlu0 %6517
      %6519 = vrot.lane.b32.xlu0 %v6499, 64
      %v6520 = vpop.permute.xlu0 %6519
      %6521 = vrot.lane.b32.xlu0 %v6500, 64
      %v6522 = vpop.permute.xlu0 %6521
      %6523 = vrot.lane.b32.xlu0 %v6501, 64
      %v6524 = vpop.permute.xlu0 %6523
      %6525 = vrot.lane.b32.xlu0 %v6502, 64
      %v6526 = vpop.permute.xlu0 %6525
      %v6535 = vsel %vm2334, %v6175, %v6512
      %v6536 = vsel %vm2334, %v6176, %v6514
      %v6537 = vsel %vm2334, %v6177, %v6516
      %v6538 = vsel %vm2334, %v6178, %v6518
      %v6539 = vsel %vm2334, %v6179, %v6520
      %v6540 = vsel %vm2334, %v6180, %v6522
      %v6541 = vsel %vm2334, %v6181, %v6524
      %v6542 = vsel %vm2334, %v6182, %v6526
      %6543 = vrot.lane.b32.xlu0 %v1161, 4
      %v6544 = vpop.permute.xlu0 %6543
      %6545 = vrot.lane.b32.xlu0 %v1164, 4
      %v6546 = vpop.permute.xlu0 %6545
      %6547 = vrot.lane.b32.xlu0 %v1167, 4
      %v6548 = vpop.permute.xlu0 %6547
      %6549 = vrot.lane.b32.xlu0 %v1170, 4
      %v6550 = vpop.permute.xlu0 %6549
      %6551 = vrot.lane.b32.xlu0 %v1173, 4
      %v6552 = vpop.permute.xlu0 %6551
      %6553 = vrot.lane.b32.xlu0 %v1176, 4
      %v6554 = vpop.permute.xlu0 %6553
      %6555 = vrot.lane.b32.xlu0 %v1179, 4
      %v6556 = vpop.permute.xlu0 %6555
      %6557 = vrot.lane.b32.xlu0 %v1182, 4
      %v6558 = vpop.permute.xlu0 %6557
      %6567 = vrot.lane.b32.xlu0 %v1185, 8
      %v6568 = vpop.permute.xlu0 %6567
      %6569 = vrot.lane.b32.xlu0 %v1188, 8
      %v6570 = vpop.permute.xlu0 %6569
      %6571 = vrot.lane.b32.xlu0 %v1191, 8
      %v6572 = vpop.permute.xlu0 %6571
      %6573 = vrot.lane.b32.xlu0 %v1194, 8
      %v6574 = vpop.permute.xlu0 %6573
      %6575 = vrot.lane.b32.xlu0 %v1197, 8
      %v6576 = vpop.permute.xlu0 %6575
      %6577 = vrot.lane.b32.xlu0 %v1200, 8
      %v6578 = vpop.permute.xlu0 %6577
      %6579 = vrot.lane.b32.xlu0 %v1203, 8
      %v6580 = vpop.permute.xlu0 %6579
      %6581 = vrot.lane.b32.xlu0 %v1206, 8
      %v6582 = vpop.permute.xlu0 %6581
      %6591 = vrot.lane.b32.xlu0 %v543, 12
      %v6592 = vpop.permute.xlu0 %6591
      %6593 = vrot.lane.b32.xlu0 %v545, 12
      %v6594 = vpop.permute.xlu0 %6593
      %6595 = vrot.lane.b32.xlu0 %v547, 12
      %v6596 = vpop.permute.xlu0 %6595
      %6597 = vrot.lane.b32.xlu0 %v549, 12
      %v6598 = vpop.permute.xlu0 %6597
      %6599 = vrot.lane.b32.xlu0 %v551, 12
      %v6600 = vpop.permute.xlu0 %6599
      %6601 = vrot.lane.b32.xlu0 %v553, 12
      %v6602 = vpop.permute.xlu0 %6601
      %6603 = vrot.lane.b32.xlu0 %v555, 12
      %v6604 = vpop.permute.xlu0 %6603
      %6605 = vrot.lane.b32.xlu0 %v557, 12
      %v6606 = vpop.permute.xlu0 %6605
      %6615 = vrot.lane.b32.xlu0 %v1164, 16
      %v6616 = vpop.permute.xlu0 %6615
      %6617 = vrot.lane.b32.xlu0 %v1167, 16
      %v6618 = vpop.permute.xlu0 %6617
      %6619 = vrot.lane.b32.xlu0 %v1170, 16
      %v6620 = vpop.permute.xlu0 %6619
      %6621 = vrot.lane.b32.xlu0 %v1173, 16
      %v6622 = vpop.permute.xlu0 %6621
      %6623 = vrot.lane.b32.xlu0 %v1176, 16
      %v6624 = vpop.permute.xlu0 %6623
      %6625 = vrot.lane.b32.xlu0 %v1179, 16
      %v6626 = vpop.permute.xlu0 %6625
      %6627 = vrot.lane.b32.xlu0 %v1182, 16
      %v6628 = vpop.permute.xlu0 %6627
      %6629 = vrot.lane.b32.xlu0 %v1211, 16
      %v6630 = vpop.permute.xlu0 %6629
      %6639 = vrot.lane.b32.xlu0 %v1188, 20
      %v6640 = vpop.permute.xlu0 %6639
      %6641 = vrot.lane.b32.xlu0 %v1191, 20
      %v6642 = vpop.permute.xlu0 %6641
      %6643 = vrot.lane.b32.xlu0 %v1194, 20
      %v6644 = vpop.permute.xlu0 %6643
      %6645 = vrot.lane.b32.xlu0 %v1197, 20
      %v6646 = vpop.permute.xlu0 %6645
      %6647 = vrot.lane.b32.xlu0 %v1200, 20
      %v6648 = vpop.permute.xlu0 %6647
      %6649 = vrot.lane.b32.xlu0 %v1203, 20
      %v6650 = vpop.permute.xlu0 %6649
      %6651 = vrot.lane.b32.xlu0 %v1206, 20
      %v6652 = vpop.permute.xlu0 %6651
      %6653 = vrot.lane.b32.xlu0 %v1214, 20
      %v6654 = vpop.permute.xlu0 %6653
      %6663 = vrot.lane.b32.xlu0 %v545, 24
      %v6664 = vpop.permute.xlu0 %6663
      %6665 = vrot.lane.b32.xlu0 %v547, 24
      %v6666 = vpop.permute.xlu0 %6665
      %6667 = vrot.lane.b32.xlu0 %v549, 24
      %v6668 = vpop.permute.xlu0 %6667
      %6669 = vrot.lane.b32.xlu0 %v551, 24
      %v6670 = vpop.permute.xlu0 %6669
      %6671 = vrot.lane.b32.xlu0 %v553, 24
      %v6672 = vpop.permute.xlu0 %6671
      %6673 = vrot.lane.b32.xlu0 %v555, 24
      %v6674 = vpop.permute.xlu0 %6673
      %6675 = vrot.lane.b32.xlu0 %v557, 24
      %v6676 = vpop.permute.xlu0 %6675
      %6677 = vrot.lane.b32.xlu0 %v559, 24
      %v6678 = vpop.permute.xlu0 %6677
      %6687 = vrot.lane.b32.xlu0 %v1167, 28
      %v6688 = vpop.permute.xlu0 %6687
      %6689 = vrot.lane.b32.xlu0 %v1170, 28
      %v6690 = vpop.permute.xlu0 %6689
      %6691 = vrot.lane.b32.xlu0 %v1173, 28
      %v6692 = vpop.permute.xlu0 %6691
      %6693 = vrot.lane.b32.xlu0 %v1176, 28
      %v6694 = vpop.permute.xlu0 %6693
      %6695 = vrot.lane.b32.xlu0 %v1179, 28
      %v6696 = vpop.permute.xlu0 %6695
      %6697 = vrot.lane.b32.xlu0 %v1182, 28
      %v6698 = vpop.permute.xlu0 %6697
      %6699 = vrot.lane.b32.xlu0 %v1211, 28
      %v6700 = vpop.permute.xlu0 %6699
      %6701 = vrot.lane.b32.xlu0 %v1219, 28
      %v6702 = vpop.permute.xlu0 %6701
      %6711 = vrot.lane.b32.xlu0 %v1191, 32
      %v6712 = vpop.permute.xlu0 %6711
      %6713 = vrot.lane.b32.xlu0 %v1194, 32
      %v6714 = vpop.permute.xlu0 %6713
      %6715 = vrot.lane.b32.xlu0 %v1197, 32
      %v6716 = vpop.permute.xlu0 %6715
      %6717 = vrot.lane.b32.xlu0 %v1200, 32
      %v6718 = vpop.permute.xlu0 %6717
      %6719 = vrot.lane.b32.xlu0 %v1203, 32
      %v6720 = vpop.permute.xlu0 %6719
      %6721 = vrot.lane.b32.xlu0 %v1206, 32
      %v6722 = vpop.permute.xlu0 %6721
      %6723 = vrot.lane.b32.xlu0 %v1214, 32
      %v6724 = vpop.permute.xlu0 %6723
      %6725 = vrot.lane.b32.xlu0 %v1230, 32
      %v6726 = vpop.permute.xlu0 %6725
      %6735 = vrot.lane.b32.xlu0 %v561, 36
      %v6736 = vpop.permute.xlu0 %6735
      %6737 = vrot.lane.b32.xlu0 %v563, 36
      %v6738 = vpop.permute.xlu0 %6737
      %6739 = vrot.lane.b32.xlu0 %v565, 36
      %v6740 = vpop.permute.xlu0 %6739
      %6741 = vrot.lane.b32.xlu0 %v567, 36
      %v6742 = vpop.permute.xlu0 %6741
      %6743 = vrot.lane.b32.xlu0 %v569, 36
      %v6744 = vpop.permute.xlu0 %6743
      %6745 = vrot.lane.b32.xlu0 %v571, 36
      %v6746 = vpop.permute.xlu0 %6745
      %6747 = vrot.lane.b32.xlu0 %v573, 36
      %v6748 = vpop.permute.xlu0 %6747
      %6749 = vrot.lane.b32.xlu0 %v575, 36
      %v6750 = vpop.permute.xlu0 %6749
      %6759 = vrot.lane.b32.xlu0 %v1249, 40
      %v6760 = vpop.permute.xlu0 %6759
      %6761 = vrot.lane.b32.xlu0 %v1252, 40
      %v6762 = vpop.permute.xlu0 %6761
      %6763 = vrot.lane.b32.xlu0 %v1255, 40
      %v6764 = vpop.permute.xlu0 %6763
      %6765 = vrot.lane.b32.xlu0 %v1258, 40
      %v6766 = vpop.permute.xlu0 %6765
      %6767 = vrot.lane.b32.xlu0 %v1261, 40
      %v6768 = vpop.permute.xlu0 %6767
      %6769 = vrot.lane.b32.xlu0 %v1264, 40
      %v6770 = vpop.permute.xlu0 %6769
      %6771 = vrot.lane.b32.xlu0 %v1267, 40
      %v6772 = vpop.permute.xlu0 %6771
      %6773 = vrot.lane.b32.xlu0 %v1270, 40
      %v6774 = vpop.permute.xlu0 %6773
      %6783 = vrot.lane.b32.xlu0 %v1273, 44
      %v6784 = vpop.permute.xlu0 %6783
      %6785 = vrot.lane.b32.xlu0 %v1276, 44
      %v6786 = vpop.permute.xlu0 %6785
      %6787 = vrot.lane.b32.xlu0 %v1279, 44
      %v6788 = vpop.permute.xlu0 %6787
      %6789 = vrot.lane.b32.xlu0 %v1282, 44
      %v6790 = vpop.permute.xlu0 %6789
      %6791 = vrot.lane.b32.xlu0 %v1285, 44
      %v6792 = vpop.permute.xlu0 %6791
      %6793 = vrot.lane.b32.xlu0 %v1288, 44
      %v6794 = vpop.permute.xlu0 %6793
      %6795 = vrot.lane.b32.xlu0 %v1291, 44
      %v6796 = vpop.permute.xlu0 %6795
      %6797 = vrot.lane.b32.xlu0 %v1294, 44
      %v6798 = vpop.permute.xlu0 %6797
      %6807 = vrot.lane.b32.xlu0 %v563, 48
      %v6808 = vpop.permute.xlu0 %6807
      %6809 = vrot.lane.b32.xlu0 %v565, 48
      %v6810 = vpop.permute.xlu0 %6809
      %6811 = vrot.lane.b32.xlu0 %v567, 48
      %v6812 = vpop.permute.xlu0 %6811
      %6813 = vrot.lane.b32.xlu0 %v569, 48
      %v6814 = vpop.permute.xlu0 %6813
      %6815 = vrot.lane.b32.xlu0 %v571, 48
      %v6816 = vpop.permute.xlu0 %6815
      %6817 = vrot.lane.b32.xlu0 %v573, 48
      %v6818 = vpop.permute.xlu0 %6817
      %6819 = vrot.lane.b32.xlu0 %v575, 48
      %v6820 = vpop.permute.xlu0 %6819
      %6821 = vrot.lane.b32.xlu0 %v577, 48
      %v6822 = vpop.permute.xlu0 %6821
      %6831 = vrot.lane.b32.xlu0 %v1252, 52
      %v6832 = vpop.permute.xlu0 %6831
      %6833 = vrot.lane.b32.xlu0 %v1255, 52
      %v6834 = vpop.permute.xlu0 %6833
      %6835 = vrot.lane.b32.xlu0 %v1258, 52
      %v6836 = vpop.permute.xlu0 %6835
      %6837 = vrot.lane.b32.xlu0 %v1261, 52
      %v6838 = vpop.permute.xlu0 %6837
      %6839 = vrot.lane.b32.xlu0 %v1264, 52
      %v6840 = vpop.permute.xlu0 %6839
      %6841 = vrot.lane.b32.xlu0 %v1267, 52
      %v6842 = vpop.permute.xlu0 %6841
      %6843 = vrot.lane.b32.xlu0 %v1270, 52
      %v6844 = vpop.permute.xlu0 %6843
      %6845 = vrot.lane.b32.xlu0 %v1299, 52
      %v6846 = vpop.permute.xlu0 %6845
      %6855 = vrot.lane.b32.xlu0 %v1276, 56
      %v6856 = vpop.permute.xlu0 %6855
      %6857 = vrot.lane.b32.xlu0 %v1279, 56
      %v6858 = vpop.permute.xlu0 %6857
      %6859 = vrot.lane.b32.xlu0 %v1282, 56
      %v6860 = vpop.permute.xlu0 %6859
      %6861 = vrot.lane.b32.xlu0 %v1285, 56
      %v6862 = vpop.permute.xlu0 %6861
      %6863 = vrot.lane.b32.xlu0 %v1288, 56
      %v6864 = vpop.permute.xlu0 %6863
      %6865 = vrot.lane.b32.xlu0 %v1291, 56
      %v6866 = vpop.permute.xlu0 %6865
      %6867 = vrot.lane.b32.xlu0 %v1294, 56
      %v6868 = vpop.permute.xlu0 %6867
      %6869 = vrot.lane.b32.xlu0 %v1302, 56
      %v6870 = vpop.permute.xlu0 %6869
      %6879 = vrot.lane.b32.xlu0 %v565, 60
      %v6880 = vpop.permute.xlu0 %6879
      %6881 = vrot.lane.b32.xlu0 %v567, 60
      %v6882 = vpop.permute.xlu0 %6881
      %6883 = vrot.lane.b32.xlu0 %v569, 60
      %v6884 = vpop.permute.xlu0 %6883
      %6885 = vrot.lane.b32.xlu0 %v571, 60
      %v6886 = vpop.permute.xlu0 %6885
      %6887 = vrot.lane.b32.xlu0 %v573, 60
      %v6888 = vpop.permute.xlu0 %6887
      %6889 = vrot.lane.b32.xlu0 %v575, 60
      %v6890 = vpop.permute.xlu0 %6889
      %6891 = vrot.lane.b32.xlu0 %v577, 60
      %v6892 = vpop.permute.xlu0 %6891
      %6893 = vrot.lane.b32.xlu0 %v579, 60
      %v6894 = vpop.permute.xlu0 %6893
      %v6903 = vsel %vm1847, %v541, %v6544
      %v6904 = vsel %vm1847, %v543, %v6546
      %v6905 = vsel %vm1847, %v545, %v6548
      %v6906 = vsel %vm1847, %v547, %v6550
      %v6907 = vsel %vm1847, %v549, %v6552
      %v6908 = vsel %vm1847, %v551, %v6554
      %v6909 = vsel %vm1847, %v553, %v6556
      %v6910 = vsel %vm1847, %v555, %v6558
      %v6911 = vsel %vm1856, %v6903, %v6568
      %v6912 = vsel %vm1856, %v6904, %v6570
      %v6913 = vsel %vm1856, %v6905, %v6572
      %v6914 = vsel %vm1856, %v6906, %v6574
      %v6915 = vsel %vm1856, %v6907, %v6576
      %v6916 = vsel %vm1856, %v6908, %v6578
      %v6917 = vsel %vm1856, %v6909, %v6580
      %v6918 = vsel %vm1856, %v6910, %v6582
      %v6919 = vsel %vm1865, %v6911, %v6592
      %v6920 = vsel %vm1865, %v6912, %v6594
      %v6921 = vsel %vm1865, %v6913, %v6596
      %v6922 = vsel %vm1865, %v6914, %v6598
      %v6923 = vsel %vm1865, %v6915, %v6600
      %v6924 = vsel %vm1865, %v6916, %v6602
      %v6925 = vsel %vm1865, %v6917, %v6604
      %v6926 = vsel %vm1865, %v6918, %v6606
      %v6927 = vsel %vm1874, %v6919, %v6616
      %v6928 = vsel %vm1874, %v6920, %v6618
      %v6929 = vsel %vm1874, %v6921, %v6620
      %v6930 = vsel %vm1874, %v6922, %v6622
      %v6931 = vsel %vm1874, %v6923, %v6624
      %v6932 = vsel %vm1874, %v6924, %v6626
      %v6933 = vsel %vm1874, %v6925, %v6628
      %v6934 = vsel %vm1874, %v6926, %v6630
      %v6935 = vsel %vm1883, %v6927, %v6640
      %v6936 = vsel %vm1883, %v6928, %v6642
      %v6937 = vsel %vm1883, %v6929, %v6644
      %v6938 = vsel %vm1883, %v6930, %v6646
      %v6939 = vsel %vm1883, %v6931, %v6648
      %v6940 = vsel %vm1883, %v6932, %v6650
      %v6941 = vsel %vm1883, %v6933, %v6652
      %v6942 = vsel %vm1883, %v6934, %v6654
      %v6943 = vsel %vm1892, %v6935, %v6664
      %v6944 = vsel %vm1892, %v6936, %v6666
      %v6945 = vsel %vm1892, %v6937, %v6668
      %v6946 = vsel %vm1892, %v6938, %v6670
      %v6947 = vsel %vm1892, %v6939, %v6672
      %v6948 = vsel %vm1892, %v6940, %v6674
      %v6949 = vsel %vm1892, %v6941, %v6676
      %v6950 = vsel %vm1892, %v6942, %v6678
      %v6951 = vsel %vm1901, %v6943, %v6688
      %v6952 = vsel %vm1901, %v6944, %v6690
      %v6953 = vsel %vm1901, %v6945, %v6692
      %v6954 = vsel %vm1901, %v6946, %v6694
      %v6955 = vsel %vm1901, %v6947, %v6696
      %v6956 = vsel %vm1901, %v6948, %v6698
      %v6957 = vsel %vm1901, %v6949, %v6700
      %v6958 = vsel %vm1901, %v6950, %v6702
      %v6959 = vsel %vm1910, %v6951, %v6712
      %v6960 = vsel %vm1910, %v6952, %v6714
      %v6961 = vsel %vm1910, %v6953, %v6716
      %v6962 = vsel %vm1910, %v6954, %v6718
      %v6963 = vsel %vm1910, %v6955, %v6720
      %v6964 = vsel %vm1910, %v6956, %v6722
      %v6965 = vsel %vm1910, %v6957, %v6724
      %v6966 = vsel %vm1910, %v6958, %v6726
      %v6967 = vsel %vm1919, %v6959, %v6736
      %v6968 = vsel %vm1919, %v6960, %v6738
      %v6969 = vsel %vm1919, %v6961, %v6740
      %v6970 = vsel %vm1919, %v6962, %v6742
      %v6971 = vsel %vm1919, %v6963, %v6744
      %v6972 = vsel %vm1919, %v6964, %v6746
      %v6973 = vsel %vm1919, %v6965, %v6748
      %v6974 = vsel %vm1919, %v6966, %v6750
      %v6975 = vsel %vm1928, %v6967, %v6760
      %v6976 = vsel %vm1928, %v6968, %v6762
      %v6977 = vsel %vm1928, %v6969, %v6764
      %v6978 = vsel %vm1928, %v6970, %v6766
      %v6979 = vsel %vm1928, %v6971, %v6768
      %v6980 = vsel %vm1928, %v6972, %v6770
      %v6981 = vsel %vm1928, %v6973, %v6772
      %v6982 = vsel %vm1928, %v6974, %v6774
      %v6983 = vsel %vm1937, %v6975, %v6784
      %v6984 = vsel %vm1937, %v6976, %v6786
      %v6985 = vsel %vm1937, %v6977, %v6788
      %v6986 = vsel %vm1937, %v6978, %v6790
      %v6987 = vsel %vm1937, %v6979, %v6792
      %v6988 = vsel %vm1937, %v6980, %v6794
      %v6989 = vsel %vm1937, %v6981, %v6796
      %v6990 = vsel %vm1937, %v6982, %v6798
      %v6991 = vsel %vm1946, %v6983, %v6808
      %v6992 = vsel %vm1946, %v6984, %v6810
      %v6993 = vsel %vm1946, %v6985, %v6812
      %v6994 = vsel %vm1946, %v6986, %v6814
      %v6995 = vsel %vm1946, %v6987, %v6816
      %v6996 = vsel %vm1946, %v6988, %v6818
      %v6997 = vsel %vm1946, %v6989, %v6820
      %v6998 = vsel %vm1946, %v6990, %v6822
      %v6999 = vsel %vm1955, %v6991, %v6832
      %v7000 = vsel %vm1955, %v6992, %v6834
      %v7001 = vsel %vm1955, %v6993, %v6836
      %v7002 = vsel %vm1955, %v6994, %v6838
      %v7003 = vsel %vm1955, %v6995, %v6840
      %v7004 = vsel %vm1955, %v6996, %v6842
      %v7005 = vsel %vm1955, %v6997, %v6844
      %v7006 = vsel %vm1955, %v6998, %v6846
      %v7007 = vsel %vm1964, %v6999, %v6856
      %v7008 = vsel %vm1964, %v7000, %v6858
      %v7009 = vsel %vm1964, %v7001, %v6860
      %v7010 = vsel %vm1964, %v7002, %v6862
      %v7011 = vsel %vm1964, %v7003, %v6864
      %v7012 = vsel %vm1964, %v7004, %v6866
      %v7013 = vsel %vm1964, %v7005, %v6868
      %v7014 = vsel %vm1964, %v7006, %v6870
      %v7015 = vsel %vm1973, %v7007, %v6880
      %v7016 = vsel %vm1973, %v7008, %v6882
      %v7017 = vsel %vm1973, %v7009, %v6884
      %v7018 = vsel %vm1973, %v7010, %v6886
      %v7019 = vsel %vm1973, %v7011, %v6888
      %v7020 = vsel %vm1973, %v7012, %v6890
      %v7021 = vsel %vm1973, %v7013, %v6892
      %v7022 = vsel %vm1973, %v7014, %v6894
      %7023 = vrot.lane.b32.xlu0 %v1279, 4
      %v7024 = vpop.permute.xlu0 %7023
      %7025 = vrot.lane.b32.xlu0 %v1282, 4
      %v7026 = vpop.permute.xlu0 %7025
      %7027 = vrot.lane.b32.xlu0 %v1285, 4
      %v7028 = vpop.permute.xlu0 %7027
      %7029 = vrot.lane.b32.xlu0 %v1288, 4
      %v7030 = vpop.permute.xlu0 %7029
      %7031 = vrot.lane.b32.xlu0 %v1291, 4
      %v7032 = vpop.permute.xlu0 %7031
      %7033 = vrot.lane.b32.xlu0 %v1294, 4
      %v7034 = vpop.permute.xlu0 %7033
      %7035 = vrot.lane.b32.xlu0 %v1302, 4
      %v7036 = vpop.permute.xlu0 %7035
      %7037 = vrot.lane.b32.xlu0 %v1318, 4
      %v7038 = vpop.permute.xlu0 %7037
      %7047 = vrot.lane.b32.xlu0 %v581, 8
      %v7048 = vpop.permute.xlu0 %7047
      %7049 = vrot.lane.b32.xlu0 %v583, 8
      %v7050 = vpop.permute.xlu0 %7049
      %7051 = vrot.lane.b32.xlu0 %v585, 8
      %v7052 = vpop.permute.xlu0 %7051
      %7053 = vrot.lane.b32.xlu0 %v587, 8
      %v7054 = vpop.permute.xlu0 %7053
      %7055 = vrot.lane.b32.xlu0 %v589, 8
      %v7056 = vpop.permute.xlu0 %7055
      %7057 = vrot.lane.b32.xlu0 %v591, 8
      %v7058 = vpop.permute.xlu0 %7057
      %7059 = vrot.lane.b32.xlu0 %v593, 8
      %v7060 = vpop.permute.xlu0 %7059
      %7061 = vrot.lane.b32.xlu0 %v595, 8
      %v7062 = vpop.permute.xlu0 %7061
      %7071 = vrot.lane.b32.xlu0 %v1337, 12
      %v7072 = vpop.permute.xlu0 %7071
      %7073 = vrot.lane.b32.xlu0 %v1340, 12
      %v7074 = vpop.permute.xlu0 %7073
      %7075 = vrot.lane.b32.xlu0 %v1343, 12
      %v7076 = vpop.permute.xlu0 %7075
      %7077 = vrot.lane.b32.xlu0 %v1346, 12
      %v7078 = vpop.permute.xlu0 %7077
      %7079 = vrot.lane.b32.xlu0 %v1349, 12
      %v7080 = vpop.permute.xlu0 %7079
      %7081 = vrot.lane.b32.xlu0 %v1352, 12
      %v7082 = vpop.permute.xlu0 %7081
      %7083 = vrot.lane.b32.xlu0 %v1355, 12
      %v7084 = vpop.permute.xlu0 %7083
      %7085 = vrot.lane.b32.xlu0 %v1358, 12
      %v7086 = vpop.permute.xlu0 %7085
      %7095 = vrot.lane.b32.xlu0 %v1361, 16
      %v7096 = vpop.permute.xlu0 %7095
      %7097 = vrot.lane.b32.xlu0 %v1364, 16
      %v7098 = vpop.permute.xlu0 %7097
      %7099 = vrot.lane.b32.xlu0 %v1367, 16
      %v7100 = vpop.permute.xlu0 %7099
      %7101 = vrot.lane.b32.xlu0 %v1370, 16
      %v7102 = vpop.permute.xlu0 %7101
      %7103 = vrot.lane.b32.xlu0 %v1373, 16
      %v7104 = vpop.permute.xlu0 %7103
      %7105 = vrot.lane.b32.xlu0 %v1376, 16
      %v7106 = vpop.permute.xlu0 %7105
      %7107 = vrot.lane.b32.xlu0 %v1379, 16
      %v7108 = vpop.permute.xlu0 %7107
      %7109 = vrot.lane.b32.xlu0 %v1382, 16
      %v7110 = vpop.permute.xlu0 %7109
      %7119 = vrot.lane.b32.xlu0 %v583, 20
      %v7120 = vpop.permute.xlu0 %7119
      %7121 = vrot.lane.b32.xlu0 %v585, 20
      %v7122 = vpop.permute.xlu0 %7121
      %7123 = vrot.lane.b32.xlu0 %v587, 20
      %v7124 = vpop.permute.xlu0 %7123
      %7125 = vrot.lane.b32.xlu0 %v589, 20
      %v7126 = vpop.permute.xlu0 %7125
      %7127 = vrot.lane.b32.xlu0 %v591, 20
      %v7128 = vpop.permute.xlu0 %7127
      %7129 = vrot.lane.b32.xlu0 %v593, 20
      %v7130 = vpop.permute.xlu0 %7129
      %7131 = vrot.lane.b32.xlu0 %v595, 20
      %v7132 = vpop.permute.xlu0 %7131
      %7133 = vrot.lane.b32.xlu0 %v597, 20
      %v7134 = vpop.permute.xlu0 %7133
      %7143 = vrot.lane.b32.xlu0 %v1340, 24
      %v7144 = vpop.permute.xlu0 %7143
      %7145 = vrot.lane.b32.xlu0 %v1343, 24
      %v7146 = vpop.permute.xlu0 %7145
      %7147 = vrot.lane.b32.xlu0 %v1346, 24
      %v7148 = vpop.permute.xlu0 %7147
      %7149 = vrot.lane.b32.xlu0 %v1349, 24
      %v7150 = vpop.permute.xlu0 %7149
      %7151 = vrot.lane.b32.xlu0 %v1352, 24
      %v7152 = vpop.permute.xlu0 %7151
      %7153 = vrot.lane.b32.xlu0 %v1355, 24
      %v7154 = vpop.permute.xlu0 %7153
      %7155 = vrot.lane.b32.xlu0 %v1358, 24
      %v7156 = vpop.permute.xlu0 %7155
      %7157 = vrot.lane.b32.xlu0 %v1387, 24
      %v7158 = vpop.permute.xlu0 %7157
      %7167 = vrot.lane.b32.xlu0 %v1364, 28
      %v7168 = vpop.permute.xlu0 %7167
      %7169 = vrot.lane.b32.xlu0 %v1367, 28
      %v7170 = vpop.permute.xlu0 %7169
      %7171 = vrot.lane.b32.xlu0 %v1370, 28
      %v7172 = vpop.permute.xlu0 %7171
      %7173 = vrot.lane.b32.xlu0 %v1373, 28
      %v7174 = vpop.permute.xlu0 %7173
      %7175 = vrot.lane.b32.xlu0 %v1376, 28
      %v7176 = vpop.permute.xlu0 %7175
      %7177 = vrot.lane.b32.xlu0 %v1379, 28
      %v7178 = vpop.permute.xlu0 %7177
      %7179 = vrot.lane.b32.xlu0 %v1382, 28
      %v7180 = vpop.permute.xlu0 %7179
      %7181 = vrot.lane.b32.xlu0 %v1390, 28
      %v7182 = vpop.permute.xlu0 %7181
      %7191 = vrot.lane.b32.xlu0 %v585, 32
      %v7192 = vpop.permute.xlu0 %7191
      %7193 = vrot.lane.b32.xlu0 %v587, 32
      %v7194 = vpop.permute.xlu0 %7193
      %7195 = vrot.lane.b32.xlu0 %v589, 32
      %v7196 = vpop.permute.xlu0 %7195
      %7197 = vrot.lane.b32.xlu0 %v591, 32
      %v7198 = vpop.permute.xlu0 %7197
      %7199 = vrot.lane.b32.xlu0 %v593, 32
      %v7200 = vpop.permute.xlu0 %7199
      %7201 = vrot.lane.b32.xlu0 %v595, 32
      %v7202 = vpop.permute.xlu0 %7201
      %7203 = vrot.lane.b32.xlu0 %v597, 32
      %v7204 = vpop.permute.xlu0 %7203
      %7205 = vrot.lane.b32.xlu0 %v599, 32
      %v7206 = vpop.permute.xlu0 %7205
      %7215 = vrot.lane.b32.xlu0 %v1343, 36
      %v7216 = vpop.permute.xlu0 %7215
      %7217 = vrot.lane.b32.xlu0 %v1346, 36
      %v7218 = vpop.permute.xlu0 %7217
      %7219 = vrot.lane.b32.xlu0 %v1349, 36
      %v7220 = vpop.permute.xlu0 %7219
      %7221 = vrot.lane.b32.xlu0 %v1352, 36
      %v7222 = vpop.permute.xlu0 %7221
      %7223 = vrot.lane.b32.xlu0 %v1355, 36
      %v7224 = vpop.permute.xlu0 %7223
      %7225 = vrot.lane.b32.xlu0 %v1358, 36
      %v7226 = vpop.permute.xlu0 %7225
      %7227 = vrot.lane.b32.xlu0 %v1387, 36
      %v7228 = vpop.permute.xlu0 %7227
      %7229 = vrot.lane.b32.xlu0 %v1395, 36
      %v7230 = vpop.permute.xlu0 %7229
      %7239 = vrot.lane.b32.xlu0 %v1367, 40
      %v7240 = vpop.permute.xlu0 %7239
      %7241 = vrot.lane.b32.xlu0 %v1370, 40
      %v7242 = vpop.permute.xlu0 %7241
      %7243 = vrot.lane.b32.xlu0 %v1373, 40
      %v7244 = vpop.permute.xlu0 %7243
      %7245 = vrot.lane.b32.xlu0 %v1376, 40
      %v7246 = vpop.permute.xlu0 %7245
      %7247 = vrot.lane.b32.xlu0 %v1379, 40
      %v7248 = vpop.permute.xlu0 %7247
      %7249 = vrot.lane.b32.xlu0 %v1382, 40
      %v7250 = vpop.permute.xlu0 %7249
      %7251 = vrot.lane.b32.xlu0 %v1390, 40
      %v7252 = vpop.permute.xlu0 %7251
      %7253 = vrot.lane.b32.xlu0 %v1406, 40
      %v7254 = vpop.permute.xlu0 %7253
      %v7263 = vsel %vm1847, %v1255, %v7024
      %v7264 = vsel %vm1847, %v1258, %v7026
      %v7265 = vsel %vm1847, %v1261, %v7028
      %v7266 = vsel %vm1847, %v1264, %v7030
      %v7267 = vsel %vm1847, %v1267, %v7032
      %v7268 = vsel %vm1847, %v1270, %v7034
      %v7269 = vsel %vm1847, %v1299, %v7036
      %v7270 = vsel %vm1847, %v1307, %v7038
      %v7271 = vsel %vm1856, %v7263, %v7048
      %v7272 = vsel %vm1856, %v7264, %v7050
      %v7273 = vsel %vm1856, %v7265, %v7052
      %v7274 = vsel %vm1856, %v7266, %v7054
      %v7275 = vsel %vm1856, %v7267, %v7056
      %v7276 = vsel %vm1856, %v7268, %v7058
      %v7277 = vsel %vm1856, %v7269, %v7060
      %v7278 = vsel %vm1856, %v7270, %v7062
      %v7279 = vsel %vm1865, %v7271, %v7072
      %v7280 = vsel %vm1865, %v7272, %v7074
      %v7281 = vsel %vm1865, %v7273, %v7076
      %v7282 = vsel %vm1865, %v7274, %v7078
      %v7283 = vsel %vm1865, %v7275, %v7080
      %v7284 = vsel %vm1865, %v7276, %v7082
      %v7285 = vsel %vm1865, %v7277, %v7084
      %v7286 = vsel %vm1865, %v7278, %v7086
      %v7287 = vsel %vm1874, %v7279, %v7096
      %v7288 = vsel %vm1874, %v7280, %v7098
      %v7289 = vsel %vm1874, %v7281, %v7100
      %v7290 = vsel %vm1874, %v7282, %v7102
      %v7291 = vsel %vm1874, %v7283, %v7104
      %v7292 = vsel %vm1874, %v7284, %v7106
      %v7293 = vsel %vm1874, %v7285, %v7108
      %v7294 = vsel %vm1874, %v7286, %v7110
      %v7295 = vsel %vm1883, %v7287, %v7120
      %v7296 = vsel %vm1883, %v7288, %v7122
      %v7297 = vsel %vm1883, %v7289, %v7124
      %v7298 = vsel %vm1883, %v7290, %v7126
      %v7299 = vsel %vm1883, %v7291, %v7128
      %v7300 = vsel %vm1883, %v7292, %v7130
      %v7301 = vsel %vm1883, %v7293, %v7132
      %v7302 = vsel %vm1883, %v7294, %v7134
      %v7303 = vsel %vm1892, %v7295, %v7144
      %v7304 = vsel %vm1892, %v7296, %v7146
      %v7305 = vsel %vm1892, %v7297, %v7148
      %v7306 = vsel %vm1892, %v7298, %v7150
      %v7307 = vsel %vm1892, %v7299, %v7152
      %v7308 = vsel %vm1892, %v7300, %v7154
      %v7309 = vsel %vm1892, %v7301, %v7156
      %v7310 = vsel %vm1892, %v7302, %v7158
      %v7311 = vsel %vm1901, %v7303, %v7168
      %v7312 = vsel %vm1901, %v7304, %v7170
      %v7313 = vsel %vm1901, %v7305, %v7172
      %v7314 = vsel %vm1901, %v7306, %v7174
      %v7315 = vsel %vm1901, %v7307, %v7176
      %v7316 = vsel %vm1901, %v7308, %v7178
      %v7317 = vsel %vm1901, %v7309, %v7180
      %v7318 = vsel %vm1901, %v7310, %v7182
      %v7319 = vsel %vm1910, %v7311, %v7192
      %v7320 = vsel %vm1910, %v7312, %v7194
      %v7321 = vsel %vm1910, %v7313, %v7196
      %v7322 = vsel %vm1910, %v7314, %v7198
      %v7323 = vsel %vm1910, %v7315, %v7200
      %v7324 = vsel %vm1910, %v7316, %v7202
      %v7325 = vsel %vm1910, %v7317, %v7204
      %v7326 = vsel %vm1910, %v7318, %v7206
      %v7327 = vsel %vm1919, %v7319, %v7216
      %v7328 = vsel %vm1919, %v7320, %v7218
      %v7329 = vsel %vm1919, %v7321, %v7220
      %v7330 = vsel %vm1919, %v7322, %v7222
      %v7331 = vsel %vm1919, %v7323, %v7224
      %v7332 = vsel %vm1919, %v7324, %v7226
      %v7333 = vsel %vm1919, %v7325, %v7228
      %v7334 = vsel %vm1919, %v7326, %v7230
      %v7335 = vsel %vm1928, %v7327, %v7240
      %v7336 = vsel %vm1928, %v7328, %v7242
      %v7337 = vsel %vm1928, %v7329, %v7244
      %v7338 = vsel %vm1928, %v7330, %v7246
      %v7339 = vsel %vm1928, %v7331, %v7248
      %v7340 = vsel %vm1928, %v7332, %v7250
      %v7341 = vsel %vm1928, %v7333, %v7252
      %v7342 = vsel %vm1928, %v7334, %v7254
      %7351 = vrot.lane.b32.xlu0 %v7335, 64
      %v7352 = vpop.permute.xlu0 %7351
      %7353 = vrot.lane.b32.xlu0 %v7336, 64
      %v7354 = vpop.permute.xlu0 %7353
      %7355 = vrot.lane.b32.xlu0 %v7337, 64
      %v7356 = vpop.permute.xlu0 %7355
      %7357 = vrot.lane.b32.xlu0 %v7338, 64
      %v7358 = vpop.permute.xlu0 %7357
      %7359 = vrot.lane.b32.xlu0 %v7339, 64
      %v7360 = vpop.permute.xlu0 %7359
      %7361 = vrot.lane.b32.xlu0 %v7340, 64
      %v7362 = vpop.permute.xlu0 %7361
      %7363 = vrot.lane.b32.xlu0 %v7341, 64
      %v7364 = vpop.permute.xlu0 %7363
      %7365 = vrot.lane.b32.xlu0 %v7342, 64
      %v7366 = vpop.permute.xlu0 %7365
      %v7375 = vsel %vm2334, %v7015, %v7352
      %v7376 = vsel %vm2334, %v7016, %v7354
      %v7377 = vsel %vm2334, %v7017, %v7356
      %v7378 = vsel %vm2334, %v7018, %v7358
      %v7379 = vsel %vm2334, %v7019, %v7360
      %v7380 = vsel %vm2334, %v7020, %v7362
      %v7381 = vsel %vm2334, %v7021, %v7364
      %v7382 = vsel %vm2334, %v7022, %v7366
      %7383 = vrot.lane.b32.xlu0 %v1249, 4
      %v7384 = vpop.permute.xlu0 %7383
      %7385 = vrot.lane.b32.xlu0 %v1252, 4
      %v7386 = vpop.permute.xlu0 %7385
      %7387 = vrot.lane.b32.xlu0 %v1255, 4
      %v7388 = vpop.permute.xlu0 %7387
      %7389 = vrot.lane.b32.xlu0 %v1258, 4
      %v7390 = vpop.permute.xlu0 %7389
      %7391 = vrot.lane.b32.xlu0 %v1261, 4
      %v7392 = vpop.permute.xlu0 %7391
      %7393 = vrot.lane.b32.xlu0 %v1264, 4
      %v7394 = vpop.permute.xlu0 %7393
      %7395 = vrot.lane.b32.xlu0 %v1267, 4
      %v7396 = vpop.permute.xlu0 %7395
      %7397 = vrot.lane.b32.xlu0 %v1270, 4
      %v7398 = vpop.permute.xlu0 %7397
      %7407 = vrot.lane.b32.xlu0 %v1273, 8
      %v7408 = vpop.permute.xlu0 %7407
      %7409 = vrot.lane.b32.xlu0 %v1276, 8
      %v7410 = vpop.permute.xlu0 %7409
      %7411 = vrot.lane.b32.xlu0 %v1279, 8
      %v7412 = vpop.permute.xlu0 %7411
      %7413 = vrot.lane.b32.xlu0 %v1282, 8
      %v7414 = vpop.permute.xlu0 %7413
      %7415 = vrot.lane.b32.xlu0 %v1285, 8
      %v7416 = vpop.permute.xlu0 %7415
      %7417 = vrot.lane.b32.xlu0 %v1288, 8
      %v7418 = vpop.permute.xlu0 %7417
      %7419 = vrot.lane.b32.xlu0 %v1291, 8
      %v7420 = vpop.permute.xlu0 %7419
      %7421 = vrot.lane.b32.xlu0 %v1294, 8
      %v7422 = vpop.permute.xlu0 %7421
      %7431 = vrot.lane.b32.xlu0 %v563, 12
      %v7432 = vpop.permute.xlu0 %7431
      %7433 = vrot.lane.b32.xlu0 %v565, 12
      %v7434 = vpop.permute.xlu0 %7433
      %7435 = vrot.lane.b32.xlu0 %v567, 12
      %v7436 = vpop.permute.xlu0 %7435
      %7437 = vrot.lane.b32.xlu0 %v569, 12
      %v7438 = vpop.permute.xlu0 %7437
      %7439 = vrot.lane.b32.xlu0 %v571, 12
      %v7440 = vpop.permute.xlu0 %7439
      %7441 = vrot.lane.b32.xlu0 %v573, 12
      %v7442 = vpop.permute.xlu0 %7441
      %7443 = vrot.lane.b32.xlu0 %v575, 12
      %v7444 = vpop.permute.xlu0 %7443
      %7445 = vrot.lane.b32.xlu0 %v577, 12
      %v7446 = vpop.permute.xlu0 %7445
      %7455 = vrot.lane.b32.xlu0 %v1252, 16
      %v7456 = vpop.permute.xlu0 %7455
      %7457 = vrot.lane.b32.xlu0 %v1255, 16
      %v7458 = vpop.permute.xlu0 %7457
      %7459 = vrot.lane.b32.xlu0 %v1258, 16
      %v7460 = vpop.permute.xlu0 %7459
      %7461 = vrot.lane.b32.xlu0 %v1261, 16
      %v7462 = vpop.permute.xlu0 %7461
      %7463 = vrot.lane.b32.xlu0 %v1264, 16
      %v7464 = vpop.permute.xlu0 %7463
      %7465 = vrot.lane.b32.xlu0 %v1267, 16
      %v7466 = vpop.permute.xlu0 %7465
      %7467 = vrot.lane.b32.xlu0 %v1270, 16
      %v7468 = vpop.permute.xlu0 %7467
      %7469 = vrot.lane.b32.xlu0 %v1299, 16
      %v7470 = vpop.permute.xlu0 %7469
      %7479 = vrot.lane.b32.xlu0 %v1276, 20
      %v7480 = vpop.permute.xlu0 %7479
      %7481 = vrot.lane.b32.xlu0 %v1279, 20
      %v7482 = vpop.permute.xlu0 %7481
      %7483 = vrot.lane.b32.xlu0 %v1282, 20
      %v7484 = vpop.permute.xlu0 %7483
      %7485 = vrot.lane.b32.xlu0 %v1285, 20
      %v7486 = vpop.permute.xlu0 %7485
      %7487 = vrot.lane.b32.xlu0 %v1288, 20
      %v7488 = vpop.permute.xlu0 %7487
      %7489 = vrot.lane.b32.xlu0 %v1291, 20
      %v7490 = vpop.permute.xlu0 %7489
      %7491 = vrot.lane.b32.xlu0 %v1294, 20
      %v7492 = vpop.permute.xlu0 %7491
      %7493 = vrot.lane.b32.xlu0 %v1302, 20
      %v7494 = vpop.permute.xlu0 %7493
      %7503 = vrot.lane.b32.xlu0 %v565, 24
      %v7504 = vpop.permute.xlu0 %7503
      %7505 = vrot.lane.b32.xlu0 %v567, 24
      %v7506 = vpop.permute.xlu0 %7505
      %7507 = vrot.lane.b32.xlu0 %v569, 24
      %v7508 = vpop.permute.xlu0 %7507
      %7509 = vrot.lane.b32.xlu0 %v571, 24
      %v7510 = vpop.permute.xlu0 %7509
      %7511 = vrot.lane.b32.xlu0 %v573, 24
      %v7512 = vpop.permute.xlu0 %7511
      %7513 = vrot.lane.b32.xlu0 %v575, 24
      %v7514 = vpop.permute.xlu0 %7513
      %7515 = vrot.lane.b32.xlu0 %v577, 24
      %v7516 = vpop.permute.xlu0 %7515
      %7517 = vrot.lane.b32.xlu0 %v579, 24
      %v7518 = vpop.permute.xlu0 %7517
      %7527 = vrot.lane.b32.xlu0 %v1255, 28
      %v7528 = vpop.permute.xlu0 %7527
      %7529 = vrot.lane.b32.xlu0 %v1258, 28
      %v7530 = vpop.permute.xlu0 %7529
      %7531 = vrot.lane.b32.xlu0 %v1261, 28
      %v7532 = vpop.permute.xlu0 %7531
      %7533 = vrot.lane.b32.xlu0 %v1264, 28
      %v7534 = vpop.permute.xlu0 %7533
      %7535 = vrot.lane.b32.xlu0 %v1267, 28
      %v7536 = vpop.permute.xlu0 %7535
      %7537 = vrot.lane.b32.xlu0 %v1270, 28
      %v7538 = vpop.permute.xlu0 %7537
      %7539 = vrot.lane.b32.xlu0 %v1299, 28
      %v7540 = vpop.permute.xlu0 %7539
      %7541 = vrot.lane.b32.xlu0 %v1307, 28
      %v7542 = vpop.permute.xlu0 %7541
      %7551 = vrot.lane.b32.xlu0 %v1279, 32
      %v7552 = vpop.permute.xlu0 %7551
      %7553 = vrot.lane.b32.xlu0 %v1282, 32
      %v7554 = vpop.permute.xlu0 %7553
      %7555 = vrot.lane.b32.xlu0 %v1285, 32
      %v7556 = vpop.permute.xlu0 %7555
      %7557 = vrot.lane.b32.xlu0 %v1288, 32
      %v7558 = vpop.permute.xlu0 %7557
      %7559 = vrot.lane.b32.xlu0 %v1291, 32
      %v7560 = vpop.permute.xlu0 %7559
      %7561 = vrot.lane.b32.xlu0 %v1294, 32
      %v7562 = vpop.permute.xlu0 %7561
      %7563 = vrot.lane.b32.xlu0 %v1302, 32
      %v7564 = vpop.permute.xlu0 %7563
      %7565 = vrot.lane.b32.xlu0 %v1318, 32
      %v7566 = vpop.permute.xlu0 %7565
      %7575 = vrot.lane.b32.xlu0 %v581, 36
      %v7576 = vpop.permute.xlu0 %7575
      %7577 = vrot.lane.b32.xlu0 %v583, 36
      %v7578 = vpop.permute.xlu0 %7577
      %7579 = vrot.lane.b32.xlu0 %v585, 36
      %v7580 = vpop.permute.xlu0 %7579
      %7581 = vrot.lane.b32.xlu0 %v587, 36
      %v7582 = vpop.permute.xlu0 %7581
      %7583 = vrot.lane.b32.xlu0 %v589, 36
      %v7584 = vpop.permute.xlu0 %7583
      %7585 = vrot.lane.b32.xlu0 %v591, 36
      %v7586 = vpop.permute.xlu0 %7585
      %7587 = vrot.lane.b32.xlu0 %v593, 36
      %v7588 = vpop.permute.xlu0 %7587
      %7589 = vrot.lane.b32.xlu0 %v595, 36
      %v7590 = vpop.permute.xlu0 %7589
      %7599 = vrot.lane.b32.xlu0 %v1337, 40
      %v7600 = vpop.permute.xlu0 %7599
      %7601 = vrot.lane.b32.xlu0 %v1340, 40
      %v7602 = vpop.permute.xlu0 %7601
      %7603 = vrot.lane.b32.xlu0 %v1343, 40
      %v7604 = vpop.permute.xlu0 %7603
      %7605 = vrot.lane.b32.xlu0 %v1346, 40
      %v7606 = vpop.permute.xlu0 %7605
      %7607 = vrot.lane.b32.xlu0 %v1349, 40
      %v7608 = vpop.permute.xlu0 %7607
      %7609 = vrot.lane.b32.xlu0 %v1352, 40
      %v7610 = vpop.permute.xlu0 %7609
      %7611 = vrot.lane.b32.xlu0 %v1355, 40
      %v7612 = vpop.permute.xlu0 %7611
      %7613 = vrot.lane.b32.xlu0 %v1358, 40
      %v7614 = vpop.permute.xlu0 %7613
      %7623 = vrot.lane.b32.xlu0 %v1361, 44
      %v7624 = vpop.permute.xlu0 %7623
      %7625 = vrot.lane.b32.xlu0 %v1364, 44
      %v7626 = vpop.permute.xlu0 %7625
      %7627 = vrot.lane.b32.xlu0 %v1367, 44
      %v7628 = vpop.permute.xlu0 %7627
      %7629 = vrot.lane.b32.xlu0 %v1370, 44
      %v7630 = vpop.permute.xlu0 %7629
      %7631 = vrot.lane.b32.xlu0 %v1373, 44
      %v7632 = vpop.permute.xlu0 %7631
      %7633 = vrot.lane.b32.xlu0 %v1376, 44
      %v7634 = vpop.permute.xlu0 %7633
      %7635 = vrot.lane.b32.xlu0 %v1379, 44
      %v7636 = vpop.permute.xlu0 %7635
      %7637 = vrot.lane.b32.xlu0 %v1382, 44
      %v7638 = vpop.permute.xlu0 %7637
      %7647 = vrot.lane.b32.xlu0 %v583, 48
      %v7648 = vpop.permute.xlu0 %7647
      %7649 = vrot.lane.b32.xlu0 %v585, 48
      %v7650 = vpop.permute.xlu0 %7649
      %7651 = vrot.lane.b32.xlu0 %v587, 48
      %v7652 = vpop.permute.xlu0 %7651
      %7653 = vrot.lane.b32.xlu0 %v589, 48
      %v7654 = vpop.permute.xlu0 %7653
      %7655 = vrot.lane.b32.xlu0 %v591, 48
      %v7656 = vpop.permute.xlu0 %7655
      %7657 = vrot.lane.b32.xlu0 %v593, 48
      %v7658 = vpop.permute.xlu0 %7657
      %7659 = vrot.lane.b32.xlu0 %v595, 48
      %v7660 = vpop.permute.xlu0 %7659
      %7661 = vrot.lane.b32.xlu0 %v597, 48
      %v7662 = vpop.permute.xlu0 %7661
      %7671 = vrot.lane.b32.xlu0 %v1340, 52
      %v7672 = vpop.permute.xlu0 %7671
      %7673 = vrot.lane.b32.xlu0 %v1343, 52
      %v7674 = vpop.permute.xlu0 %7673
      %7675 = vrot.lane.b32.xlu0 %v1346, 52
      %v7676 = vpop.permute.xlu0 %7675
      %7677 = vrot.lane.b32.xlu0 %v1349, 52
      %v7678 = vpop.permute.xlu0 %7677
      %7679 = vrot.lane.b32.xlu0 %v1352, 52
      %v7680 = vpop.permute.xlu0 %7679
      %7681 = vrot.lane.b32.xlu0 %v1355, 52
      %v7682 = vpop.permute.xlu0 %7681
      %7683 = vrot.lane.b32.xlu0 %v1358, 52
      %v7684 = vpop.permute.xlu0 %7683
      %7685 = vrot.lane.b32.xlu0 %v1387, 52
      %v7686 = vpop.permute.xlu0 %7685
      %7695 = vrot.lane.b32.xlu0 %v1364, 56
      %v7696 = vpop.permute.xlu0 %7695
      %7697 = vrot.lane.b32.xlu0 %v1367, 56
      %v7698 = vpop.permute.xlu0 %7697
      %7699 = vrot.lane.b32.xlu0 %v1370, 56
      %v7700 = vpop.permute.xlu0 %7699
      %7701 = vrot.lane.b32.xlu0 %v1373, 56
      %v7702 = vpop.permute.xlu0 %7701
      %7703 = vrot.lane.b32.xlu0 %v1376, 56
      %v7704 = vpop.permute.xlu0 %7703
      %7705 = vrot.lane.b32.xlu0 %v1379, 56
      %v7706 = vpop.permute.xlu0 %7705
      %7707 = vrot.lane.b32.xlu0 %v1382, 56
      %v7708 = vpop.permute.xlu0 %7707
      %7709 = vrot.lane.b32.xlu0 %v1390, 56
      %v7710 = vpop.permute.xlu0 %7709
      %7719 = vrot.lane.b32.xlu0 %v585, 60
      %v7720 = vpop.permute.xlu0 %7719
      %7721 = vrot.lane.b32.xlu0 %v587, 60
      %v7722 = vpop.permute.xlu0 %7721
      %7723 = vrot.lane.b32.xlu0 %v589, 60
      %v7724 = vpop.permute.xlu0 %7723
      %7725 = vrot.lane.b32.xlu0 %v591, 60
      %v7726 = vpop.permute.xlu0 %7725
      %7727 = vrot.lane.b32.xlu0 %v593, 60
      %v7728 = vpop.permute.xlu0 %7727
      %7729 = vrot.lane.b32.xlu0 %v595, 60
      %v7730 = vpop.permute.xlu0 %7729
      %7731 = vrot.lane.b32.xlu0 %v597, 60
      %v7732 = vpop.permute.xlu0 %7731
      %7733 = vrot.lane.b32.xlu0 %v599, 60
      %v7734 = vpop.permute.xlu0 %7733
      %v7743 = vsel %vm1847, %v561, %v7384
      %v7744 = vsel %vm1847, %v563, %v7386
      %v7745 = vsel %vm1847, %v565, %v7388
      %v7746 = vsel %vm1847, %v567, %v7390
      %v7747 = vsel %vm1847, %v569, %v7392
      %v7748 = vsel %vm1847, %v571, %v7394
      %v7749 = vsel %vm1847, %v573, %v7396
      %v7750 = vsel %vm1847, %v575, %v7398
      %v7751 = vsel %vm1856, %v7743, %v7408
      %v7752 = vsel %vm1856, %v7744, %v7410
      %v7753 = vsel %vm1856, %v7745, %v7412
      %v7754 = vsel %vm1856, %v7746, %v7414
      %v7755 = vsel %vm1856, %v7747, %v7416
      %v7756 = vsel %vm1856, %v7748, %v7418
      %v7757 = vsel %vm1856, %v7749, %v7420
      %v7758 = vsel %vm1856, %v7750, %v7422
      %v7759 = vsel %vm1865, %v7751, %v7432
      %v7760 = vsel %vm1865, %v7752, %v7434
      %v7761 = vsel %vm1865, %v7753, %v7436
      %v7762 = vsel %vm1865, %v7754, %v7438
      %v7763 = vsel %vm1865, %v7755, %v7440
      %v7764 = vsel %vm1865, %v7756, %v7442
      %v7765 = vsel %vm1865, %v7757, %v7444
      %v7766 = vsel %vm1865, %v7758, %v7446
      %v7767 = vsel %vm1874, %v7759, %v7456
      %v7768 = vsel %vm1874, %v7760, %v7458
      %v7769 = vsel %vm1874, %v7761, %v7460
      %v7770 = vsel %vm1874, %v7762, %v7462
      %v7771 = vsel %vm1874, %v7763, %v7464
      %v7772 = vsel %vm1874, %v7764, %v7466
      %v7773 = vsel %vm1874, %v7765, %v7468
      %v7774 = vsel %vm1874, %v7766, %v7470
      %v7775 = vsel %vm1883, %v7767, %v7480
      %v7776 = vsel %vm1883, %v7768, %v7482
      %v7777 = vsel %vm1883, %v7769, %v7484
      %v7778 = vsel %vm1883, %v7770, %v7486
      %v7779 = vsel %vm1883, %v7771, %v7488
      %v7780 = vsel %vm1883, %v7772, %v7490
      %v7781 = vsel %vm1883, %v7773, %v7492
      %v7782 = vsel %vm1883, %v7774, %v7494
      %v7783 = vsel %vm1892, %v7775, %v7504
      %v7784 = vsel %vm1892, %v7776, %v7506
      %v7785 = vsel %vm1892, %v7777, %v7508
      %v7786 = vsel %vm1892, %v7778, %v7510
      %v7787 = vsel %vm1892, %v7779, %v7512
      %v7788 = vsel %vm1892, %v7780, %v7514
      %v7789 = vsel %vm1892, %v7781, %v7516
      %v7790 = vsel %vm1892, %v7782, %v7518
      %v7791 = vsel %vm1901, %v7783, %v7528
      %v7792 = vsel %vm1901, %v7784, %v7530
      %v7793 = vsel %vm1901, %v7785, %v7532
      %v7794 = vsel %vm1901, %v7786, %v7534
      %v7795 = vsel %vm1901, %v7787, %v7536
      %v7796 = vsel %vm1901, %v7788, %v7538
      %v7797 = vsel %vm1901, %v7789, %v7540
      %v7798 = vsel %vm1901, %v7790, %v7542
      %v7799 = vsel %vm1910, %v7791, %v7552
      %v7800 = vsel %vm1910, %v7792, %v7554
      %v7801 = vsel %vm1910, %v7793, %v7556
      %v7802 = vsel %vm1910, %v7794, %v7558
      %v7803 = vsel %vm1910, %v7795, %v7560
      %v7804 = vsel %vm1910, %v7796, %v7562
      %v7805 = vsel %vm1910, %v7797, %v7564
      %v7806 = vsel %vm1910, %v7798, %v7566
      %v7807 = vsel %vm1919, %v7799, %v7576
      %v7808 = vsel %vm1919, %v7800, %v7578
      %v7809 = vsel %vm1919, %v7801, %v7580
      %v7810 = vsel %vm1919, %v7802, %v7582
      %v7811 = vsel %vm1919, %v7803, %v7584
      %v7812 = vsel %vm1919, %v7804, %v7586
      %v7813 = vsel %vm1919, %v7805, %v7588
      %v7814 = vsel %vm1919, %v7806, %v7590
      %v7815 = vsel %vm1928, %v7807, %v7600
      %v7816 = vsel %vm1928, %v7808, %v7602
      %v7817 = vsel %vm1928, %v7809, %v7604
      %v7818 = vsel %vm1928, %v7810, %v7606
      %v7819 = vsel %vm1928, %v7811, %v7608
      %v7820 = vsel %vm1928, %v7812, %v7610
      %v7821 = vsel %vm1928, %v7813, %v7612
      %v7822 = vsel %vm1928, %v7814, %v7614
      %v7823 = vsel %vm1937, %v7815, %v7624
      %v7824 = vsel %vm1937, %v7816, %v7626
      %v7825 = vsel %vm1937, %v7817, %v7628
      %v7826 = vsel %vm1937, %v7818, %v7630
      %v7827 = vsel %vm1937, %v7819, %v7632
      %v7828 = vsel %vm1937, %v7820, %v7634
      %v7829 = vsel %vm1937, %v7821, %v7636
      %v7830 = vsel %vm1937, %v7822, %v7638
      %v7831 = vsel %vm1946, %v7823, %v7648
      %v7832 = vsel %vm1946, %v7824, %v7650
      %v7833 = vsel %vm1946, %v7825, %v7652
      %v7834 = vsel %vm1946, %v7826, %v7654
      %v7835 = vsel %vm1946, %v7827, %v7656
      %v7836 = vsel %vm1946, %v7828, %v7658
      %v7837 = vsel %vm1946, %v7829, %v7660
      %v7838 = vsel %vm1946, %v7830, %v7662
      %v7839 = vsel %vm1955, %v7831, %v7672
      %v7840 = vsel %vm1955, %v7832, %v7674
      %v7841 = vsel %vm1955, %v7833, %v7676
      %v7842 = vsel %vm1955, %v7834, %v7678
      %v7843 = vsel %vm1955, %v7835, %v7680
      %v7844 = vsel %vm1955, %v7836, %v7682
      %v7845 = vsel %vm1955, %v7837, %v7684
      %v7846 = vsel %vm1955, %v7838, %v7686
      %v7847 = vsel %vm1964, %v7839, %v7696
      %v7848 = vsel %vm1964, %v7840, %v7698
      %v7849 = vsel %vm1964, %v7841, %v7700
      %v7850 = vsel %vm1964, %v7842, %v7702
      %v7851 = vsel %vm1964, %v7843, %v7704
      %v7852 = vsel %vm1964, %v7844, %v7706
      %v7853 = vsel %vm1964, %v7845, %v7708
      %v7854 = vsel %vm1964, %v7846, %v7710
      %v7855 = vsel %vm1973, %v7847, %v7720
      %v7856 = vsel %vm1973, %v7848, %v7722
      %v7857 = vsel %vm1973, %v7849, %v7724
      %v7858 = vsel %vm1973, %v7850, %v7726
      %v7859 = vsel %vm1973, %v7851, %v7728
      %v7860 = vsel %vm1973, %v7852, %v7730
      %v7861 = vsel %vm1973, %v7853, %v7732
      %v7862 = vsel %vm1973, %v7854, %v7734
      %7863 = vrot.lane.b32.xlu0 %v1367, 4
      %v7864 = vpop.permute.xlu0 %7863
      %7865 = vrot.lane.b32.xlu0 %v1370, 4
      %v7866 = vpop.permute.xlu0 %7865
      %7867 = vrot.lane.b32.xlu0 %v1373, 4
      %v7868 = vpop.permute.xlu0 %7867
      %7869 = vrot.lane.b32.xlu0 %v1376, 4
      %v7870 = vpop.permute.xlu0 %7869
      %7871 = vrot.lane.b32.xlu0 %v1379, 4
      %v7872 = vpop.permute.xlu0 %7871
      %7873 = vrot.lane.b32.xlu0 %v1382, 4
      %v7874 = vpop.permute.xlu0 %7873
      %7875 = vrot.lane.b32.xlu0 %v1390, 4
      %v7876 = vpop.permute.xlu0 %7875
      %7877 = vrot.lane.b32.xlu0 %v1406, 4
      %v7878 = vpop.permute.xlu0 %7877
      %7887 = vrot.lane.b32.xlu0 %v601, 8
      %v7888 = vpop.permute.xlu0 %7887
      %7889 = vrot.lane.b32.xlu0 %v603, 8
      %v7890 = vpop.permute.xlu0 %7889
      %7891 = vrot.lane.b32.xlu0 %v605, 8
      %v7892 = vpop.permute.xlu0 %7891
      %7893 = vrot.lane.b32.xlu0 %v607, 8
      %v7894 = vpop.permute.xlu0 %7893
      %7895 = vrot.lane.b32.xlu0 %v609, 8
      %v7896 = vpop.permute.xlu0 %7895
      %7897 = vrot.lane.b32.xlu0 %v611, 8
      %v7898 = vpop.permute.xlu0 %7897
      %7899 = vrot.lane.b32.xlu0 %v613, 8
      %v7900 = vpop.permute.xlu0 %7899
      %7901 = vrot.lane.b32.xlu0 %v615, 8
      %v7902 = vpop.permute.xlu0 %7901
      %7911 = vrot.lane.b32.xlu0 %v1425, 12
      %v7912 = vpop.permute.xlu0 %7911
      %7913 = vrot.lane.b32.xlu0 %v1428, 12
      %v7914 = vpop.permute.xlu0 %7913
      %7915 = vrot.lane.b32.xlu0 %v1431, 12
      %v7916 = vpop.permute.xlu0 %7915
      %7917 = vrot.lane.b32.xlu0 %v1434, 12
      %v7918 = vpop.permute.xlu0 %7917
      %7919 = vrot.lane.b32.xlu0 %v1437, 12
      %v7920 = vpop.permute.xlu0 %7919
      %7921 = vrot.lane.b32.xlu0 %v1440, 12
      %v7922 = vpop.permute.xlu0 %7921
      %7923 = vrot.lane.b32.xlu0 %v1443, 12
      %v7924 = vpop.permute.xlu0 %7923
      %7925 = vrot.lane.b32.xlu0 %v1446, 12
      %v7926 = vpop.permute.xlu0 %7925
      %7935 = vrot.lane.b32.xlu0 %v1449, 16
      %v7936 = vpop.permute.xlu0 %7935
      %7937 = vrot.lane.b32.xlu0 %v1452, 16
      %v7938 = vpop.permute.xlu0 %7937
      %7939 = vrot.lane.b32.xlu0 %v1455, 16
      %v7940 = vpop.permute.xlu0 %7939
      %7941 = vrot.lane.b32.xlu0 %v1458, 16
      %v7942 = vpop.permute.xlu0 %7941
      %7943 = vrot.lane.b32.xlu0 %v1461, 16
      %v7944 = vpop.permute.xlu0 %7943
      %7945 = vrot.lane.b32.xlu0 %v1464, 16
      %v7946 = vpop.permute.xlu0 %7945
      %7947 = vrot.lane.b32.xlu0 %v1467, 16
      %v7948 = vpop.permute.xlu0 %7947
      %7949 = vrot.lane.b32.xlu0 %v1470, 16
      %v7950 = vpop.permute.xlu0 %7949
      %7959 = vrot.lane.b32.xlu0 %v603, 20
      %v7960 = vpop.permute.xlu0 %7959
      %7961 = vrot.lane.b32.xlu0 %v605, 20
      %v7962 = vpop.permute.xlu0 %7961
      %7963 = vrot.lane.b32.xlu0 %v607, 20
      %v7964 = vpop.permute.xlu0 %7963
      %7965 = vrot.lane.b32.xlu0 %v609, 20
      %v7966 = vpop.permute.xlu0 %7965
      %7967 = vrot.lane.b32.xlu0 %v611, 20
      %v7968 = vpop.permute.xlu0 %7967
      %7969 = vrot.lane.b32.xlu0 %v613, 20
      %v7970 = vpop.permute.xlu0 %7969
      %7971 = vrot.lane.b32.xlu0 %v615, 20
      %v7972 = vpop.permute.xlu0 %7971
      %7973 = vrot.lane.b32.xlu0 %v617, 20
      %v7974 = vpop.permute.xlu0 %7973
      %7983 = vrot.lane.b32.xlu0 %v1428, 24
      %v7984 = vpop.permute.xlu0 %7983
      %7985 = vrot.lane.b32.xlu0 %v1431, 24
      %v7986 = vpop.permute.xlu0 %7985
      %7987 = vrot.lane.b32.xlu0 %v1434, 24
      %v7988 = vpop.permute.xlu0 %7987
      %7989 = vrot.lane.b32.xlu0 %v1437, 24
      %v7990 = vpop.permute.xlu0 %7989
      %7991 = vrot.lane.b32.xlu0 %v1440, 24
      %v7992 = vpop.permute.xlu0 %7991
      %7993 = vrot.lane.b32.xlu0 %v1443, 24
      %v7994 = vpop.permute.xlu0 %7993
      %7995 = vrot.lane.b32.xlu0 %v1446, 24
      %v7996 = vpop.permute.xlu0 %7995
      %7997 = vrot.lane.b32.xlu0 %v1475, 24
      %v7998 = vpop.permute.xlu0 %7997
      %8007 = vrot.lane.b32.xlu0 %v1452, 28
      %v8008 = vpop.permute.xlu0 %8007
      %8009 = vrot.lane.b32.xlu0 %v1455, 28
      %v8010 = vpop.permute.xlu0 %8009
      %8011 = vrot.lane.b32.xlu0 %v1458, 28
      %v8012 = vpop.permute.xlu0 %8011
      %8013 = vrot.lane.b32.xlu0 %v1461, 28
      %v8014 = vpop.permute.xlu0 %8013
      %8015 = vrot.lane.b32.xlu0 %v1464, 28
      %v8016 = vpop.permute.xlu0 %8015
      %8017 = vrot.lane.b32.xlu0 %v1467, 28
      %v8018 = vpop.permute.xlu0 %8017
      %8019 = vrot.lane.b32.xlu0 %v1470, 28
      %v8020 = vpop.permute.xlu0 %8019
      %8021 = vrot.lane.b32.xlu0 %v1478, 28
      %v8022 = vpop.permute.xlu0 %8021
      %8031 = vrot.lane.b32.xlu0 %v605, 32
      %v8032 = vpop.permute.xlu0 %8031
      %8033 = vrot.lane.b32.xlu0 %v607, 32
      %v8034 = vpop.permute.xlu0 %8033
      %8035 = vrot.lane.b32.xlu0 %v609, 32
      %v8036 = vpop.permute.xlu0 %8035
      %8037 = vrot.lane.b32.xlu0 %v611, 32
      %v8038 = vpop.permute.xlu0 %8037
      %8039 = vrot.lane.b32.xlu0 %v613, 32
      %v8040 = vpop.permute.xlu0 %8039
      %8041 = vrot.lane.b32.xlu0 %v615, 32
      %v8042 = vpop.permute.xlu0 %8041
      %8043 = vrot.lane.b32.xlu0 %v617, 32
      %v8044 = vpop.permute.xlu0 %8043
      %8045 = vrot.lane.b32.xlu0 %v619, 32
      %v8046 = vpop.permute.xlu0 %8045
      %8055 = vrot.lane.b32.xlu0 %v1431, 36
      %v8056 = vpop.permute.xlu0 %8055
      %8057 = vrot.lane.b32.xlu0 %v1434, 36
      %v8058 = vpop.permute.xlu0 %8057
      %8059 = vrot.lane.b32.xlu0 %v1437, 36
      %v8060 = vpop.permute.xlu0 %8059
      %8061 = vrot.lane.b32.xlu0 %v1440, 36
      %v8062 = vpop.permute.xlu0 %8061
      %8063 = vrot.lane.b32.xlu0 %v1443, 36
      %v8064 = vpop.permute.xlu0 %8063
      %8065 = vrot.lane.b32.xlu0 %v1446, 36
      %v8066 = vpop.permute.xlu0 %8065
      %8067 = vrot.lane.b32.xlu0 %v1475, 36
      %v8068 = vpop.permute.xlu0 %8067
      %8069 = vrot.lane.b32.xlu0 %v1483, 36
      %v8070 = vpop.permute.xlu0 %8069
      %8079 = vrot.lane.b32.xlu0 %v1455, 40
      %v8080 = vpop.permute.xlu0 %8079
      %8081 = vrot.lane.b32.xlu0 %v1458, 40
      %v8082 = vpop.permute.xlu0 %8081
      %8083 = vrot.lane.b32.xlu0 %v1461, 40
      %v8084 = vpop.permute.xlu0 %8083
      %8085 = vrot.lane.b32.xlu0 %v1464, 40
      %v8086 = vpop.permute.xlu0 %8085
      %8087 = vrot.lane.b32.xlu0 %v1467, 40
      %v8088 = vpop.permute.xlu0 %8087
      %8089 = vrot.lane.b32.xlu0 %v1470, 40
      %v8090 = vpop.permute.xlu0 %8089
      %8091 = vrot.lane.b32.xlu0 %v1478, 40
      %v8092 = vpop.permute.xlu0 %8091
      %8093 = vrot.lane.b32.xlu0 %v1486, 40
      %v8094 = vpop.permute.xlu0 %8093
      %v8103 = vsel %vm1847, %v1343, %v7864
      %v8104 = vsel %vm1847, %v1346, %v7866
      %v8105 = vsel %vm1847, %v1349, %v7868
      %v8106 = vsel %vm1847, %v1352, %v7870
      %v8107 = vsel %vm1847, %v1355, %v7872
      %v8108 = vsel %vm1847, %v1358, %v7874
      %v8109 = vsel %vm1847, %v1387, %v7876
      %v8110 = vsel %vm1847, %v1395, %v7878
      %v8111 = vsel %vm1856, %v8103, %v7888
      %v8112 = vsel %vm1856, %v8104, %v7890
      %v8113 = vsel %vm1856, %v8105, %v7892
      %v8114 = vsel %vm1856, %v8106, %v7894
      %v8115 = vsel %vm1856, %v8107, %v7896
      %v8116 = vsel %vm1856, %v8108, %v7898
      %v8117 = vsel %vm1856, %v8109, %v7900
      %v8118 = vsel %vm1856, %v8110, %v7902
      %v8119 = vsel %vm1865, %v8111, %v7912
      %v8120 = vsel %vm1865, %v8112, %v7914
      %v8121 = vsel %vm1865, %v8113, %v7916
      %v8122 = vsel %vm1865, %v8114, %v7918
      %v8123 = vsel %vm1865, %v8115, %v7920
      %v8124 = vsel %vm1865, %v8116, %v7922
      %v8125 = vsel %vm1865, %v8117, %v7924
      %v8126 = vsel %vm1865, %v8118, %v7926
      %v8127 = vsel %vm1874, %v8119, %v7936
      %v8128 = vsel %vm1874, %v8120, %v7938
      %v8129 = vsel %vm1874, %v8121, %v7940
      %v8130 = vsel %vm1874, %v8122, %v7942
      %v8131 = vsel %vm1874, %v8123, %v7944
      %v8132 = vsel %vm1874, %v8124, %v7946
      %v8133 = vsel %vm1874, %v8125, %v7948
      %v8134 = vsel %vm1874, %v8126, %v7950
      %v8135 = vsel %vm1883, %v8127, %v7960
      %v8136 = vsel %vm1883, %v8128, %v7962
      %v8137 = vsel %vm1883, %v8129, %v7964
      %v8138 = vsel %vm1883, %v8130, %v7966
      %v8139 = vsel %vm1883, %v8131, %v7968
      %v8140 = vsel %vm1883, %v8132, %v7970
      %v8141 = vsel %vm1883, %v8133, %v7972
      %v8142 = vsel %vm1883, %v8134, %v7974
      %v8143 = vsel %vm1892, %v8135, %v7984
      %v8144 = vsel %vm1892, %v8136, %v7986
      %v8145 = vsel %vm1892, %v8137, %v7988
      %v8146 = vsel %vm1892, %v8138, %v7990
      %v8147 = vsel %vm1892, %v8139, %v7992
      %v8148 = vsel %vm1892, %v8140, %v7994
      %v8149 = vsel %vm1892, %v8141, %v7996
      %v8150 = vsel %vm1892, %v8142, %v7998
      %v8151 = vsel %vm1901, %v8143, %v8008
      %v8152 = vsel %vm1901, %v8144, %v8010
      %v8153 = vsel %vm1901, %v8145, %v8012
      %v8154 = vsel %vm1901, %v8146, %v8014
      %v8155 = vsel %vm1901, %v8147, %v8016
      %v8156 = vsel %vm1901, %v8148, %v8018
      %v8157 = vsel %vm1901, %v8149, %v8020
      %v8158 = vsel %vm1901, %v8150, %v8022
      %v8159 = vsel %vm1910, %v8151, %v8032
      %v8160 = vsel %vm1910, %v8152, %v8034
      %v8161 = vsel %vm1910, %v8153, %v8036
      %v8162 = vsel %vm1910, %v8154, %v8038
      %v8163 = vsel %vm1910, %v8155, %v8040
      %v8164 = vsel %vm1910, %v8156, %v8042
      %v8165 = vsel %vm1910, %v8157, %v8044
      %v8166 = vsel %vm1910, %v8158, %v8046
      %v8167 = vsel %vm1919, %v8159, %v8056
      %v8168 = vsel %vm1919, %v8160, %v8058
      %v8169 = vsel %vm1919, %v8161, %v8060
      %v8170 = vsel %vm1919, %v8162, %v8062
      %v8171 = vsel %vm1919, %v8163, %v8064
      %v8172 = vsel %vm1919, %v8164, %v8066
      %v8173 = vsel %vm1919, %v8165, %v8068
      %v8174 = vsel %vm1919, %v8166, %v8070
      %v8175 = vsel %vm1928, %v8167, %v8080
      %v8176 = vsel %vm1928, %v8168, %v8082
      %v8177 = vsel %vm1928, %v8169, %v8084
      %v8178 = vsel %vm1928, %v8170, %v8086
      %v8179 = vsel %vm1928, %v8171, %v8088
      %v8180 = vsel %vm1928, %v8172, %v8090
      %v8181 = vsel %vm1928, %v8173, %v8092
      %v8182 = vsel %vm1928, %v8174, %v8094
      %8191 = vrot.lane.b32.xlu0 %v8175, 64
      %v8192 = vpop.permute.xlu0 %8191
      %8193 = vrot.lane.b32.xlu0 %v8176, 64
      %v8194 = vpop.permute.xlu0 %8193
      %8195 = vrot.lane.b32.xlu0 %v8177, 64
      %v8196 = vpop.permute.xlu0 %8195
      %8197 = vrot.lane.b32.xlu0 %v8178, 64
      %v8198 = vpop.permute.xlu0 %8197
      %8199 = vrot.lane.b32.xlu0 %v8179, 64
      %v8200 = vpop.permute.xlu0 %8199
      %8201 = vrot.lane.b32.xlu0 %v8180, 64
      %v8202 = vpop.permute.xlu0 %8201
      %8203 = vrot.lane.b32.xlu0 %v8181, 64
      %v8204 = vpop.permute.xlu0 %8203
      %8205 = vrot.lane.b32.xlu0 %v8182, 64
      %v8206 = vpop.permute.xlu0 %8205
      %v8215 = vsel %vm2334, %v7855, %v8192
      %v8216 = vsel %vm2334, %v7856, %v8194
      %v8217 = vsel %vm2334, %v7857, %v8196
      %v8218 = vsel %vm2334, %v7858, %v8198
      %v8219 = vsel %vm2334, %v7859, %v8200
      %v8220 = vsel %vm2334, %v7860, %v8202
      %v8221 = vsel %vm2334, %v7861, %v8204
      %v8222 = vsel %vm2334, %v7862, %v8206
      %v8223 = vld [vmem:[%s3] sm:$0xff]
      %v8224 = vld [vmem:[%s3 + $0x8] sm:$0xff]
      %v8225 = vld [vmem:[%s3 + $0x10] sm:$0xff]
      %v8226 = vld [vmem:[%s3 + $0x18] sm:$0xff]
      %v8227 = vld [vmem:[%s3 + $0x20] sm:$0xff]
      %v8228 = vld [vmem:[%s3 + $0x28] sm:$0xff]
      %v8229 = vld [vmem:[%s3 + $0x30] sm:$0xff]
      %v8230 = vld [vmem:[%s3 + $0x38] sm:$0xff]
      %v8231 = vld [vmem:[%s3 + $0x40] sm:$0xff]
      %v8232 = vld [vmem:[%s3 + $0x48] sm:$0xff]
      %v8233 = vld [vmem:[%s3 + $0x50] sm:$0xff]
      %v8234 = vld [vmem:[%s3 + $0x58] sm:$0xff]
      %v8235 = vld [vmem:[%s3 + $0x60] sm:$0xff]
      %v8236 = vld [vmem:[%s3 + $0x68] sm:$0xf]
      %vm8237 = vcmask 883712
      %v8239 = vsel %vm8237, %v2335, 0
      %v8242 = vsel %vm8237, %v2336, 0
      %v8245 = vsel %vm8237, %v2337, 0
      %v8248 = vsel %vm8237, %v2338, 0
      %v8251 = vsel %vm8237, %v2339, 0
      %v8254 = vsel %vm8237, %v2340, 0
      %v8257 = vsel %vm8237, %v2341, 0
      %v8260 = vsel %vm8237, %v2342, 0
      %v8263 = vsel %vm8237, %v3175, 0
      %v8266 = vsel %vm8237, %v3176, 0
      %v8269 = vsel %vm8237, %v3177, 0
      %v8272 = vsel %vm8237, %v3178, 0
      %v8275 = vsel %vm8237, %v3179, 0
      %v8278 = vsel %vm8237, %v3180, 0
      %v8281 = vsel %vm8237, %v3181, 0
      %v8284 = vsel %vm8237, %v3182, 0
      %v8287 = vsel %vm8237, %v4015, 0
      %v8290 = vsel %vm8237, %v4016, 0
      %v8293 = vsel %vm8237, %v4017, 0
      %v8296 = vsel %vm8237, %v4018, 0
      %v8299 = vsel %vm8237, %v4019, 0
      %v8302 = vsel %vm8237, %v4020, 0
      %v8305 = vsel %vm8237, %v4021, 0
      %v8308 = vsel %vm8237, %v4022, 0
      %v8311 = vsel %vm8237, %v4855, 0
      %v8314 = vsel %vm8237, %v4856, 0
      %v8317 = vsel %vm8237, %v4857, 0
      %v8320 = vsel %vm8237, %v4858, 0
      %v8323 = vsel %vm8237, %v4859, 0
      %v8326 = vsel %vm8237, %v4860, 0
      %v8329 = vsel %vm8237, %v4861, 0
      %v8332 = vsel %vm8237, %v4862, 0
      %v8335 = vsel %vm8237, %v5695, 0
      %v8338 = vsel %vm8237, %v5696, 0
      %v8341 = vsel %vm8237, %v5697, 0
      %v8344 = vsel %vm8237, %v5698, 0
      %v8347 = vsel %vm8237, %v5699, 0
      %v8350 = vsel %vm8237, %v5700, 0
      %v8353 = vsel %vm8237, %v5701, 0
      %v8356 = vsel %vm8237, %v5702, 0
      %v8359 = vsel %vm8237, %v6535, 0
      %v8362 = vsel %vm8237, %v6536, 0
      %v8365 = vsel %vm8237, %v6537, 0
      %v8368 = vsel %vm8237, %v6538, 0
      %v8371 = vsel %vm8237, %v6539, 0
      %v8374 = vsel %vm8237, %v6540, 0
      %v8377 = vsel %vm8237, %v6541, 0
      %v8380 = vsel %vm8237, %v6542, 0
      %v8383 = vsel %vm8237, %v7375, 0
      %v8386 = vsel %vm8237, %v7376, 0
      %v8389 = vsel %vm8237, %v7377, 0
      %v8392 = vsel %vm8237, %v7378, 0
      %v8395 = vsel %vm8237, %v7379, 0
      %v8398 = vsel %vm8237, %v7380, 0
      %v8401 = vsel %vm8237, %v7381, 0
      %v8404 = vsel %vm8237, %v7382, 0
      %v8407 = vsel %vm8237, %v8215, 0
      %v8410 = vsel %vm8237, %v8216, 0
      %v8413 = vsel %vm8237, %v8217, 0
      %v8416 = vsel %vm8237, %v8218, 0
      %v8419 = vsel %vm8237, %v8219, 0
      %v8422 = vsel %vm8237, %v8220, 0
      %v8425 = vsel %vm8237, %v8221, 0
      %v8428 = vsel %vm8237, %v8222, 0
      %vm8430 = vcmask 1043456
      %v8432 = vsel %vm8430, %v8236, 0
      %8434 = vmatprep.subr.mxu0 0.0
      %8435 = vmatpush1.msra.mxu0 0.0
      %8436 = vmatprep.subr.mxu0 0.0
      %8437 = vmatpush1.msra.mxu0 0.0
      %8438 = vmatprep.subr.mxu0 0.0
      %8439 = vmatpush1.msra.mxu0 %v8432
      %8440 = vmatprep.subr.mxu0 0.0
      %8441 = vmatpush1.msra.mxu0 %v8235
      %8442 = vmatprep.subr.mxu0 0.0
      %8443 = vmatpush1.msra.mxu0 %v8234
      %8444 = vmatprep.subr.mxu0 0.0
      %8445 = vmatpush1.msra.mxu0 %v8233
      %8446 = vmatprep.subr.mxu0 0.0
      %8447 = vmatpush1.msra.mxu0 %v8232
      %8448 = vmatprep.subr.mxu0 0.0
      %8449 = vmatpush1.msra.mxu0 %v8231
      %8450 = vmatprep.subr.mxu0 0.0
      %8451 = vmatpush1.msra.mxu0 %v8230
      %8452 = vmatprep.subr.mxu0 0.0
      %8453 = vmatpush1.msra.mxu0 %v8229
      %8454 = vmatprep.subr.mxu0 0.0
      %8455 = vmatpush1.msra.mxu0 %v8228
      %8456 = vmatprep.subr.mxu0 0.0
      %8457 = vmatpush1.msra.mxu0 %v8227
      %8458 = vmatprep.subr.mxu0 0.0
      %8459 = vmatpush1.msra.mxu0 %v8226
      %8460 = vmatprep.subr.mxu0 0.0
      %8461 = vmatpush1.msra.mxu0 %v8225
      %8462 = vmatprep.subr.mxu0 0.0
      %8463 = vmatpush1.msra.mxu0 %v8224
      %8464 = vmatprep.subr.mxu0 0.0
      %8465 = vmatpush1.msra.mxu0 %v8223
      %8466 = vmatprep.subr.mxu0 0.0
      %8467 = vmatpush2.msra.mxu0 0.0
      %8468 = vmatprep.subr.mxu0 0.0
      %8469 = vmatpush2.msra.mxu0 0.0
      %8470 = vmatprep.subr.mxu0 0.0
      %8471 = vmatpush2.msra.mxu0 0.0
      %8472 = vmatprep.subr.mxu0 0.0
      %8473 = vmatpush2.msra.mxu0 0.0
      %8474 = vmatprep.subr.mxu0 0.0
      %8475 = vmatpush2.msra.mxu0 0.0
      %8476 = vmatprep.subr.mxu0 0.0
      %8477 = vmatpush2.msra.mxu0 0.0
      %8478 = vmatprep.subr.mxu0 0.0
      %8479 = vmatpush2.msra.mxu0 0.0
      %8480 = vmatprep.subr.mxu0 0.0
      %8481 = vmatpush2.msra.mxu0 0.0
      %8482 = vmatprep.subr.mxu0 0.0
      %8483 = vmatpush2.msra.mxu0 0.0
      %8484 = vmatprep.subr.mxu0 0.0
      %8485 = vmatpush2.msra.mxu0 0.0
      %8486 = vmatprep.subr.mxu0 0.0
      %8487 = vmatpush2.msra.mxu0 0.0
      %8488 = vmatprep.subr.mxu0 0.0
      %8489 = vmatpush2.msra.mxu0 0.0
      %8490 = vmatprep.subr.mxu0 0.0
      %8491 = vmatpush2.msra.mxu0 0.0
      %8492 = vmatprep.subr.mxu0 0.0
      %8493 = vmatpush2.msra.mxu0 0.0
      %8494 = vmatprep.subr.mxu0 0.0
      %8495 = vmatpush2.msra.mxu0 0.0
      %8496 = vmatprep.subr.mxu0 0.0
      %8497 = vmatpush2.msra.mxu0 0.0
      %8498 = vmatprep.mubr.f32.mxu0 0.0
      %8499 = vmatmul.mubr.f32.gmra.mxu0 %v8239
      %v8500 = vpop.f32.mrf.mxu0
      %v8501 = vadd.f32 0.0, %v8500
      %v8502 = vpop.f32.mrf.mxu0
      %8503 = vmatprep.mubr.f32.mxu0 0.0
      %8504 = vmatmul.mubr.f32.gmra.mxu0 %v8242
      %v8505 = vpop.f32.mrf.mxu0
      %v8506 = vadd.f32 0.0, %v8505
      %v8507 = vpop.f32.mrf.mxu0
      %8508 = vmatprep.mubr.f32.mxu0 0.0
      %8509 = vmatmul.mubr.f32.gmra.mxu0 %v8245
      %v8510 = vpop.f32.mrf.mxu0
      %v8511 = vadd.f32 0.0, %v8510
      %v8512 = vpop.f32.mrf.mxu0
      %8513 = vmatprep.mubr.f32.mxu0 0.0
      %8514 = vmatmul.mubr.f32.gmra.mxu0 %v8248
      %v8515 = vpop.f32.mrf.mxu0
      %v8516 = vadd.f32 0.0, %v8515
      %v8517 = vpop.f32.mrf.mxu0
      %8518 = vmatprep.mubr.f32.mxu0 0.0
      %8519 = vmatmul.mubr.f32.gmra.mxu0 %v8251
      %v8520 = vpop.f32.mrf.mxu0
      %v8521 = vadd.f32 0.0, %v8520
      %v8522 = vpop.f32.mrf.mxu0
      %8523 = vmatprep.mubr.f32.mxu0 0.0
      %8524 = vmatmul.mubr.f32.gmra.mxu0 %v8254
      %v8525 = vpop.f32.mrf.mxu0
      %v8526 = vadd.f32 0.0, %v8525
      %v8527 = vpop.f32.mrf.mxu0
      %8528 = vmatprep.mubr.f32.mxu0 0.0
      %8529 = vmatmul.mubr.f32.gmra.mxu0 %v8257
      %v8530 = vpop.f32.mrf.mxu0
      %v8531 = vadd.f32 0.0, %v8530
      %v8532 = vpop.f32.mrf.mxu0
      %8533 = vmatprep.mubr.f32.mxu0 0.0
      %8534 = vmatmul.mubr.f32.gmra.mxu0 %v8260
      %v8535 = vpop.f32.mrf.mxu0
      %v8536 = vadd.f32 0.0, %v8535
      %v8537 = vpop.f32.mrf.mxu0
      %8538 = vmatprep.mubr.f32.mxu0 0.0
      %8539 = vmatmul.mubr.f32.gmra.mxu0 %v8263
      %v8540 = vpop.f32.mrf.mxu0
      %v8541 = vadd.f32 0.0, %v8540
      %v8542 = vpop.f32.mrf.mxu0
      %8543 = vmatprep.mubr.f32.mxu0 0.0
      %8544 = vmatmul.mubr.f32.gmra.mxu0 %v8266
      %v8545 = vpop.f32.mrf.mxu0
      %v8546 = vadd.f32 0.0, %v8545
      %v8547 = vpop.f32.mrf.mxu0
      %8548 = vmatprep.mubr.f32.mxu0 0.0
      %8549 = vmatmul.mubr.f32.gmra.mxu0 %v8269
      %v8550 = vpop.f32.mrf.mxu0
      %v8551 = vadd.f32 0.0, %v8550
      %v8552 = vpop.f32.mrf.mxu0
      %8553 = vmatprep.mubr.f32.mxu0 0.0
      %8554 = vmatmul.mubr.f32.gmra.mxu0 %v8272
      %v8555 = vpop.f32.mrf.mxu0
      %v8556 = vadd.f32 0.0, %v8555
      %v8557 = vpop.f32.mrf.mxu0
      %8558 = vmatprep.mubr.f32.mxu0 0.0
      %8559 = vmatmul.mubr.f32.gmra.mxu0 %v8275
      %v8560 = vpop.f32.mrf.mxu0
      %v8561 = vadd.f32 0.0, %v8560
      %v8562 = vpop.f32.mrf.mxu0
      %8563 = vmatprep.mubr.f32.mxu0 0.0
      %8564 = vmatmul.mubr.f32.gmra.mxu0 %v8278
      %v8565 = vpop.f32.mrf.mxu0
      %v8566 = vadd.f32 0.0, %v8565
      %v8567 = vpop.f32.mrf.mxu0
      %8568 = vmatprep.mubr.f32.mxu0 0.0
      %8569 = vmatmul.mubr.f32.gmra.mxu0 %v8281
      %v8570 = vpop.f32.mrf.mxu0
      %v8571 = vadd.f32 0.0, %v8570
      %v8572 = vpop.f32.mrf.mxu0
      %8573 = vmatprep.mubr.f32.mxu0 0.0
      %8574 = vmatmul.mubr.f32.gmra.mxu0 %v8284
      %v8575 = vpop.f32.mrf.mxu0
      %v8576 = vadd.f32 0.0, %v8575
      %v8577 = vpop.f32.mrf.mxu0
      %8578 = vmatprep.mubr.f32.mxu0 0.0
      %8579 = vmatmul.mubr.f32.gmra.mxu0 %v8287
      %v8580 = vpop.f32.mrf.mxu0
      %v8581 = vadd.f32 0.0, %v8580
      %v8582 = vpop.f32.mrf.mxu0
      %8583 = vmatprep.mubr.f32.mxu0 0.0
      %8584 = vmatmul.mubr.f32.gmra.mxu0 %v8290
      %v8585 = vpop.f32.mrf.mxu0
      %v8586 = vadd.f32 0.0, %v8585
      %v8587 = vpop.f32.mrf.mxu0
      %8588 = vmatprep.mubr.f32.mxu0 0.0
      %8589 = vmatmul.mubr.f32.gmra.mxu0 %v8293
      %v8590 = vpop.f32.mrf.mxu0
      %v8591 = vadd.f32 0.0, %v8590
      %v8592 = vpop.f32.mrf.mxu0
      %8593 = vmatprep.mubr.f32.mxu0 0.0
      %8594 = vmatmul.mubr.f32.gmra.mxu0 %v8296
      %v8595 = vpop.f32.mrf.mxu0
      %v8596 = vadd.f32 0.0, %v8595
      %v8597 = vpop.f32.mrf.mxu0
      %8598 = vmatprep.mubr.f32.mxu0 0.0
      %8599 = vmatmul.mubr.f32.gmra.mxu0 %v8299
      %v8600 = vpop.f32.mrf.mxu0
      %v8601 = vadd.f32 0.0, %v8600
      %v8602 = vpop.f32.mrf.mxu0
      %8603 = vmatprep.mubr.f32.mxu0 0.0
      %8604 = vmatmul.mubr.f32.gmra.mxu0 %v8302
      %v8605 = vpop.f32.mrf.mxu0
      %v8606 = vadd.f32 0.0, %v8605
      %v8607 = vpop.f32.mrf.mxu0
      %8608 = vmatprep.mubr.f32.mxu0 0.0
      %8609 = vmatmul.mubr.f32.gmra.mxu0 %v8305
      %v8610 = vpop.f32.mrf.mxu0
      %v8611 = vadd.f32 0.0, %v8610
      %v8612 = vpop.f32.mrf.mxu0
      %8613 = vmatprep.mubr.f32.mxu0 0.0
      %8614 = vmatmul.mubr.f32.gmra.mxu0 %v8308
      %v8615 = vpop.f32.mrf.mxu0
      %v8616 = vadd.f32 0.0, %v8615
      %v8617 = vpop.f32.mrf.mxu0
      %8618 = vmatprep.mubr.f32.mxu0 0.0
      %8619 = vmatmul.mubr.f32.gmra.mxu0 %v8311
      %v8620 = vpop.f32.mrf.mxu0
      %v8621 = vadd.f32 0.0, %v8620
      %v8622 = vpop.f32.mrf.mxu0
      %8623 = vmatprep.mubr.f32.mxu0 0.0
      %8624 = vmatmul.mubr.f32.gmra.mxu0 %v8314
      %v8625 = vpop.f32.mrf.mxu0
      %v8626 = vadd.f32 0.0, %v8625
      %v8627 = vpop.f32.mrf.mxu0
      %8628 = vmatprep.mubr.f32.mxu0 0.0
      %8629 = vmatmul.mubr.f32.gmra.mxu0 %v8317
      %v8630 = vpop.f32.mrf.mxu0
      %v8631 = vadd.f32 0.0, %v8630
      %v8632 = vpop.f32.mrf.mxu0
      %8633 = vmatprep.mubr.f32.mxu0 0.0
      %8634 = vmatmul.mubr.f32.gmra.mxu0 %v8320
      %v8635 = vpop.f32.mrf.mxu0
      %v8636 = vadd.f32 0.0, %v8635
      %v8637 = vpop.f32.mrf.mxu0
      %8638 = vmatprep.mubr.f32.mxu0 0.0
      %8639 = vmatmul.mubr.f32.gmra.mxu0 %v8323
      %v8640 = vpop.f32.mrf.mxu0
      %v8641 = vadd.f32 0.0, %v8640
      %v8642 = vpop.f32.mrf.mxu0
      %8643 = vmatprep.mubr.f32.mxu0 0.0
      %8644 = vmatmul.mubr.f32.gmra.mxu0 %v8326
      %v8645 = vpop.f32.mrf.mxu0
      %v8646 = vadd.f32 0.0, %v8645
      %v8647 = vpop.f32.mrf.mxu0
      %8648 = vmatprep.mubr.f32.mxu0 0.0
      %8649 = vmatmul.mubr.f32.gmra.mxu0 %v8329
      %v8650 = vpop.f32.mrf.mxu0
      %v8651 = vadd.f32 0.0, %v8650
      %v8652 = vpop.f32.mrf.mxu0
      %8653 = vmatprep.mubr.f32.mxu0 0.0
      %8654 = vmatmul.mubr.f32.gmra.mxu0 %v8332
      %v8655 = vpop.f32.mrf.mxu0
      %v8656 = vadd.f32 0.0, %v8655
      %v8657 = vpop.f32.mrf.mxu0
      %8658 = vmatprep.mubr.f32.mxu0 0.0
      %8659 = vmatmul.mubr.f32.gmra.mxu0 %v8335
      %v8660 = vpop.f32.mrf.mxu0
      %v8661 = vadd.f32 0.0, %v8660
      %v8662 = vpop.f32.mrf.mxu0
      %8663 = vmatprep.mubr.f32.mxu0 0.0
      %8664 = vmatmul.mubr.f32.gmra.mxu0 %v8338
      %v8665 = vpop.f32.mrf.mxu0
      %v8666 = vadd.f32 0.0, %v8665
      %v8667 = vpop.f32.mrf.mxu0
      %8668 = vmatprep.mubr.f32.mxu0 0.0
      %8669 = vmatmul.mubr.f32.gmra.mxu0 %v8341
      %v8670 = vpop.f32.mrf.mxu0
      %v8671 = vadd.f32 0.0, %v8670
      %v8672 = vpop.f32.mrf.mxu0
      %8673 = vmatprep.mubr.f32.mxu0 0.0
      %8674 = vmatmul.mubr.f32.gmra.mxu0 %v8344
      %v8675 = vpop.f32.mrf.mxu0
      %v8676 = vadd.f32 0.0, %v8675
      %v8677 = vpop.f32.mrf.mxu0
      %8678 = vmatprep.mubr.f32.mxu0 0.0
      %8679 = vmatmul.mubr.f32.gmra.mxu0 %v8347
      %v8680 = vpop.f32.mrf.mxu0
      %v8681 = vadd.f32 0.0, %v8680
      %v8682 = vpop.f32.mrf.mxu0
      %8683 = vmatprep.mubr.f32.mxu0 0.0
      %8684 = vmatmul.mubr.f32.gmra.mxu0 %v8350
      %v8685 = vpop.f32.mrf.mxu0
      %v8686 = vadd.f32 0.0, %v8685
      %v8687 = vpop.f32.mrf.mxu0
      %8688 = vmatprep.mubr.f32.mxu0 0.0
      %8689 = vmatmul.mubr.f32.gmra.mxu0 %v8353
      %v8690 = vpop.f32.mrf.mxu0
      %v8691 = vadd.f32 0.0, %v8690
      %v8692 = vpop.f32.mrf.mxu0
      %8693 = vmatprep.mubr.f32.mxu0 0.0
      %8694 = vmatmul.mubr.f32.gmra.mxu0 %v8356
      %v8695 = vpop.f32.mrf.mxu0
      %v8696 = vadd.f32 0.0, %v8695
      %v8697 = vpop.f32.mrf.mxu0
      %8698 = vmatprep.mubr.f32.mxu0 0.0
      %8699 = vmatmul.mubr.f32.gmra.mxu0 %v8359
      %v8700 = vpop.f32.mrf.mxu0
      %v8701 = vadd.f32 0.0, %v8700
      %v8702 = vpop.f32.mrf.mxu0
      %8703 = vmatprep.mubr.f32.mxu0 0.0
      %8704 = vmatmul.mubr.f32.gmra.mxu0 %v8362
      %v8705 = vpop.f32.mrf.mxu0
      %v8706 = vadd.f32 0.0, %v8705
      %v8707 = vpop.f32.mrf.mxu0
      %8708 = vmatprep.mubr.f32.mxu0 0.0
      %8709 = vmatmul.mubr.f32.gmra.mxu0 %v8365
      %v8710 = vpop.f32.mrf.mxu0
      %v8711 = vadd.f32 0.0, %v8710
      %v8712 = vpop.f32.mrf.mxu0
      %8713 = vmatprep.mubr.f32.mxu0 0.0
      %8714 = vmatmul.mubr.f32.gmra.mxu0 %v8368
      %v8715 = vpop.f32.mrf.mxu0
      %v8716 = vadd.f32 0.0, %v8715
      %v8717 = vpop.f32.mrf.mxu0
      %8718 = vmatprep.mubr.f32.mxu0 0.0
      %8719 = vmatmul.mubr.f32.gmra.mxu0 %v8371
      %v8720 = vpop.f32.mrf.mxu0
      %v8721 = vadd.f32 0.0, %v8720
      %v8722 = vpop.f32.mrf.mxu0
      %8723 = vmatprep.mubr.f32.mxu0 0.0
      %8724 = vmatmul.mubr.f32.gmra.mxu0 %v8374
      %v8725 = vpop.f32.mrf.mxu0
      %v8726 = vadd.f32 0.0, %v8725
      %v8727 = vpop.f32.mrf.mxu0
      %8728 = vmatprep.mubr.f32.mxu0 0.0
      %8729 = vmatmul.mubr.f32.gmra.mxu0 %v8377
      %v8730 = vpop.f32.mrf.mxu0
      %v8731 = vadd.f32 0.0, %v8730
      %v8732 = vpop.f32.mrf.mxu0
      %8733 = vmatprep.mubr.f32.mxu0 0.0
      %8734 = vmatmul.mubr.f32.gmra.mxu0 %v8380
      %v8735 = vpop.f32.mrf.mxu0
      %v8736 = vadd.f32 0.0, %v8735
      %v8737 = vpop.f32.mrf.mxu0
      %8738 = vmatprep.mubr.f32.mxu0 0.0
      %8739 = vmatmul.mubr.f32.gmra.mxu0 %v8383
      %v8740 = vpop.f32.mrf.mxu0
      %v8741 = vadd.f32 0.0, %v8740
      %v8742 = vpop.f32.mrf.mxu0
      %8743 = vmatprep.mubr.f32.mxu0 0.0
      %8744 = vmatmul.mubr.f32.gmra.mxu0 %v8386
      %v8745 = vpop.f32.mrf.mxu0
      %v8746 = vadd.f32 0.0, %v8745
      %v8747 = vpop.f32.mrf.mxu0
      %8748 = vmatprep.mubr.f32.mxu0 0.0
      %8749 = vmatmul.mubr.f32.gmra.mxu0 %v8389
      %v8750 = vpop.f32.mrf.mxu0
      %v8751 = vadd.f32 0.0, %v8750
      %v8752 = vpop.f32.mrf.mxu0
      %8753 = vmatprep.mubr.f32.mxu0 0.0
      %8754 = vmatmul.mubr.f32.gmra.mxu0 %v8392
      %v8755 = vpop.f32.mrf.mxu0
      %v8756 = vadd.f32 0.0, %v8755
      %v8757 = vpop.f32.mrf.mxu0
      %8758 = vmatprep.mubr.f32.mxu0 0.0
      %8759 = vmatmul.mubr.f32.gmra.mxu0 %v8395
      %v8760 = vpop.f32.mrf.mxu0
      %v8761 = vadd.f32 0.0, %v8760
      %v8762 = vpop.f32.mrf.mxu0
      %8763 = vmatprep.mubr.f32.mxu0 0.0
      %8764 = vmatmul.mubr.f32.gmra.mxu0 %v8398
      %v8765 = vpop.f32.mrf.mxu0
      %v8766 = vadd.f32 0.0, %v8765
      %v8767 = vpop.f32.mrf.mxu0
      %8768 = vmatprep.mubr.f32.mxu0 0.0
      %8769 = vmatmul.mubr.f32.gmra.mxu0 %v8401
      %v8770 = vpop.f32.mrf.mxu0
      %v8771 = vadd.f32 0.0, %v8770
      %v8772 = vpop.f32.mrf.mxu0
      %8773 = vmatprep.mubr.f32.mxu0 0.0
      %8774 = vmatmul.mubr.f32.gmra.mxu0 %v8404
      %v8775 = vpop.f32.mrf.mxu0
      %v8776 = vadd.f32 0.0, %v8775
      %v8777 = vpop.f32.mrf.mxu0
      %8778 = vmatprep.mubr.f32.mxu0 0.0
      %8779 = vmatmul.mubr.f32.gmra.mxu0 %v8407
      %v8780 = vpop.f32.mrf.mxu0
      %v8781 = vadd.f32 0.0, %v8780
      %v8782 = vpop.f32.mrf.mxu0
      %8783 = vmatprep.mubr.f32.mxu0 0.0
      %8784 = vmatmul.mubr.f32.gmra.mxu0 %v8410
      %v8785 = vpop.f32.mrf.mxu0
      %v8786 = vadd.f32 0.0, %v8785
      %v8787 = vpop.f32.mrf.mxu0
      %8788 = vmatprep.mubr.f32.mxu0 0.0
      %8789 = vmatmul.mubr.f32.gmra.mxu0 %v8413
      %v8790 = vpop.f32.mrf.mxu0
      %v8791 = vadd.f32 0.0, %v8790
      %v8792 = vpop.f32.mrf.mxu0
      %8793 = vmatprep.mubr.f32.mxu0 0.0
      %8794 = vmatmul.mubr.f32.gmra.mxu0 %v8416
      %v8795 = vpop.f32.mrf.mxu0
      %v8796 = vadd.f32 0.0, %v8795
      %v8797 = vpop.f32.mrf.mxu0
      %8798 = vmatprep.mubr.f32.mxu0 0.0
      %8799 = vmatmul.mubr.f32.gmra.mxu0 %v8419
      %v8800 = vpop.f32.mrf.mxu0
      %v8801 = vadd.f32 0.0, %v8800
      %v8802 = vpop.f32.mrf.mxu0
      %8803 = vmatprep.mubr.f32.mxu0 0.0
      %8804 = vmatmul.mubr.f32.gmra.mxu0 %v8422
      %v8805 = vpop.f32.mrf.mxu0
      %v8806 = vadd.f32 0.0, %v8805
      %v8807 = vpop.f32.mrf.mxu0
      %8808 = vmatprep.mubr.f32.mxu0 0.0
      %8809 = vmatmul.mubr.f32.gmra.mxu0 %v8425
      %v8810 = vpop.f32.mrf.mxu0
      %v8811 = vadd.f32 0.0, %v8810
      %v8812 = vpop.f32.mrf.mxu0
      %8813 = vmatprep.mubr.f32.mxu0 0.0
      %8814 = vmatmul.mubr.f32.gmra.mxu0 %v8428
      %v8815 = vpop.f32.mrf.mxu0
      %v8816 = vadd.f32 0.0, %v8815
      %v8817 = vpop.f32.mrf.mxu0
      %8818 = vdwg.mxu0
      %8819 = vst [vmem:[%s412] sm:$0xff] %v8501
      %8820 = vst [vmem:[%s412 + $0x8] sm:$0xff] %v8506
      %8821 = vst [vmem:[%s412 + $0x10] sm:$0xff] %v8511
      %8822 = vst [vmem:[%s412 + $0x18] sm:$0xff] %v8516
      %8823 = vst [vmem:[%s412 + $0x20] sm:$0xff] %v8521
      %8824 = vst [vmem:[%s412 + $0x28] sm:$0xff] %v8526
      %8825 = vst [vmem:[%s412 + $0x30] sm:$0xff] %v8531
      %8826 = vst [vmem:[%s412 + $0x38] sm:$0xff] %v8536
      %8827 = vst [vmem:[%s412 + $0x40] sm:$0xff] %v8541
      %8828 = vst [vmem:[%s412 + $0x48] sm:$0xff] %v8546
      %8829 = vst [vmem:[%s412 + $0x50] sm:$0xff] %v8551
      %8830 = vst [vmem:[%s412 + $0x58] sm:$0xff] %v8556
      %8831 = vst [vmem:[%s412 + $0x60] sm:$0xff] %v8561
      %8832 = vst [vmem:[%s412 + $0x68] sm:$0xff] %v8566
      %8833 = vst [vmem:[%s412 + $0x70] sm:$0xff] %v8571
      %8834 = vst [vmem:[%s412 + $0x78] sm:$0xff] %v8576
      %8835 = vst [vmem:[%s412 + $0x80] sm:$0xff] %v8581
      %8836 = vst [vmem:[%s412 + $0x88] sm:$0xff] %v8586
      %8837 = vst [vmem:[%s412 + $0x90] sm:$0xff] %v8591
      %8838 = vst [vmem:[%s412 + $0x98] sm:$0xff] %v8596
      %8839 = vst [vmem:[%s412 + $0xa0] sm:$0xff] %v8601
      %8840 = vst [vmem:[%s412 + $0xa8] sm:$0xff] %v8606
      %8841 = vst [vmem:[%s412 + $0xb0] sm:$0xff] %v8611
      %8842 = vst [vmem:[%s412 + $0xb8] sm:$0xff] %v8616
      %8843 = vst [vmem:[%s412 + $0xc0] sm:$0xff] %v8621
      %8844 = vst [vmem:[%s412 + $0xc8] sm:$0xff] %v8626
      %8845 = vst [vmem:[%s412 + $0xd0] sm:$0xff] %v8631
      %8846 = vst [vmem:[%s412 + $0xd8] sm:$0xff] %v8636
      %8847 = vst [vmem:[%s412 + $0xe0] sm:$0xff] %v8641
      %8848 = vst [vmem:[%s412 + $0xe8] sm:$0xff] %v8646
      %8849 = vst [vmem:[%s412 + $0xf0] sm:$0xff] %v8651
      %8850 = vst [vmem:[%s412 + $0xf8] sm:$0xff] %v8656
      %8851 = vst [vmem:[%s412 + $0x100] sm:$0xff] %v8661
      %8852 = vst [vmem:[%s412 + $0x108] sm:$0xff] %v8666
      %8853 = vst [vmem:[%s412 + $0x110] sm:$0xff] %v8671
      %8854 = vst [vmem:[%s412 + $0x118] sm:$0xff] %v8676
      %8855 = vst [vmem:[%s412 + $0x120] sm:$0xff] %v8681
      %8856 = vst [vmem:[%s412 + $0x128] sm:$0xff] %v8686
      %8857 = vst [vmem:[%s412 + $0x130] sm:$0xff] %v8691
      %8858 = vst [vmem:[%s412 + $0x138] sm:$0xff] %v8696
      %8859 = vst [vmem:[%s412 + $0x140] sm:$0xff] %v8701
      %8860 = vst [vmem:[%s412 + $0x148] sm:$0xff] %v8706
      %8861 = vst [vmem:[%s412 + $0x150] sm:$0xff] %v8711
      %8862 = vst [vmem:[%s412 + $0x158] sm:$0xff] %v8716
      %8863 = vst [vmem:[%s412 + $0x160] sm:$0xff] %v8721
      %8864 = vst [vmem:[%s412 + $0x168] sm:$0xff] %v8726
      %8865 = vst [vmem:[%s412 + $0x170] sm:$0xff] %v8731
      %8866 = vst [vmem:[%s412 + $0x178] sm:$0xff] %v8736
      %8867 = vst [vmem:[%s412 + $0x180] sm:$0xff] %v8741
      %8868 = vst [vmem:[%s412 + $0x188] sm:$0xff] %v8746
      %8869 = vst [vmem:[%s412 + $0x190] sm:$0xff] %v8751
      %8870 = vst [vmem:[%s412 + $0x198] sm:$0xff] %v8756
      %8871 = vst [vmem:[%s412 + $0x1a0] sm:$0xff] %v8761
      %8872 = vst [vmem:[%s412 + $0x1a8] sm:$0xff] %v8766
      %8873 = vst [vmem:[%s412 + $0x1b0] sm:$0xff] %v8771
      %8874 = vst [vmem:[%s412 + $0x1b8] sm:$0xff] %v8776
      %8875 = vst [vmem:[%s412 + $0x1c0] sm:$0xff] %v8781
      %8876 = vst [vmem:[%s412 + $0x1c8] sm:$0xff] %v8786
      %8877 = vst [vmem:[%s412 + $0x1d0] sm:$0xff] %v8791
      %8878 = vst [vmem:[%s412 + $0x1d8] sm:$0xff] %v8796
      %8879 = vst [vmem:[%s412 + $0x1e0] sm:$0xff] %v8801
      %8880 = vst [vmem:[%s412 + $0x1e8] sm:$0xff] %v8806
      %8881 = vst [vmem:[%s412 + $0x1f0] sm:$0xff] %v8811
      %8882 = vst [vmem:[%s412 + $0x1f8] sm:$0xff] %v8816
      %v8883 = vadd.f32 %v8501, %v8506
      %v8884 = vadd.f32 %v8883, %v8511
      %v8885 = vadd.f32 %v8884, %v8516
      %v8886 = vadd.f32 %v8885, %v8521
      %v8887 = vadd.f32 %v8886, %v8526
      %v8888 = vadd.f32 %v8887, %v8531
      %v8889 = vadd.f32 %v8888, %v8536
      %v8890 = vadd.f32 %v8889, %v8541
      %v8891 = vadd.f32 %v8890, %v8546
      %v8892 = vadd.f32 %v8891, %v8551
      %v8893 = vadd.f32 %v8892, %v8556
      %v8894 = vadd.f32 %v8893, %v8561
      %v8895 = vadd.f32 %v8894, %v8566
      %v8896 = vadd.f32 %v8895, %v8571
      %v8897 = vadd.f32 %v8896, %v8576
      %v8898 = vadd.f32 %v8897, %v8581
      %v8899 = vadd.f32 %v8898, %v8586
      %v8900 = vadd.f32 %v8899, %v8591
      %v8901 = vadd.f32 %v8900, %v8596
      %v8902 = vadd.f32 %v8901, %v8601
      %v8903 = vadd.f32 %v8902, %v8606
      %v8904 = vadd.f32 %v8903, %v8611
      %v8905 = vadd.f32 %v8904, %v8616
      %v8906 = vadd.f32 %v8905, %v8621
      %v8907 = vadd.f32 %v8906, %v8626
      %v8908 = vadd.f32 %v8907, %v8631
      %v8909 = vadd.f32 %v8908, %v8636
      %v8910 = vadd.f32 %v8909, %v8641
      %v8911 = vadd.f32 %v8910, %v8646
      %v8912 = vadd.f32 %v8911, %v8651
      %v8913 = vadd.f32 %v8912, %v8656
      %v8914 = vadd.f32 %v8913, %v8661
      %v8915 = vadd.f32 %v8914, %v8666
      %v8916 = vadd.f32 %v8915, %v8671
      %v8917 = vadd.f32 %v8916, %v8676
      %v8918 = vadd.f32 %v8917, %v8681
      %v8919 = vadd.f32 %v8918, %v8686
      %v8920 = vadd.f32 %v8919, %v8691
      %v8921 = vadd.f32 %v8920, %v8696
      %v8922 = vadd.f32 %v8921, %v8701
      %v8923 = vadd.f32 %v8922, %v8706
      %v8924 = vadd.f32 %v8923, %v8711
      %v8925 = vadd.f32 %v8924, %v8716
      %v8926 = vadd.f32 %v8925, %v8721
      %v8927 = vadd.f32 %v8926, %v8726
      %v8928 = vadd.f32 %v8927, %v8731
      %v8929 = vadd.f32 %v8928, %v8736
      %v8930 = vadd.f32 %v8929, %v8741
      %v8931 = vadd.f32 %v8930, %v8746
      %v8932 = vadd.f32 %v8931, %v8751
      %v8933 = vadd.f32 %v8932, %v8756
      %v8934 = vadd.f32 %v8933, %v8761
      %v8935 = vadd.f32 %v8934, %v8766
      %v8936 = vadd.f32 %v8935, %v8771
      %v8937 = vadd.f32 %v8936, %v8776
      %v8938 = vadd.f32 %v8937, %v8781
      %v8939 = vadd.f32 %v8938, %v8786
      %v8940 = vadd.f32 %v8939, %v8791
      %v8941 = vadd.f32 %v8940, %v8796
      %v8942 = vadd.f32 %v8941, %v8801
      %v8943 = vadd.f32 %v8942, %v8806
      %v8944 = vadd.f32 %v8943, %v8811
      %v8945 = vadd.f32 %v8944, %v8816
      %v8946 = vrot.slane %v8945, 4
      %v8947 = vadd.f32 %v8945, %v8946
      %v8948 = vrot.slane %v8947, 2
      %v8949 = vadd.f32 %v8947, %v8948
      %v8950 = vrot.slane %v8949, 1
      %v8951 = vadd.f32 %v8949, %v8950
      %v8952 = vmul.f32 %v8501, %v8501
      %v8953 = vmul.f32 %v8506, %v8506
      %v8954 = vmul.f32 %v8511, %v8511
      %v8955 = vmul.f32 %v8516, %v8516
      %v8956 = vmul.f32 %v8521, %v8521
      %v8957 = vmul.f32 %v8526, %v8526
      %v8958 = vmul.f32 %v8531, %v8531
      %v8959 = vmul.f32 %v8536, %v8536
      %v8960 = vmul.f32 %v8541, %v8541
      %v8961 = vmul.f32 %v8546, %v8546
      %v8962 = vmul.f32 %v8551, %v8551
      %v8963 = vmul.f32 %v8556, %v8556
      %v8964 = vmul.f32 %v8561, %v8561
      %v8965 = vmul.f32 %v8566, %v8566
      %v8966 = vmul.f32 %v8571, %v8571
      %v8967 = vmul.f32 %v8576, %v8576
      %v8968 = vmul.f32 %v8581, %v8581
      %v8969 = vmul.f32 %v8586, %v8586
      %v8970 = vmul.f32 %v8591, %v8591
      %v8971 = vmul.f32 %v8596, %v8596
      %v8972 = vmul.f32 %v8601, %v8601
      %v8973 = vmul.f32 %v8606, %v8606
      %v8974 = vmul.f32 %v8611, %v8611
      %v8975 = vmul.f32 %v8616, %v8616
      %v8976 = vmul.f32 %v8621, %v8621
      %v8977 = vmul.f32 %v8626, %v8626
      %v8978 = vmul.f32 %v8631, %v8631
      %v8979 = vmul.f32 %v8636, %v8636
      %v8980 = vmul.f32 %v8641, %v8641
      %v8981 = vmul.f32 %v8646, %v8646
      %v8982 = vmul.f32 %v8651, %v8651
      %v8983 = vmul.f32 %v8656, %v8656
      %v8984 = vmul.f32 %v8661, %v8661
      %v8985 = vmul.f32 %v8666, %v8666
      %v8986 = vmul.f32 %v8671, %v8671
      %v8987 = vmul.f32 %v8676, %v8676
      %v8988 = vmul.f32 %v8681, %v8681
      %v8989 = vmul.f32 %v8686, %v8686
      %v8990 = vmul.f32 %v8691, %v8691
      %v8991 = vmul.f32 %v8696, %v8696
      %v8992 = vmul.f32 %v8701, %v8701
      %v8993 = vmul.f32 %v8706, %v8706
      %v8994 = vmul.f32 %v8711, %v8711
      %v8995 = vmul.f32 %v8716, %v8716
      %v8996 = vmul.f32 %v8721, %v8721
      %v8997 = vmul.f32 %v8726, %v8726
      %v8998 = vmul.f32 %v8731, %v8731
      %v8999 = vmul.f32 %v8736, %v8736
      %v9000 = vmul.f32 %v8741, %v8741
      %v9001 = vmul.f32 %v8746, %v8746
      %v9002 = vmul.f32 %v8751, %v8751
      %v9003 = vmul.f32 %v8756, %v8756
      %v9004 = vmul.f32 %v8761, %v8761
      %v9005 = vmul.f32 %v8766, %v8766
      %v9006 = vmul.f32 %v8771, %v8771
      %v9007 = vmul.f32 %v8776, %v8776
      %v9008 = vmul.f32 %v8781, %v8781
      %v9009 = vmul.f32 %v8786, %v8786
      %v9010 = vmul.f32 %v8791, %v8791
      %v9011 = vmul.f32 %v8796, %v8796
      %v9012 = vmul.f32 %v8801, %v8801
      %v9013 = vmul.f32 %v8806, %v8806
      %v9014 = vmul.f32 %v8811, %v8811
      %v9015 = vmul.f32 %v8816, %v8816
      %v9016 = vadd.f32 %v8952, %v8953
      %v9017 = vadd.f32 %v9016, %v8954
      %v9018 = vadd.f32 %v9017, %v8955
      %v9019 = vadd.f32 %v9018, %v8956
      %v9020 = vadd.f32 %v9019, %v8957
      %v9021 = vadd.f32 %v9020, %v8958
      %v9022 = vadd.f32 %v9021, %v8959
      %v9023 = vadd.f32 %v9022, %v8960
      %v9024 = vadd.f32 %v9023, %v8961
      %v9025 = vadd.f32 %v9024, %v8962
      %v9026 = vadd.f32 %v9025, %v8963
      %v9027 = vadd.f32 %v9026, %v8964
      %v9028 = vadd.f32 %v9027, %v8965
      %v9029 = vadd.f32 %v9028, %v8966
      %v9030 = vadd.f32 %v9029, %v8967
      %v9031 = vadd.f32 %v9030, %v8968
      %v9032 = vadd.f32 %v9031, %v8969
      %v9033 = vadd.f32 %v9032, %v8970
      %v9034 = vadd.f32 %v9033, %v8971
      %v9035 = vadd.f32 %v9034, %v8972
      %v9036 = vadd.f32 %v9035, %v8973
      %v9037 = vadd.f32 %v9036, %v8974
      %v9038 = vadd.f32 %v9037, %v8975
      %v9039 = vadd.f32 %v9038, %v8976
      %v9040 = vadd.f32 %v9039, %v8977
      %v9041 = vadd.f32 %v9040, %v8978
      %v9042 = vadd.f32 %v9041, %v8979
      %v9043 = vadd.f32 %v9042, %v8980
      %v9044 = vadd.f32 %v9043, %v8981
      %v9045 = vadd.f32 %v9044, %v8982
      %v9046 = vadd.f32 %v9045, %v8983
      %v9047 = vadd.f32 %v9046, %v8984
      %v9048 = vadd.f32 %v9047, %v8985
      %v9049 = vadd.f32 %v9048, %v8986
      %v9050 = vadd.f32 %v9049, %v8987
      %v9051 = vadd.f32 %v9050, %v8988
      %v9052 = vadd.f32 %v9051, %v8989
      %v9053 = vadd.f32 %v9052, %v8990
      %v9054 = vadd.f32 %v9053, %v8991
      %v9055 = vadd.f32 %v9054, %v8992
      %v9056 = vadd.f32 %v9055, %v8993
      %v9057 = vadd.f32 %v9056, %v8994
      %v9058 = vadd.f32 %v9057, %v8995
      %v9059 = vadd.f32 %v9058, %v8996
      %v9060 = vadd.f32 %v9059, %v8997
      %v9061 = vadd.f32 %v9060, %v8998
      %v9062 = vadd.f32 %v9061, %v8999
      %v9063 = vadd.f32 %v9062, %v9000
      %v9064 = vadd.f32 %v9063, %v9001
      %v9065 = vadd.f32 %v9064, %v9002
      %v9066 = vadd.f32 %v9065, %v9003
      %v9067 = vadd.f32 %v9066, %v9004
      %v9068 = vadd.f32 %v9067, %v9005
      %v9069 = vadd.f32 %v9068, %v9006
      %v9070 = vadd.f32 %v9069, %v9007
      %v9071 = vadd.f32 %v9070, %v9008
      %v9072 = vadd.f32 %v9071, %v9009
      %v9073 = vadd.f32 %v9072, %v9010
      %v9074 = vadd.f32 %v9073, %v9011
      %v9075 = vadd.f32 %v9074, %v9012
      %v9076 = vadd.f32 %v9075, %v9013
      %v9077 = vadd.f32 %v9076, %v9014
      %v9078 = vadd.f32 %v9077, %v9015
      %v9079 = vrot.slane %v9078, 4
      %v9080 = vadd.f32 %v9078, %v9079
      %v9081 = vrot.slane %v9080, 2
      %v9082 = vadd.f32 %v9080, %v9081
      %v9083 = vrot.slane %v9082, 1
      %v9084 = vadd.f32 %v9082, %v9083
      %vm9085 = vcmask 1040384
      %v9086 = vsel %vm9085, %v8951, %v9084
      %vm9087 = vcmask 1041408
      %v9088 = vsel %vm9087, %v9086, 0.0
      %9089 = vst [vmem:[%s420] sm:$0xff] %v9088
      %s9090 = smul.u32 8, %s22
      %p9091 = scmp.lt.s32.totalorder %s21, 1
      %s9092 = scalar_select %p9091, %s21, 1
      %p9093 = scmp.lt.s32.totalorder %s9090, 7
      %s9094 = scalar_select %p9093, %s9090, 7
      %s9095 = smul.addr %s9094, 8
      %s9096 = smul.addr %s9092, 64
      %s9097 = sadd.s32 %s9095, %s9096
      %s9098 = smul.addr %s9097, 8
      %s9099 = scalar_lea.vmem %s4, %s9098
      %p9100 = scmp.lt.s32.totalorder %s21, 1
      %s9101 = scalar_select %p9100, %s21, 1
      %p9102 = scmp.lt.s32.totalorder %s22, 0
      %s9103 = scalar_select %p9102, %s22, 0
      %s9104 = sadd.s32 %s9103, %s9101
      %s9105 = smul.addr %s9104, 8
      %s9106 = scalar_lea.vmem %s5, %s9105
      // Predicated region
      $region37: #{conv_bn_relu_3d.1} parent=35 // pred_check
        %p9107 = pneg %p164
      $region38: #{conv_bn_relu_3d.1} parent=35 // pred_check_branch
        %9109 = sbr.rel (%p9107) target = $region40
      $region39: #{conv_bn_relu_3d.1} parent=35 // pred_region
        %s9110 = smul.u32 8, %s22
      $region40: #{conv_bn_relu_3d.1} parent=35 // pred_fallthru
        _
      // Predicated region
      $region41: #{conv_bn_relu_3d.1} parent=35 // pred_check
        %p9111 = pneg %p192
      $region42: #{conv_bn_relu_3d.1} parent=35 // pred_check_branch
        %9113 = sbr.rel (%p9111) target = $region44
      $region43: #{conv_bn_relu_3d.1} parent=35 // pred_region
        _
      $region44: #{conv_bn_relu_3d.1} parent=35 // pred_fallthru
        _
    $region36: #{conv_bn_relu_3d.1} parent=5 // pred_fallthru
      _
    %p9114 = scmp.le.s32.totalorder 2, %s12
    // Predicated region
    $region45: #{conv_bn_relu_3d.1} parent=5 // pred_check
      %p9115 = pneg %p9114
    $region46: #{conv_bn_relu_3d.1} parent=5 // pred_check_branch
      %9117 = sbr.rel (%p9115) target = $region48
    $region47: #{conv_bn_relu_3d.1} parent=5 // pred_region
      %s9118 = ssub.s32 %s12, 2
      // Predicated region
      $region49: #{conv_bn_relu_3d.1} parent=47 // pred_check
        %p9119 = pneg %p170
      $region50: #{conv_bn_relu_3d.1} parent=47 // pred_check_branch
        %9121 = sbr.rel (%p9119) target = $region52
      $region51: #{conv_bn_relu_3d.1} parent=47 // pred_region
        %s9122 = smul.u32 8, %s24
        %p9123 = scmp.lt.s32.totalorder %s23, 1
        %s9124 = scalar_select %p9123, %s23, 1
        %p9125 = scmp.lt.s32.totalorder %s9122, 7
        %s9126 = scalar_select %p9125, %s9122, 7
        %s9127 = smul.addr %s9126, 8
        %s9128 = smul.addr %s9124, 64
        %s9129 = sadd.s32 %s9127, %s9128
        %s9130 = smul.addr %s9129, 8
        %s9131 = scalar_lea.vmem %s4, %s9130
      $region52: #{conv_bn_relu_3d.1} parent=47 // pred_fallthru
        _
      // Predicated region
      $region53: #{conv_bn_relu_3d.1} parent=47 // pred_check
        %p9132 = pneg %p198
      $region54: #{conv_bn_relu_3d.1} parent=47 // pred_check_branch
        %9134 = sbr.rel (%p9132) target = $region56
      $region55: #{conv_bn_relu_3d.1} parent=47 // pred_region
        %p9135 = scmp.lt.s32.totalorder %s23, 1
        %s9136 = scalar_select %p9135, %s23, 1
        %p9137 = scmp.lt.s32.totalorder %s24, 0
        %s9138 = scalar_select %p9137, %s24, 0
        %s9139 = sadd.s32 %s9138, %s9136
        %s9140 = smul.addr %s9139, 8
        %s9141 = scalar_lea.vmem %s5, %s9140
      $region56: #{conv_bn_relu_3d.1} parent=47 // pred_fallthru
        _
    $region48: #{conv_bn_relu_3d.1} parent=5 // pred_fallthru
      _
  $region6: #{conv_bn_relu_3d.1} parent=0 // loop_footer
    %s16 = sadd.s32 1, %s12
  $region7: #{conv_bn_relu_3d.1} parent=0 // loop_footer_branch
    %11 = sbr.rel target = $region3
  $region8: #{conv_bn_relu_3d.1} parent=0 // loop_exit
    _

</llo_original>
